<compile_context>
chip_gen: v5e
topology: v5e:2x2
jax: 0.10.0
libtpu: 0.0.40
codegen_flags: <defaults>
</compile_context>

<pallas_src>
import functools

import numpy as np
import jax
import jax.numpy as jnp
from jax.experimental import pallas as pl
from jax.experimental.pallas import tpu as pltpu


GROWTH = 8                      # dense growth (hardcoded 8 in the PyTorch module)
N_DENSE = 16                    # 2 stages x 8 blocks
DENSE_DILS = tuple(2 ** j for _ in range(2) for j in range(8))
LAYER_DILS = (1,) + DENSE_DILS + (1,)       # stem + dense blocks + out_conv
EPS = 1e-5
LRELU_SLOPE = 0.01


def _static_cfg(N, H, W, c_in, nf):
    assert nf == GROWTH, "packing assumes stem num_filters == dense growth == 8"
    M = N * H * W

    # A tap can land in-bounds for some output pixel iff its offset is smaller
    # than the spatial extent along *each* axis (per-axis test -> correct for
    # non-square inputs as well).
    def active_taps(d):
        return tuple(t for t in range(9)
                     if abs((t // 3 - 1) * d) < H and abs((t % 3 - 1) * d) < W)

    acts = {d: active_taps(d) for d in sorted(set(LAYER_DILS))}

    # One (8, M) border mask per (dilation, non-centre active tap).
    mask_idx = {}
    for d in sorted(acts):
        for t in acts[d]:
            if t != 4:
                mask_idx[(d, t)] = len(mask_idx)

    return dict(N=N, H=H, W=W, M=M, c_in=c_in, nf=nf,
                c_total=nf + GROWTH * N_DENSE,
                active=acts, mask_idx=mask_idx)


# ----------------------------------------------------------------------------
# The single fused kernel
# ----------------------------------------------------------------------------
def _dense_net_kernel(x_ref, masks_ref, gamma_ref, beta_ref, obias_ref, *rest,
                      cfg):
    W, M = cfg['W'], cfg['M']
    nf, c_total = cfg['nf'], cfg['c_total']
    active, mask_idx = cfg['active'], cfg['mask_idx']

    n_w = 1 + N_DENSE + 1                       # stem + dense layers + out_conv
    w_refs = rest[:n_w]
    o_ref = rest[n_w]
    buf_ref = rest[n_w + 1]                     # (c_total, M) bf16 concat buffer

    inv_m = 1.0 / float(M)

    def conv(w_ref, x_val, d):
        # w_ref: (n_taps*GROWTH, Cin) bf16, tap-major over the *active* taps.
        # x_val: (Cin, M) bf16.  One MXU matmul for all taps (f32 accumulate),
        # then lane-rotate + border-mask + tree-sum the per-tap partials.
        p = jnp.dot(w_ref[...], x_val, preferred_element_type=jnp.float32)
        taps = active[d]
        terms = []
        for i, t in enumerate(taps):
            sl = p[i * GROWTH:(i + 1) * GROWTH, :]
            if t == 4:
                terms.append(sl)                 # centre tap: no shift, no mask
            else:
                off = (t // 3 - 1) * d * W + (t % 3 - 1) * d
                # need q[:, m] = sl[:, (m + off) mod M]  ->  roll by (-off) mod M
                q = pltpu.roll(sl, (-off) % M, axis=1)
                mi = mask_idx[(d, t)] * GROWTH
                terms.append(q * masks_ref[mi:mi + GROWTH, :])
        # pairwise tree-sum (short dependent-add chain instead of a serial one)
        while len(terms) > 1:
            terms = [terms[i] + terms[i + 1] if i + 1 < len(terms) else terms[i]
                     for i in range(0, len(terms), 2)]
        return terms[0]

    def bn_lrelu(acc, k):
        # BatchNorm2d (training-mode batch stats, biased var, eps=1e-5) fused
        # into a single affine pass, followed by LeakyReLU(0.01).
        s1 = jnp.sum(acc, axis=1, keepdims=True)
        s2 = jnp.sum(acc * acc, axis=1, keepdims=True)
        mean = s1 * inv_m
        var = jnp.maximum(s2 * inv_m - mean * mean, 0.0)
        scale = gamma_ref[:, k:k + 1] * jax.lax.rsqrt(var + EPS)
        shift = beta_ref[:, k:k + 1] - mean * scale
        y = acc * scale + shift
        y = jnp.where(y >= 0.0, y, LRELU_SLOPE * y)
        return y.astype(jnp.bfloat16)            # cast each channel exactly once

    # stem: c_in -> nf, 3x3, dilation 1
    buf_ref[0:nf, :] = bn_lrelu(conv(w_refs[0], x_ref[...], 1), 0)

    # 16 dense blocks; each appends its 8 new channels to the concat buffer
    c = nf
    for k in range(N_DENSE):
        d = DENSE_DILS[k]
        acc = conv(w_refs[1 + k], buf_ref[0:c, :], d)
        buf_ref[c:c + GROWTH, :] = bn_lrelu(acc, 1 + k)
        c += GROWTH

    # out_conv: c_total -> c_in (zero-padded to GROWTH rows), 3x3, bias, no BN/act
    o_ref[...] = conv(w_refs[1 + N_DENSE], buf_ref[0:c_total, :], 1) + obias_ref[...]


# ----------------------------------------------------------------------------
# Packing (parameters -> kernel layout) and the wrapper
# ----------------------------------------------------------------------------
def _build_masks(cfg):
    H, W, M = cfg['H'], cfg['W'], cfg['M']
    ii = np.arange(M)
    ys = (ii // W) % H
    xs = ii % W
    n = max(len(cfg['mask_idx']), 1)
    masks = np.zeros((n * GROWTH, M), np.float32)
    for (d, t), mi in cfg['mask_idx'].items():
        dy = (t // 3 - 1) * d
        dx = (t % 3 - 1) * d
        m = ((ys + dy >= 0) & (ys + dy < H) &
             (xs + dx >= 0) & (xs + dx < W)).astype(np.float32)
        # pre-broadcast to 8 sublanes so the kernel never replicates
        masks[mi * GROWTH:(mi + 1) * GROWTH, :] = m
    return jnp.asarray(masks)


def pack_params(params, cfg):
    c_in = cfg['c_in']

    def pack_w(w9, d):              # (9, cout, cin) -> (n_active*cout, cin) bf16
        taps = cfg['active'][d]
        return jnp.concatenate([w9[t] for t in taps], axis=0).astype(jnp.bfloat16)

    weights = [pack_w(params['stem']['w9'], 1)]
    gammas = [params['stem']['gamma']]
    betas = [params['stem']['beta']]
    for k, d in enumerate(DENSE_DILS):
        p = params['conv_{}_{}'.format(k // 8, k % 8)]
        weights.append(pack_w(p['w9'], d))
        gammas.append(p['gamma'])
        betas.append(p['beta'])
    w_out = jnp.pad(params['out']['w9'], ((0, 0), (0, GROWTH - c_in), (0, 0)))
    weights.append(pack_w(w_out, 1))
    obias = jnp.pad(params['out']['bias'], (0, GROWTH - c_in)).reshape(GROWTH, 1)

    return dict(masks=_build_masks(cfg),
                gammas=jnp.stack(gammas, axis=1).astype(jnp.float32),   # (8, 17)
                betas=jnp.stack(betas, axis=1).astype(jnp.float32),     # (8, 17)
                obias=obias.astype(jnp.float32),                        # (8, 1)
                weights=tuple(weights))                                 # 18 arrays


def dilated_densenet_forward(x_nchw, packed, cfg, bias_params=None):
    N, C, H, W = x_nchw.shape
    M = cfg['M']
    assert (N * H * W, C) == (M, cfg['c_in'])
    # NCHW -> channel-major (C, N*H*W), pre-cast to bf16 (reference rounds conv
    # inputs to bf16 as well).
    x_cm = jnp.transpose(x_nchw, (1, 0, 2, 3)).reshape(C, M).astype(jnp.bfloat16)

    n_in = 5 + len(packed['weights'])
    out = pl.pallas_call(
        functools.partial(_dense_net_kernel, cfg=cfg),
        out_shape=jax.ShapeDtypeStruct((GROWTH, M), jnp.float32),
        in_specs=[pl.BlockSpec(memory_space=pltpu.MemorySpace.VMEM)] * n_in,
        out_specs=pl.BlockSpec(memory_space=pltpu.MemorySpace.VMEM),
        scratch_shapes=[pltpu.VMEM((cfg['c_total'], M), jnp.bfloat16)],
        compiler_params=pltpu.CompilerParams(vmem_limit_bytes=32 * 1024 * 1024),
    )(x_cm, packed['masks'], packed['gammas'], packed['betas'], packed['obias'],
      *packed['weights'])

    out = jnp.transpose(out[:C].reshape(C, N, H, W), (1, 0, 2, 3))  # -> NCHW
    if bias_params is not None:            # per_param_biases=True path
        out = out + bias_params
    return out


# ----------------------------------------------------------------------------
# Pure-JAX reference.  Conv operands are rounded to bf16 (f32 accumulation) so
# the reference reproduces the TPU MXU default-precision numerics the kernel
# uses; all other math is f32.
# ----------------------------------------------------------------------------
def reference_forward(x_nchw, params):
    def r(v):
        return v.astype(jnp.bfloat16).astype(jnp.float32)

    x = jnp.transpose(x_nchw, (0, 2, 3, 1)).astype(jnp.float32)

    def conv(xx, w9, d):
        cout, cin = w9.shape[1], w9.shape[2]
        w4 = jnp.transpose(w9.reshape(3, 3, cout, cin), (0, 1, 3, 2))  # HWIO
        return jax.lax.conv_general_dilated(
            r(xx), r(w4), (1, 1), [(d, d), (d, d)], rhs_dilation=(d, d),
            dimension_numbers=('NHWC', 'HWIO', 'NHWC'),
            precision=jax.lax.Precision.HIGHEST)

    def bn_lrelu(y, gamma, beta):
        mean = jnp.mean(y, axis=(0, 1, 2), keepdims=True)
        var = jnp.mean(jnp.square(y - mean), axis=(0, 1, 2), keepdims=True)
        y = (y - mean) * jax.lax.rsqrt(var + 1e-5)
        y = y * gamma.reshape(1, 1, 1, -1) + beta.reshape(1, 1, 1, -1)
        return jnp.where(y >= 0.0, y, 0.01 * y)

    p = params['stem']
    out = bn_lrelu(conv(x, p['w9'], 1), p['gamma'], p['beta'])
    for i in range(2):
        for j in range(8):
            d = 2 ** j
            p = params['conv_{}_{}'.format(i, j)]
            cur = bn_lrelu(conv(out, p['w9'], d), p['gamma'], p['beta'])
            out = jnp.concatenate([out, cur], axis=-1)
    p = params['out']
    out = conv(out, p['w9'], 1) + p['bias'].reshape(1, 1, 1, -1)
    return jnp.transpose(out, (0, 3, 1, 2))


# ----------------------------------------------------------------------------
# Deterministic parameter init (shapes dictated by the module's __init__)
# ----------------------------------------------------------------------------
def init_params(key, c_in, num_filters):
    keys = iter(jax.random.split(key, 64))

    def conv_w(cout, cin):   # tap-major: (9, cout, cin), taps ordered ky*3+kx
        return jax.random.normal(next(keys), (9, cout, cin), jnp.float32) / np.sqrt(9.0 * cin)

    def bn(cout):
        g = 1.0 + 0.1 * jax.random.normal(next(keys), (cout,), jnp.float32)
        b = 0.1 * jax.random.normal(next(keys), (cout,), jnp.float32)
        return g, b

    params = {}
    g, b = bn(num_filters)
    params['stem'] = dict(w9=conv_w(num_filters, c_in), gamma=g, beta=b)
    c = num_filters
    for i in range(2):
        for j in range(8):
            g, b = bn(GROWTH)
            params['conv_{}_{}'.format(i, j)] = dict(w9=conv_w(GROWTH, c), gamma=g, beta=b)
            c += GROWTH
    params['out'] = dict(w9=conv_w(c_in, c),
                         bias=0.1 * jax.random.normal(next(keys), (c_in,), jnp.float32))
    return params


if __name__ == "__main__":
    key = jax.random.PRNGKey(0)
    k_x, k_p = jax.random.split(key)

    # im_shape = (2, 4, 16, 16), num_filters = 8, per_param_biases = False
    N, C, H, W = 2, 4, 16, 16
    NUM_FILTERS = 8
    x = jax.random.normal(k_x, (N, C, H, W), jnp.float32)
    params = init_params(k_p, C, NUM_FILTERS)

    cfg = _static_cfg(N, H, W, C, NUM_FILTERS)
    packed = pack_params(params, cfg)

    fwd = jax.jit(lambda xx: dilated_densenet_forward(xx, packed, cfg))
    out = jax.block_until_ready(fwd(x))
    assert out.shape == (N, C, H, W)

    ref = jax.block_until_ready(reference_forward(x, params))
    np.testing.assert_allclose(np.asarray(out), np.asarray(ref), rtol=1e-2, atol=1e-2)

    print("KERNEL_OK")
</pallas_src>

<mosaic_0001>
module attributes {stable_mosaic.version = 11 : i64} {
  func.func @_dense_net_kernel(%arg0: memref<4x512xbf16, #tpu.memory_space<vmem>>, %arg1: memref<256x512xf32, #tpu.memory_space<vmem>>, %arg2: memref<8x17xf32, #tpu.memory_space<vmem>>, %arg3: memref<8x17xf32, #tpu.memory_space<vmem>>, %arg4: memref<8x1xf32, #tpu.memory_space<vmem>>, %arg5: memref<72x4xbf16, #tpu.memory_space<vmem>>, %arg6: memref<72x8xbf16, #tpu.memory_space<vmem>>, %arg7: memref<72x16xbf16, #tpu.memory_space<vmem>>, %arg8: memref<72x24xbf16, #tpu.memory_space<vmem>>, %arg9: memref<72x32xbf16, #tpu.memory_space<vmem>>, %arg10: memref<8x40xbf16, #tpu.memory_space<vmem>>, %arg11: memref<8x48xbf16, #tpu.memory_space<vmem>>, %arg12: memref<8x56xbf16, #tpu.memory_space<vmem>>, %arg13: memref<8x64xbf16, #tpu.memory_space<vmem>>, %arg14: memref<72x72xbf16, #tpu.memory_space<vmem>>, %arg15: memref<72x80xbf16, #tpu.memory_space<vmem>>, %arg16: memref<72x88xbf16, #tpu.memory_space<vmem>>, %arg17: memref<72x96xbf16, #tpu.memory_space<vmem>>, %arg18: memref<8x104xbf16, #tpu.memory_space<vmem>>, %arg19: memref<8x112xbf16, #tpu.memory_space<vmem>>, %arg20: memref<8x120xbf16, #tpu.memory_space<vmem>>, %arg21: memref<8x128xbf16, #tpu.memory_space<vmem>>, %arg22: memref<72x136xbf16, #tpu.memory_space<vmem>>, %arg23: memref<8x512xf32, #tpu.memory_space<vmem>>, %arg24: memref<136x512xbf16, #tpu.memory_space<vmem>>) attributes {dimension_semantics = [], scalar_prefetch = 0 : i64, scratch_operands = 1 : i64, tpu.core_type = #tpu.core_type<tc>} {
    %c0 = arith.constant 0 : index
    %c0_0 = arith.constant 0 : index
    %0 = vector.load %arg0[%c0, %c0_0] : memref<4x512xbf16, #tpu.memory_space<vmem>>, vector<4x512xbf16>
    %c0_1 = arith.constant 0 : index
    %c0_2 = arith.constant 0 : index
    %1 = vector.load %arg5[%c0_1, %c0_2] : memref<72x4xbf16, #tpu.memory_space<vmem>>, vector<72x4xbf16>
    %cst = arith.constant dense<0.000000e+00> : vector<72x512xf32>
    %2 = tpu.matmul %1, %0, %cst {dimension_numbers = #tpu.dot_dimension_numbers<[1], [0], [0], [1], [0, 0, 1, 1], [], []>} : vector<72x4xbf16>, vector<4x512xbf16>, vector<72x512xf32> -> vector<72x512xf32>
    %3 = vector.extract_strided_slice %2 {offsets = [0, 0], sizes = [8, 512], strides = [1, 1]} : vector<72x512xf32> to vector<8x512xf32>
    %c17_i32 = arith.constant 17 : i32
    %4 = tpu.dynamic_rotate %3 by %c17_i32 dim 1 : vector<8x512xf32>, i32 -> vector<8x512xf32>
    %c0_3 = arith.constant 0 : index
    %c0_4 = arith.constant 0 : index
    %5 = vector.load %arg1[%c0_3, %c0_4] : memref<256x512xf32, #tpu.memory_space<vmem>>, vector<8x512xf32>
    %6 = arith.mulf %4, %5 : vector<8x512xf32>
    %7 = vector.extract_strided_slice %2 {offsets = [8, 0], sizes = [8, 512], strides = [1, 1]} : vector<72x512xf32> to vector<8x512xf32>
    %c16_i32 = arith.constant 16 : i32
    %8 = tpu.dynamic_rotate %7 by %c16_i32 dim 1 : vector<8x512xf32>, i32 -> vector<8x512xf32>
    %c8 = arith.constant 8 : index
    %c0_5 = arith.constant 0 : index
    %9 = vector.load %arg1[%c8, %c0_5] : memref<256x512xf32, #tpu.memory_space<vmem>>, vector<8x512xf32>
    %10 = arith.mulf %8, %9 : vector<8x512xf32>
    %11 = vector.extract_strided_slice %2 {offsets = [16, 0], sizes = [8, 512], strides = [1, 1]} : vector<72x512xf32> to vector<8x512xf32>
    %c15_i32 = arith.constant 15 : i32
    %12 = tpu.dynamic_rotate %11 by %c15_i32 dim 1 : vector<8x512xf32>, i32 -> vector<8x512xf32>
    %c16 = arith.constant 16 : index
    %c0_6 = arith.constant 0 : index
    %13 = vector.load %arg1[%c16, %c0_6] : memref<256x512xf32, #tpu.memory_space<vmem>>, vector<8x512xf32>
    %14 = arith.mulf %12, %13 : vector<8x512xf32>
    %15 = vector.extract_strided_slice %2 {offsets = [24, 0], sizes = [8, 512], strides = [1, 1]} : vector<72x512xf32> to vector<8x512xf32>
    %c1_i32 = arith.constant 1 : i32
    %16 = tpu.dynamic_rotate %15 by %c1_i32 dim 1 : vector<8x512xf32>, i32 -> vector<8x512xf32>
    %c24 = arith.constant 24 : index
    %c0_7 = arith.constant 0 : index
    %17 = vector.load %arg1[%c24, %c0_7] : memref<256x512xf32, #tpu.memory_space<vmem>>, vector<8x512xf32>
    %18 = arith.mulf %16, %17 : vector<8x512xf32>
    %19 = vector.extract_strided_slice %2 {offsets = [32, 0], sizes = [8, 512], strides = [1, 1]} : vector<72x512xf32> to vector<8x512xf32>
    %20 = vector.extract_strided_slice %2 {offsets = [40, 0], sizes = [8, 512], strides = [1, 1]} : vector<72x512xf32> to vector<8x512xf32>
    %c511_i32 = arith.constant 511 : i32
    %21 = tpu.dynamic_rotate %20 by %c511_i32 dim 1 : vector<8x512xf32>, i32 -> vector<8x512xf32>
    %c32 = arith.constant 32 : index
    %c0_8 = arith.constant 0 : index
    %22 = vector.load %arg1[%c32, %c0_8] : memref<256x512xf32, #tpu.memory_space<vmem>>, vector<8x512xf32>
    %23 = arith.mulf %21, %22 : vector<8x512xf32>
    %24 = vector.extract_strided_slice %2 {offsets = [48, 0], sizes = [8, 512], strides = [1, 1]} : vector<72x512xf32> to vector<8x512xf32>
    %c497_i32 = arith.constant 497 : i32
    %25 = tpu.dynamic_rotate %24 by %c497_i32 dim 1 : vector<8x512xf32>, i32 -> vector<8x512xf32>
    %c40 = arith.constant 40 : index
    %c0_9 = arith.constant 0 : index
    %26 = vector.load %arg1[%c40, %c0_9] : memref<256x512xf32, #tpu.memory_space<vmem>>, vector<8x512xf32>
    %27 = arith.mulf %25, %26 : vector<8x512xf32>
    %28 = vector.extract_strided_slice %2 {offsets = [56, 0], sizes = [8, 512], strides = [1, 1]} : vector<72x512xf32> to vector<8x512xf32>
    %c496_i32 = arith.constant 496 : i32
    %29 = tpu.dynamic_rotate %28 by %c496_i32 dim 1 : vector<8x512xf32>, i32 -> vector<8x512xf32>
    %c48 = arith.constant 48 : index
    %c0_10 = arith.constant 0 : index
    %30 = vector.load %arg1[%c48, %c0_10] : memref<256x512xf32, #tpu.memory_space<vmem>>, vector<8x512xf32>
    %31 = arith.mulf %29, %30 : vector<8x512xf32>
    %32 = vector.extract_strided_slice %2 {offsets = [64, 0], sizes = [8, 512], strides = [1, 1]} : vector<72x512xf32> to vector<8x512xf32>
    %c495_i32 = arith.constant 495 : i32
    %33 = tpu.dynamic_rotate %32 by %c495_i32 dim 1 : vector<8x512xf32>, i32 -> vector<8x512xf32>
    %c56 = arith.constant 56 : index
    %c0_11 = arith.constant 0 : index
    %34 = vector.load %arg1[%c56, %c0_11] : memref<256x512xf32, #tpu.memory_space<vmem>>, vector<8x512xf32>
    %35 = arith.mulf %33, %34 : vector<8x512xf32>
    %36 = arith.addf %6, %10 : vector<8x512xf32>
    %37 = arith.addf %14, %18 : vector<8x512xf32>
    %38 = arith.addf %19, %23 : vector<8x512xf32>
    %39 = arith.addf %27, %31 : vector<8x512xf32>
    %40 = arith.addf %36, %37 : vector<8x512xf32>
    %41 = arith.addf %38, %39 : vector<8x512xf32>
    %42 = arith.addf %40, %41 : vector<8x512xf32>
    %43 = arith.addf %42, %35 : vector<8x512xf32>
    %cst_12 = arith.constant dense<0.000000e+00> : vector<8xf32>
    %44 = vector.multi_reduction <add>, %43, %cst_12 [1] : vector<8x512xf32> to vector<8xf32>
    %45 = vector.shape_cast %44 : vector<8xf32> to vector<8x1xf32>
    %46 = arith.mulf %43, %43 : vector<8x512xf32>
    %cst_13 = arith.constant dense<0.000000e+00> : vector<8xf32>
    %47 = vector.multi_reduction <add>, %46, %cst_13 [1] : vector<8x512xf32> to vector<8xf32>
    %48 = vector.shape_cast %47 : vector<8xf32> to vector<8x1xf32>
    %cst_14 = arith.constant 0.001953125 : f32
    %49 = vector.broadcast %cst_14 : f32 to vector<8x1xf32>
    %50 = arith.mulf %45, %49 : vector<8x1xf32>
    %cst_15 = arith.constant 0.001953125 : f32
    %51 = vector.broadcast %cst_15 : f32 to vector<8x1xf32>
    %52 = arith.mulf %48, %51 : vector<8x1xf32>
    %53 = arith.mulf %50, %50 : vector<8x1xf32>
    %54 = arith.subf %52, %53 : vector<8x1xf32>
    %cst_16 = arith.constant 0.000000e+00 : f32
    %55 = vector.broadcast %cst_16 : f32 to vector<8x1xf32>
    %56 = arith.maximumf %54, %55 : vector<8x1xf32>
    %c0_17 = arith.constant 0 : index
    %c0_18 = arith.constant 0 : index
    %57 = vector.load %arg2[%c0_17, %c0_18] : memref<8x17xf32, #tpu.memory_space<vmem>>, vector<8x1xf32>
    %cst_19 = arith.constant 9.99999974E-6 : f32
    %58 = vector.broadcast %cst_19 : f32 to vector<8x1xf32>
    %59 = arith.addf %56, %58 : vector<8x1xf32>
    %60 = math.rsqrt %59 : vector<8x1xf32>
    %61 = arith.mulf %57, %60 : vector<8x1xf32>
    %c0_20 = arith.constant 0 : index
    %c0_21 = arith.constant 0 : index
    %62 = vector.load %arg3[%c0_20, %c0_21] : memref<8x17xf32, #tpu.memory_space<vmem>>, vector<8x1xf32>
    %63 = arith.mulf %50, %61 : vector<8x1xf32>
    %64 = arith.subf %62, %63 : vector<8x1xf32>
    %65 = vector.broadcast %61 : vector<8x1xf32> to vector<8x512xf32>
    %66 = arith.mulf %43, %65 : vector<8x512xf32>
    %67 = vector.broadcast %64 : vector<8x1xf32> to vector<8x512xf32>
    %68 = arith.addf %66, %67 : vector<8x512xf32>
    %cst_22 = arith.constant 0.000000e+00 : f32
    %69 = vector.broadcast %cst_22 : f32 to vector<8x512xf32>
    %70 = arith.cmpf oge, %68, %69 : vector<8x512xf32>
    %cst_23 = arith.constant 0.00999999977 : f32
    %71 = vector.broadcast %cst_23 : f32 to vector<8x512xf32>
    %72 = arith.mulf %71, %68 : vector<8x512xf32>
    %73 = arith.select %70, %68, %72 : vector<8x512xi1>, vector<8x512xf32>
    %74 = arith.truncf %73 : vector<8x512xf32> to vector<8x512xbf16>
    %c0_24 = arith.constant 0 : index
    %c0_25 = arith.constant 0 : index
    %75 = vector.load %arg24[%c0_24, %c0_25] : memref<136x512xbf16, #tpu.memory_space<vmem>>, vector<8x512xbf16>
    tpu.vector_store %arg24[%c0_24, %c0_25], %74 {strides = array<i32>} : memref<136x512xbf16, #tpu.memory_space<vmem>>, vector<8x512xbf16>,
    %c0_26 = arith.constant 0 : index
    %c0_27 = arith.constant 0 : index
    %76 = vector.load %arg24[%c0_26, %c0_27] : memref<136x512xbf16, #tpu.memory_space<vmem>>, vector<8x512xbf16>
    %c0_28 = arith.constant 0 : index
    %c0_29 = arith.constant 0 : index
    %77 = vector.load %arg6[%c0_28, %c0_29] : memref<72x8xbf16, #tpu.memory_space<vmem>>, vector<72x8xbf16>
    %cst_30 = arith.constant dense<0.000000e+00> : vector<72x512xf32>
    %78 = tpu.matmul %77, %76, %cst_30 {dimension_numbers = #tpu.dot_dimension_numbers<[1], [0], [0], [1], [0, 0, 1, 1], [], []>} : vector<72x8xbf16>, vector<8x512xbf16>, vector<72x512xf32> -> vector<72x512xf32>
    %79 = vector.extract_strided_slice %78 {offsets = [0, 0], sizes = [8, 512], strides = [1, 1]} : vector<72x512xf32> to vector<8x512xf32>
    %c17_i32_31 = arith.constant 17 : i32
    %80 = tpu.dynamic_rotate %79 by %c17_i32_31 dim 1 : vector<8x512xf32>, i32 -> vector<8x512xf32>
    %c0_32 = arith.constant 0 : index
    %c0_33 = arith.constant 0 : index
    %81 = vector.load %arg1[%c0_32, %c0_33] : memref<256x512xf32, #tpu.memory_space<vmem>>, vector<8x512xf32>
    %82 = arith.mulf %80, %81 : vector<8x512xf32>
    %83 = vector.extract_strided_slice %78 {offsets = [8, 0], sizes = [8, 512], strides = [1, 1]} : vector<72x512xf32> to vector<8x512xf32>
    %c16_i32_34 = arith.constant 16 : i32
    %84 = tpu.dynamic_rotate %83 by %c16_i32_34 dim 1 : vector<8x512xf32>, i32 -> vector<8x512xf32>
    %c8_35 = arith.constant 8 : index
    %c0_36 = arith.constant 0 : index
    %85 = vector.load %arg1[%c8_35, %c0_36] : memref<256x512xf32, #tpu.memory_space<vmem>>, vector<8x512xf32>
    %86 = arith.mulf %84, %85 : vector<8x512xf32>
    %87 = vector.extract_strided_slice %78 {offsets = [16, 0], sizes = [8, 512], strides = [1, 1]} : vector<72x512xf32> to vector<8x512xf32>
    %c15_i32_37 = arith.constant 15 : i32
    %88 = tpu.dynamic_rotate %87 by %c15_i32_37 dim 1 : vector<8x512xf32>, i32 -> vector<8x512xf32>
    %c16_38 = arith.constant 16 : index
    %c0_39 = arith.constant 0 : index
    %89 = vector.load %arg1[%c16_38, %c0_39] : memref<256x512xf32, #tpu.memory_space<vmem>>, vector<8x512xf32>
    %90 = arith.mulf %88, %89 : vector<8x512xf32>
    %91 = vector.extract_strided_slice %78 {offsets = [24, 0], sizes = [8, 512], strides = [1, 1]} : vector<72x512xf32> to vector<8x512xf32>
    %c1_i32_40 = arith.constant 1 : i32
    %92 = tpu.dynamic_rotate %91 by %c1_i32_40 dim 1 : vector<8x512xf32>, i32 -> vector<8x512xf32>
    %c24_41 = arith.constant 24 : index
    %c0_42 = arith.constant 0 : index
    %93 = vector.load %arg1[%c24_41, %c0_42] : memref<256x512xf32, #tpu.memory_space<vmem>>, vector<8x512xf32>
    %94 = arith.mulf %92, %93 : vector<8x512xf32>
    %95 = vector.extract_strided_slice %78 {offsets = [32, 0], sizes = [8, 512], strides = [1, 1]} : vector<72x512xf32> to vector<8x512xf32>
    %96 = vector.extract_strided_slice %78 {offsets = [40, 0], sizes = [8, 512], strides = [1, 1]} : vector<72x512xf32> to vector<8x512xf32>
    %c511_i32_43 = arith.constant 511 : i32
    %97 = tpu.dynamic_rotate %96 by %c511_i32_43 dim 1 : vector<8x512xf32>, i32 -> vector<8x512xf32>
    %c32_44 = arith.constant 32 : index
    %c0_45 = arith.constant 0 : index
    %98 = vector.load %arg1[%c32_44, %c0_45] : memref<256x512xf32, #tpu.memory_space<vmem>>, vector<8x512xf32>
    %99 = arith.mulf %97, %98 : vector<8x512xf32>
    %100 = vector.extract_strided_slice %78 {offsets = [48, 0], sizes = [8, 512], strides = [1, 1]} : vector<72x512xf32> to vector<8x512xf32>
    %c497_i32_46 = arith.constant 497 : i32
    %101 = tpu.dynamic_rotate %100 by %c497_i32_46 dim 1 : vector<8x512xf32>, i32 -> vector<8x512xf32>
    %c40_47 = arith.constant 40 : index
    %c0_48 = arith.constant 0 : index
    %102 = vector.load %arg1[%c40_47, %c0_48] : memref<256x512xf32, #tpu.memory_space<vmem>>, vector<8x512xf32>
    %103 = arith.mulf %101, %102 : vector<8x512xf32>
    %104 = vector.extract_strided_slice %78 {offsets = [56, 0], sizes = [8, 512], strides = [1, 1]} : vector<72x512xf32> to vector<8x512xf32>
    %c496_i32_49 = arith.constant 496 : i32
    %105 = tpu.dynamic_rotate %104 by %c496_i32_49 dim 1 : vector<8x512xf32>, i32 -> vector<8x512xf32>
    %c48_50 = arith.constant 48 : index
    %c0_51 = arith.constant 0 : index
    %106 = vector.load %arg1[%c48_50, %c0_51] : memref<256x512xf32, #tpu.memory_space<vmem>>, vector<8x512xf32>
    %107 = arith.mulf %105, %106 : vector<8x512xf32>
    %108 = vector.extract_strided_slice %78 {offsets = [64, 0], sizes = [8, 512], strides = [1, 1]} : vector<72x512xf32> to vector<8x512xf32>
    %c495_i32_52 = arith.constant 495 : i32
    %109 = tpu.dynamic_rotate %108 by %c495_i32_52 dim 1 : vector<8x512xf32>, i32 -> vector<8x512xf32>
    %c56_53 = arith.constant 56 : index
    %c0_54 = arith.constant 0 : index
    %110 = vector.load %arg1[%c56_53, %c0_54] : memref<256x512xf32, #tpu.memory_space<vmem>>, vector<8x512xf32>
    %111 = arith.mulf %109, %110 : vector<8x512xf32>
    %112 = arith.addf %82, %86 : vector<8x512xf32>
    %113 = arith.addf %90, %94 : vector<8x512xf32>
    %114 = arith.addf %95, %99 : vector<8x512xf32>
    %115 = arith.addf %103, %107 : vector<8x512xf32>
    %116 = arith.addf %112, %113 : vector<8x512xf32>
    %117 = arith.addf %114, %115 : vector<8x512xf32>
    %118 = arith.addf %116, %117 : vector<8x512xf32>
    %119 = arith.addf %118, %111 : vector<8x512xf32>
    %cst_55 = arith.constant dense<0.000000e+00> : vector<8xf32>
    %120 = vector.multi_reduction <add>, %119, %cst_55 [1] : vector<8x512xf32> to vector<8xf32>
    %121 = vector.shape_cast %120 : vector<8xf32> to vector<8x1xf32>
    %122 = arith.mulf %119, %119 : vector<8x512xf32>
    %cst_56 = arith.constant dense<0.000000e+00> : vector<8xf32>
    %123 = vector.multi_reduction <add>, %122, %cst_56 [1] : vector<8x512xf32> to vector<8xf32>
    %124 = vector.shape_cast %123 : vector<8xf32> to vector<8x1xf32>
    %cst_57 = arith.constant 0.001953125 : f32
    %125 = vector.broadcast %cst_57 : f32 to vector<8x1xf32>
    %126 = arith.mulf %121, %125 : vector<8x1xf32>
    %cst_58 = arith.constant 0.001953125 : f32
    %127 = vector.broadcast %cst_58 : f32 to vector<8x1xf32>
    %128 = arith.mulf %124, %127 : vector<8x1xf32>
    %129 = arith.mulf %126, %126 : vector<8x1xf32>
    %130 = arith.subf %128, %129 : vector<8x1xf32>
    %cst_59 = arith.constant 0.000000e+00 : f32
    %131 = vector.broadcast %cst_59 : f32 to vector<8x1xf32>
    %132 = arith.maximumf %130, %131 : vector<8x1xf32>
    %c0_60 = arith.constant 0 : index
    %c1 = arith.constant 1 : index
    %133 = vector.load %arg2[%c0_60, %c1] : memref<8x17xf32, #tpu.memory_space<vmem>>, vector<8x1xf32>
    %cst_61 = arith.constant 9.99999974E-6 : f32
    %134 = vector.broadcast %cst_61 : f32 to vector<8x1xf32>
    %135 = arith.addf %132, %134 : vector<8x1xf32>
    %136 = math.rsqrt %135 : vector<8x1xf32>
    %137 = arith.mulf %133, %136 : vector<8x1xf32>
    %c0_62 = arith.constant 0 : index
    %c1_63 = arith.constant 1 : index
    %138 = vector.load %arg3[%c0_62, %c1_63] : memref<8x17xf32, #tpu.memory_space<vmem>>, vector<8x1xf32>
    %139 = arith.mulf %126, %137 : vector<8x1xf32>
    %140 = arith.subf %138, %139 : vector<8x1xf32>
    %141 = vector.broadcast %137 : vector<8x1xf32> to vector<8x512xf32>
    %142 = arith.mulf %119, %141 : vector<8x512xf32>
    %143 = vector.broadcast %140 : vector<8x1xf32> to vector<8x512xf32>
    %144 = arith.addf %142, %143 : vector<8x512xf32>
    %cst_64 = arith.constant 0.000000e+00 : f32
    %145 = vector.broadcast %cst_64 : f32 to vector<8x512xf32>
    %146 = arith.cmpf oge, %144, %145 : vector<8x512xf32>
    %cst_65 = arith.constant 0.00999999977 : f32
    %147 = vector.broadcast %cst_65 : f32 to vector<8x512xf32>
    %148 = arith.mulf %147, %144 : vector<8x512xf32>
    %149 = arith.select %146, %144, %148 : vector<8x512xi1>, vector<8x512xf32>
    %150 = arith.truncf %149 : vector<8x512xf32> to vector<8x512xbf16>
    %c8_66 = arith.constant 8 : index
    %c0_67 = arith.constant 0 : index
    %151 = vector.load %arg24[%c8_66, %c0_67] : memref<136x512xbf16, #tpu.memory_space<vmem>>, vector<8x512xbf16>
    tpu.vector_store %arg24[%c8_66, %c0_67], %150 {strides = array<i32>} : memref<136x512xbf16, #tpu.memory_space<vmem>>, vector<8x512xbf16>,
    %c0_68 = arith.constant 0 : index
    %c0_69 = arith.constant 0 : index
    %152 = vector.load %arg24[%c0_68, %c0_69] : memref<136x512xbf16, #tpu.memory_space<vmem>>, vector<16x512xbf16>
    %c0_70 = arith.constant 0 : index
    %c0_71 = arith.constant 0 : index
    %153 = vector.load %arg7[%c0_70, %c0_71] : memref<72x16xbf16, #tpu.memory_space<vmem>>, vector<72x16xbf16>
    %cst_72 = arith.constant dense<0.000000e+00> : vector<72x512xf32>
    %154 = tpu.matmul %153, %152, %cst_72 {dimension_numbers = #tpu.dot_dimension_numbers<[1], [0], [0], [1], [0, 0, 1, 1], [], []>} : vector<72x16xbf16>, vector<16x512xbf16>, vector<72x512xf32> -> vector<72x512xf32>
    %155 = vector.extract_strided_slice %154 {offsets = [0, 0], sizes = [8, 512], strides = [1, 1]} : vector<72x512xf32> to vector<8x512xf32>
    %c34_i32 = arith.constant 34 : i32
    %156 = tpu.dynamic_rotate %155 by %c34_i32 dim 1 : vector<8x512xf32>, i32 -> vector<8x512xf32>
    %c64 = arith.constant 64 : index
    %c0_73 = arith.constant 0 : index
    %157 = vector.load %arg1[%c64, %c0_73] : memref<256x512xf32, #tpu.memory_space<vmem>>, vector<8x512xf32>
    %158 = arith.mulf %156, %157 : vector<8x512xf32>
    %159 = vector.extract_strided_slice %154 {offsets = [8, 0], sizes = [8, 512], strides = [1, 1]} : vector<72x512xf32> to vector<8x512xf32>
    %c32_i32 = arith.constant 32 : i32
    %160 = tpu.dynamic_rotate %159 by %c32_i32 dim 1 : vector<8x512xf32>, i32 -> vector<8x512xf32>
    %c72 = arith.constant 72 : index
    %c0_74 = arith.constant 0 : index
    %161 = vector.load %arg1[%c72, %c0_74] : memref<256x512xf32, #tpu.memory_space<vmem>>, vector<8x512xf32>
    %162 = arith.mulf %160, %161 : vector<8x512xf32>
    %163 = vector.extract_strided_slice %154 {offsets = [16, 0], sizes = [8, 512], strides = [1, 1]} : vector<72x512xf32> to vector<8x512xf32>
    %c30_i32 = arith.constant 30 : i32
    %164 = tpu.dynamic_rotate %163 by %c30_i32 dim 1 : vector<8x512xf32>, i32 -> vector<8x512xf32>
    %c80 = arith.constant 80 : index
    %c0_75 = arith.constant 0 : index
    %165 = vector.load %arg1[%c80, %c0_75] : memref<256x512xf32, #tpu.memory_space<vmem>>, vector<8x512xf32>
    %166 = arith.mulf %164, %165 : vector<8x512xf32>
    %167 = vector.extract_strided_slice %154 {offsets = [24, 0], sizes = [8, 512], strides = [1, 1]} : vector<72x512xf32> to vector<8x512xf32>
    %c2_i32 = arith.constant 2 : i32
    %168 = tpu.dynamic_rotate %167 by %c2_i32 dim 1 : vector<8x512xf32>, i32 -> vector<8x512xf32>
    %c88 = arith.constant 88 : index
    %c0_76 = arith.constant 0 : index
    %169 = vector.load %arg1[%c88, %c0_76] : memref<256x512xf32, #tpu.memory_space<vmem>>, vector<8x512xf32>
    %170 = arith.mulf %168, %169 : vector<8x512xf32>
    %171 = vector.extract_strided_slice %154 {offsets = [32, 0], sizes = [8, 512], strides = [1, 1]} : vector<72x512xf32> to vector<8x512xf32>
    %172 = vector.extract_strided_slice %154 {offsets = [40, 0], sizes = [8, 512], strides = [1, 1]} : vector<72x512xf32> to vector<8x512xf32>
    %c510_i32 = arith.constant 510 : i32
    %173 = tpu.dynamic_rotate %172 by %c510_i32 dim 1 : vector<8x512xf32>, i32 -> vector<8x512xf32>
    %c96 = arith.constant 96 : index
    %c0_77 = arith.constant 0 : index
    %174 = vector.load %arg1[%c96, %c0_77] : memref<256x512xf32, #tpu.memory_space<vmem>>, vector<8x512xf32>
    %175 = arith.mulf %173, %174 : vector<8x512xf32>
    %176 = vector.extract_strided_slice %154 {offsets = [48, 0], sizes = [8, 512], strides = [1, 1]} : vector<72x512xf32> to vector<8x512xf32>
    %c482_i32 = arith.constant 482 : i32
    %177 = tpu.dynamic_rotate %176 by %c482_i32 dim 1 : vector<8x512xf32>, i32 -> vector<8x512xf32>
    %c104 = arith.constant 104 : index
    %c0_78 = arith.constant 0 : index
    %178 = vector.load %arg1[%c104, %c0_78] : memref<256x512xf32, #tpu.memory_space<vmem>>, vector<8x512xf32>
    %179 = arith.mulf %177, %178 : vector<8x512xf32>
    %180 = vector.extract_strided_slice %154 {offsets = [56, 0], sizes = [8, 512], strides = [1, 1]} : vector<72x512xf32> to vector<8x512xf32>
    %c480_i32 = arith.constant 480 : i32
    %181 = tpu.dynamic_rotate %180 by %c480_i32 dim 1 : vector<8x512xf32>, i32 -> vector<8x512xf32>
    %c112 = arith.constant 112 : index
    %c0_79 = arith.constant 0 : index
    %182 = vector.load %arg1[%c112, %c0_79] : memref<256x512xf32, #tpu.memory_space<vmem>>, vector<8x512xf32>
    %183 = arith.mulf %181, %182 : vector<8x512xf32>
    %184 = vector.extract_strided_slice %154 {offsets = [64, 0], sizes = [8, 512], strides = [1, 1]} : vector<72x512xf32> to vector<8x512xf32>
    %c478_i32 = arith.constant 478 : i32
    %185 = tpu.dynamic_rotate %184 by %c478_i32 dim 1 : vector<8x512xf32>, i32 -> vector<8x512xf32>
    %c120 = arith.constant 120 : index
    %c0_80 = arith.constant 0 : index
    %186 = vector.load %arg1[%c120, %c0_80] : memref<256x512xf32, #tpu.memory_space<vmem>>, vector<8x512xf32>
    %187 = arith.mulf %185, %186 : vector<8x512xf32>
    %188 = arith.addf %158, %162 : vector<8x512xf32>
    %189 = arith.addf %166, %170 : vector<8x512xf32>
    %190 = arith.addf %171, %175 : vector<8x512xf32>
    %191 = arith.addf %179, %183 : vector<8x512xf32>
    %192 = arith.addf %188, %189 : vector<8x512xf32>
    %193 = arith.addf %190, %191 : vector<8x512xf32>
    %194 = arith.addf %192, %193 : vector<8x512xf32>
    %195 = arith.addf %194, %187 : vector<8x512xf32>
    %cst_81 = arith.constant dense<0.000000e+00> : vector<8xf32>
    %196 = vector.multi_reduction <add>, %195, %cst_81 [1] : vector<8x512xf32> to vector<8xf32>
    %197 = vector.shape_cast %196 : vector<8xf32> to vector<8x1xf32>
    %198 = arith.mulf %195, %195 : vector<8x512xf32>
    %cst_82 = arith.constant dense<0.000000e+00> : vector<8xf32>
    %199 = vector.multi_reduction <add>, %198, %cst_82 [1] : vector<8x512xf32> to vector<8xf32>
    %200 = vector.shape_cast %199 : vector<8xf32> to vector<8x1xf32>
    %cst_83 = arith.constant 0.001953125 : f32
    %201 = vector.broadcast %cst_83 : f32 to vector<8x1xf32>
    %202 = arith.mulf %197, %201 : vector<8x1xf32>
    %cst_84 = arith.constant 0.001953125 : f32
    %203 = vector.broadcast %cst_84 : f32 to vector<8x1xf32>
    %204 = arith.mulf %200, %203 : vector<8x1xf32>
    %205 = arith.mulf %202, %202 : vector<8x1xf32>
    %206 = arith.subf %204, %205 : vector<8x1xf32>
    %cst_85 = arith.constant 0.000000e+00 : f32
    %207 = vector.broadcast %cst_85 : f32 to vector<8x1xf32>
    %208 = arith.maximumf %206, %207 : vector<8x1xf32>
    %c0_86 = arith.constant 0 : index
    %c2 = arith.constant 2 : index
    %209 = vector.load %arg2[%c0_86, %c2] : memref<8x17xf32, #tpu.memory_space<vmem>>, vector<8x1xf32>
    %cst_87 = arith.constant 9.99999974E-6 : f32
    %210 = vector.broadcast %cst_87 : f32 to vector<8x1xf32>
    %211 = arith.addf %208, %210 : vector<8x1xf32>
    %212 = math.rsqrt %211 : vector<8x1xf32>
    %213 = arith.mulf %209, %212 : vector<8x1xf32>
    %c0_88 = arith.constant 0 : index
    %c2_89 = arith.constant 2 : index
    %214 = vector.load %arg3[%c0_88, %c2_89] : memref<8x17xf32, #tpu.memory_space<vmem>>, vector<8x1xf32>
    %215 = arith.mulf %202, %213 : vector<8x1xf32>
    %216 = arith.subf %214, %215 : vector<8x1xf32>
    %217 = vector.broadcast %213 : vector<8x1xf32> to vector<8x512xf32>
    %218 = arith.mulf %195, %217 : vector<8x512xf32>
    %219 = vector.broadcast %216 : vector<8x1xf32> to vector<8x512xf32>
    %220 = arith.addf %218, %219 : vector<8x512xf32>
    %cst_90 = arith.constant 0.000000e+00 : f32
    %221 = vector.broadcast %cst_90 : f32 to vector<8x512xf32>
    %222 = arith.cmpf oge, %220, %221 : vector<8x512xf32>
    %cst_91 = arith.constant 0.00999999977 : f32
    %223 = vector.broadcast %cst_91 : f32 to vector<8x512xf32>
    %224 = arith.mulf %223, %220 : vector<8x512xf32>
    %225 = arith.select %222, %220, %224 : vector<8x512xi1>, vector<8x512xf32>
    %226 = arith.truncf %225 : vector<8x512xf32> to vector<8x512xbf16>
    %c16_92 = arith.constant 16 : index
    %c0_93 = arith.constant 0 : index
    %227 = vector.load %arg24[%c16_92, %c0_93] : memref<136x512xbf16, #tpu.memory_space<vmem>>, vector<8x512xbf16>
    tpu.vector_store %arg24[%c16_92, %c0_93], %226 {strides = array<i32>} : memref<136x512xbf16, #tpu.memory_space<vmem>>, vector<8x512xbf16>,
    %c0_94 = arith.constant 0 : index
    %c0_95 = arith.constant 0 : index
    %228 = vector.load %arg24[%c0_94, %c0_95] : memref<136x512xbf16, #tpu.memory_space<vmem>>, vector<24x512xbf16>
    %c0_96 = arith.constant 0 : index
    %c0_97 = arith.constant 0 : index
    %229 = vector.load %arg8[%c0_96, %c0_97] : memref<72x24xbf16, #tpu.memory_space<vmem>>, vector<72x24xbf16>
    %cst_98 = arith.constant dense<0.000000e+00> : vector<72x512xf32>
    %230 = tpu.matmul %229, %228, %cst_98 {dimension_numbers = #tpu.dot_dimension_numbers<[1], [0], [0], [1], [0, 0, 1, 1], [], []>} : vector<72x24xbf16>, vector<24x512xbf16>, vector<72x512xf32> -> vector<72x512xf32>
    %231 = vector.extract_strided_slice %230 {offsets = [0, 0], sizes = [8, 512], strides = [1, 1]} : vector<72x512xf32> to vector<8x512xf32>
    %c68_i32 = arith.constant 68 : i32
    %232 = tpu.dynamic_rotate %231 by %c68_i32 dim 1 : vector<8x512xf32>, i32 -> vector<8x512xf32>
    %c128 = arith.constant 128 : index
    %c0_99 = arith.constant 0 : index
    %233 = vector.load %arg1[%c128, %c0_99] : memref<256x512xf32, #tpu.memory_space<vmem>>, vector<8x512xf32>
    %234 = arith.mulf %232, %233 : vector<8x512xf32>
    %235 = vector.extract_strided_slice %230 {offsets = [8, 0], sizes = [8, 512], strides = [1, 1]} : vector<72x512xf32> to vector<8x512xf32>
    %c64_i32 = arith.constant 64 : i32
    %236 = tpu.dynamic_rotate %235 by %c64_i32 dim 1 : vector<8x512xf32>, i32 -> vector<8x512xf32>
    %c136 = arith.constant 136 : index
    %c0_100 = arith.constant 0 : index
    %237 = vector.load %arg1[%c136, %c0_100] : memref<256x512xf32, #tpu.memory_space<vmem>>, vector<8x512xf32>
    %238 = arith.mulf %236, %237 : vector<8x512xf32>
    %239 = vector.extract_strided_slice %230 {offsets = [16, 0], sizes = [8, 512], strides = [1, 1]} : vector<72x512xf32> to vector<8x512xf32>
    %c60_i32 = arith.constant 60 : i32
    %240 = tpu.dynamic_rotate %239 by %c60_i32 dim 1 : vector<8x512xf32>, i32 -> vector<8x512xf32>
    %c144 = arith.constant 144 : index
    %c0_101 = arith.constant 0 : index
    %241 = vector.load %arg1[%c144, %c0_101] : memref<256x512xf32, #tpu.memory_space<vmem>>, vector<8x512xf32>
    %242 = arith.mulf %240, %241 : vector<8x512xf32>
    %243 = vector.extract_strided_slice %230 {offsets = [24, 0], sizes = [8, 512], strides = [1, 1]} : vector<72x512xf32> to vector<8x512xf32>
    %c4_i32 = arith.constant 4 : i32
    %244 = tpu.dynamic_rotate %243 by %c4_i32 dim 1 : vector<8x512xf32>, i32 -> vector<8x512xf32>
    %c152 = arith.constant 152 : index
    %c0_102 = arith.constant 0 : index
    %245 = vector.load %arg1[%c152, %c0_102] : memref<256x512xf32, #tpu.memory_space<vmem>>, vector<8x512xf32>
    %246 = arith.mulf %244, %245 : vector<8x512xf32>
    %247 = vector.extract_strided_slice %230 {offsets = [32, 0], sizes = [8, 512], strides = [1, 1]} : vector<72x512xf32> to vector<8x512xf32>
    %248 = vector.extract_strided_slice %230 {offsets = [40, 0], sizes = [8, 512], strides = [1, 1]} : vector<72x512xf32> to vector<8x512xf32>
    %c508_i32 = arith.constant 508 : i32
    %249 = tpu.dynamic_rotate %248 by %c508_i32 dim 1 : vector<8x512xf32>, i32 -> vector<8x512xf32>
    %c160 = arith.constant 160 : index
    %c0_103 = arith.constant 0 : index
    %250 = vector.load %arg1[%c160, %c0_103] : memref<256x512xf32, #tpu.memory_space<vmem>>, vector<8x512xf32>
    %251 = arith.mulf %249, %250 : vector<8x512xf32>
    %252 = vector.extract_strided_slice %230 {offsets = [48, 0], sizes = [8, 512], strides = [1, 1]} : vector<72x512xf32> to vector<8x512xf32>
    %c452_i32 = arith.constant 452 : i32
    %253 = tpu.dynamic_rotate %252 by %c452_i32 dim 1 : vector<8x512xf32>, i32 -> vector<8x512xf32>
    %c168 = arith.constant 168 : index
    %c0_104 = arith.constant 0 : index
    %254 = vector.load %arg1[%c168, %c0_104] : memref<256x512xf32, #tpu.memory_space<vmem>>, vector<8x512xf32>
    %255 = arith.mulf %253, %254 : vector<8x512xf32>
    %256 = vector.extract_strided_slice %230 {offsets = [56, 0], sizes = [8, 512], strides = [1, 1]} : vector<72x512xf32> to vector<8x512xf32>
    %c448_i32 = arith.constant 448 : i32
    %257 = tpu.dynamic_rotate %256 by %c448_i32 dim 1 : vector<8x512xf32>, i32 -> vector<8x512xf32>
    %c176 = arith.constant 176 : index
    %c0_105 = arith.constant 0 : index
    %258 = vector.load %arg1[%c176, %c0_105] : memref<256x512xf32, #tpu.memory_space<vmem>>, vector<8x512xf32>
    %259 = arith.mulf %257, %258 : vector<8x512xf32>
    %260 = vector.extract_strided_slice %230 {offsets = [64, 0], sizes = [8, 512], strides = [1, 1]} : vector<72x512xf32> to vector<8x512xf32>
    %c444_i32 = arith.constant 444 : i32
    %261 = tpu.dynamic_rotate %260 by %c444_i32 dim 1 : vector<8x512xf32>, i32 -> vector<8x512xf32>
    %c184 = arith.constant 184 : index
    %c0_106 = arith.constant 0 : index
    %262 = vector.load %arg1[%c184, %c0_106] : memref<256x512xf32, #tpu.memory_space<vmem>>, vector<8x512xf32>
    %263 = arith.mulf %261, %262 : vector<8x512xf32>
    %264 = arith.addf %234, %238 : vector<8x512xf32>
    %265 = arith.addf %242, %246 : vector<8x512xf32>
    %266 = arith.addf %247, %251 : vector<8x512xf32>
    %267 = arith.addf %255, %259 : vector<8x512xf32>
    %268 = arith.addf %264, %265 : vector<8x512xf32>
    %269 = arith.addf %266, %267 : vector<8x512xf32>
    %270 = arith.addf %268, %269 : vector<8x512xf32>
    %271 = arith.addf %270, %263 : vector<8x512xf32>
    %cst_107 = arith.constant dense<0.000000e+00> : vector<8xf32>
    %272 = vector.multi_reduction <add>, %271, %cst_107 [1] : vector<8x512xf32> to vector<8xf32>
    %273 = vector.shape_cast %272 : vector<8xf32> to vector<8x1xf32>
    %274 = arith.mulf %271, %271 : vector<8x512xf32>
    %cst_108 = arith.constant dense<0.000000e+00> : vector<8xf32>
    %275 = vector.multi_reduction <add>, %274, %cst_108 [1] : vector<8x512xf32> to vector<8xf32>
    %276 = vector.shape_cast %275 : vector<8xf32> to vector<8x1xf32>
    %cst_109 = arith.constant 0.001953125 : f32
    %277 = vector.broadcast %cst_109 : f32 to vector<8x1xf32>
    %278 = arith.mulf %273, %277 : vector<8x1xf32>
    %cst_110 = arith.constant 0.001953125 : f32
    %279 = vector.broadcast %cst_110 : f32 to vector<8x1xf32>
    %280 = arith.mulf %276, %279 : vector<8x1xf32>
    %281 = arith.mulf %278, %278 : vector<8x1xf32>
    %282 = arith.subf %280, %281 : vector<8x1xf32>
    %cst_111 = arith.constant 0.000000e+00 : f32
    %283 = vector.broadcast %cst_111 : f32 to vector<8x1xf32>
    %284 = arith.maximumf %282, %283 : vector<8x1xf32>
    %c0_112 = arith.constant 0 : index
    %c3 = arith.constant 3 : index
    %285 = vector.load %arg2[%c0_112, %c3] : memref<8x17xf32, #tpu.memory_space<vmem>>, vector<8x1xf32>
    %cst_113 = arith.constant 9.99999974E-6 : f32
    %286 = vector.broadcast %cst_113 : f32 to vector<8x1xf32>
    %287 = arith.addf %284, %286 : vector<8x1xf32>
    %288 = math.rsqrt %287 : vector<8x1xf32>
    %289 = arith.mulf %285, %288 : vector<8x1xf32>
    %c0_114 = arith.constant 0 : index
    %c3_115 = arith.constant 3 : index
    %290 = vector.load %arg3[%c0_114, %c3_115] : memref<8x17xf32, #tpu.memory_space<vmem>>, vector<8x1xf32>
    %291 = arith.mulf %278, %289 : vector<8x1xf32>
    %292 = arith.subf %290, %291 : vector<8x1xf32>
    %293 = vector.broadcast %289 : vector<8x1xf32> to vector<8x512xf32>
    %294 = arith.mulf %271, %293 : vector<8x512xf32>
    %295 = vector.broadcast %292 : vector<8x1xf32> to vector<8x512xf32>
    %296 = arith.addf %294, %295 : vector<8x512xf32>
    %cst_116 = arith.constant 0.000000e+00 : f32
    %297 = vector.broadcast %cst_116 : f32 to vector<8x512xf32>
    %298 = arith.cmpf oge, %296, %297 : vector<8x512xf32>
    %cst_117 = arith.constant 0.00999999977 : f32
    %299 = vector.broadcast %cst_117 : f32 to vector<8x512xf32>
    %300 = arith.mulf %299, %296 : vector<8x512xf32>
    %301 = arith.select %298, %296, %300 : vector<8x512xi1>, vector<8x512xf32>
    %302 = arith.truncf %301 : vector<8x512xf32> to vector<8x512xbf16>
    %c24_118 = arith.constant 24 : index
    %c0_119 = arith.constant 0 : index
    %303 = vector.load %arg24[%c24_118, %c0_119] : memref<136x512xbf16, #tpu.memory_space<vmem>>, vector<8x512xbf16>
    tpu.vector_store %arg24[%c24_118, %c0_119], %302 {strides = array<i32>} : memref<136x512xbf16, #tpu.memory_space<vmem>>, vector<8x512xbf16>,
    %c0_120 = arith.constant 0 : index
    %c0_121 = arith.constant 0 : index
    %304 = vector.load %arg24[%c0_120, %c0_121] : memref<136x512xbf16, #tpu.memory_space<vmem>>, vector<32x512xbf16>
    %c0_122 = arith.constant 0 : index
    %c0_123 = arith.constant 0 : index
    %305 = vector.load %arg9[%c0_122, %c0_123] : memref<72x32xbf16, #tpu.memory_space<vmem>>, vector<72x32xbf16>
    %cst_124 = arith.constant dense<0.000000e+00> : vector<72x512xf32>
    %306 = tpu.matmul %305, %304, %cst_124 {dimension_numbers = #tpu.dot_dimension_numbers<[1], [0], [0], [1], [0, 0, 1, 1], [], []>} : vector<72x32xbf16>, vector<32x512xbf16>, vector<72x512xf32> -> vector<72x512xf32>
    %307 = vector.extract_strided_slice %306 {offsets = [0, 0], sizes = [8, 512], strides = [1, 1]} : vector<72x512xf32> to vector<8x512xf32>
    %c136_i32 = arith.constant 136 : i32
    %308 = tpu.dynamic_rotate %307 by %c136_i32 dim 1 : vector<8x512xf32>, i32 -> vector<8x512xf32>
    %c192 = arith.constant 192 : index
    %c0_125 = arith.constant 0 : index
    %309 = vector.load %arg1[%c192, %c0_125] : memref<256x512xf32, #tpu.memory_space<vmem>>, vector<8x512xf32>
    %310 = arith.mulf %308, %309 : vector<8x512xf32>
    %311 = vector.extract_strided_slice %306 {offsets = [8, 0], sizes = [8, 512], strides = [1, 1]} : vector<72x512xf32> to vector<8x512xf32>
    %c128_i32 = arith.constant 128 : i32
    %312 = tpu.dynamic_rotate %311 by %c128_i32 dim 1 : vector<8x512xf32>, i32 -> vector<8x512xf32>
    %c200 = arith.constant 200 : index
    %c0_126 = arith.constant 0 : index
    %313 = vector.load %arg1[%c200, %c0_126] : memref<256x512xf32, #tpu.memory_space<vmem>>, vector<8x512xf32>
    %314 = arith.mulf %312, %313 : vector<8x512xf32>
    %315 = vector.extract_strided_slice %306 {offsets = [16, 0], sizes = [8, 512], strides = [1, 1]} : vector<72x512xf32> to vector<8x512xf32>
    %c120_i32 = arith.constant 120 : i32
    %316 = tpu.dynamic_rotate %315 by %c120_i32 dim 1 : vector<8x512xf32>, i32 -> vector<8x512xf32>
    %c208 = arith.constant 208 : index
    %c0_127 = arith.constant 0 : index
    %317 = vector.load %arg1[%c208, %c0_127] : memref<256x512xf32, #tpu.memory_space<vmem>>, vector<8x512xf32>
    %318 = arith.mulf %316, %317 : vector<8x512xf32>
    %319 = vector.extract_strided_slice %306 {offsets = [24, 0], sizes = [8, 512], strides = [1, 1]} : vector<72x512xf32> to vector<8x512xf32>
    %c8_i32 = arith.constant 8 : i32
    %320 = tpu.dynamic_rotate %319 by %c8_i32 dim 1 : vector<8x512xf32>, i32 -> vector<8x512xf32>
    %c216 = arith.constant 216 : index
    %c0_128 = arith.constant 0 : index
    %321 = vector.load %arg1[%c216, %c0_128] : memref<256x512xf32, #tpu.memory_space<vmem>>, vector<8x512xf32>
    %322 = arith.mulf %320, %321 : vector<8x512xf32>
    %323 = vector.extract_strided_slice %306 {offsets = [32, 0], sizes = [8, 512], strides = [1, 1]} : vector<72x512xf32> to vector<8x512xf32>
    %324 = vector.extract_strided_slice %306 {offsets = [40, 0], sizes = [8, 512], strides = [1, 1]} : vector<72x512xf32> to vector<8x512xf32>
    %c504_i32 = arith.constant 504 : i32
    %325 = tpu.dynamic_rotate %324 by %c504_i32 dim 1 : vector<8x512xf32>, i32 -> vector<8x512xf32>
    %c224 = arith.constant 224 : index
    %c0_129 = arith.constant 0 : index
    %326 = vector.load %arg1[%c224, %c0_129] : memref<256x512xf32, #tpu.memory_space<vmem>>, vector<8x512xf32>
    %327 = arith.mulf %325, %326 : vector<8x512xf32>
    %328 = vector.extract_strided_slice %306 {offsets = [48, 0], sizes = [8, 512], strides = [1, 1]} : vector<72x512xf32> to vector<8x512xf32>
    %c392_i32 = arith.constant 392 : i32
    %329 = tpu.dynamic_rotate %328 by %c392_i32 dim 1 : vector<8x512xf32>, i32 -> vector<8x512xf32>
    %c232 = arith.constant 232 : index
    %c0_130 = arith.constant 0 : index
    %330 = vector.load %arg1[%c232, %c0_130] : memref<256x512xf32, #tpu.memory_space<vmem>>, vector<8x512xf32>
    %331 = arith.mulf %329, %330 : vector<8x512xf32>
    %332 = vector.extract_strided_slice %306 {offsets = [56, 0], sizes = [8, 512], strides = [1, 1]} : vector<72x512xf32> to vector<8x512xf32>
    %c384_i32 = arith.constant 384 : i32
    %333 = tpu.dynamic_rotate %332 by %c384_i32 dim 1 : vector<8x512xf32>, i32 -> vector<8x512xf32>
    %c240 = arith.constant 240 : index
    %c0_131 = arith.constant 0 : index
    %334 = vector.load %arg1[%c240, %c0_131] : memref<256x512xf32, #tpu.memory_space<vmem>>, vector<8x512xf32>
    %335 = arith.mulf %333, %334 : vector<8x512xf32>
    %336 = vector.extract_strided_slice %306 {offsets = [64, 0], sizes = [8, 512], strides = [1, 1]} : vector<72x512xf32> to vector<8x512xf32>
    %c376_i32 = arith.constant 376 : i32
    %337 = tpu.dynamic_rotate %336 by %c376_i32 dim 1 : vector<8x512xf32>, i32 -> vector<8x512xf32>
    %c248 = arith.constant 248 : index
    %c0_132 = arith.constant 0 : index
    %338 = vector.load %arg1[%c248, %c0_132] : memref<256x512xf32, #tpu.memory_space<vmem>>, vector<8x512xf32>
    %339 = arith.mulf %337, %338 : vector<8x512xf32>
    %340 = arith.addf %310, %314 : vector<8x512xf32>
    %341 = arith.addf %318, %322 : vector<8x512xf32>
    %342 = arith.addf %323, %327 : vector<8x512xf32>
    %343 = arith.addf %331, %335 : vector<8x512xf32>
    %344 = arith.addf %340, %341 : vector<8x512xf32>
    %345 = arith.addf %342, %343 : vector<8x512xf32>
    %346 = arith.addf %344, %345 : vector<8x512xf32>
    %347 = arith.addf %346, %339 : vector<8x512xf32>
    %cst_133 = arith.constant dense<0.000000e+00> : vector<8xf32>
    %348 = vector.multi_reduction <add>, %347, %cst_133 [1] : vector<8x512xf32> to vector<8xf32>
    %349 = vector.shape_cast %348 : vector<8xf32> to vector<8x1xf32>
    %350 = arith.mulf %347, %347 : vector<8x512xf32>
    %cst_134 = arith.constant dense<0.000000e+00> : vector<8xf32>
    %351 = vector.multi_reduction <add>, %350, %cst_134 [1] : vector<8x512xf32> to vector<8xf32>
    %352 = vector.shape_cast %351 : vector<8xf32> to vector<8x1xf32>
    %cst_135 = arith.constant 0.001953125 : f32
    %353 = vector.broadcast %cst_135 : f32 to vector<8x1xf32>
    %354 = arith.mulf %349, %353 : vector<8x1xf32>
    %cst_136 = arith.constant 0.001953125 : f32
    %355 = vector.broadcast %cst_136 : f32 to vector<8x1xf32>
    %356 = arith.mulf %352, %355 : vector<8x1xf32>
    %357 = arith.mulf %354, %354 : vector<8x1xf32>
    %358 = arith.subf %356, %357 : vector<8x1xf32>
    %cst_137 = arith.constant 0.000000e+00 : f32
    %359 = vector.broadcast %cst_137 : f32 to vector<8x1xf32>
    %360 = arith.maximumf %358, %359 : vector<8x1xf32>
    %c0_138 = arith.constant 0 : index
    %c4 = arith.constant 4 : index
    %361 = vector.load %arg2[%c0_138, %c4] : memref<8x17xf32, #tpu.memory_space<vmem>>, vector<8x1xf32>
    %cst_139 = arith.constant 9.99999974E-6 : f32
    %362 = vector.broadcast %cst_139 : f32 to vector<8x1xf32>
    %363 = arith.addf %360, %362 : vector<8x1xf32>
    %364 = math.rsqrt %363 : vector<8x1xf32>
    %365 = arith.mulf %361, %364 : vector<8x1xf32>
    %c0_140 = arith.constant 0 : index
    %c4_141 = arith.constant 4 : index
    %366 = vector.load %arg3[%c0_140, %c4_141] : memref<8x17xf32, #tpu.memory_space<vmem>>, vector<8x1xf32>
    %367 = arith.mulf %354, %365 : vector<8x1xf32>
    %368 = arith.subf %366, %367 : vector<8x1xf32>
    %369 = vector.broadcast %365 : vector<8x1xf32> to vector<8x512xf32>
    %370 = arith.mulf %347, %369 : vector<8x512xf32>
    %371 = vector.broadcast %368 : vector<8x1xf32> to vector<8x512xf32>
    %372 = arith.addf %370, %371 : vector<8x512xf32>
    %cst_142 = arith.constant 0.000000e+00 : f32
    %373 = vector.broadcast %cst_142 : f32 to vector<8x512xf32>
    %374 = arith.cmpf oge, %372, %373 : vector<8x512xf32>
    %cst_143 = arith.constant 0.00999999977 : f32
    %375 = vector.broadcast %cst_143 : f32 to vector<8x512xf32>
    %376 = arith.mulf %375, %372 : vector<8x512xf32>
    %377 = arith.select %374, %372, %376 : vector<8x512xi1>, vector<8x512xf32>
    %378 = arith.truncf %377 : vector<8x512xf32> to vector<8x512xbf16>
    %c32_144 = arith.constant 32 : index
    %c0_145 = arith.constant 0 : index
    %379 = vector.load %arg24[%c32_144, %c0_145] : memref<136x512xbf16, #tpu.memory_space<vmem>>, vector<8x512xbf16>
    tpu.vector_store %arg24[%c32_144, %c0_145], %378 {strides = array<i32>} : memref<136x512xbf16, #tpu.memory_space<vmem>>, vector<8x512xbf16>,
    %c0_146 = arith.constant 0 : index
    %c0_147 = arith.constant 0 : index
    %380 = vector.load %arg24[%c0_146, %c0_147] : memref<136x512xbf16, #tpu.memory_space<vmem>>, vector<40x512xbf16>
    %c0_148 = arith.constant 0 : index
    %c0_149 = arith.constant 0 : index
    %381 = vector.load %arg10[%c0_148, %c0_149] : memref<8x40xbf16, #tpu.memory_space<vmem>>, vector<8x40xbf16>
    %cst_150 = arith.constant dense<0.000000e+00> : vector<8x512xf32>
    %382 = tpu.matmul %381, %380, %cst_150 {dimension_numbers = #tpu.dot_dimension_numbers<[1], [0], [0], [1], [0, 0, 1, 1], [], []>} : vector<8x40xbf16>, vector<40x512xbf16>, vector<8x512xf32> -> vector<8x512xf32>
    %cst_151 = arith.constant dense<0.000000e+00> : vector<8xf32>
    %383 = vector.multi_reduction <add>, %382, %cst_151 [1] : vector<8x512xf32> to vector<8xf32>
    %384 = vector.shape_cast %383 : vector<8xf32> to vector<8x1xf32>
    %385 = arith.mulf %382, %382 : vector<8x512xf32>
    %cst_152 = arith.constant dense<0.000000e+00> : vector<8xf32>
    %386 = vector.multi_reduction <add>, %385, %cst_152 [1] : vector<8x512xf32> to vector<8xf32>
    %387 = vector.shape_cast %386 : vector<8xf32> to vector<8x1xf32>
    %cst_153 = arith.constant 0.001953125 : f32
    %388 = vector.broadcast %cst_153 : f32 to vector<8x1xf32>
    %389 = arith.mulf %384, %388 : vector<8x1xf32>
    %cst_154 = arith.constant 0.001953125 : f32
    %390 = vector.broadcast %cst_154 : f32 to vector<8x1xf32>
    %391 = arith.mulf %387, %390 : vector<8x1xf32>
    %392 = arith.mulf %389, %389 : vector<8x1xf32>
    %393 = arith.subf %391, %392 : vector<8x1xf32>
    %cst_155 = arith.constant 0.000000e+00 : f32
    %394 = vector.broadcast %cst_155 : f32 to vector<8x1xf32>
    %395 = arith.maximumf %393, %394 : vector<8x1xf32>
    %c0_156 = arith.constant 0 : index
    %c5 = arith.constant 5 : index
    %396 = vector.load %arg2[%c0_156, %c5] : memref<8x17xf32, #tpu.memory_space<vmem>>, vector<8x1xf32>
    %cst_157 = arith.constant 9.99999974E-6 : f32
    %397 = vector.broadcast %cst_157 : f32 to vector<8x1xf32>
    %398 = arith.addf %395, %397 : vector<8x1xf32>
    %399 = math.rsqrt %398 : vector<8x1xf32>
    %400 = arith.mulf %396, %399 : vector<8x1xf32>
    %c0_158 = arith.constant 0 : index
    %c5_159 = arith.constant 5 : index
    %401 = vector.load %arg3[%c0_158, %c5_159] : memref<8x17xf32, #tpu.memory_space<vmem>>, vector<8x1xf32>
    %402 = arith.mulf %389, %400 : vector<8x1xf32>
    %403 = arith.subf %401, %402 : vector<8x1xf32>
    %404 = vector.broadcast %400 : vector<8x1xf32> to vector<8x512xf32>
    %405 = arith.mulf %382, %404 : vector<8x512xf32>
    %406 = vector.broadcast %403 : vector<8x1xf32> to vector<8x512xf32>
    %407 = arith.addf %405, %406 : vector<8x512xf32>
    %cst_160 = arith.constant 0.000000e+00 : f32
    %408 = vector.broadcast %cst_160 : f32 to vector<8x512xf32>
    %409 = arith.cmpf oge, %407, %408 : vector<8x512xf32>
    %cst_161 = arith.constant 0.00999999977 : f32
    %410 = vector.broadcast %cst_161 : f32 to vector<8x512xf32>
    %411 = arith.mulf %410, %407 : vector<8x512xf32>
    %412 = arith.select %409, %407, %411 : vector<8x512xi1>, vector<8x512xf32>
    %413 = arith.truncf %412 : vector<8x512xf32> to vector<8x512xbf16>
    %c40_162 = arith.constant 40 : index
    %c0_163 = arith.constant 0 : index
    %414 = vector.load %arg24[%c40_162, %c0_163] : memref<136x512xbf16, #tpu.memory_space<vmem>>, vector<8x512xbf16>
    tpu.vector_store %arg24[%c40_162, %c0_163], %413 {strides = array<i32>} : memref<136x512xbf16, #tpu.memory_space<vmem>>, vector<8x512xbf16>,
    %c0_164 = arith.constant 0 : index
    %c0_165 = arith.constant 0 : index
    %415 = vector.load %arg24[%c0_164, %c0_165] : memref<136x512xbf16, #tpu.memory_space<vmem>>, vector<48x512xbf16>
    %c0_166 = arith.constant 0 : index
    %c0_167 = arith.constant 0 : index
    %416 = vector.load %arg11[%c0_166, %c0_167] : memref<8x48xbf16, #tpu.memory_space<vmem>>, vector<8x48xbf16>
    %cst_168 = arith.constant dense<0.000000e+00> : vector<8x512xf32>
    %417 = tpu.matmul %416, %415, %cst_168 {dimension_numbers = #tpu.dot_dimension_numbers<[1], [0], [0], [1], [0, 0, 1, 1], [], []>} : vector<8x48xbf16>, vector<48x512xbf16>, vector<8x512xf32> -> vector<8x512xf32>
    %cst_169 = arith.constant dense<0.000000e+00> : vector<8xf32>
    %418 = vector.multi_reduction <add>, %417, %cst_169 [1] : vector<8x512xf32> to vector<8xf32>
    %419 = vector.shape_cast %418 : vector<8xf32> to vector<8x1xf32>
    %420 = arith.mulf %417, %417 : vector<8x512xf32>
    %cst_170 = arith.constant dense<0.000000e+00> : vector<8xf32>
    %421 = vector.multi_reduction <add>, %420, %cst_170 [1] : vector<8x512xf32> to vector<8xf32>
    %422 = vector.shape_cast %421 : vector<8xf32> to vector<8x1xf32>
    %cst_171 = arith.constant 0.001953125 : f32
    %423 = vector.broadcast %cst_171 : f32 to vector<8x1xf32>
    %424 = arith.mulf %419, %423 : vector<8x1xf32>
    %cst_172 = arith.constant 0.001953125 : f32
    %425 = vector.broadcast %cst_172 : f32 to vector<8x1xf32>
    %426 = arith.mulf %422, %425 : vector<8x1xf32>
    %427 = arith.mulf %424, %424 : vector<8x1xf32>
    %428 = arith.subf %426, %427 : vector<8x1xf32>
    %cst_173 = arith.constant 0.000000e+00 : f32
    %429 = vector.broadcast %cst_173 : f32 to vector<8x1xf32>
    %430 = arith.maximumf %428, %429 : vector<8x1xf32>
    %c0_174 = arith.constant 0 : index
    %c6 = arith.constant 6 : index
    %431 = vector.load %arg2[%c0_174, %c6] : memref<8x17xf32, #tpu.memory_space<vmem>>, vector<8x1xf32>
    %cst_175 = arith.constant 9.99999974E-6 : f32
    %432 = vector.broadcast %cst_175 : f32 to vector<8x1xf32>
    %433 = arith.addf %430, %432 : vector<8x1xf32>
    %434 = math.rsqrt %433 : vector<8x1xf32>
    %435 = arith.mulf %431, %434 : vector<8x1xf32>
    %c0_176 = arith.constant 0 : index
    %c6_177 = arith.constant 6 : index
    %436 = vector.load %arg3[%c0_176, %c6_177] : memref<8x17xf32, #tpu.memory_space<vmem>>, vector<8x1xf32>
    %437 = arith.mulf %424, %435 : vector<8x1xf32>
    %438 = arith.subf %436, %437 : vector<8x1xf32>
    %439 = vector.broadcast %435 : vector<8x1xf32> to vector<8x512xf32>
    %440 = arith.mulf %417, %439 : vector<8x512xf32>
    %441 = vector.broadcast %438 : vector<8x1xf32> to vector<8x512xf32>
    %442 = arith.addf %440, %441 : vector<8x512xf32>
    %cst_178 = arith.constant 0.000000e+00 : f32
    %443 = vector.broadcast %cst_178 : f32 to vector<8x512xf32>
    %444 = arith.cmpf oge, %442, %443 : vector<8x512xf32>
    %cst_179 = arith.constant 0.00999999977 : f32
    %445 = vector.broadcast %cst_179 : f32 to vector<8x512xf32>
    %446 = arith.mulf %445, %442 : vector<8x512xf32>
    %447 = arith.select %444, %442, %446 : vector<8x512xi1>, vector<8x512xf32>
    %448 = arith.truncf %447 : vector<8x512xf32> to vector<8x512xbf16>
    %c48_180 = arith.constant 48 : index
    %c0_181 = arith.constant 0 : index
    %449 = vector.load %arg24[%c48_180, %c0_181] : memref<136x512xbf16, #tpu.memory_space<vmem>>, vector<8x512xbf16>
    tpu.vector_store %arg24[%c48_180, %c0_181], %448 {strides = array<i32>} : memref<136x512xbf16, #tpu.memory_space<vmem>>, vector<8x512xbf16>,
    %c0_182 = arith.constant 0 : index
    %c0_183 = arith.constant 0 : index
    %450 = vector.load %arg24[%c0_182, %c0_183] : memref<136x512xbf16, #tpu.memory_space<vmem>>, vector<56x512xbf16>
    %c0_184 = arith.constant 0 : index
    %c0_185 = arith.constant 0 : index
    %451 = vector.load %arg12[%c0_184, %c0_185] : memref<8x56xbf16, #tpu.memory_space<vmem>>, vector<8x56xbf16>
    %cst_186 = arith.constant dense<0.000000e+00> : vector<8x512xf32>
    %452 = tpu.matmul %451, %450, %cst_186 {dimension_numbers = #tpu.dot_dimension_numbers<[1], [0], [0], [1], [0, 0, 1, 1], [], []>} : vector<8x56xbf16>, vector<56x512xbf16>, vector<8x512xf32> -> vector<8x512xf32>
    %cst_187 = arith.constant dense<0.000000e+00> : vector<8xf32>
    %453 = vector.multi_reduction <add>, %452, %cst_187 [1] : vector<8x512xf32> to vector<8xf32>
    %454 = vector.shape_cast %453 : vector<8xf32> to vector<8x1xf32>
    %455 = arith.mulf %452, %452 : vector<8x512xf32>
    %cst_188 = arith.constant dense<0.000000e+00> : vector<8xf32>
    %456 = vector.multi_reduction <add>, %455, %cst_188 [1] : vector<8x512xf32> to vector<8xf32>
    %457 = vector.shape_cast %456 : vector<8xf32> to vector<8x1xf32>
    %cst_189 = arith.constant 0.001953125 : f32
    %458 = vector.broadcast %cst_189 : f32 to vector<8x1xf32>
    %459 = arith.mulf %454, %458 : vector<8x1xf32>
    %cst_190 = arith.constant 0.001953125 : f32
    %460 = vector.broadcast %cst_190 : f32 to vector<8x1xf32>
    %461 = arith.mulf %457, %460 : vector<8x1xf32>
    %462 = arith.mulf %459, %459 : vector<8x1xf32>
    %463 = arith.subf %461, %462 : vector<8x1xf32>
    %cst_191 = arith.constant 0.000000e+00 : f32
    %464 = vector.broadcast %cst_191 : f32 to vector<8x1xf32>
    %465 = arith.maximumf %463, %464 : vector<8x1xf32>
    %c0_192 = arith.constant 0 : index
    %c7 = arith.constant 7 : index
    %466 = vector.load %arg2[%c0_192, %c7] : memref<8x17xf32, #tpu.memory_space<vmem>>, vector<8x1xf32>
    %cst_193 = arith.constant 9.99999974E-6 : f32
    %467 = vector.broadcast %cst_193 : f32 to vector<8x1xf32>
    %468 = arith.addf %465, %467 : vector<8x1xf32>
    %469 = math.rsqrt %468 : vector<8x1xf32>
    %470 = arith.mulf %466, %469 : vector<8x1xf32>
    %c0_194 = arith.constant 0 : index
    %c7_195 = arith.constant 7 : index
    %471 = vector.load %arg3[%c0_194, %c7_195] : memref<8x17xf32, #tpu.memory_space<vmem>>, vector<8x1xf32>
    %472 = arith.mulf %459, %470 : vector<8x1xf32>
    %473 = arith.subf %471, %472 : vector<8x1xf32>
    %474 = vector.broadcast %470 : vector<8x1xf32> to vector<8x512xf32>
    %475 = arith.mulf %452, %474 : vector<8x512xf32>
    %476 = vector.broadcast %473 : vector<8x1xf32> to vector<8x512xf32>
    %477 = arith.addf %475, %476 : vector<8x512xf32>
    %cst_196 = arith.constant 0.000000e+00 : f32
    %478 = vector.broadcast %cst_196 : f32 to vector<8x512xf32>
    %479 = arith.cmpf oge, %477, %478 : vector<8x512xf32>
    %cst_197 = arith.constant 0.00999999977 : f32
    %480 = vector.broadcast %cst_197 : f32 to vector<8x512xf32>
    %481 = arith.mulf %480, %477 : vector<8x512xf32>
    %482 = arith.select %479, %477, %481 : vector<8x512xi1>, vector<8x512xf32>
    %483 = arith.truncf %482 : vector<8x512xf32> to vector<8x512xbf16>
    %c56_198 = arith.constant 56 : index
    %c0_199 = arith.constant 0 : index
    %484 = vector.load %arg24[%c56_198, %c0_199] : memref<136x512xbf16, #tpu.memory_space<vmem>>, vector<8x512xbf16>
    tpu.vector_store %arg24[%c56_198, %c0_199], %483 {strides = array<i32>} : memref<136x512xbf16, #tpu.memory_space<vmem>>, vector<8x512xbf16>,
    %c0_200 = arith.constant 0 : index
    %c0_201 = arith.constant 0 : index
    %485 = vector.load %arg24[%c0_200, %c0_201] : memref<136x512xbf16, #tpu.memory_space<vmem>>, vector<64x512xbf16>
    %c0_202 = arith.constant 0 : index
    %c0_203 = arith.constant 0 : index
    %486 = vector.load %arg13[%c0_202, %c0_203] : memref<8x64xbf16, #tpu.memory_space<vmem>>, vector<8x64xbf16>
    %cst_204 = arith.constant dense<0.000000e+00> : vector<8x512xf32>
    %487 = tpu.matmul %486, %485, %cst_204 {dimension_numbers = #tpu.dot_dimension_numbers<[1], [0], [0], [1], [0, 0, 1, 1], [], []>} : vector<8x64xbf16>, vector<64x512xbf16>, vector<8x512xf32> -> vector<8x512xf32>
    %cst_205 = arith.constant dense<0.000000e+00> : vector<8xf32>
    %488 = vector.multi_reduction <add>, %487, %cst_205 [1] : vector<8x512xf32> to vector<8xf32>
    %489 = vector.shape_cast %488 : vector<8xf32> to vector<8x1xf32>
    %490 = arith.mulf %487, %487 : vector<8x512xf32>
    %cst_206 = arith.constant dense<0.000000e+00> : vector<8xf32>
    %491 = vector.multi_reduction <add>, %490, %cst_206 [1] : vector<8x512xf32> to vector<8xf32>
    %492 = vector.shape_cast %491 : vector<8xf32> to vector<8x1xf32>
    %cst_207 = arith.constant 0.001953125 : f32
    %493 = vector.broadcast %cst_207 : f32 to vector<8x1xf32>
    %494 = arith.mulf %489, %493 : vector<8x1xf32>
    %cst_208 = arith.constant 0.001953125 : f32
    %495 = vector.broadcast %cst_208 : f32 to vector<8x1xf32>
    %496 = arith.mulf %492, %495 : vector<8x1xf32>
    %497 = arith.mulf %494, %494 : vector<8x1xf32>
    %498 = arith.subf %496, %497 : vector<8x1xf32>
    %cst_209 = arith.constant 0.000000e+00 : f32
    %499 = vector.broadcast %cst_209 : f32 to vector<8x1xf32>
    %500 = arith.maximumf %498, %499 : vector<8x1xf32>
    %c0_210 = arith.constant 0 : index
    %c8_211 = arith.constant 8 : index
    %501 = vector.load %arg2[%c0_210, %c8_211] : memref<8x17xf32, #tpu.memory_space<vmem>>, vector<8x1xf32>
    %cst_212 = arith.constant 9.99999974E-6 : f32
    %502 = vector.broadcast %cst_212 : f32 to vector<8x1xf32>
    %503 = arith.addf %500, %502 : vector<8x1xf32>
    %504 = math.rsqrt %503 : vector<8x1xf32>
    %505 = arith.mulf %501, %504 : vector<8x1xf32>
    %c0_213 = arith.constant 0 : index
    %c8_214 = arith.constant 8 : index
    %506 = vector.load %arg3[%c0_213, %c8_214] : memref<8x17xf32, #tpu.memory_space<vmem>>, vector<8x1xf32>
    %507 = arith.mulf %494, %505 : vector<8x1xf32>
    %508 = arith.subf %506, %507 : vector<8x1xf32>
    %509 = vector.broadcast %505 : vector<8x1xf32> to vector<8x512xf32>
    %510 = arith.mulf %487, %509 : vector<8x512xf32>
    %511 = vector.broadcast %508 : vector<8x1xf32> to vector<8x512xf32>
    %512 = arith.addf %510, %511 : vector<8x512xf32>
    %cst_215 = arith.constant 0.000000e+00 : f32
    %513 = vector.broadcast %cst_215 : f32 to vector<8x512xf32>
    %514 = arith.cmpf oge, %512, %513 : vector<8x512xf32>
    %cst_216 = arith.constant 0.00999999977 : f32
    %515 = vector.broadcast %cst_216 : f32 to vector<8x512xf32>
    %516 = arith.mulf %515, %512 : vector<8x512xf32>
    %517 = arith.select %514, %512, %516 : vector<8x512xi1>, vector<8x512xf32>
    %518 = arith.truncf %517 : vector<8x512xf32> to vector<8x512xbf16>
    %c64_217 = arith.constant 64 : index
    %c0_218 = arith.constant 0 : index
    %519 = vector.load %arg24[%c64_217, %c0_218] : memref<136x512xbf16, #tpu.memory_space<vmem>>, vector<8x512xbf16>
    tpu.vector_store %arg24[%c64_217, %c0_218], %518 {strides = array<i32>} : memref<136x512xbf16, #tpu.memory_space<vmem>>, vector<8x512xbf16>,
    %c0_219 = arith.constant 0 : index
    %c0_220 = arith.constant 0 : index
    %520 = vector.load %arg24[%c0_219, %c0_220] : memref<136x512xbf16, #tpu.memory_space<vmem>>, vector<72x512xbf16>
    %c0_221 = arith.constant 0 : index
    %c0_222 = arith.constant 0 : index
    %521 = vector.load %arg14[%c0_221, %c0_222] : memref<72x72xbf16, #tpu.memory_space<vmem>>, vector<72x72xbf16>
    %cst_223 = arith.constant dense<0.000000e+00> : vector<72x512xf32>
    %522 = tpu.matmul %521, %520, %cst_223 {dimension_numbers = #tpu.dot_dimension_numbers<[1], [0], [0], [1], [0, 0, 1, 1], [], []>} : vector<72x72xbf16>, vector<72x512xbf16>, vector<72x512xf32> -> vector<72x512xf32>
    %523 = vector.extract_strided_slice %522 {offsets = [0, 0], sizes = [8, 512], strides = [1, 1]} : vector<72x512xf32> to vector<8x512xf32>
    %c17_i32_224 = arith.constant 17 : i32
    %524 = tpu.dynamic_rotate %523 by %c17_i32_224 dim 1 : vector<8x512xf32>, i32 -> vector<8x512xf32>
    %c0_225 = arith.constant 0 : index
    %c0_226 = arith.constant 0 : index
    %525 = vector.load %arg1[%c0_225, %c0_226] : memref<256x512xf32, #tpu.memory_space<vmem>>, vector<8x512xf32>
    %526 = arith.mulf %524, %525 : vector<8x512xf32>
    %527 = vector.extract_strided_slice %522 {offsets = [8, 0], sizes = [8, 512], strides = [1, 1]} : vector<72x512xf32> to vector<8x512xf32>
    %c16_i32_227 = arith.constant 16 : i32
    %528 = tpu.dynamic_rotate %527 by %c16_i32_227 dim 1 : vector<8x512xf32>, i32 -> vector<8x512xf32>
    %c8_228 = arith.constant 8 : index
    %c0_229 = arith.constant 0 : index
    %529 = vector.load %arg1[%c8_228, %c0_229] : memref<256x512xf32, #tpu.memory_space<vmem>>, vector<8x512xf32>
    %530 = arith.mulf %528, %529 : vector<8x512xf32>
    %531 = vector.extract_strided_slice %522 {offsets = [16, 0], sizes = [8, 512], strides = [1, 1]} : vector<72x512xf32> to vector<8x512xf32>
    %c15_i32_230 = arith.constant 15 : i32
    %532 = tpu.dynamic_rotate %531 by %c15_i32_230 dim 1 : vector<8x512xf32>, i32 -> vector<8x512xf32>
    %c16_231 = arith.constant 16 : index
    %c0_232 = arith.constant 0 : index
    %533 = vector.load %arg1[%c16_231, %c0_232] : memref<256x512xf32, #tpu.memory_space<vmem>>, vector<8x512xf32>
    %534 = arith.mulf %532, %533 : vector<8x512xf32>
    %535 = vector.extract_strided_slice %522 {offsets = [24, 0], sizes = [8, 512], strides = [1, 1]} : vector<72x512xf32> to vector<8x512xf32>
    %c1_i32_233 = arith.constant 1 : i32
    %536 = tpu.dynamic_rotate %535 by %c1_i32_233 dim 1 : vector<8x512xf32>, i32 -> vector<8x512xf32>
    %c24_234 = arith.constant 24 : index
    %c0_235 = arith.constant 0 : index
    %537 = vector.load %arg1[%c24_234, %c0_235] : memref<256x512xf32, #tpu.memory_space<vmem>>, vector<8x512xf32>
    %538 = arith.mulf %536, %537 : vector<8x512xf32>
    %539 = vector.extract_strided_slice %522 {offsets = [32, 0], sizes = [8, 512], strides = [1, 1]} : vector<72x512xf32> to vector<8x512xf32>
    %540 = vector.extract_strided_slice %522 {offsets = [40, 0], sizes = [8, 512], strides = [1, 1]} : vector<72x512xf32> to vector<8x512xf32>
    %c511_i32_236 = arith.constant 511 : i32
    %541 = tpu.dynamic_rotate %540 by %c511_i32_236 dim 1 : vector<8x512xf32>, i32 -> vector<8x512xf32>
    %c32_237 = arith.constant 32 : index
    %c0_238 = arith.constant 0 : index
    %542 = vector.load %arg1[%c32_237, %c0_238] : memref<256x512xf32, #tpu.memory_space<vmem>>, vector<8x512xf32>
    %543 = arith.mulf %541, %542 : vector<8x512xf32>
    %544 = vector.extract_strided_slice %522 {offsets = [48, 0], sizes = [8, 512], strides = [1, 1]} : vector<72x512xf32> to vector<8x512xf32>
    %c497_i32_239 = arith.constant 497 : i32
    %545 = tpu.dynamic_rotate %544 by %c497_i32_239 dim 1 : vector<8x512xf32>, i32 -> vector<8x512xf32>
    %c40_240 = arith.constant 40 : index
    %c0_241 = arith.constant 0 : index
    %546 = vector.load %arg1[%c40_240, %c0_241] : memref<256x512xf32, #tpu.memory_space<vmem>>, vector<8x512xf32>
    %547 = arith.mulf %545, %546 : vector<8x512xf32>
    %548 = vector.extract_strided_slice %522 {offsets = [56, 0], sizes = [8, 512], strides = [1, 1]} : vector<72x512xf32> to vector<8x512xf32>
    %c496_i32_242 = arith.constant 496 : i32
    %549 = tpu.dynamic_rotate %548 by %c496_i32_242 dim 1 : vector<8x512xf32>, i32 -> vector<8x512xf32>
    %c48_243 = arith.constant 48 : index
    %c0_244 = arith.constant 0 : index
    %550 = vector.load %arg1[%c48_243, %c0_244] : memref<256x512xf32, #tpu.memory_space<vmem>>, vector<8x512xf32>
    %551 = arith.mulf %549, %550 : vector<8x512xf32>
    %552 = vector.extract_strided_slice %522 {offsets = [64, 0], sizes = [8, 512], strides = [1, 1]} : vector<72x512xf32> to vector<8x512xf32>
    %c495_i32_245 = arith.constant 495 : i32
    %553 = tpu.dynamic_rotate %552 by %c495_i32_245 dim 1 : vector<8x512xf32>, i32 -> vector<8x512xf32>
    %c56_246 = arith.constant 56 : index
    %c0_247 = arith.constant 0 : index
    %554 = vector.load %arg1[%c56_246, %c0_247] : memref<256x512xf32, #tpu.memory_space<vmem>>, vector<8x512xf32>
    %555 = arith.mulf %553, %554 : vector<8x512xf32>
    %556 = arith.addf %526, %530 : vector<8x512xf32>
    %557 = arith.addf %534, %538 : vector<8x512xf32>
    %558 = arith.addf %539, %543 : vector<8x512xf32>
    %559 = arith.addf %547, %551 : vector<8x512xf32>
    %560 = arith.addf %556, %557 : vector<8x512xf32>
    %561 = arith.addf %558, %559 : vector<8x512xf32>
    %562 = arith.addf %560, %561 : vector<8x512xf32>
    %563 = arith.addf %562, %555 : vector<8x512xf32>
    %cst_248 = arith.constant dense<0.000000e+00> : vector<8xf32>
    %564 = vector.multi_reduction <add>, %563, %cst_248 [1] : vector<8x512xf32> to vector<8xf32>
    %565 = vector.shape_cast %564 : vector<8xf32> to vector<8x1xf32>
    %566 = arith.mulf %563, %563 : vector<8x512xf32>
    %cst_249 = arith.constant dense<0.000000e+00> : vector<8xf32>
    %567 = vector.multi_reduction <add>, %566, %cst_249 [1] : vector<8x512xf32> to vector<8xf32>
    %568 = vector.shape_cast %567 : vector<8xf32> to vector<8x1xf32>
    %cst_250 = arith.constant 0.001953125 : f32
    %569 = vector.broadcast %cst_250 : f32 to vector<8x1xf32>
    %570 = arith.mulf %565, %569 : vector<8x1xf32>
    %cst_251 = arith.constant 0.001953125 : f32
    %571 = vector.broadcast %cst_251 : f32 to vector<8x1xf32>
    %572 = arith.mulf %568, %571 : vector<8x1xf32>
    %573 = arith.mulf %570, %570 : vector<8x1xf32>
    %574 = arith.subf %572, %573 : vector<8x1xf32>
    %cst_252 = arith.constant 0.000000e+00 : f32
    %575 = vector.broadcast %cst_252 : f32 to vector<8x1xf32>
    %576 = arith.maximumf %574, %575 : vector<8x1xf32>
    %c0_253 = arith.constant 0 : index
    %c9 = arith.constant 9 : index
    %577 = vector.load %arg2[%c0_253, %c9] : memref<8x17xf32, #tpu.memory_space<vmem>>, vector<8x1xf32>
    %cst_254 = arith.constant 9.99999974E-6 : f32
    %578 = vector.broadcast %cst_254 : f32 to vector<8x1xf32>
    %579 = arith.addf %576, %578 : vector<8x1xf32>
    %580 = math.rsqrt %579 : vector<8x1xf32>
    %581 = arith.mulf %577, %580 : vector<8x1xf32>
    %c0_255 = arith.constant 0 : index
    %c9_256 = arith.constant 9 : index
    %582 = vector.load %arg3[%c0_255, %c9_256] : memref<8x17xf32, #tpu.memory_space<vmem>>, vector<8x1xf32>
    %583 = arith.mulf %570, %581 : vector<8x1xf32>
    %584 = arith.subf %582, %583 : vector<8x1xf32>
    %585 = vector.broadcast %581 : vector<8x1xf32> to vector<8x512xf32>
    %586 = arith.mulf %563, %585 : vector<8x512xf32>
    %587 = vector.broadcast %584 : vector<8x1xf32> to vector<8x512xf32>
    %588 = arith.addf %586, %587 : vector<8x512xf32>
    %cst_257 = arith.constant 0.000000e+00 : f32
    %589 = vector.broadcast %cst_257 : f32 to vector<8x512xf32>
    %590 = arith.cmpf oge, %588, %589 : vector<8x512xf32>
    %cst_258 = arith.constant 0.00999999977 : f32
    %591 = vector.broadcast %cst_258 : f32 to vector<8x512xf32>
    %592 = arith.mulf %591, %588 : vector<8x512xf32>
    %593 = arith.select %590, %588, %592 : vector<8x512xi1>, vector<8x512xf32>
    %594 = arith.truncf %593 : vector<8x512xf32> to vector<8x512xbf16>
    %c72_259 = arith.constant 72 : index
    %c0_260 = arith.constant 0 : index
    %595 = vector.load %arg24[%c72_259, %c0_260] : memref<136x512xbf16, #tpu.memory_space<vmem>>, vector<8x512xbf16>
    tpu.vector_store %arg24[%c72_259, %c0_260], %594 {strides = array<i32>} : memref<136x512xbf16, #tpu.memory_space<vmem>>, vector<8x512xbf16>,
    %c0_261 = arith.constant 0 : index
    %c0_262 = arith.constant 0 : index
    %596 = vector.load %arg24[%c0_261, %c0_262] : memref<136x512xbf16, #tpu.memory_space<vmem>>, vector<80x512xbf16>
    %c0_263 = arith.constant 0 : index
    %c0_264 = arith.constant 0 : index
    %597 = vector.load %arg15[%c0_263, %c0_264] : memref<72x80xbf16, #tpu.memory_space<vmem>>, vector<72x80xbf16>
    %cst_265 = arith.constant dense<0.000000e+00> : vector<72x512xf32>
    %598 = tpu.matmul %597, %596, %cst_265 {dimension_numbers = #tpu.dot_dimension_numbers<[1], [0], [0], [1], [0, 0, 1, 1], [], []>} : vector<72x80xbf16>, vector<80x512xbf16>, vector<72x512xf32> -> vector<72x512xf32>
    %599 = vector.extract_strided_slice %598 {offsets = [0, 0], sizes = [8, 512], strides = [1, 1]} : vector<72x512xf32> to vector<8x512xf32>
    %c34_i32_266 = arith.constant 34 : i32
    %600 = tpu.dynamic_rotate %599 by %c34_i32_266 dim 1 : vector<8x512xf32>, i32 -> vector<8x512xf32>
    %c64_267 = arith.constant 64 : index
    %c0_268 = arith.constant 0 : index
    %601 = vector.load %arg1[%c64_267, %c0_268] : memref<256x512xf32, #tpu.memory_space<vmem>>, vector<8x512xf32>
    %602 = arith.mulf %600, %601 : vector<8x512xf32>
    %603 = vector.extract_strided_slice %598 {offsets = [8, 0], sizes = [8, 512], strides = [1, 1]} : vector<72x512xf32> to vector<8x512xf32>
    %c32_i32_269 = arith.constant 32 : i32
    %604 = tpu.dynamic_rotate %603 by %c32_i32_269 dim 1 : vector<8x512xf32>, i32 -> vector<8x512xf32>
    %c72_270 = arith.constant 72 : index
    %c0_271 = arith.constant 0 : index
    %605 = vector.load %arg1[%c72_270, %c0_271] : memref<256x512xf32, #tpu.memory_space<vmem>>, vector<8x512xf32>
    %606 = arith.mulf %604, %605 : vector<8x512xf32>
    %607 = vector.extract_strided_slice %598 {offsets = [16, 0], sizes = [8, 512], strides = [1, 1]} : vector<72x512xf32> to vector<8x512xf32>
    %c30_i32_272 = arith.constant 30 : i32
    %608 = tpu.dynamic_rotate %607 by %c30_i32_272 dim 1 : vector<8x512xf32>, i32 -> vector<8x512xf32>
    %c80_273 = arith.constant 80 : index
    %c0_274 = arith.constant 0 : index
    %609 = vector.load %arg1[%c80_273, %c0_274] : memref<256x512xf32, #tpu.memory_space<vmem>>, vector<8x512xf32>
    %610 = arith.mulf %608, %609 : vector<8x512xf32>
    %611 = vector.extract_strided_slice %598 {offsets = [24, 0], sizes = [8, 512], strides = [1, 1]} : vector<72x512xf32> to vector<8x512xf32>
    %c2_i32_275 = arith.constant 2 : i32
    %612 = tpu.dynamic_rotate %611 by %c2_i32_275 dim 1 : vector<8x512xf32>, i32 -> vector<8x512xf32>
    %c88_276 = arith.constant 88 : index
    %c0_277 = arith.constant 0 : index
    %613 = vector.load %arg1[%c88_276, %c0_277] : memref<256x512xf32, #tpu.memory_space<vmem>>, vector<8x512xf32>
    %614 = arith.mulf %612, %613 : vector<8x512xf32>
    %615 = vector.extract_strided_slice %598 {offsets = [32, 0], sizes = [8, 512], strides = [1, 1]} : vector<72x512xf32> to vector<8x512xf32>
    %616 = vector.extract_strided_slice %598 {offsets = [40, 0], sizes = [8, 512], strides = [1, 1]} : vector<72x512xf32> to vector<8x512xf32>
    %c510_i32_278 = arith.constant 510 : i32
    %617 = tpu.dynamic_rotate %616 by %c510_i32_278 dim 1 : vector<8x512xf32>, i32 -> vector<8x512xf32>
    %c96_279 = arith.constant 96 : index
    %c0_280 = arith.constant 0 : index
    %618 = vector.load %arg1[%c96_279, %c0_280] : memref<256x512xf32, #tpu.memory_space<vmem>>, vector<8x512xf32>
    %619 = arith.mulf %617, %618 : vector<8x512xf32>
    %620 = vector.extract_strided_slice %598 {offsets = [48, 0], sizes = [8, 512], strides = [1, 1]} : vector<72x512xf32> to vector<8x512xf32>
    %c482_i32_281 = arith.constant 482 : i32
    %621 = tpu.dynamic_rotate %620 by %c482_i32_281 dim 1 : vector<8x512xf32>, i32 -> vector<8x512xf32>
    %c104_282 = arith.constant 104 : index
    %c0_283 = arith.constant 0 : index
    %622 = vector.load %arg1[%c104_282, %c0_283] : memref<256x512xf32, #tpu.memory_space<vmem>>, vector<8x512xf32>
    %623 = arith.mulf %621, %622 : vector<8x512xf32>
    %624 = vector.extract_strided_slice %598 {offsets = [56, 0], sizes = [8, 512], strides = [1, 1]} : vector<72x512xf32> to vector<8x512xf32>
    %c480_i32_284 = arith.constant 480 : i32
    %625 = tpu.dynamic_rotate %624 by %c480_i32_284 dim 1 : vector<8x512xf32>, i32 -> vector<8x512xf32>
    %c112_285 = arith.constant 112 : index
    %c0_286 = arith.constant 0 : index
    %626 = vector.load %arg1[%c112_285, %c0_286] : memref<256x512xf32, #tpu.memory_space<vmem>>, vector<8x512xf32>
    %627 = arith.mulf %625, %626 : vector<8x512xf32>
    %628 = vector.extract_strided_slice %598 {offsets = [64, 0], sizes = [8, 512], strides = [1, 1]} : vector<72x512xf32> to vector<8x512xf32>
    %c478_i32_287 = arith.constant 478 : i32
    %629 = tpu.dynamic_rotate %628 by %c478_i32_287 dim 1 : vector<8x512xf32>, i32 -> vector<8x512xf32>
    %c120_288 = arith.constant 120 : index
    %c0_289 = arith.constant 0 : index
    %630 = vector.load %arg1[%c120_288, %c0_289] : memref<256x512xf32, #tpu.memory_space<vmem>>, vector<8x512xf32>
    %631 = arith.mulf %629, %630 : vector<8x512xf32>
    %632 = arith.addf %602, %606 : vector<8x512xf32>
    %633 = arith.addf %610, %614 : vector<8x512xf32>
    %634 = arith.addf %615, %619 : vector<8x512xf32>
    %635 = arith.addf %623, %627 : vector<8x512xf32>
    %636 = arith.addf %632, %633 : vector<8x512xf32>
    %637 = arith.addf %634, %635 : vector<8x512xf32>
    %638 = arith.addf %636, %637 : vector<8x512xf32>
    %639 = arith.addf %638, %631 : vector<8x512xf32>
    %cst_290 = arith.constant dense<0.000000e+00> : vector<8xf32>
    %640 = vector.multi_reduction <add>, %639, %cst_290 [1] : vector<8x512xf32> to vector<8xf32>
    %641 = vector.shape_cast %640 : vector<8xf32> to vector<8x1xf32>
    %642 = arith.mulf %639, %639 : vector<8x512xf32>
    %cst_291 = arith.constant dense<0.000000e+00> : vector<8xf32>
    %643 = vector.multi_reduction <add>, %642, %cst_291 [1] : vector<8x512xf32> to vector<8xf32>
    %644 = vector.shape_cast %643 : vector<8xf32> to vector<8x1xf32>
    %cst_292 = arith.constant 0.001953125 : f32
    %645 = vector.broadcast %cst_292 : f32 to vector<8x1xf32>
    %646 = arith.mulf %641, %645 : vector<8x1xf32>
    %cst_293 = arith.constant 0.001953125 : f32
    %647 = vector.broadcast %cst_293 : f32 to vector<8x1xf32>
    %648 = arith.mulf %644, %647 : vector<8x1xf32>
    %649 = arith.mulf %646, %646 : vector<8x1xf32>
    %650 = arith.subf %648, %649 : vector<8x1xf32>
    %cst_294 = arith.constant 0.000000e+00 : f32
    %651 = vector.broadcast %cst_294 : f32 to vector<8x1xf32>
    %652 = arith.maximumf %650, %651 : vector<8x1xf32>
    %c0_295 = arith.constant 0 : index
    %c10 = arith.constant 10 : index
    %653 = vector.load %arg2[%c0_295, %c10] : memref<8x17xf32, #tpu.memory_space<vmem>>, vector<8x1xf32>
    %cst_296 = arith.constant 9.99999974E-6 : f32
    %654 = vector.broadcast %cst_296 : f32 to vector<8x1xf32>
    %655 = arith.addf %652, %654 : vector<8x1xf32>
    %656 = math.rsqrt %655 : vector<8x1xf32>
    %657 = arith.mulf %653, %656 : vector<8x1xf32>
    %c0_297 = arith.constant 0 : index
    %c10_298 = arith.constant 10 : index
    %658 = vector.load %arg3[%c0_297, %c10_298] : memref<8x17xf32, #tpu.memory_space<vmem>>, vector<8x1xf32>
    %659 = arith.mulf %646, %657 : vector<8x1xf32>
    %660 = arith.subf %658, %659 : vector<8x1xf32>
    %661 = vector.broadcast %657 : vector<8x1xf32> to vector<8x512xf32>
    %662 = arith.mulf %639, %661 : vector<8x512xf32>
    %663 = vector.broadcast %660 : vector<8x1xf32> to vector<8x512xf32>
    %664 = arith.addf %662, %663 : vector<8x512xf32>
    %cst_299 = arith.constant 0.000000e+00 : f32
    %665 = vector.broadcast %cst_299 : f32 to vector<8x512xf32>
    %666 = arith.cmpf oge, %664, %665 : vector<8x512xf32>
    %cst_300 = arith.constant 0.00999999977 : f32
    %667 = vector.broadcast %cst_300 : f32 to vector<8x512xf32>
    %668 = arith.mulf %667, %664 : vector<8x512xf32>
    %669 = arith.select %666, %664, %668 : vector<8x512xi1>, vector<8x512xf32>
    %670 = arith.truncf %669 : vector<8x512xf32> to vector<8x512xbf16>
    %c80_301 = arith.constant 80 : index
    %c0_302 = arith.constant 0 : index
    %671 = vector.load %arg24[%c80_301, %c0_302] : memref<136x512xbf16, #tpu.memory_space<vmem>>, vector<8x512xbf16>
    tpu.vector_store %arg24[%c80_301, %c0_302], %670 {strides = array<i32>} : memref<136x512xbf16, #tpu.memory_space<vmem>>, vector<8x512xbf16>,
    %c0_303 = arith.constant 0 : index
    %c0_304 = arith.constant 0 : index
    %672 = vector.load %arg24[%c0_303, %c0_304] : memref<136x512xbf16, #tpu.memory_space<vmem>>, vector<88x512xbf16>
    %c0_305 = arith.constant 0 : index
    %c0_306 = arith.constant 0 : index
    %673 = vector.load %arg16[%c0_305, %c0_306] : memref<72x88xbf16, #tpu.memory_space<vmem>>, vector<72x88xbf16>
    %cst_307 = arith.constant dense<0.000000e+00> : vector<72x512xf32>
    %674 = tpu.matmul %673, %672, %cst_307 {dimension_numbers = #tpu.dot_dimension_numbers<[1], [0], [0], [1], [0, 0, 1, 1], [], []>} : vector<72x88xbf16>, vector<88x512xbf16>, vector<72x512xf32> -> vector<72x512xf32>
    %675 = vector.extract_strided_slice %674 {offsets = [0, 0], sizes = [8, 512], strides = [1, 1]} : vector<72x512xf32> to vector<8x512xf32>
    %c68_i32_308 = arith.constant 68 : i32
    %676 = tpu.dynamic_rotate %675 by %c68_i32_308 dim 1 : vector<8x512xf32>, i32 -> vector<8x512xf32>
    %c128_309 = arith.constant 128 : index
    %c0_310 = arith.constant 0 : index
    %677 = vector.load %arg1[%c128_309, %c0_310] : memref<256x512xf32, #tpu.memory_space<vmem>>, vector<8x512xf32>
    %678 = arith.mulf %676, %677 : vector<8x512xf32>
    %679 = vector.extract_strided_slice %674 {offsets = [8, 0], sizes = [8, 512], strides = [1, 1]} : vector<72x512xf32> to vector<8x512xf32>
    %c64_i32_311 = arith.constant 64 : i32
    %680 = tpu.dynamic_rotate %679 by %c64_i32_311 dim 1 : vector<8x512xf32>, i32 -> vector<8x512xf32>
    %c136_312 = arith.constant 136 : index
    %c0_313 = arith.constant 0 : index
    %681 = vector.load %arg1[%c136_312, %c0_313] : memref<256x512xf32, #tpu.memory_space<vmem>>, vector<8x512xf32>
    %682 = arith.mulf %680, %681 : vector<8x512xf32>
    %683 = vector.extract_strided_slice %674 {offsets = [16, 0], sizes = [8, 512], strides = [1, 1]} : vector<72x512xf32> to vector<8x512xf32>
    %c60_i32_314 = arith.constant 60 : i32
    %684 = tpu.dynamic_rotate %683 by %c60_i32_314 dim 1 : vector<8x512xf32>, i32 -> vector<8x512xf32>
    %c144_315 = arith.constant 144 : index
    %c0_316 = arith.constant 0 : index
    %685 = vector.load %arg1[%c144_315, %c0_316] : memref<256x512xf32, #tpu.memory_space<vmem>>, vector<8x512xf32>
    %686 = arith.mulf %684, %685 : vector<8x512xf32>
    %687 = vector.extract_strided_slice %674 {offsets = [24, 0], sizes = [8, 512], strides = [1, 1]} : vector<72x512xf32> to vector<8x512xf32>
    %c4_i32_317 = arith.constant 4 : i32
    %688 = tpu.dynamic_rotate %687 by %c4_i32_317 dim 1 : vector<8x512xf32>, i32 -> vector<8x512xf32>
    %c152_318 = arith.constant 152 : index
    %c0_319 = arith.constant 0 : index
    %689 = vector.load %arg1[%c152_318, %c0_319] : memref<256x512xf32, #tpu.memory_space<vmem>>, vector<8x512xf32>
    %690 = arith.mulf %688, %689 : vector<8x512xf32>
    %691 = vector.extract_strided_slice %674 {offsets = [32, 0], sizes = [8, 512], strides = [1, 1]} : vector<72x512xf32> to vector<8x512xf32>
    %692 = vector.extract_strided_slice %674 {offsets = [40, 0], sizes = [8, 512], strides = [1, 1]} : vector<72x512xf32> to vector<8x512xf32>
    %c508_i32_320 = arith.constant 508 : i32
    %693 = tpu.dynamic_rotate %692 by %c508_i32_320 dim 1 : vector<8x512xf32>, i32 -> vector<8x512xf32>
    %c160_321 = arith.constant 160 : index
    %c0_322 = arith.constant 0 : index
    %694 = vector.load %arg1[%c160_321, %c0_322] : memref<256x512xf32, #tpu.memory_space<vmem>>, vector<8x512xf32>
    %695 = arith.mulf %693, %694 : vector<8x512xf32>
    %696 = vector.extract_strided_slice %674 {offsets = [48, 0], sizes = [8, 512], strides = [1, 1]} : vector<72x512xf32> to vector<8x512xf32>
    %c452_i32_323 = arith.constant 452 : i32
    %697 = tpu.dynamic_rotate %696 by %c452_i32_323 dim 1 : vector<8x512xf32>, i32 -> vector<8x512xf32>
    %c168_324 = arith.constant 168 : index
    %c0_325 = arith.constant 0 : index
    %698 = vector.load %arg1[%c168_324, %c0_325] : memref<256x512xf32, #tpu.memory_space<vmem>>, vector<8x512xf32>
    %699 = arith.mulf %697, %698 : vector<8x512xf32>
    %700 = vector.extract_strided_slice %674 {offsets = [56, 0], sizes = [8, 512], strides = [1, 1]} : vector<72x512xf32> to vector<8x512xf32>
    %c448_i32_326 = arith.constant 448 : i32
    %701 = tpu.dynamic_rotate %700 by %c448_i32_326 dim 1 : vector<8x512xf32>, i32 -> vector<8x512xf32>
    %c176_327 = arith.constant 176 : index
    %c0_328 = arith.constant 0 : index
    %702 = vector.load %arg1[%c176_327, %c0_328] : memref<256x512xf32, #tpu.memory_space<vmem>>, vector<8x512xf32>
    %703 = arith.mulf %701, %702 : vector<8x512xf32>
    %704 = vector.extract_strided_slice %674 {offsets = [64, 0], sizes = [8, 512], strides = [1, 1]} : vector<72x512xf32> to vector<8x512xf32>
    %c444_i32_329 = arith.constant 444 : i32
    %705 = tpu.dynamic_rotate %704 by %c444_i32_329 dim 1 : vector<8x512xf32>, i32 -> vector<8x512xf32>
    %c184_330 = arith.constant 184 : index
    %c0_331 = arith.constant 0 : index
    %706 = vector.load %arg1[%c184_330, %c0_331] : memref<256x512xf32, #tpu.memory_space<vmem>>, vector<8x512xf32>
    %707 = arith.mulf %705, %706 : vector<8x512xf32>
    %708 = arith.addf %678, %682 : vector<8x512xf32>
    %709 = arith.addf %686, %690 : vector<8x512xf32>
    %710 = arith.addf %691, %695 : vector<8x512xf32>
    %711 = arith.addf %699, %703 : vector<8x512xf32>
    %712 = arith.addf %708, %709 : vector<8x512xf32>
    %713 = arith.addf %710, %711 : vector<8x512xf32>
    %714 = arith.addf %712, %713 : vector<8x512xf32>
    %715 = arith.addf %714, %707 : vector<8x512xf32>
    %cst_332 = arith.constant dense<0.000000e+00> : vector<8xf32>
    %716 = vector.multi_reduction <add>, %715, %cst_332 [1] : vector<8x512xf32> to vector<8xf32>
    %717 = vector.shape_cast %716 : vector<8xf32> to vector<8x1xf32>
    %718 = arith.mulf %715, %715 : vector<8x512xf32>
    %cst_333 = arith.constant dense<0.000000e+00> : vector<8xf32>
    %719 = vector.multi_reduction <add>, %718, %cst_333 [1] : vector<8x512xf32> to vector<8xf32>
    %720 = vector.shape_cast %719 : vector<8xf32> to vector<8x1xf32>
    %cst_334 = arith.constant 0.001953125 : f32
    %721 = vector.broadcast %cst_334 : f32 to vector<8x1xf32>
    %722 = arith.mulf %717, %721 : vector<8x1xf32>
    %cst_335 = arith.constant 0.001953125 : f32
    %723 = vector.broadcast %cst_335 : f32 to vector<8x1xf32>
    %724 = arith.mulf %720, %723 : vector<8x1xf32>
    %725 = arith.mulf %722, %722 : vector<8x1xf32>
    %726 = arith.subf %724, %725 : vector<8x1xf32>
    %cst_336 = arith.constant 0.000000e+00 : f32
    %727 = vector.broadcast %cst_336 : f32 to vector<8x1xf32>
    %728 = arith.maximumf %726, %727 : vector<8x1xf32>
    %c0_337 = arith.constant 0 : index
    %c11 = arith.constant 11 : index
    %729 = vector.load %arg2[%c0_337, %c11] : memref<8x17xf32, #tpu.memory_space<vmem>>, vector<8x1xf32>
    %cst_338 = arith.constant 9.99999974E-6 : f32
    %730 = vector.broadcast %cst_338 : f32 to vector<8x1xf32>
    %731 = arith.addf %728, %730 : vector<8x1xf32>
    %732 = math.rsqrt %731 : vector<8x1xf32>
    %733 = arith.mulf %729, %732 : vector<8x1xf32>
    %c0_339 = arith.constant 0 : index
    %c11_340 = arith.constant 11 : index
    %734 = vector.load %arg3[%c0_339, %c11_340] : memref<8x17xf32, #tpu.memory_space<vmem>>, vector<8x1xf32>
    %735 = arith.mulf %722, %733 : vector<8x1xf32>
    %736 = arith.subf %734, %735 : vector<8x1xf32>
    %737 = vector.broadcast %733 : vector<8x1xf32> to vector<8x512xf32>
    %738 = arith.mulf %715, %737 : vector<8x512xf32>
    %739 = vector.broadcast %736 : vector<8x1xf32> to vector<8x512xf32>
    %740 = arith.addf %738, %739 : vector<8x512xf32>
    %cst_341 = arith.constant 0.000000e+00 : f32
    %741 = vector.broadcast %cst_341 : f32 to vector<8x512xf32>
    %742 = arith.cmpf oge, %740, %741 : vector<8x512xf32>
    %cst_342 = arith.constant 0.00999999977 : f32
    %743 = vector.broadcast %cst_342 : f32 to vector<8x512xf32>
    %744 = arith.mulf %743, %740 : vector<8x512xf32>
    %745 = arith.select %742, %740, %744 : vector<8x512xi1>, vector<8x512xf32>
    %746 = arith.truncf %745 : vector<8x512xf32> to vector<8x512xbf16>
    %c88_343 = arith.constant 88 : index
    %c0_344 = arith.constant 0 : index
    %747 = vector.load %arg24[%c88_343, %c0_344] : memref<136x512xbf16, #tpu.memory_space<vmem>>, vector<8x512xbf16>
    tpu.vector_store %arg24[%c88_343, %c0_344], %746 {strides = array<i32>} : memref<136x512xbf16, #tpu.memory_space<vmem>>, vector<8x512xbf16>,
    %c0_345 = arith.constant 0 : index
    %c0_346 = arith.constant 0 : index
    %748 = vector.load %arg24[%c0_345, %c0_346] : memref<136x512xbf16, #tpu.memory_space<vmem>>, vector<96x512xbf16>
    %c0_347 = arith.constant 0 : index
    %c0_348 = arith.constant 0 : index
    %749 = vector.load %arg17[%c0_347, %c0_348] : memref<72x96xbf16, #tpu.memory_space<vmem>>, vector<72x96xbf16>
    %cst_349 = arith.constant dense<0.000000e+00> : vector<72x512xf32>
    %750 = tpu.matmul %749, %748, %cst_349 {dimension_numbers = #tpu.dot_dimension_numbers<[1], [0], [0], [1], [0, 0, 1, 1], [], []>} : vector<72x96xbf16>, vector<96x512xbf16>, vector<72x512xf32> -> vector<72x512xf32>
    %751 = vector.extract_strided_slice %750 {offsets = [0, 0], sizes = [8, 512], strides = [1, 1]} : vector<72x512xf32> to vector<8x512xf32>
    %c136_i32_350 = arith.constant 136 : i32
    %752 = tpu.dynamic_rotate %751 by %c136_i32_350 dim 1 : vector<8x512xf32>, i32 -> vector<8x512xf32>
    %c192_351 = arith.constant 192 : index
    %c0_352 = arith.constant 0 : index
    %753 = vector.load %arg1[%c192_351, %c0_352] : memref<256x512xf32, #tpu.memory_space<vmem>>, vector<8x512xf32>
    %754 = arith.mulf %752, %753 : vector<8x512xf32>
    %755 = vector.extract_strided_slice %750 {offsets = [8, 0], sizes = [8, 512], strides = [1, 1]} : vector<72x512xf32> to vector<8x512xf32>
    %c128_i32_353 = arith.constant 128 : i32
    %756 = tpu.dynamic_rotate %755 by %c128_i32_353 dim 1 : vector<8x512xf32>, i32 -> vector<8x512xf32>
    %c200_354 = arith.constant 200 : index
    %c0_355 = arith.constant 0 : index
    %757 = vector.load %arg1[%c200_354, %c0_355] : memref<256x512xf32, #tpu.memory_space<vmem>>, vector<8x512xf32>
    %758 = arith.mulf %756, %757 : vector<8x512xf32>
    %759 = vector.extract_strided_slice %750 {offsets = [16, 0], sizes = [8, 512], strides = [1, 1]} : vector<72x512xf32> to vector<8x512xf32>
    %c120_i32_356 = arith.constant 120 : i32
    %760 = tpu.dynamic_rotate %759 by %c120_i32_356 dim 1 : vector<8x512xf32>, i32 -> vector<8x512xf32>
    %c208_357 = arith.constant 208 : index
    %c0_358 = arith.constant 0 : index
    %761 = vector.load %arg1[%c208_357, %c0_358] : memref<256x512xf32, #tpu.memory_space<vmem>>, vector<8x512xf32>
    %762 = arith.mulf %760, %761 : vector<8x512xf32>
    %763 = vector.extract_strided_slice %750 {offsets = [24, 0], sizes = [8, 512], strides = [1, 1]} : vector<72x512xf32> to vector<8x512xf32>
    %c8_i32_359 = arith.constant 8 : i32
    %764 = tpu.dynamic_rotate %763 by %c8_i32_359 dim 1 : vector<8x512xf32>, i32 -> vector<8x512xf32>
    %c216_360 = arith.constant 216 : index
    %c0_361 = arith.constant 0 : index
    %765 = vector.load %arg1[%c216_360, %c0_361] : memref<256x512xf32, #tpu.memory_space<vmem>>, vector<8x512xf32>
    %766 = arith.mulf %764, %765 : vector<8x512xf32>
    %767 = vector.extract_strided_slice %750 {offsets = [32, 0], sizes = [8, 512], strides = [1, 1]} : vector<72x512xf32> to vector<8x512xf32>
    %768 = vector.extract_strided_slice %750 {offsets = [40, 0], sizes = [8, 512], strides = [1, 1]} : vector<72x512xf32> to vector<8x512xf32>
    %c504_i32_362 = arith.constant 504 : i32
    %769 = tpu.dynamic_rotate %768 by %c504_i32_362 dim 1 : vector<8x512xf32>, i32 -> vector<8x512xf32>
    %c224_363 = arith.constant 224 : index
    %c0_364 = arith.constant 0 : index
    %770 = vector.load %arg1[%c224_363, %c0_364] : memref<256x512xf32, #tpu.memory_space<vmem>>, vector<8x512xf32>
    %771 = arith.mulf %769, %770 : vector<8x512xf32>
    %772 = vector.extract_strided_slice %750 {offsets = [48, 0], sizes = [8, 512], strides = [1, 1]} : vector<72x512xf32> to vector<8x512xf32>
    %c392_i32_365 = arith.constant 392 : i32
    %773 = tpu.dynamic_rotate %772 by %c392_i32_365 dim 1 : vector<8x512xf32>, i32 -> vector<8x512xf32>
    %c232_366 = arith.constant 232 : index
    %c0_367 = arith.constant 0 : index
    %774 = vector.load %arg1[%c232_366, %c0_367] : memref<256x512xf32, #tpu.memory_space<vmem>>, vector<8x512xf32>
    %775 = arith.mulf %773, %774 : vector<8x512xf32>
    %776 = vector.extract_strided_slice %750 {offsets = [56, 0], sizes = [8, 512], strides = [1, 1]} : vector<72x512xf32> to vector<8x512xf32>
    %c384_i32_368 = arith.constant 384 : i32
    %777 = tpu.dynamic_rotate %776 by %c384_i32_368 dim 1 : vector<8x512xf32>, i32 -> vector<8x512xf32>
    %c240_369 = arith.constant 240 : index
    %c0_370 = arith.constant 0 : index
    %778 = vector.load %arg1[%c240_369, %c0_370] : memref<256x512xf32, #tpu.memory_space<vmem>>, vector<8x512xf32>
    %779 = arith.mulf %777, %778 : vector<8x512xf32>
    %780 = vector.extract_strided_slice %750 {offsets = [64, 0], sizes = [8, 512], strides = [1, 1]} : vector<72x512xf32> to vector<8x512xf32>
    %c376_i32_371 = arith.constant 376 : i32
    %781 = tpu.dynamic_rotate %780 by %c376_i32_371 dim 1 : vector<8x512xf32>, i32 -> vector<8x512xf32>
    %c248_372 = arith.constant 248 : index
    %c0_373 = arith.constant 0 : index
    %782 = vector.load %arg1[%c248_372, %c0_373] : memref<256x512xf32, #tpu.memory_space<vmem>>, vector<8x512xf32>
    %783 = arith.mulf %781, %782 : vector<8x512xf32>
    %784 = arith.addf %754, %758 : vector<8x512xf32>
    %785 = arith.addf %762, %766 : vector<8x512xf32>
    %786 = arith.addf %767, %771 : vector<8x512xf32>
    %787 = arith.addf %775, %779 : vector<8x512xf32>
    %788 = arith.addf %784, %785 : vector<8x512xf32>
    %789 = arith.addf %786, %787 : vector<8x512xf32>
    %790 = arith.addf %788, %789 : vector<8x512xf32>
    %791 = arith.addf %790, %783 : vector<8x512xf32>
    %cst_374 = arith.constant dense<0.000000e+00> : vector<8xf32>
    %792 = vector.multi_reduction <add>, %791, %cst_374 [1] : vector<8x512xf32> to vector<8xf32>
    %793 = vector.shape_cast %792 : vector<8xf32> to vector<8x1xf32>
    %794 = arith.mulf %791, %791 : vector<8x512xf32>
    %cst_375 = arith.constant dense<0.000000e+00> : vector<8xf32>
    %795 = vector.multi_reduction <add>, %794, %cst_375 [1] : vector<8x512xf32> to vector<8xf32>
    %796 = vector.shape_cast %795 : vector<8xf32> to vector<8x1xf32>
    %cst_376 = arith.constant 0.001953125 : f32
    %797 = vector.broadcast %cst_376 : f32 to vector<8x1xf32>
    %798 = arith.mulf %793, %797 : vector<8x1xf32>
    %cst_377 = arith.constant 0.001953125 : f32
    %799 = vector.broadcast %cst_377 : f32 to vector<8x1xf32>
    %800 = arith.mulf %796, %799 : vector<8x1xf32>
    %801 = arith.mulf %798, %798 : vector<8x1xf32>
    %802 = arith.subf %800, %801 : vector<8x1xf32>
    %cst_378 = arith.constant 0.000000e+00 : f32
    %803 = vector.broadcast %cst_378 : f32 to vector<8x1xf32>
    %804 = arith.maximumf %802, %803 : vector<8x1xf32>
    %c0_379 = arith.constant 0 : index
    %c12 = arith.constant 12 : index
    %805 = vector.load %arg2[%c0_379, %c12] : memref<8x17xf32, #tpu.memory_space<vmem>>, vector<8x1xf32>
    %cst_380 = arith.constant 9.99999974E-6 : f32
    %806 = vector.broadcast %cst_380 : f32 to vector<8x1xf32>
    %807 = arith.addf %804, %806 : vector<8x1xf32>
    %808 = math.rsqrt %807 : vector<8x1xf32>
    %809 = arith.mulf %805, %808 : vector<8x1xf32>
    %c0_381 = arith.constant 0 : index
    %c12_382 = arith.constant 12 : index
    %810 = vector.load %arg3[%c0_381, %c12_382] : memref<8x17xf32, #tpu.memory_space<vmem>>, vector<8x1xf32>
    %811 = arith.mulf %798, %809 : vector<8x1xf32>
    %812 = arith.subf %810, %811 : vector<8x1xf32>
    %813 = vector.broadcast %809 : vector<8x1xf32> to vector<8x512xf32>
    %814 = arith.mulf %791, %813 : vector<8x512xf32>
    %815 = vector.broadcast %812 : vector<8x1xf32> to vector<8x512xf32>
    %816 = arith.addf %814, %815 : vector<8x512xf32>
    %cst_383 = arith.constant 0.000000e+00 : f32
    %817 = vector.broadcast %cst_383 : f32 to vector<8x512xf32>
    %818 = arith.cmpf oge, %816, %817 : vector<8x512xf32>
    %cst_384 = arith.constant 0.00999999977 : f32
    %819 = vector.broadcast %cst_384 : f32 to vector<8x512xf32>
    %820 = arith.mulf %819, %816 : vector<8x512xf32>
    %821 = arith.select %818, %816, %820 : vector<8x512xi1>, vector<8x512xf32>
    %822 = arith.truncf %821 : vector<8x512xf32> to vector<8x512xbf16>
    %c96_385 = arith.constant 96 : index
    %c0_386 = arith.constant 0 : index
    %823 = vector.load %arg24[%c96_385, %c0_386] : memref<136x512xbf16, #tpu.memory_space<vmem>>, vector<8x512xbf16>
    tpu.vector_store %arg24[%c96_385, %c0_386], %822 {strides = array<i32>} : memref<136x512xbf16, #tpu.memory_space<vmem>>, vector<8x512xbf16>,
    %c0_387 = arith.constant 0 : index
    %c0_388 = arith.constant 0 : index
    %824 = vector.load %arg24[%c0_387, %c0_388] : memref<136x512xbf16, #tpu.memory_space<vmem>>, vector<104x512xbf16>
    %c0_389 = arith.constant 0 : index
    %c0_390 = arith.constant 0 : index
    %825 = vector.load %arg18[%c0_389, %c0_390] : memref<8x104xbf16, #tpu.memory_space<vmem>>, vector<8x104xbf16>
    %cst_391 = arith.constant dense<0.000000e+00> : vector<8x512xf32>
    %826 = tpu.matmul %825, %824, %cst_391 {dimension_numbers = #tpu.dot_dimension_numbers<[1], [0], [0], [1], [0, 0, 1, 1], [], []>} : vector<8x104xbf16>, vector<104x512xbf16>, vector<8x512xf32> -> vector<8x512xf32>
    %cst_392 = arith.constant dense<0.000000e+00> : vector<8xf32>
    %827 = vector.multi_reduction <add>, %826, %cst_392 [1] : vector<8x512xf32> to vector<8xf32>
    %828 = vector.shape_cast %827 : vector<8xf32> to vector<8x1xf32>
    %829 = arith.mulf %826, %826 : vector<8x512xf32>
    %cst_393 = arith.constant dense<0.000000e+00> : vector<8xf32>
    %830 = vector.multi_reduction <add>, %829, %cst_393 [1] : vector<8x512xf32> to vector<8xf32>
    %831 = vector.shape_cast %830 : vector<8xf32> to vector<8x1xf32>
    %cst_394 = arith.constant 0.001953125 : f32
    %832 = vector.broadcast %cst_394 : f32 to vector<8x1xf32>
    %833 = arith.mulf %828, %832 : vector<8x1xf32>
    %cst_395 = arith.constant 0.001953125 : f32
    %834 = vector.broadcast %cst_395 : f32 to vector<8x1xf32>
    %835 = arith.mulf %831, %834 : vector<8x1xf32>
    %836 = arith.mulf %833, %833 : vector<8x1xf32>
    %837 = arith.subf %835, %836 : vector<8x1xf32>
    %cst_396 = arith.constant 0.000000e+00 : f32
    %838 = vector.broadcast %cst_396 : f32 to vector<8x1xf32>
    %839 = arith.maximumf %837, %838 : vector<8x1xf32>
    %c0_397 = arith.constant 0 : index
    %c13 = arith.constant 13 : index
    %840 = vector.load %arg2[%c0_397, %c13] : memref<8x17xf32, #tpu.memory_space<vmem>>, vector<8x1xf32>
    %cst_398 = arith.constant 9.99999974E-6 : f32
    %841 = vector.broadcast %cst_398 : f32 to vector<8x1xf32>
    %842 = arith.addf %839, %841 : vector<8x1xf32>
    %843 = math.rsqrt %842 : vector<8x1xf32>
    %844 = arith.mulf %840, %843 : vector<8x1xf32>
    %c0_399 = arith.constant 0 : index
    %c13_400 = arith.constant 13 : index
    %845 = vector.load %arg3[%c0_399, %c13_400] : memref<8x17xf32, #tpu.memory_space<vmem>>, vector<8x1xf32>
    %846 = arith.mulf %833, %844 : vector<8x1xf32>
    %847 = arith.subf %845, %846 : vector<8x1xf32>
    %848 = vector.broadcast %844 : vector<8x1xf32> to vector<8x512xf32>
    %849 = arith.mulf %826, %848 : vector<8x512xf32>
    %850 = vector.broadcast %847 : vector<8x1xf32> to vector<8x512xf32>
    %851 = arith.addf %849, %850 : vector<8x512xf32>
    %cst_401 = arith.constant 0.000000e+00 : f32
    %852 = vector.broadcast %cst_401 : f32 to vector<8x512xf32>
    %853 = arith.cmpf oge, %851, %852 : vector<8x512xf32>
    %cst_402 = arith.constant 0.00999999977 : f32
    %854 = vector.broadcast %cst_402 : f32 to vector<8x512xf32>
    %855 = arith.mulf %854, %851 : vector<8x512xf32>
    %856 = arith.select %853, %851, %855 : vector<8x512xi1>, vector<8x512xf32>
    %857 = arith.truncf %856 : vector<8x512xf32> to vector<8x512xbf16>
    %c104_403 = arith.constant 104 : index
    %c0_404 = arith.constant 0 : index
    %858 = vector.load %arg24[%c104_403, %c0_404] : memref<136x512xbf16, #tpu.memory_space<vmem>>, vector<8x512xbf16>
    tpu.vector_store %arg24[%c104_403, %c0_404], %857 {strides = array<i32>} : memref<136x512xbf16, #tpu.memory_space<vmem>>, vector<8x512xbf16>,
    %c0_405 = arith.constant 0 : index
    %c0_406 = arith.constant 0 : index
    %859 = vector.load %arg24[%c0_405, %c0_406] : memref<136x512xbf16, #tpu.memory_space<vmem>>, vector<112x512xbf16>
    %c0_407 = arith.constant 0 : index
    %c0_408 = arith.constant 0 : index
    %860 = vector.load %arg19[%c0_407, %c0_408] : memref<8x112xbf16, #tpu.memory_space<vmem>>, vector<8x112xbf16>
    %cst_409 = arith.constant dense<0.000000e+00> : vector<8x512xf32>
    %861 = tpu.matmul %860, %859, %cst_409 {dimension_numbers = #tpu.dot_dimension_numbers<[1], [0], [0], [1], [0, 0, 1, 1], [], []>} : vector<8x112xbf16>, vector<112x512xbf16>, vector<8x512xf32> -> vector<8x512xf32>
    %cst_410 = arith.constant dense<0.000000e+00> : vector<8xf32>
    %862 = vector.multi_reduction <add>, %861, %cst_410 [1] : vector<8x512xf32> to vector<8xf32>
    %863 = vector.shape_cast %862 : vector<8xf32> to vector<8x1xf32>
    %864 = arith.mulf %861, %861 : vector<8x512xf32>
    %cst_411 = arith.constant dense<0.000000e+00> : vector<8xf32>
    %865 = vector.multi_reduction <add>, %864, %cst_411 [1] : vector<8x512xf32> to vector<8xf32>
    %866 = vector.shape_cast %865 : vector<8xf32> to vector<8x1xf32>
    %cst_412 = arith.constant 0.001953125 : f32
    %867 = vector.broadcast %cst_412 : f32 to vector<8x1xf32>
    %868 = arith.mulf %863, %867 : vector<8x1xf32>
    %cst_413 = arith.constant 0.001953125 : f32
    %869 = vector.broadcast %cst_413 : f32 to vector<8x1xf32>
    %870 = arith.mulf %866, %869 : vector<8x1xf32>
    %871 = arith.mulf %868, %868 : vector<8x1xf32>
    %872 = arith.subf %870, %871 : vector<8x1xf32>
    %cst_414 = arith.constant 0.000000e+00 : f32
    %873 = vector.broadcast %cst_414 : f32 to vector<8x1xf32>
    %874 = arith.maximumf %872, %873 : vector<8x1xf32>
    %c0_415 = arith.constant 0 : index
    %c14 = arith.constant 14 : index
    %875 = vector.load %arg2[%c0_415, %c14] : memref<8x17xf32, #tpu.memory_space<vmem>>, vector<8x1xf32>
    %cst_416 = arith.constant 9.99999974E-6 : f32
    %876 = vector.broadcast %cst_416 : f32 to vector<8x1xf32>
    %877 = arith.addf %874, %876 : vector<8x1xf32>
    %878 = math.rsqrt %877 : vector<8x1xf32>
    %879 = arith.mulf %875, %878 : vector<8x1xf32>
    %c0_417 = arith.constant 0 : index
    %c14_418 = arith.constant 14 : index
    %880 = vector.load %arg3[%c0_417, %c14_418] : memref<8x17xf32, #tpu.memory_space<vmem>>, vector<8x1xf32>
    %881 = arith.mulf %868, %879 : vector<8x1xf32>
    %882 = arith.subf %880, %881 : vector<8x1xf32>
    %883 = vector.broadcast %879 : vector<8x1xf32> to vector<8x512xf32>
    %884 = arith.mulf %861, %883 : vector<8x512xf32>
    %885 = vector.broadcast %882 : vector<8x1xf32> to vector<8x512xf32>
    %886 = arith.addf %884, %885 : vector<8x512xf32>
    %cst_419 = arith.constant 0.000000e+00 : f32
    %887 = vector.broadcast %cst_419 : f32 to vector<8x512xf32>
    %888 = arith.cmpf oge, %886, %887 : vector<8x512xf32>
    %cst_420 = arith.constant 0.00999999977 : f32
    %889 = vector.broadcast %cst_420 : f32 to vector<8x512xf32>
    %890 = arith.mulf %889, %886 : vector<8x512xf32>
    %891 = arith.select %888, %886, %890 : vector<8x512xi1>, vector<8x512xf32>
    %892 = arith.truncf %891 : vector<8x512xf32> to vector<8x512xbf16>
    %c112_421 = arith.constant 112 : index
    %c0_422 = arith.constant 0 : index
    %893 = vector.load %arg24[%c112_421, %c0_422] : memref<136x512xbf16, #tpu.memory_space<vmem>>, vector<8x512xbf16>
    tpu.vector_store %arg24[%c112_421, %c0_422], %892 {strides = array<i32>} : memref<136x512xbf16, #tpu.memory_space<vmem>>, vector<8x512xbf16>,
    %c0_423 = arith.constant 0 : index
    %c0_424 = arith.constant 0 : index
    %894 = vector.load %arg24[%c0_423, %c0_424] : memref<136x512xbf16, #tpu.memory_space<vmem>>, vector<120x512xbf16>
    %c0_425 = arith.constant 0 : index
    %c0_426 = arith.constant 0 : index
    %895 = vector.load %arg20[%c0_425, %c0_426] : memref<8x120xbf16, #tpu.memory_space<vmem>>, vector<8x120xbf16>
    %cst_427 = arith.constant dense<0.000000e+00> : vector<8x512xf32>
    %896 = tpu.matmul %895, %894, %cst_427 {dimension_numbers = #tpu.dot_dimension_numbers<[1], [0], [0], [1], [0, 0, 1, 1], [], []>} : vector<8x120xbf16>, vector<120x512xbf16>, vector<8x512xf32> -> vector<8x512xf32>
    %cst_428 = arith.constant dense<0.000000e+00> : vector<8xf32>
    %897 = vector.multi_reduction <add>, %896, %cst_428 [1] : vector<8x512xf32> to vector<8xf32>
    %898 = vector.shape_cast %897 : vector<8xf32> to vector<8x1xf32>
    %899 = arith.mulf %896, %896 : vector<8x512xf32>
    %cst_429 = arith.constant dense<0.000000e+00> : vector<8xf32>
    %900 = vector.multi_reduction <add>, %899, %cst_429 [1] : vector<8x512xf32> to vector<8xf32>
    %901 = vector.shape_cast %900 : vector<8xf32> to vector<8x1xf32>
    %cst_430 = arith.constant 0.001953125 : f32
    %902 = vector.broadcast %cst_430 : f32 to vector<8x1xf32>
    %903 = arith.mulf %898, %902 : vector<8x1xf32>
    %cst_431 = arith.constant 0.001953125 : f32
    %904 = vector.broadcast %cst_431 : f32 to vector<8x1xf32>
    %905 = arith.mulf %901, %904 : vector<8x1xf32>
    %906 = arith.mulf %903, %903 : vector<8x1xf32>
    %907 = arith.subf %905, %906 : vector<8x1xf32>
    %cst_432 = arith.constant 0.000000e+00 : f32
    %908 = vector.broadcast %cst_432 : f32 to vector<8x1xf32>
    %909 = arith.maximumf %907, %908 : vector<8x1xf32>
    %c0_433 = arith.constant 0 : index
    %c15 = arith.constant 15 : index
    %910 = vector.load %arg2[%c0_433, %c15] : memref<8x17xf32, #tpu.memory_space<vmem>>, vector<8x1xf32>
    %cst_434 = arith.constant 9.99999974E-6 : f32
    %911 = vector.broadcast %cst_434 : f32 to vector<8x1xf32>
    %912 = arith.addf %909, %911 : vector<8x1xf32>
    %913 = math.rsqrt %912 : vector<8x1xf32>
    %914 = arith.mulf %910, %913 : vector<8x1xf32>
    %c0_435 = arith.constant 0 : index
    %c15_436 = arith.constant 15 : index
    %915 = vector.load %arg3[%c0_435, %c15_436] : memref<8x17xf32, #tpu.memory_space<vmem>>, vector<8x1xf32>
    %916 = arith.mulf %903, %914 : vector<8x1xf32>
    %917 = arith.subf %915, %916 : vector<8x1xf32>
    %918 = vector.broadcast %914 : vector<8x1xf32> to vector<8x512xf32>
    %919 = arith.mulf %896, %918 : vector<8x512xf32>
    %920 = vector.broadcast %917 : vector<8x1xf32> to vector<8x512xf32>
    %921 = arith.addf %919, %920 : vector<8x512xf32>
    %cst_437 = arith.constant 0.000000e+00 : f32
    %922 = vector.broadcast %cst_437 : f32 to vector<8x512xf32>
    %923 = arith.cmpf oge, %921, %922 : vector<8x512xf32>
    %cst_438 = arith.constant 0.00999999977 : f32
    %924 = vector.broadcast %cst_438 : f32 to vector<8x512xf32>
    %925 = arith.mulf %924, %921 : vector<8x512xf32>
    %926 = arith.select %923, %921, %925 : vector<8x512xi1>, vector<8x512xf32>
    %927 = arith.truncf %926 : vector<8x512xf32> to vector<8x512xbf16>
    %c120_439 = arith.constant 120 : index
    %c0_440 = arith.constant 0 : index
    %928 = vector.load %arg24[%c120_439, %c0_440] : memref<136x512xbf16, #tpu.memory_space<vmem>>, vector<8x512xbf16>
    tpu.vector_store %arg24[%c120_439, %c0_440], %927 {strides = array<i32>} : memref<136x512xbf16, #tpu.memory_space<vmem>>, vector<8x512xbf16>,
    %c0_441 = arith.constant 0 : index
    %c0_442 = arith.constant 0 : index
    %929 = vector.load %arg24[%c0_441, %c0_442] : memref<136x512xbf16, #tpu.memory_space<vmem>>, vector<128x512xbf16>
    %c0_443 = arith.constant 0 : index
    %c0_444 = arith.constant 0 : index
    %930 = vector.load %arg21[%c0_443, %c0_444] : memref<8x128xbf16, #tpu.memory_space<vmem>>, vector<8x128xbf16>
    %cst_445 = arith.constant dense<0.000000e+00> : vector<8x512xf32>
    %931 = tpu.matmul %930, %929, %cst_445 {dimension_numbers = #tpu.dot_dimension_numbers<[1], [0], [0], [1], [0, 0, 1, 1], [], []>} : vector<8x128xbf16>, vector<128x512xbf16>, vector<8x512xf32> -> vector<8x512xf32>
    %cst_446 = arith.constant dense<0.000000e+00> : vector<8xf32>
    %932 = vector.multi_reduction <add>, %931, %cst_446 [1] : vector<8x512xf32> to vector<8xf32>
    %933 = vector.shape_cast %932 : vector<8xf32> to vector<8x1xf32>
    %934 = arith.mulf %931, %931 : vector<8x512xf32>
    %cst_447 = arith.constant dense<0.000000e+00> : vector<8xf32>
    %935 = vector.multi_reduction <add>, %934, %cst_447 [1] : vector<8x512xf32> to vector<8xf32>
    %936 = vector.shape_cast %935 : vector<8xf32> to vector<8x1xf32>
    %cst_448 = arith.constant 0.001953125 : f32
    %937 = vector.broadcast %cst_448 : f32 to vector<8x1xf32>
    %938 = arith.mulf %933, %937 : vector<8x1xf32>
    %cst_449 = arith.constant 0.001953125 : f32
    %939 = vector.broadcast %cst_449 : f32 to vector<8x1xf32>
    %940 = arith.mulf %936, %939 : vector<8x1xf32>
    %941 = arith.mulf %938, %938 : vector<8x1xf32>
    %942 = arith.subf %940, %941 : vector<8x1xf32>
    %cst_450 = arith.constant 0.000000e+00 : f32
    %943 = vector.broadcast %cst_450 : f32 to vector<8x1xf32>
    %944 = arith.maximumf %942, %943 : vector<8x1xf32>
    %c0_451 = arith.constant 0 : index
    %c16_452 = arith.constant 16 : index
    %945 = vector.load %arg2[%c0_451, %c16_452] : memref<8x17xf32, #tpu.memory_space<vmem>>, vector<8x1xf32>
    %cst_453 = arith.constant 9.99999974E-6 : f32
    %946 = vector.broadcast %cst_453 : f32 to vector<8x1xf32>
    %947 = arith.addf %944, %946 : vector<8x1xf32>
    %948 = math.rsqrt %947 : vector<8x1xf32>
    %949 = arith.mulf %945, %948 : vector<8x1xf32>
    %c0_454 = arith.constant 0 : index
    %c16_455 = arith.constant 16 : index
    %950 = vector.load %arg3[%c0_454, %c16_455] : memref<8x17xf32, #tpu.memory_space<vmem>>, vector<8x1xf32>
    %951 = arith.mulf %938, %949 : vector<8x1xf32>
    %952 = arith.subf %950, %951 : vector<8x1xf32>
    %953 = vector.broadcast %949 : vector<8x1xf32> to vector<8x512xf32>
    %954 = arith.mulf %931, %953 : vector<8x512xf32>
    %955 = vector.broadcast %952 : vector<8x1xf32> to vector<8x512xf32>
    %956 = arith.addf %954, %955 : vector<8x512xf32>
    %cst_456 = arith.constant 0.000000e+00 : f32
    %957 = vector.broadcast %cst_456 : f32 to vector<8x512xf32>
    %958 = arith.cmpf oge, %956, %957 : vector<8x512xf32>
    %cst_457 = arith.constant 0.00999999977 : f32
    %959 = vector.broadcast %cst_457 : f32 to vector<8x512xf32>
    %960 = arith.mulf %959, %956 : vector<8x512xf32>
    %961 = arith.select %958, %956, %960 : vector<8x512xi1>, vector<8x512xf32>
    %962 = arith.truncf %961 : vector<8x512xf32> to vector<8x512xbf16>
    %c128_458 = arith.constant 128 : index
    %c0_459 = arith.constant 0 : index
    %963 = vector.load %arg24[%c128_458, %c0_459] : memref<136x512xbf16, #tpu.memory_space<vmem>>, vector<8x512xbf16>
    tpu.vector_store %arg24[%c128_458, %c0_459], %962 {strides = array<i32>} : memref<136x512xbf16, #tpu.memory_space<vmem>>, vector<8x512xbf16>,
    %c0_460 = arith.constant 0 : index
    %c0_461 = arith.constant 0 : index
    %964 = vector.load %arg24[%c0_460, %c0_461] : memref<136x512xbf16, #tpu.memory_space<vmem>>, vector<136x512xbf16>
    %c0_462 = arith.constant 0 : index
    %c0_463 = arith.constant 0 : index
    %965 = vector.load %arg22[%c0_462, %c0_463] : memref<72x136xbf16, #tpu.memory_space<vmem>>, vector<72x136xbf16>
    %cst_464 = arith.constant dense<0.000000e+00> : vector<72x512xf32>
    %966 = tpu.matmul %965, %964, %cst_464 {dimension_numbers = #tpu.dot_dimension_numbers<[1], [0], [0], [1], [0, 0, 1, 1], [], []>} : vector<72x136xbf16>, vector<136x512xbf16>, vector<72x512xf32> -> vector<72x512xf32>
    %967 = vector.extract_strided_slice %966 {offsets = [0, 0], sizes = [8, 512], strides = [1, 1]} : vector<72x512xf32> to vector<8x512xf32>
    %c17_i32_465 = arith.constant 17 : i32
    %968 = tpu.dynamic_rotate %967 by %c17_i32_465 dim 1 : vector<8x512xf32>, i32 -> vector<8x512xf32>
    %c0_466 = arith.constant 0 : index
    %c0_467 = arith.constant 0 : index
    %969 = vector.load %arg1[%c0_466, %c0_467] : memref<256x512xf32, #tpu.memory_space<vmem>>, vector<8x512xf32>
    %970 = arith.mulf %968, %969 : vector<8x512xf32>
    %971 = vector.extract_strided_slice %966 {offsets = [8, 0], sizes = [8, 512], strides = [1, 1]} : vector<72x512xf32> to vector<8x512xf32>
    %c16_i32_468 = arith.constant 16 : i32
    %972 = tpu.dynamic_rotate %971 by %c16_i32_468 dim 1 : vector<8x512xf32>, i32 -> vector<8x512xf32>
    %c8_469 = arith.constant 8 : index
    %c0_470 = arith.constant 0 : index
    %973 = vector.load %arg1[%c8_469, %c0_470] : memref<256x512xf32, #tpu.memory_space<vmem>>, vector<8x512xf32>
    %974 = arith.mulf %972, %973 : vector<8x512xf32>
    %975 = vector.extract_strided_slice %966 {offsets = [16, 0], sizes = [8, 512], strides = [1, 1]} : vector<72x512xf32> to vector<8x512xf32>
    %c15_i32_471 = arith.constant 15 : i32
    %976 = tpu.dynamic_rotate %975 by %c15_i32_471 dim 1 : vector<8x512xf32>, i32 -> vector<8x512xf32>
    %c16_472 = arith.constant 16 : index
    %c0_473 = arith.constant 0 : index
    %977 = vector.load %arg1[%c16_472, %c0_473] : memref<256x512xf32, #tpu.memory_space<vmem>>, vector<8x512xf32>
    %978 = arith.mulf %976, %977 : vector<8x512xf32>
    %979 = vector.extract_strided_slice %966 {offsets = [24, 0], sizes = [8, 512], strides = [1, 1]} : vector<72x512xf32> to vector<8x512xf32>
    %c1_i32_474 = arith.constant 1 : i32
    %980 = tpu.dynamic_rotate %979 by %c1_i32_474 dim 1 : vector<8x512xf32>, i32 -> vector<8x512xf32>
    %c24_475 = arith.constant 24 : index
    %c0_476 = arith.constant 0 : index
    %981 = vector.load %arg1[%c24_475, %c0_476] : memref<256x512xf32, #tpu.memory_space<vmem>>, vector<8x512xf32>
    %982 = arith.mulf %980, %981 : vector<8x512xf32>
    %983 = vector.extract_strided_slice %966 {offsets = [32, 0], sizes = [8, 512], strides = [1, 1]} : vector<72x512xf32> to vector<8x512xf32>
    %984 = vector.extract_strided_slice %966 {offsets = [40, 0], sizes = [8, 512], strides = [1, 1]} : vector<72x512xf32> to vector<8x512xf32>
    %c511_i32_477 = arith.constant 511 : i32
    %985 = tpu.dynamic_rotate %984 by %c511_i32_477 dim 1 : vector<8x512xf32>, i32 -> vector<8x512xf32>
    %c32_478 = arith.constant 32 : index
    %c0_479 = arith.constant 0 : index
    %986 = vector.load %arg1[%c32_478, %c0_479] : memref<256x512xf32, #tpu.memory_space<vmem>>, vector<8x512xf32>
    %987 = arith.mulf %985, %986 : vector<8x512xf32>
    %988 = vector.extract_strided_slice %966 {offsets = [48, 0], sizes = [8, 512], strides = [1, 1]} : vector<72x512xf32> to vector<8x512xf32>
    %c497_i32_480 = arith.constant 497 : i32
    %989 = tpu.dynamic_rotate %988 by %c497_i32_480 dim 1 : vector<8x512xf32>, i32 -> vector<8x512xf32>
    %c40_481 = arith.constant 40 : index
    %c0_482 = arith.constant 0 : index
    %990 = vector.load %arg1[%c40_481, %c0_482] : memref<256x512xf32, #tpu.memory_space<vmem>>, vector<8x512xf32>
    %991 = arith.mulf %989, %990 : vector<8x512xf32>
    %992 = vector.extract_strided_slice %966 {offsets = [56, 0], sizes = [8, 512], strides = [1, 1]} : vector<72x512xf32> to vector<8x512xf32>
    %c496_i32_483 = arith.constant 496 : i32
    %993 = tpu.dynamic_rotate %992 by %c496_i32_483 dim 1 : vector<8x512xf32>, i32 -> vector<8x512xf32>
    %c48_484 = arith.constant 48 : index
    %c0_485 = arith.constant 0 : index
    %994 = vector.load %arg1[%c48_484, %c0_485] : memref<256x512xf32, #tpu.memory_space<vmem>>, vector<8x512xf32>
    %995 = arith.mulf %993, %994 : vector<8x512xf32>
    %996 = vector.extract_strided_slice %966 {offsets = [64, 0], sizes = [8, 512], strides = [1, 1]} : vector<72x512xf32> to vector<8x512xf32>
    %c495_i32_486 = arith.constant 495 : i32
    %997 = tpu.dynamic_rotate %996 by %c495_i32_486 dim 1 : vector<8x512xf32>, i32 -> vector<8x512xf32>
    %c56_487 = arith.constant 56 : index
    %c0_488 = arith.constant 0 : index
    %998 = vector.load %arg1[%c56_487, %c0_488] : memref<256x512xf32, #tpu.memory_space<vmem>>, vector<8x512xf32>
    %999 = arith.mulf %997, %998 : vector<8x512xf32>
    %1000 = arith.addf %970, %974 : vector<8x512xf32>
    %1001 = arith.addf %978, %982 : vector<8x512xf32>
    %1002 = arith.addf %983, %987 : vector<8x512xf32>
    %1003 = arith.addf %991, %995 : vector<8x512xf32>
    %1004 = arith.addf %1000, %1001 : vector<8x512xf32>
    %1005 = arith.addf %1002, %1003 : vector<8x512xf32>
    %1006 = arith.addf %1004, %1005 : vector<8x512xf32>
    %1007 = arith.addf %1006, %999 : vector<8x512xf32>
    %c0_489 = arith.constant 0 : index
    %c0_490 = arith.constant 0 : index
    %1008 = vector.load %arg4[%c0_489, %c0_490] : memref<8x1xf32, #tpu.memory_space<vmem>>, vector<8x1xf32>
    %1009 = vector.broadcast %1008 : vector<8x1xf32> to vector<8x512xf32>
    %1010 = arith.addf %1007, %1009 : vector<8x512xf32>
    %c0_491 = arith.constant 0 : index
    %c0_492 = arith.constant 0 : index
    %1011 = vector.load %arg23[%c0_491, %c0_492] : memref<8x512xf32, #tpu.memory_space<vmem>>, vector<8x512xf32>
    tpu.vector_store %arg23[%c0_491, %c0_492], %1010 {strides = array<i32>} : memref<8x512xf32, #tpu.memory_space<vmem>>, vector<8x512xf32>,
    return
  }
}

</mosaic_0001>

<llo_original>
// kernel: _lambda_.1
$region0: #{_lambda_.1}
  #allocation0 [shape = 'u32[]', space=smem, size = 0x4, offset = 0x4, fixed_abs, tag = 'smem constant byte address 0x4 - core index']
  #allocation1 [shape = 'u32[72,128]{1,0:T(1,128)}', space=vmem, size = 0x9000, scoped, tag = 'internal scratch']
  #allocation2 [shape = 'bf16[136,512]{1,0:T(8,128)(2,1)}', space=vmem, size = 0x22000, scoped, tag = 'scratch operand']
  %s0 = inlined_call_operand.vmem [shape: bf16[4,512], index: 0, kind: input, shape index: {}]
  %s1 = inlined_call_operand.hbm [shape: f32[256,512], index: 1, kind: input, shape index: {}]
  %s2 = inlined_call_operand.hbm [shape: f32[8,17], index: 2, kind: input, shape index: {}]
  %s3 = inlined_call_operand.hbm [shape: f32[8,17], index: 3, kind: input, shape index: {}]
  %s4 = inlined_call_operand.hbm [shape: f32[8,1], index: 4, kind: input, shape index: {}]
  %s5 = inlined_call_operand.vmem [shape: bf16[72,4], index: 5, kind: input, shape index: {}]
  %s6 = inlined_call_operand.vmem [shape: bf16[72,8], index: 6, kind: input, shape index: {}]
  %s7 = inlined_call_operand.vmem [shape: bf16[72,16], index: 7, kind: input, shape index: {}]
  %s8 = inlined_call_operand.vmem [shape: bf16[72,24], index: 8, kind: input, shape index: {}]
  %s9 = inlined_call_operand.vmem [shape: bf16[72,32], index: 9, kind: input, shape index: {}]
  %s10 = inlined_call_operand.hbm [shape: bf16[8,40], index: 10, kind: input, shape index: {}]
  %s11 = inlined_call_operand.hbm [shape: bf16[8,48], index: 11, kind: input, shape index: {}]
  %s12 = inlined_call_operand.hbm [shape: bf16[8,56], index: 12, kind: input, shape index: {}]
  %s13 = inlined_call_operand.hbm [shape: bf16[8,64], index: 13, kind: input, shape index: {}]
  %s14 = inlined_call_operand.vmem [shape: bf16[72,72], index: 14, kind: input, shape index: {}]
  %s15 = inlined_call_operand.vmem [shape: bf16[72,80], index: 15, kind: input, shape index: {}]
  %s16 = inlined_call_operand.vmem [shape: bf16[72,88], index: 16, kind: input, shape index: {}]
  %s17 = inlined_call_operand.vmem [shape: bf16[72,96], index: 17, kind: input, shape index: {}]
  %s18 = inlined_call_operand.hbm [shape: bf16[8,104], index: 18, kind: input, shape index: {}]
  %s19 = inlined_call_operand.hbm [shape: bf16[8,112], index: 19, kind: input, shape index: {}]
  %s20 = inlined_call_operand.vmem [shape: bf16[8,120], index: 20, kind: input, shape index: {}]
  %s21 = inlined_call_operand.vmem [shape: bf16[8,128], index: 21, kind: input, shape index: {}]
  %s22 = inlined_call_operand.vmem [shape: bf16[72,136], index: 22, kind: input, shape index: {}]
  %s23 = inlined_call_operand.vmem [shape: f32[8,512], index: 23, kind: output, shape index: {}]
  %s24 = sld [smem:[#allocation0]]
  $region142: #{_lambda_.1} parent=0
    _
  %s26 = ssub.s32 1, %s24
  %s27 = scalar_select 0, %s26, %s24
  $region1: #{_lambda_.1} parent=0
    #allocation3 [shape = 'u8[524288]{0}', space=vmem, size = 0x80000, scoped, tag = 'input window, operand 1, single buffered']
    #allocation4 [shape = 's32[1]{0}', space=sflag, size = 0x4, scoped, tag = 'scoped memory for _lambda_.1']
    #allocation5 [shape = 'u8[4096]{0}', space=vmem, size = 0x1000, scoped, tag = 'input window, operand 2, single buffered']
    #allocation6 [shape = 's32[1]{0}', space=sflag, size = 0x4, scoped, tag = 'scoped memory for _lambda_.1']
    #allocation7 [shape = 'u8[4096]{0}', space=vmem, size = 0x1000, scoped, tag = 'input window, operand 3, single buffered']
    #allocation8 [shape = 'u8[4096]{0}', space=vmem, size = 0x1000, scoped, tag = 'input window, operand 4, single buffered']
    #allocation9 [shape = 's32[1]{0}', space=sflag, size = 0x4, scoped, tag = 'scoped memory for _lambda_.1']
    #allocation10 [shape = 'u8[2048]{0}', space=vmem, size = 0x800, scoped, tag = 'input window, operand 10, single buffered']
    #allocation11 [shape = 'u8[2048]{0}', space=vmem, size = 0x800, scoped, tag = 'input window, operand 11, single buffered']
    #allocation12 [shape = 's32[1]{0}', space=sflag, size = 0x4, scoped, tag = 'scoped memory for _lambda_.1']
    #allocation13 [shape = 'u8[2048]{0}', space=vmem, size = 0x800, scoped, tag = 'input window, operand 12, single buffered']
    #allocation14 [shape = 'u8[2048]{0}', space=vmem, size = 0x800, scoped, tag = 'input window, operand 13, single buffered']
    #allocation15 [shape = 's32[1]{0}', space=sflag, size = 0x4, scoped, tag = 'scoped memory for _lambda_.1']
    #allocation16 [shape = 'u8[2048]{0}', space=vmem, size = 0x800, scoped, tag = 'input window, operand 18, single buffered']
    #allocation17 [shape = 'u8[2048]{0}', space=vmem, size = 0x800, scoped, tag = 'input window, operand 19, single buffered']
    #allocation18 [shape = 's32[1]{0}', space=sflag, size = 0x4, scoped, tag = 'scoped memory for _lambda_.1']
    %28 = vsyncpa [#allocation4], 0
    %29 = vsyncpa [#allocation6], 0
    %30 = vsyncpa [#allocation9], 0
    %31 = vsyncpa [#allocation12], 0
    %32 = vsyncpa [#allocation15], 0
    %33 = vsyncpa [#allocation18], 0
    // Predicated region
    $region2: #{_lambda_.1} parent=1 // pred_check
      _
    $region3: #{_lambda_.1} parent=1 // pred_check_branch
      %35 = sbr.rel (0) target = $region5
    $region4: #{_lambda_.1} parent=1 // pred_region
      _
    $region5: #{_lambda_.1} parent=1 // pred_fallthru
      _
    // Predicated region
    $region6: #{_lambda_.1} parent=1 // pred_check
      _
    $region7: #{_lambda_.1} parent=1 // pred_check_branch
      %37 = sbr.rel (0) target = $region9
    $region8: #{_lambda_.1} parent=1 // pred_region
      %39 = vsyncadd [#allocation4], 0
      %s40 = sshll.u32 %s1, 4
      %s41 = int_to_ptr.hbm [resolvable:$true] %s40
      %s42 = sshll.u32 [#allocation3], 4
      %s43 = int_to_ptr.vmem [resolvable:$true] %s42
      %48 = dma.hbm_to_vmem [thread:$0]  %s41, 16384, %s43, [#allocation4], 512, 512, 32
    $region9: #{_lambda_.1} parent=1 // pred_fallthru
      _
    // Predicated region
    $region10: #{_lambda_.1} parent=1 // pred_check
      _
    $region11: #{_lambda_.1} parent=1 // pred_check_branch
      %50 = sbr.rel (0) target = $region13
    $region12: #{_lambda_.1} parent=1 // pred_region
      %52 = vsyncadd [#allocation6], 0
      %s54 = sshll.u32 %s2, 4
      %s55 = int_to_ptr.hbm [resolvable:$true] %s54
      %s56 = sshll.u32 [#allocation5], 4
      %s57 = int_to_ptr.vmem [resolvable:$true] %s56
      %59 = dma.hbm_to_vmem [thread:$0]  %s55, 128, %s57, [#allocation6]
    $region13: #{_lambda_.1} parent=1 // pred_fallthru
      _
    // Predicated region
    $region14: #{_lambda_.1} parent=1 // pred_check
      _
    $region15: #{_lambda_.1} parent=1 // pred_check_branch
      %61 = sbr.rel (0) target = $region17
    $region16: #{_lambda_.1} parent=1 // pred_region
      %63 = vsyncadd [#allocation6], 0
      %s65 = sshll.u32 %s3, 4
      %s66 = int_to_ptr.hbm [resolvable:$true] %s65
      %s67 = sshll.u32 [#allocation7], 4
      %s68 = int_to_ptr.vmem [resolvable:$true] %s67
      %70 = dma.hbm_to_vmem [thread:$0]  %s66, 128, %s68, [#allocation6]
    $region17: #{_lambda_.1} parent=1 // pred_fallthru
      _
    // Predicated region
    $region18: #{_lambda_.1} parent=1 // pred_check
      _
    $region19: #{_lambda_.1} parent=1 // pred_check_branch
      %72 = sbr.rel (0) target = $region21
    $region20: #{_lambda_.1} parent=1 // pred_region
      %74 = vsyncadd [#allocation9], 0
      %s76 = sshll.u32 %s4, 4
      %s77 = int_to_ptr.hbm [resolvable:$true] %s76
      %s78 = sshll.u32 [#allocation8], 4
      %s79 = int_to_ptr.vmem [resolvable:$true] %s78
      %81 = dma.hbm_to_vmem [thread:$0]  %s77, 128, %s79, [#allocation9]
    $region21: #{_lambda_.1} parent=1 // pred_fallthru
      _
    // Predicated region
    $region22: #{_lambda_.1} parent=1 // pred_check
      _
    $region23: #{_lambda_.1} parent=1 // pred_check_branch
      %83 = sbr.rel (0) target = $region25
    $region24: #{_lambda_.1} parent=1 // pred_region
      _
    $region25: #{_lambda_.1} parent=1 // pred_fallthru
      _
    // Predicated region
    $region26: #{_lambda_.1} parent=1 // pred_check
      _
    $region27: #{_lambda_.1} parent=1 // pred_check_branch
      %85 = sbr.rel (0) target = $region29
    $region28: #{_lambda_.1} parent=1 // pred_region
      _
    $region29: #{_lambda_.1} parent=1 // pred_fallthru
      _
    // Predicated region
    $region30: #{_lambda_.1} parent=1 // pred_check
      _
    $region31: #{_lambda_.1} parent=1 // pred_check_branch
      %87 = sbr.rel (0) target = $region33
    $region32: #{_lambda_.1} parent=1 // pred_region
      _
    $region33: #{_lambda_.1} parent=1 // pred_fallthru
      _
    // Predicated region
    $region34: #{_lambda_.1} parent=1 // pred_check
      _
    $region35: #{_lambda_.1} parent=1 // pred_check_branch
      %89 = sbr.rel (0) target = $region37
    $region36: #{_lambda_.1} parent=1 // pred_region
      _
    $region37: #{_lambda_.1} parent=1 // pred_fallthru
      _
    // Predicated region
    $region38: #{_lambda_.1} parent=1 // pred_check
      _
    $region39: #{_lambda_.1} parent=1 // pred_check_branch
      %91 = sbr.rel (0) target = $region41
    $region40: #{_lambda_.1} parent=1 // pred_region
      _
    $region41: #{_lambda_.1} parent=1 // pred_fallthru
      _
    // Predicated region
    $region42: #{_lambda_.1} parent=1 // pred_check
      _
    $region43: #{_lambda_.1} parent=1 // pred_check_branch
      %93 = sbr.rel (0) target = $region45
    $region44: #{_lambda_.1} parent=1 // pred_region
      %95 = vsyncadd [#allocation9], 0
      %s97 = sshll.u32 %s10, 4
      %s98 = int_to_ptr.hbm [resolvable:$true] %s97
      %s99 = sshll.u32 [#allocation10], 4
      %s100 = int_to_ptr.vmem [resolvable:$true] %s99
      %102 = dma.hbm_to_vmem [thread:$0]  %s98, 64, %s100, [#allocation9]
    $region45: #{_lambda_.1} parent=1 // pred_fallthru
      _
    // Predicated region
    $region46: #{_lambda_.1} parent=1 // pred_check
      _
    $region47: #{_lambda_.1} parent=1 // pred_check_branch
      %104 = sbr.rel (0) target = $region49
    $region48: #{_lambda_.1} parent=1 // pred_region
      %106 = vsyncadd [#allocation12], 0
      %s108 = sshll.u32 %s11, 4
      %s109 = int_to_ptr.hbm [resolvable:$true] %s108
      %s110 = sshll.u32 [#allocation11], 4
      %s111 = int_to_ptr.vmem [resolvable:$true] %s110
      %113 = dma.hbm_to_vmem [thread:$0]  %s109, 64, %s111, [#allocation12]
    $region49: #{_lambda_.1} parent=1 // pred_fallthru
      _
    // Predicated region
    $region50: #{_lambda_.1} parent=1 // pred_check
      _
    $region51: #{_lambda_.1} parent=1 // pred_check_branch
      %115 = sbr.rel (0) target = $region53
    $region52: #{_lambda_.1} parent=1 // pred_region
      %117 = vsyncadd [#allocation12], 0
      %s119 = sshll.u32 %s12, 4
      %s120 = int_to_ptr.hbm [resolvable:$true] %s119
      %s121 = sshll.u32 [#allocation13], 4
      %s122 = int_to_ptr.vmem [resolvable:$true] %s121
      %124 = dma.hbm_to_vmem [thread:$0]  %s120, 64, %s122, [#allocation12]
    $region53: #{_lambda_.1} parent=1 // pred_fallthru
      _
    // Predicated region
    $region54: #{_lambda_.1} parent=1 // pred_check
      _
    $region55: #{_lambda_.1} parent=1 // pred_check_branch
      %126 = sbr.rel (0) target = $region57
    $region56: #{_lambda_.1} parent=1 // pred_region
      %128 = vsyncadd [#allocation15], 0
      %s130 = sshll.u32 %s13, 4
      %s131 = int_to_ptr.hbm [resolvable:$true] %s130
      %s132 = sshll.u32 [#allocation14], 4
      %s133 = int_to_ptr.vmem [resolvable:$true] %s132
      %135 = dma.hbm_to_vmem [thread:$0]  %s131, 64, %s133, [#allocation15]
    $region57: #{_lambda_.1} parent=1 // pred_fallthru
      _
    // Predicated region
    $region58: #{_lambda_.1} parent=1 // pred_check
      _
    $region59: #{_lambda_.1} parent=1 // pred_check_branch
      %137 = sbr.rel (0) target = $region61
    $region60: #{_lambda_.1} parent=1 // pred_region
      _
    $region61: #{_lambda_.1} parent=1 // pred_fallthru
      _
    // Predicated region
    $region62: #{_lambda_.1} parent=1 // pred_check
      _
    $region63: #{_lambda_.1} parent=1 // pred_check_branch
      %139 = sbr.rel (0) target = $region65
    $region64: #{_lambda_.1} parent=1 // pred_region
      _
    $region65: #{_lambda_.1} parent=1 // pred_fallthru
      _
    // Predicated region
    $region66: #{_lambda_.1} parent=1 // pred_check
      _
    $region67: #{_lambda_.1} parent=1 // pred_check_branch
      %141 = sbr.rel (0) target = $region69
    $region68: #{_lambda_.1} parent=1 // pred_region
      _
    $region69: #{_lambda_.1} parent=1 // pred_fallthru
      _
    // Predicated region
    $region70: #{_lambda_.1} parent=1 // pred_check
      _
    $region71: #{_lambda_.1} parent=1 // pred_check_branch
      %143 = sbr.rel (0) target = $region73
    $region72: #{_lambda_.1} parent=1 // pred_region
      _
    $region73: #{_lambda_.1} parent=1 // pred_fallthru
      _
    // Predicated region
    $region74: #{_lambda_.1} parent=1 // pred_check
      _
    $region75: #{_lambda_.1} parent=1 // pred_check_branch
      %145 = sbr.rel (0) target = $region77
    $region76: #{_lambda_.1} parent=1 // pred_region
      %147 = vsyncadd [#allocation15], 0
      %s149 = sshll.u32 %s18, 4
      %s150 = int_to_ptr.hbm [resolvable:$true] %s149
      %s151 = sshll.u32 [#allocation16], 4
      %s152 = int_to_ptr.vmem [resolvable:$true] %s151
      %154 = dma.hbm_to_vmem [thread:$0]  %s150, 64, %s152, [#allocation15]
    $region77: #{_lambda_.1} parent=1 // pred_fallthru
      _
    // Predicated region
    $region78: #{_lambda_.1} parent=1 // pred_check
      _
    $region79: #{_lambda_.1} parent=1 // pred_check_branch
      %156 = sbr.rel (0) target = $region81
    $region80: #{_lambda_.1} parent=1 // pred_region
      %158 = vsyncadd [#allocation18], 0
      %s160 = sshll.u32 %s19, 4
      %s161 = int_to_ptr.hbm [resolvable:$true] %s160
      %s162 = sshll.u32 [#allocation17], 4
      %s163 = int_to_ptr.vmem [resolvable:$true] %s162
      %165 = dma.hbm_to_vmem [thread:$0]  %s161, 64, %s163, [#allocation18]
    $region81: #{_lambda_.1} parent=1 // pred_fallthru
      _
    // Predicated region
    $region82: #{_lambda_.1} parent=1 // pred_check
      _
    $region83: #{_lambda_.1} parent=1 // pred_check_branch
      %167 = sbr.rel (0) target = $region85
    $region84: #{_lambda_.1} parent=1 // pred_region
      _
    $region85: #{_lambda_.1} parent=1 // pred_fallthru
      _
    // Predicated region
    $region86: #{_lambda_.1} parent=1 // pred_check
      _
    $region87: #{_lambda_.1} parent=1 // pred_check_branch
      %169 = sbr.rel (0) target = $region89
    $region88: #{_lambda_.1} parent=1 // pred_region
      _
    $region89: #{_lambda_.1} parent=1 // pred_fallthru
      _
    // Predicated region
    $region90: #{_lambda_.1} parent=1 // pred_check
      _
    $region91: #{_lambda_.1} parent=1 // pred_check_branch
      %171 = sbr.rel (0) target = $region93
    $region92: #{_lambda_.1} parent=1 // pred_region
      _
    $region93: #{_lambda_.1} parent=1 // pred_fallthru
      _
    // Predicated region
    $region94: #{_lambda_.1} parent=1 // pred_check
      _
    $region95: #{_lambda_.1} parent=1 // pred_check_branch
      %173 = sbr.rel (0) target = $region97
    $region96: #{_lambda_.1} parent=1 // pred_region
      %175 = dma.done [#allocation4], 16384
    $region97: #{_lambda_.1} parent=1 // pred_fallthru
      _
    // Predicated region
    $region98: #{_lambda_.1} parent=1 // pred_check
      _
    $region99: #{_lambda_.1} parent=1 // pred_check_branch
      %177 = sbr.rel (0) target = $region101
    $region100: #{_lambda_.1} parent=1 // pred_region
      %179 = dma.done [#allocation6], 128
    $region101: #{_lambda_.1} parent=1 // pred_fallthru
      _
    // Predicated region
    $region102: #{_lambda_.1} parent=1 // pred_check
      _
    $region103: #{_lambda_.1} parent=1 // pred_check_branch
      %181 = sbr.rel (0) target = $region105
    $region104: #{_lambda_.1} parent=1 // pred_region
      %183 = dma.done [#allocation6], 128
    $region105: #{_lambda_.1} parent=1 // pred_fallthru
      _
    // Predicated region
    $region106: #{_lambda_.1} parent=1 // pred_check
      _
    $region107: #{_lambda_.1} parent=1 // pred_check_branch
      %185 = sbr.rel (0) target = $region109
    $region108: #{_lambda_.1} parent=1 // pred_region
      %187 = dma.done [#allocation9], 128
    $region109: #{_lambda_.1} parent=1 // pred_fallthru
      _
    // Predicated region
    $region110: #{_lambda_.1} parent=1 // pred_check
      _
    $region111: #{_lambda_.1} parent=1 // pred_check_branch
      %189 = sbr.rel (0) target = $region113
    $region112: #{_lambda_.1} parent=1 // pred_region
      %191 = dma.done [#allocation9], 64
    $region113: #{_lambda_.1} parent=1 // pred_fallthru
      _
    // Predicated region
    $region114: #{_lambda_.1} parent=1 // pred_check
      _
    $region115: #{_lambda_.1} parent=1 // pred_check_branch
      %193 = sbr.rel (0) target = $region117
    $region116: #{_lambda_.1} parent=1 // pred_region
      %195 = dma.done [#allocation12], 64
    $region117: #{_lambda_.1} parent=1 // pred_fallthru
      _
    // Predicated region
    $region118: #{_lambda_.1} parent=1 // pred_check
      _
    $region119: #{_lambda_.1} parent=1 // pred_check_branch
      %197 = sbr.rel (0) target = $region121
    $region120: #{_lambda_.1} parent=1 // pred_region
      %199 = dma.done [#allocation12], 64
    $region121: #{_lambda_.1} parent=1 // pred_fallthru
      _
    // Predicated region
    $region122: #{_lambda_.1} parent=1 // pred_check
      _
    $region123: #{_lambda_.1} parent=1 // pred_check_branch
      %201 = sbr.rel (0) target = $region125
    $region124: #{_lambda_.1} parent=1 // pred_region
      %203 = dma.done [#allocation15], 64
    $region125: #{_lambda_.1} parent=1 // pred_fallthru
      _
    // Predicated region
    $region126: #{_lambda_.1} parent=1 // pred_check
      _
    $region127: #{_lambda_.1} parent=1 // pred_check_branch
      %205 = sbr.rel (0) target = $region129
    $region128: #{_lambda_.1} parent=1 // pred_region
      %207 = dma.done [#allocation15], 64
    $region129: #{_lambda_.1} parent=1 // pred_fallthru
      _
    // Predicated region
    $region130: #{_lambda_.1} parent=1 // pred_check
      _
    $region131: #{_lambda_.1} parent=1 // pred_check_branch
      %209 = sbr.rel (0) target = $region133
    $region132: #{_lambda_.1} parent=1 // pred_region
      %211 = dma.done [#allocation18], 64
    $region133: #{_lambda_.1} parent=1 // pred_fallthru
      _
    %v213 = vld [vmem:[%s0] sm:$0xff]
    %v214 = vld [vmem:[%s5] sm:$0xf]
    %v215 = vld [vmem:[%s5 + $0x4] sm:$0xf]
    %v216 = vld [vmem:[%s5 + $0x8] sm:$0xf]
    %v217 = vld [vmem:[%s5 + $0xc] sm:$0xf]
    %v218 = vld [vmem:[%s5 + $0x10] sm:$0xf]
    %v219 = vld [vmem:[%s5 + $0x14] sm:$0xf]
    %v220 = vld [vmem:[%s5 + $0x18] sm:$0xf]
    %v221 = vld [vmem:[%s5 + $0x1c] sm:$0xf]
    %v222 = vld [vmem:[%s5 + $0x20] sm:$0xf]
    %v232 = vunpack.c.l.b16 %v214
    %v233 = vunpack.c.l.b16 %v215
    %v234 = vunpack.c.l.b16 %v216
    %v235 = vunpack.c.l.b16 %v217
    %v236 = vunpack.c.l.b16 %v218
    %v237 = vunpack.c.l.b16 %v219
    %v238 = vunpack.c.l.b16 %v220
    %v239 = vunpack.c.l.b16 %v221
    %v240 = vunpack.c.l.b16 %v222
    %v241 = vpack.c.b16 %v233, %v232
    %v242 = vpack.c.b16 %v235, %v234
    %v243 = vpack.c.b16 %v237, %v236
    %v244 = vpack.c.b16 %v239, %v238
    %v245 = vpack.c.b16 %v240, %v240
    %247 = vst [vmem:[#allocation1] ss:$4 sm:$0xff] %v213
    %v248 = vld.sshfl [vmem:[#allocation1] sm:$0xff pattern:$0x73625140]
    %v249 = vld.sshfl [vmem:[#allocation1 + $0x8] sm:$0xff pattern:$0x73625140]
    %v250 = vld.sshfl [vmem:[#allocation1 + $0x10] sm:$0xff pattern:$0x73625140]
    %v251 = vld.sshfl [vmem:[#allocation1 + $0x18] sm:$0xff pattern:$0x73625140]
    %vm252 = vcmask 31744
    %v254 = vsel %vm252, %v241, 0
    %v257 = vsel %vm252, %v242, 0
    %v260 = vsel %vm252, %v243, 0
    %v263 = vsel %vm252, %v244, 0
    %v266 = vsel %vm252, %v245, 0
    %vm268 = vcmask 1041408
    %v269 = vsel %vm268, %v248, 0
    %v271 = vsel %vm268, %v249, 0
    %v273 = vsel %vm268, %v250, 0
    %v275 = vsel %vm268, %v251, 0
    %277 = vmatpush.bf16.msra.mxu0 0
    %278 = vmatpush.bf16.msra.mxu0 0
    %279 = vmatpush.bf16.msra.mxu0 0
    %280 = vmatpush.bf16.msra.mxu0 0
    %281 = vmatpush.bf16.msra.mxu0 0
    %282 = vmatpush.bf16.msra.mxu0 0
    %283 = vmatpush.bf16.msra.mxu0 0
    %284 = vmatpush.bf16.msra.mxu0 %v269
    %285 = vmatmul.bf16.gmra.mxu0 %v254
    %v286 = vpop.f32.mrf.mxu0
    %v287 = vadd.f32 0.0, %v286
    %v288 = vpop.f32.mrf.mxu0
    %v289 = vadd.f32 0.0, %v288
    %290 = vmatmul.bf16.gmra.mxu0 %v257
    %v291 = vpop.f32.mrf.mxu0
    %v292 = vadd.f32 0.0, %v291
    %v293 = vpop.f32.mrf.mxu0
    %v294 = vadd.f32 0.0, %v293
    %295 = vmatmul.bf16.gmra.mxu0 %v260
    %v296 = vpop.f32.mrf.mxu0
    %v297 = vadd.f32 0.0, %v296
    %v298 = vpop.f32.mrf.mxu0
    %v299 = vadd.f32 0.0, %v298
    %300 = vmatmul.bf16.gmra.mxu0 %v263
    %v301 = vpop.f32.mrf.mxu0
    %v302 = vadd.f32 0.0, %v301
    %v303 = vpop.f32.mrf.mxu0
    %v304 = vadd.f32 0.0, %v303
    %305 = vmatmul.bf16.gmra.mxu0 %v266
    %v306 = vpop.f32.mrf.mxu0
    %v307 = vadd.f32 0.0, %v306
    %v308 = vpop.f32.mrf.mxu0
    %309 = vdwg.mxu0
    %310 = vmatpush.bf16.msra.mxu0 0
    %311 = vmatpush.bf16.msra.mxu0 0
    %312 = vmatpush.bf16.msra.mxu0 0
    %313 = vmatpush.bf16.msra.mxu0 0
    %314 = vmatpush.bf16.msra.mxu0 0
    %315 = vmatpush.bf16.msra.mxu0 0
    %316 = vmatpush.bf16.msra.mxu0 0
    %317 = vmatpush.bf16.msra.mxu0 %v271
    %318 = vmatmul.bf16.gmra.mxu0 %v254
    %v319 = vpop.f32.mrf.mxu0
    %v320 = vadd.f32 0.0, %v319
    %v321 = vpop.f32.mrf.mxu0
    %v322 = vadd.f32 0.0, %v321
    %323 = vmatmul.bf16.gmra.mxu0 %v257
    %v324 = vpop.f32.mrf.mxu0
    %v325 = vadd.f32 0.0, %v324
    %v326 = vpop.f32.mrf.mxu0
    %v327 = vadd.f32 0.0, %v326
    %328 = vmatmul.bf16.gmra.mxu0 %v260
    %v329 = vpop.f32.mrf.mxu0
    %v330 = vadd.f32 0.0, %v329
    %v331 = vpop.f32.mrf.mxu0
    %v332 = vadd.f32 0.0, %v331
    %333 = vmatmul.bf16.gmra.mxu0 %v263
    %v334 = vpop.f32.mrf.mxu0
    %v335 = vadd.f32 0.0, %v334
    %v336 = vpop.f32.mrf.mxu0
    %v337 = vadd.f32 0.0, %v336
    %338 = vmatmul.bf16.gmra.mxu0 %v266
    %v339 = vpop.f32.mrf.mxu0
    %v340 = vadd.f32 0.0, %v339
    %v341 = vpop.f32.mrf.mxu0
    %342 = vdwg.mxu0
    %343 = vmatpush.bf16.msra.mxu0 0
    %344 = vmatpush.bf16.msra.mxu0 0
    %345 = vmatpush.bf16.msra.mxu0 0
    %346 = vmatpush.bf16.msra.mxu0 0
    %347 = vmatpush.bf16.msra.mxu0 0
    %348 = vmatpush.bf16.msra.mxu0 0
    %349 = vmatpush.bf16.msra.mxu0 0
    %350 = vmatpush.bf16.msra.mxu0 %v273
    %351 = vmatmul.bf16.gmra.mxu0 %v254
    %v352 = vpop.f32.mrf.mxu0
    %v353 = vadd.f32 0.0, %v352
    %v354 = vpop.f32.mrf.mxu0
    %v355 = vadd.f32 0.0, %v354
    %356 = vmatmul.bf16.gmra.mxu0 %v257
    %v357 = vpop.f32.mrf.mxu0
    %v358 = vadd.f32 0.0, %v357
    %v359 = vpop.f32.mrf.mxu0
    %v360 = vadd.f32 0.0, %v359
    %361 = vmatmul.bf16.gmra.mxu0 %v260
    %v362 = vpop.f32.mrf.mxu0
    %v363 = vadd.f32 0.0, %v362
    %v364 = vpop.f32.mrf.mxu0
    %v365 = vadd.f32 0.0, %v364
    %366 = vmatmul.bf16.gmra.mxu0 %v263
    %v367 = vpop.f32.mrf.mxu0
    %v368 = vadd.f32 0.0, %v367
    %v369 = vpop.f32.mrf.mxu0
    %v370 = vadd.f32 0.0, %v369
    %371 = vmatmul.bf16.gmra.mxu0 %v266
    %v372 = vpop.f32.mrf.mxu0
    %v373 = vadd.f32 0.0, %v372
    %v374 = vpop.f32.mrf.mxu0
    %375 = vdwg.mxu0
    %376 = vmatpush.bf16.msra.mxu0 0
    %377 = vmatpush.bf16.msra.mxu0 0
    %378 = vmatpush.bf16.msra.mxu0 0
    %379 = vmatpush.bf16.msra.mxu0 0
    %380 = vmatpush.bf16.msra.mxu0 0
    %381 = vmatpush.bf16.msra.mxu0 0
    %382 = vmatpush.bf16.msra.mxu0 0
    %383 = vmatpush.bf16.msra.mxu0 %v275
    %384 = vmatmul.bf16.gmra.mxu0 %v254
    %v385 = vpop.f32.mrf.mxu0
    %v386 = vadd.f32 0.0, %v385
    %v387 = vpop.f32.mrf.mxu0
    %v388 = vadd.f32 0.0, %v387
    %389 = vmatmul.bf16.gmra.mxu0 %v257
    %v390 = vpop.f32.mrf.mxu0
    %v391 = vadd.f32 0.0, %v390
    %v392 = vpop.f32.mrf.mxu0
    %v393 = vadd.f32 0.0, %v392
    %394 = vmatmul.bf16.gmra.mxu0 %v260
    %v395 = vpop.f32.mrf.mxu0
    %v396 = vadd.f32 0.0, %v395
    %v397 = vpop.f32.mrf.mxu0
    %v398 = vadd.f32 0.0, %v397
    %399 = vmatmul.bf16.gmra.mxu0 %v263
    %v400 = vpop.f32.mrf.mxu0
    %v401 = vadd.f32 0.0, %v400
    %v402 = vpop.f32.mrf.mxu0
    %v403 = vadd.f32 0.0, %v402
    %404 = vmatmul.bf16.gmra.mxu0 %v266
    %v405 = vpop.f32.mrf.mxu0
    %v406 = vadd.f32 0.0, %v405
    %v407 = vpop.f32.mrf.mxu0
    %408 = vdwg.mxu0
    %409 = vrot.lane.b32.xlu0 %v287, 17
    %v410 = vpop.permute.xlu0 %409
    %411 = vrot.lane.b32.xlu0 %v320, 17
    %v412 = vpop.permute.xlu0 %411
    %413 = vrot.lane.b32.xlu0 %v353, 17
    %v414 = vpop.permute.xlu0 %413
    %415 = vrot.lane.b32.xlu0 %v386, 17
    %v416 = vpop.permute.xlu0 %415
    %v417 = vlaneseq
    %v418 = vand.u32 %v417, 127
    %vm419 = vcmp.lt.s32.totalorder %v418, 17
    %v420 = vsel %vm419, %v414, %v416
    %v421 = vsel %vm419, %v412, %v414
    %v422 = vsel %vm419, %v410, %v412
    %v423 = vsel %vm419, %v416, %v410
    %v424 = vld [vmem:[#allocation3] sm:$0xff]
    %v425 = vld [vmem:[#allocation3 + $0x8] sm:$0xff]
    %v426 = vld [vmem:[#allocation3 + $0x10] sm:$0xff]
    %v427 = vld [vmem:[#allocation3 + $0x18] sm:$0xff]
    %v428 = vmul.f32 %v423, %v424
    %v429 = vmul.f32 %v422, %v425
    %v430 = vmul.f32 %v421, %v426
    %v431 = vmul.f32 %v420, %v427
    %432 = vrot.lane.b32.xlu0 %v289, 16
    %v433 = vpop.permute.xlu0 %432
    %434 = vrot.lane.b32.xlu0 %v322, 16
    %v435 = vpop.permute.xlu0 %434
    %436 = vrot.lane.b32.xlu0 %v355, 16
    %v437 = vpop.permute.xlu0 %436
    %438 = vrot.lane.b32.xlu0 %v388, 16
    %v439 = vpop.permute.xlu0 %438
    %vm440 = vcmp.lt.s32.totalorder %v418, 16
    %v441 = vsel %vm440, %v437, %v439
    %v442 = vsel %vm440, %v435, %v437
    %v443 = vsel %vm440, %v433, %v435
    %v444 = vsel %vm440, %v439, %v433
    %v445 = vld [vmem:[#allocation3 + $0x20] sm:$0xff]
    %v446 = vld [vmem:[#allocation3 + $0x28] sm:$0xff]
    %v447 = vld [vmem:[#allocation3 + $0x30] sm:$0xff]
    %v448 = vld [vmem:[#allocation3 + $0x38] sm:$0xff]
    %v449 = vmul.f32 %v444, %v445
    %v450 = vmul.f32 %v443, %v446
    %v451 = vmul.f32 %v442, %v447
    %v452 = vmul.f32 %v441, %v448
    %453 = vrot.lane.b32.xlu0 %v292, 15
    %v454 = vpop.permute.xlu0 %453
    %455 = vrot.lane.b32.xlu0 %v325, 15
    %v456 = vpop.permute.xlu0 %455
    %457 = vrot.lane.b32.xlu0 %v358, 15
    %v458 = vpop.permute.xlu0 %457
    %459 = vrot.lane.b32.xlu0 %v391, 15
    %v460 = vpop.permute.xlu0 %459
    %vm461 = vcmp.lt.s32.totalorder %v418, 15
    %v462 = vsel %vm461, %v458, %v460
    %v463 = vsel %vm461, %v456, %v458
    %v464 = vsel %vm461, %v454, %v456
    %v465 = vsel %vm461, %v460, %v454
    %v466 = vld [vmem:[#allocation3 + $0x40] sm:$0xff]
    %v467 = vld [vmem:[#allocation3 + $0x48] sm:$0xff]
    %v468 = vld [vmem:[#allocation3 + $0x50] sm:$0xff]
    %v469 = vld [vmem:[#allocation3 + $0x58] sm:$0xff]
    %v470 = vmul.f32 %v465, %v466
    %v471 = vmul.f32 %v464, %v467
    %v472 = vmul.f32 %v463, %v468
    %v473 = vmul.f32 %v462, %v469
    %474 = vrot.lane.b32.xlu0 %v294, 1
    %v475 = vpop.permute.xlu0 %474
    %476 = vrot.lane.b32.xlu0 %v327, 1
    %v477 = vpop.permute.xlu0 %476
    %478 = vrot.lane.b32.xlu0 %v360, 1
    %v479 = vpop.permute.xlu0 %478
    %480 = vrot.lane.b32.xlu0 %v393, 1
    %v481 = vpop.permute.xlu0 %480
    %vm482 = vcmp.lt.s32.totalorder %v418, 1
    %v483 = vsel %vm482, %v479, %v481
    %v484 = vsel %vm482, %v477, %v479
    %v485 = vsel %vm482, %v475, %v477
    %v486 = vsel %vm482, %v481, %v475
    %v487 = vld [vmem:[#allocation3 + $0x60] sm:$0xff]
    %v488 = vld [vmem:[#allocation3 + $0x68] sm:$0xff]
    %v489 = vld [vmem:[#allocation3 + $0x70] sm:$0xff]
    %v490 = vld [vmem:[#allocation3 + $0x78] sm:$0xff]
    %v491 = vmul.f32 %v486, %v487
    %v492 = vmul.f32 %v485, %v488
    %v493 = vmul.f32 %v484, %v489
    %v494 = vmul.f32 %v483, %v490
    %495 = vrot.lane.b32.xlu0 %v299, 127
    %v496 = vpop.permute.xlu0 %495
    %497 = vrot.lane.b32.xlu0 %v332, 127
    %v498 = vpop.permute.xlu0 %497
    %499 = vrot.lane.b32.xlu0 %v365, 127
    %v500 = vpop.permute.xlu0 %499
    %501 = vrot.lane.b32.xlu0 %v398, 127
    %v502 = vpop.permute.xlu0 %501
    %vm503 = vcmp.lt.s32.totalorder %v418, 127
    %v504 = vsel %vm503, %v500, %v502
    %v505 = vsel %vm503, %v498, %v500
    %v506 = vsel %vm503, %v496, %v498
    %v507 = vsel %vm503, %v502, %v496
    %v508 = vld [vmem:[#allocation3 + $0x80] sm:$0xff]
    %v509 = vld [vmem:[#allocation3 + $0x88] sm:$0xff]
    %v510 = vld [vmem:[#allocation3 + $0x90] sm:$0xff]
    %v511 = vld [vmem:[#allocation3 + $0x98] sm:$0xff]
    %v512 = vmul.f32 %v506, %v508
    %v513 = vmul.f32 %v505, %v509
    %v514 = vmul.f32 %v504, %v510
    %v515 = vmul.f32 %v507, %v511
    %516 = vrot.lane.b32.xlu0 %v302, 113
    %v517 = vpop.permute.xlu0 %516
    %518 = vrot.lane.b32.xlu0 %v335, 113
    %v519 = vpop.permute.xlu0 %518
    %520 = vrot.lane.b32.xlu0 %v368, 113
    %v521 = vpop.permute.xlu0 %520
    %522 = vrot.lane.b32.xlu0 %v401, 113
    %v523 = vpop.permute.xlu0 %522
    %vm524 = vcmp.lt.s32.totalorder %v418, 113
    %v525 = vsel %vm524, %v521, %v523
    %v526 = vsel %vm524, %v519, %v521
    %v527 = vsel %vm524, %v517, %v519
    %v528 = vsel %vm524, %v523, %v517
    %v529 = vld [vmem:[#allocation3 + $0xa0] sm:$0xff]
    %v530 = vld [vmem:[#allocation3 + $0xa8] sm:$0xff]
    %v531 = vld [vmem:[#allocation3 + $0xb0] sm:$0xff]
    %v532 = vld [vmem:[#allocation3 + $0xb8] sm:$0xff]
    %v533 = vmul.f32 %v527, %v529
    %v534 = vmul.f32 %v526, %v530
    %v535 = vmul.f32 %v525, %v531
    %v536 = vmul.f32 %v528, %v532
    %537 = vrot.lane.b32.xlu0 %v304, 112
    %v538 = vpop.permute.xlu0 %537
    %539 = vrot.lane.b32.xlu0 %v337, 112
    %v540 = vpop.permute.xlu0 %539
    %541 = vrot.lane.b32.xlu0 %v370, 112
    %v542 = vpop.permute.xlu0 %541
    %543 = vrot.lane.b32.xlu0 %v403, 112
    %v544 = vpop.permute.xlu0 %543
    %vm545 = vcmp.lt.s32.totalorder %v418, 112
    %v546 = vsel %vm545, %v542, %v544
    %v547 = vsel %vm545, %v540, %v542
    %v548 = vsel %vm545, %v538, %v540
    %v549 = vsel %vm545, %v544, %v538
    %v550 = vld [vmem:[#allocation3 + $0xc0] sm:$0xff]
    %v551 = vld [vmem:[#allocation3 + $0xc8] sm:$0xff]
    %v552 = vld [vmem:[#allocation3 + $0xd0] sm:$0xff]
    %v553 = vld [vmem:[#allocation3 + $0xd8] sm:$0xff]
    %v554 = vmul.f32 %v548, %v550
    %v555 = vmul.f32 %v547, %v551
    %v556 = vmul.f32 %v546, %v552
    %v557 = vmul.f32 %v549, %v553
    %558 = vrot.lane.b32.xlu0 %v307, 111
    %v559 = vpop.permute.xlu0 %558
    %560 = vrot.lane.b32.xlu0 %v340, 111
    %v561 = vpop.permute.xlu0 %560
    %562 = vrot.lane.b32.xlu0 %v373, 111
    %v563 = vpop.permute.xlu0 %562
    %564 = vrot.lane.b32.xlu0 %v406, 111
    %v565 = vpop.permute.xlu0 %564
    %vm566 = vcmp.lt.s32.totalorder %v418, 111
    %v567 = vsel %vm566, %v563, %v565
    %v568 = vsel %vm566, %v561, %v563
    %v569 = vsel %vm566, %v559, %v561
    %v570 = vsel %vm566, %v565, %v559
    %v571 = vld [vmem:[#allocation3 + $0xe0] sm:$0xff]
    %v572 = vld [vmem:[#allocation3 + $0xe8] sm:$0xff]
    %v573 = vld [vmem:[#allocation3 + $0xf0] sm:$0xff]
    %v574 = vld [vmem:[#allocation3 + $0xf8] sm:$0xff]
    %v575 = vmul.f32 %v569, %v571
    %v576 = vmul.f32 %v568, %v572
    %v577 = vmul.f32 %v567, %v573
    %v578 = vmul.f32 %v570, %v574
    %v579 = vadd.f32 %v428, %v449
    %v580 = vadd.f32 %v429, %v450
    %v581 = vadd.f32 %v430, %v451
    %v582 = vadd.f32 %v431, %v452
    %v583 = vadd.f32 %v470, %v491
    %v584 = vadd.f32 %v471, %v492
    %v585 = vadd.f32 %v472, %v493
    %v586 = vadd.f32 %v473, %v494
    %v587 = vadd.f32 %v297, %v512
    %v588 = vadd.f32 %v330, %v513
    %v589 = vadd.f32 %v363, %v514
    %v590 = vadd.f32 %v396, %v515
    %v591 = vadd.f32 %v533, %v554
    %v592 = vadd.f32 %v534, %v555
    %v593 = vadd.f32 %v535, %v556
    %v594 = vadd.f32 %v536, %v557
    %v595 = vadd.f32 %v579, %v583
    %v596 = vadd.f32 %v580, %v584
    %v597 = vadd.f32 %v581, %v585
    %v598 = vadd.f32 %v582, %v586
    %v599 = vadd.f32 %v587, %v591
    %v600 = vadd.f32 %v588, %v592
    %v601 = vadd.f32 %v589, %v593
    %v602 = vadd.f32 %v590, %v594
    %v603 = vadd.f32 %v595, %v599
    %v604 = vadd.f32 %v596, %v600
    %v605 = vadd.f32 %v597, %v601
    %v606 = vadd.f32 %v598, %v602
    %v607 = vadd.f32 %v603, %v575
    %v608 = vadd.f32 %v604, %v576
    %v609 = vadd.f32 %v605, %v577
    %v610 = vadd.f32 %v606, %v578
    %v611 = vadd.f32 %v607, %v608
    %v612 = vadd.f32 %v611, %v609
    %v613 = vadd.f32 %v612, %v610
    %614 = vadd.xlane.f32.xlu0 %v613
    %v615 = vpop.xlane.xlu0 %614
    %v616 = vmul.f32 %v607, %v607
    %v617 = vmul.f32 %v608, %v608
    %v618 = vmul.f32 %v609, %v609
    %v619 = vmul.f32 %v610, %v610
    %v620 = vadd.f32 %v616, %v617
    %v621 = vadd.f32 %v620, %v618
    %v622 = vadd.f32 %v621, %v619
    %623 = vadd.xlane.f32.xlu0 %v622
    %v624 = vpop.xlane.xlu0 %623
    %v625 = vmul.f32 %v615, 0.001953125
    %v626 = vmul.f32 %v624, 0.001953125
    %v627 = vmul.f32 %v625, %v625
    %v628 = vsub.f32 %v626, %v627
    %v629 = vmax.f32 %v628, 0.0
    %v630 = vld [vmem:[#allocation5] sm:$0xff]
    %v631 = vadd.f32 %v629, 1e-05
    %v632 = vrsqrt.pop %v631
    %v633 = vmul.f32 %v632, %v631
    %v634 = vmul.f32 %v633, %v632
    %v635 = vmul.f32 0.5, %v634
    %v636 = vsub.f32 1.5, %v635
    %v637 = vmul.f32 %v632, %v636
    %vm638 = vweird.f32 %v631
    %vm639 = vweird.f32 %v632
    %vm640 = vmor %vm638, %vm639
    %v641 = vsel %vm640, %v632, %v637
    %v642 = vmul.f32 %v630, %v641
    %v643 = vld [vmem:[#allocation7] sm:$0xff]
    %v644 = vmul.f32 %v625, %v642
    %v645 = vsub.f32 %v643, %v644
    %647 = vset.pattern.permute.xlu0 0
    %648 = vperm.xlu0 %647, %v642
    %v649 = vpop.permute.xlu0 %648
    %v651 = vmul.f32 %v607, %v649
    %v652 = vmul.f32 %v608, %v649
    %v653 = vmul.f32 %v609, %v649
    %v654 = vmul.f32 %v610, %v649
    %656 = vset.pattern.permute.xlu0 0
    %657 = vperm.xlu0 %656, %v645
    %v658 = vpop.permute.xlu0 %657
    %v660 = vadd.f32 %v651, %v658
    %v661 = vadd.f32 %v652, %v658
    %v662 = vadd.f32 %v653, %v658
    %v663 = vadd.f32 %v654, %v658
    %vm664 = vcmp.ge.f32.partialorder %v660, 0.0
    %vm665 = vcmp.ge.f32.partialorder %v661, 0.0
    %vm666 = vcmp.ge.f32.partialorder %v662, 0.0
    %vm667 = vcmp.ge.f32.partialorder %v663, 0.0
    %v668 = vmul.f32 %v660, 0.01
    %v669 = vmul.f32 %v661, 0.01
    %v670 = vmul.f32 %v662, 0.01
    %v671 = vmul.f32 %v663, 0.01
    %v672 = vsel %vm664, %v660, %v668
    %v673 = vsel %vm665, %v661, %v669
    %v674 = vsel %vm666, %v662, %v670
    %v675 = vsel %vm667, %v663, %v671
    %v676 = vpack.c.bf16 %v673, %v672
    %v677 = vpack.c.bf16 %v675, %v674
    %678 = vst [vmem:[#allocation2] sm:$0xff] %v676
    %679 = vst [vmem:[#allocation2 + $0x8] sm:$0xff] %v677
    %v680 = vld [vmem:[#allocation2] sm:$0xff]
    %v681 = vld [vmem:[#allocation2 + $0x8] sm:$0xff]
    %v682 = vld [vmem:[%s6] sm:$0xf]
    %v683 = vld [vmem:[%s6 + $0x4] sm:$0xf]
    %v684 = vld [vmem:[%s6 + $0x8] sm:$0xf]
    %v685 = vld [vmem:[%s6 + $0xc] sm:$0xf]
    %v686 = vld [vmem:[%s6 + $0x10] sm:$0xf]
    %v687 = vld [vmem:[%s6 + $0x14] sm:$0xf]
    %v688 = vld [vmem:[%s6 + $0x18] sm:$0xf]
    %v689 = vld [vmem:[%s6 + $0x1c] sm:$0xf]
    %v690 = vld [vmem:[%s6 + $0x20] sm:$0xf]
    %v700 = vunpack.c.l.b16 %v682
    %v701 = vunpack.c.l.b16 %v683
    %v702 = vunpack.c.l.b16 %v684
    %v703 = vunpack.c.l.b16 %v685
    %v704 = vunpack.c.l.b16 %v686
    %v705 = vunpack.c.l.b16 %v687
    %v706 = vunpack.c.l.b16 %v688
    %v707 = vunpack.c.l.b16 %v689
    %v708 = vunpack.c.l.b16 %v690
    %v709 = vpack.c.b16 %v701, %v700
    %v710 = vpack.c.b16 %v703, %v702
    %v711 = vpack.c.b16 %v705, %v704
    %v712 = vpack.c.b16 %v707, %v706
    %v713 = vpack.c.b16 %v708, %v708
    %v716 = vunpack.c.l.b16 %v680
    %v717 = vunpack.c.h.b16 %v680
    %v718 = vunpack.c.l.b16 %v681
    %v719 = vunpack.c.h.b16 %v681
    %v720 = vpack.c.b16 %v716, %v716
    %v721 = vpack.c.b16 %v717, %v717
    %v722 = vpack.c.b16 %v718, %v718
    %v723 = vpack.c.b16 %v719, %v719
    %vm724 = vcmask 64512
    %v726 = vsel %vm724, %v709, 0
    %v729 = vsel %vm724, %v710, 0
    %v732 = vsel %vm724, %v711, 0
    %v735 = vsel %vm724, %v712, 0
    %v738 = vsel %vm724, %v713, 0
    %vm740 = vcmask 1043456
    %v742 = vsel %vm740, %v720, 0
    %v745 = vsel %vm740, %v721, 0
    %v748 = vsel %vm740, %v722, 0
    %v751 = vsel %vm740, %v723, 0
    %753 = vmatpush.bf16.msra.mxu0 0
    %754 = vmatpush.bf16.msra.mxu0 0
    %755 = vmatpush.bf16.msra.mxu0 0
    %756 = vmatpush.bf16.msra.mxu0 0
    %757 = vmatpush.bf16.msra.mxu0 0
    %758 = vmatpush.bf16.msra.mxu0 0
    %759 = vmatpush.bf16.msra.mxu0 0
    %760 = vmatpush.bf16.msra.mxu0 %v742
    %761 = vmatmul.bf16.gmra.mxu0 %v726
    %v762 = vpop.f32.mrf.mxu0
    %v763 = vadd.f32 0.0, %v762
    %v764 = vpop.f32.mrf.mxu0
    %v765 = vadd.f32 0.0, %v764
    %766 = vmatmul.bf16.gmra.mxu0 %v729
    %v767 = vpop.f32.mrf.mxu0
    %v768 = vadd.f32 0.0, %v767
    %v769 = vpop.f32.mrf.mxu0
    %v770 = vadd.f32 0.0, %v769
    %771 = vmatmul.bf16.gmra.mxu0 %v732
    %v772 = vpop.f32.mrf.mxu0
    %v773 = vadd.f32 0.0, %v772
    %v774 = vpop.f32.mrf.mxu0
    %v775 = vadd.f32 0.0, %v774
    %776 = vmatmul.bf16.gmra.mxu0 %v735
    %v777 = vpop.f32.mrf.mxu0
    %v778 = vadd.f32 0.0, %v777
    %v779 = vpop.f32.mrf.mxu0
    %v780 = vadd.f32 0.0, %v779
    %781 = vmatmul.bf16.gmra.mxu0 %v738
    %v782 = vpop.f32.mrf.mxu0
    %v783 = vadd.f32 0.0, %v782
    %v784 = vpop.f32.mrf.mxu0
    %785 = vdwg.mxu0
    %786 = vmatpush.bf16.msra.mxu0 0
    %787 = vmatpush.bf16.msra.mxu0 0
    %788 = vmatpush.bf16.msra.mxu0 0
    %789 = vmatpush.bf16.msra.mxu0 0
    %790 = vmatpush.bf16.msra.mxu0 0
    %791 = vmatpush.bf16.msra.mxu0 0
    %792 = vmatpush.bf16.msra.mxu0 0
    %793 = vmatpush.bf16.msra.mxu0 %v745
    %794 = vmatmul.bf16.gmra.mxu0 %v726
    %v795 = vpop.f32.mrf.mxu0
    %v796 = vadd.f32 0.0, %v795
    %v797 = vpop.f32.mrf.mxu0
    %v798 = vadd.f32 0.0, %v797
    %799 = vmatmul.bf16.gmra.mxu0 %v729
    %v800 = vpop.f32.mrf.mxu0
    %v801 = vadd.f32 0.0, %v800
    %v802 = vpop.f32.mrf.mxu0
    %v803 = vadd.f32 0.0, %v802
    %804 = vmatmul.bf16.gmra.mxu0 %v732
    %v805 = vpop.f32.mrf.mxu0
    %v806 = vadd.f32 0.0, %v805
    %v807 = vpop.f32.mrf.mxu0
    %v808 = vadd.f32 0.0, %v807
    %809 = vmatmul.bf16.gmra.mxu0 %v735
    %v810 = vpop.f32.mrf.mxu0
    %v811 = vadd.f32 0.0, %v810
    %v812 = vpop.f32.mrf.mxu0
    %v813 = vadd.f32 0.0, %v812
    %814 = vmatmul.bf16.gmra.mxu0 %v738
    %v815 = vpop.f32.mrf.mxu0
    %v816 = vadd.f32 0.0, %v815
    %v817 = vpop.f32.mrf.mxu0
    %818 = vdwg.mxu0
    %819 = vmatpush.bf16.msra.mxu0 0
    %820 = vmatpush.bf16.msra.mxu0 0
    %821 = vmatpush.bf16.msra.mxu0 0
    %822 = vmatpush.bf16.msra.mxu0 0
    %823 = vmatpush.bf16.msra.mxu0 0
    %824 = vmatpush.bf16.msra.mxu0 0
    %825 = vmatpush.bf16.msra.mxu0 0
    %826 = vmatpush.bf16.msra.mxu0 %v748
    %827 = vmatmul.bf16.gmra.mxu0 %v726
    %v828 = vpop.f32.mrf.mxu0
    %v829 = vadd.f32 0.0, %v828
    %v830 = vpop.f32.mrf.mxu0
    %v831 = vadd.f32 0.0, %v830
    %832 = vmatmul.bf16.gmra.mxu0 %v729
    %v833 = vpop.f32.mrf.mxu0
    %v834 = vadd.f32 0.0, %v833
    %v835 = vpop.f32.mrf.mxu0
    %v836 = vadd.f32 0.0, %v835
    %837 = vmatmul.bf16.gmra.mxu0 %v732
    %v838 = vpop.f32.mrf.mxu0
    %v839 = vadd.f32 0.0, %v838
    %v840 = vpop.f32.mrf.mxu0
    %v841 = vadd.f32 0.0, %v840
    %842 = vmatmul.bf16.gmra.mxu0 %v735
    %v843 = vpop.f32.mrf.mxu0
    %v844 = vadd.f32 0.0, %v843
    %v845 = vpop.f32.mrf.mxu0
    %v846 = vadd.f32 0.0, %v845
    %847 = vmatmul.bf16.gmra.mxu0 %v738
    %v848 = vpop.f32.mrf.mxu0
    %v849 = vadd.f32 0.0, %v848
    %v850 = vpop.f32.mrf.mxu0
    %851 = vdwg.mxu0
    %852 = vmatpush.bf16.msra.mxu0 0
    %853 = vmatpush.bf16.msra.mxu0 0
    %854 = vmatpush.bf16.msra.mxu0 0
    %855 = vmatpush.bf16.msra.mxu0 0
    %856 = vmatpush.bf16.msra.mxu0 0
    %857 = vmatpush.bf16.msra.mxu0 0
    %858 = vmatpush.bf16.msra.mxu0 0
    %859 = vmatpush.bf16.msra.mxu0 %v751
    %860 = vmatmul.bf16.gmra.mxu0 %v726
    %v861 = vpop.f32.mrf.mxu0
    %v862 = vadd.f32 0.0, %v861
    %v863 = vpop.f32.mrf.mxu0
    %v864 = vadd.f32 0.0, %v863
    %865 = vmatmul.bf16.gmra.mxu0 %v729
    %v866 = vpop.f32.mrf.mxu0
    %v867 = vadd.f32 0.0, %v866
    %v868 = vpop.f32.mrf.mxu0
    %v869 = vadd.f32 0.0, %v868
    %870 = vmatmul.bf16.gmra.mxu0 %v732
    %v871 = vpop.f32.mrf.mxu0
    %v872 = vadd.f32 0.0, %v871
    %v873 = vpop.f32.mrf.mxu0
    %v874 = vadd.f32 0.0, %v873
    %875 = vmatmul.bf16.gmra.mxu0 %v735
    %v876 = vpop.f32.mrf.mxu0
    %v877 = vadd.f32 0.0, %v876
    %v878 = vpop.f32.mrf.mxu0
    %v879 = vadd.f32 0.0, %v878
    %880 = vmatmul.bf16.gmra.mxu0 %v738
    %v881 = vpop.f32.mrf.mxu0
    %v882 = vadd.f32 0.0, %v881
    %v883 = vpop.f32.mrf.mxu0
    %884 = vdwg.mxu0
    %885 = vrot.lane.b32.xlu0 %v763, 17
    %v886 = vpop.permute.xlu0 %885
    %887 = vrot.lane.b32.xlu0 %v796, 17
    %v888 = vpop.permute.xlu0 %887
    %889 = vrot.lane.b32.xlu0 %v829, 17
    %v890 = vpop.permute.xlu0 %889
    %891 = vrot.lane.b32.xlu0 %v862, 17
    %v892 = vpop.permute.xlu0 %891
    %v893 = vsel %vm419, %v890, %v892
    %v894 = vsel %vm419, %v888, %v890
    %v895 = vsel %vm419, %v886, %v888
    %v896 = vsel %vm419, %v892, %v886
    %v897 = vld [vmem:[#allocation3] sm:$0xff]
    %v898 = vld [vmem:[#allocation3 + $0x8] sm:$0xff]
    %v899 = vld [vmem:[#allocation3 + $0x10] sm:$0xff]
    %v900 = vld [vmem:[#allocation3 + $0x18] sm:$0xff]
    %v901 = vmul.f32 %v896, %v897
    %v902 = vmul.f32 %v895, %v898
    %v903 = vmul.f32 %v894, %v899
    %v904 = vmul.f32 %v893, %v900
    %905 = vrot.lane.b32.xlu0 %v765, 16
    %v906 = vpop.permute.xlu0 %905
    %907 = vrot.lane.b32.xlu0 %v798, 16
    %v908 = vpop.permute.xlu0 %907
    %909 = vrot.lane.b32.xlu0 %v831, 16
    %v910 = vpop.permute.xlu0 %909
    %911 = vrot.lane.b32.xlu0 %v864, 16
    %v912 = vpop.permute.xlu0 %911
    %v913 = vsel %vm440, %v910, %v912
    %v914 = vsel %vm440, %v908, %v910
    %v915 = vsel %vm440, %v906, %v908
    %v916 = vsel %vm440, %v912, %v906
    %v917 = vld [vmem:[#allocation3 + $0x20] sm:$0xff]
    %v918 = vld [vmem:[#allocation3 + $0x28] sm:$0xff]
    %v919 = vld [vmem:[#allocation3 + $0x30] sm:$0xff]
    %v920 = vld [vmem:[#allocation3 + $0x38] sm:$0xff]
    %v921 = vmul.f32 %v916, %v917
    %v922 = vmul.f32 %v915, %v918
    %v923 = vmul.f32 %v914, %v919
    %v924 = vmul.f32 %v913, %v920
    %925 = vrot.lane.b32.xlu0 %v768, 15
    %v926 = vpop.permute.xlu0 %925
    %927 = vrot.lane.b32.xlu0 %v801, 15
    %v928 = vpop.permute.xlu0 %927
    %929 = vrot.lane.b32.xlu0 %v834, 15
    %v930 = vpop.permute.xlu0 %929
    %931 = vrot.lane.b32.xlu0 %v867, 15
    %v932 = vpop.permute.xlu0 %931
    %v933 = vsel %vm461, %v930, %v932
    %v934 = vsel %vm461, %v928, %v930
    %v935 = vsel %vm461, %v926, %v928
    %v936 = vsel %vm461, %v932, %v926
    %v937 = vld [vmem:[#allocation3 + $0x40] sm:$0xff]
    %v938 = vld [vmem:[#allocation3 + $0x48] sm:$0xff]
    %v939 = vld [vmem:[#allocation3 + $0x50] sm:$0xff]
    %v940 = vld [vmem:[#allocation3 + $0x58] sm:$0xff]
    %v941 = vmul.f32 %v936, %v937
    %v942 = vmul.f32 %v935, %v938
    %v943 = vmul.f32 %v934, %v939
    %v944 = vmul.f32 %v933, %v940
    %945 = vrot.lane.b32.xlu0 %v770, 1
    %v946 = vpop.permute.xlu0 %945
    %947 = vrot.lane.b32.xlu0 %v803, 1
    %v948 = vpop.permute.xlu0 %947
    %949 = vrot.lane.b32.xlu0 %v836, 1
    %v950 = vpop.permute.xlu0 %949
    %951 = vrot.lane.b32.xlu0 %v869, 1
    %v952 = vpop.permute.xlu0 %951
    %v953 = vsel %vm482, %v950, %v952
    %v954 = vsel %vm482, %v948, %v950
    %v955 = vsel %vm482, %v946, %v948
    %v956 = vsel %vm482, %v952, %v946
    %v957 = vld [vmem:[#allocation3 + $0x60] sm:$0xff]
    %v958 = vld [vmem:[#allocation3 + $0x68] sm:$0xff]
    %v959 = vld [vmem:[#allocation3 + $0x70] sm:$0xff]
    %v960 = vld [vmem:[#allocation3 + $0x78] sm:$0xff]
    %v961 = vmul.f32 %v956, %v957
    %v962 = vmul.f32 %v955, %v958
    %v963 = vmul.f32 %v954, %v959
    %v964 = vmul.f32 %v953, %v960
    %965 = vrot.lane.b32.xlu0 %v775, 127
    %v966 = vpop.permute.xlu0 %965
    %967 = vrot.lane.b32.xlu0 %v808, 127
    %v968 = vpop.permute.xlu0 %967
    %969 = vrot.lane.b32.xlu0 %v841, 127
    %v970 = vpop.permute.xlu0 %969
    %971 = vrot.lane.b32.xlu0 %v874, 127
    %v972 = vpop.permute.xlu0 %971
    %v973 = vsel %vm503, %v970, %v972
    %v974 = vsel %vm503, %v968, %v970
    %v975 = vsel %vm503, %v966, %v968
    %v976 = vsel %vm503, %v972, %v966
    %v977 = vld [vmem:[#allocation3 + $0x80] sm:$0xff]
    %v978 = vld [vmem:[#allocation3 + $0x88] sm:$0xff]
    %v979 = vld [vmem:[#allocation3 + $0x90] sm:$0xff]
    %v980 = vld [vmem:[#allocation3 + $0x98] sm:$0xff]
    %v981 = vmul.f32 %v975, %v977
    %v982 = vmul.f32 %v974, %v978
    %v983 = vmul.f32 %v973, %v979
    %v984 = vmul.f32 %v976, %v980
    %985 = vrot.lane.b32.xlu0 %v778, 113
    %v986 = vpop.permute.xlu0 %985
    %987 = vrot.lane.b32.xlu0 %v811, 113
    %v988 = vpop.permute.xlu0 %987
    %989 = vrot.lane.b32.xlu0 %v844, 113
    %v990 = vpop.permute.xlu0 %989
    %991 = vrot.lane.b32.xlu0 %v877, 113
    %v992 = vpop.permute.xlu0 %991
    %v993 = vsel %vm524, %v990, %v992
    %v994 = vsel %vm524, %v988, %v990
    %v995 = vsel %vm524, %v986, %v988
    %v996 = vsel %vm524, %v992, %v986
    %v997 = vld [vmem:[#allocation3 + $0xa0] sm:$0xff]
    %v998 = vld [vmem:[#allocation3 + $0xa8] sm:$0xff]
    %v999 = vld [vmem:[#allocation3 + $0xb0] sm:$0xff]
    %v1000 = vld [vmem:[#allocation3 + $0xb8] sm:$0xff]
    %v1001 = vmul.f32 %v995, %v997
    %v1002 = vmul.f32 %v994, %v998
    %v1003 = vmul.f32 %v993, %v999
    %v1004 = vmul.f32 %v996, %v1000
    %1005 = vrot.lane.b32.xlu0 %v780, 112
    %v1006 = vpop.permute.xlu0 %1005
    %1007 = vrot.lane.b32.xlu0 %v813, 112
    %v1008 = vpop.permute.xlu0 %1007
    %1009 = vrot.lane.b32.xlu0 %v846, 112
    %v1010 = vpop.permute.xlu0 %1009
    %1011 = vrot.lane.b32.xlu0 %v879, 112
    %v1012 = vpop.permute.xlu0 %1011
    %v1013 = vsel %vm545, %v1010, %v1012
    %v1014 = vsel %vm545, %v1008, %v1010
    %v1015 = vsel %vm545, %v1006, %v1008
    %v1016 = vsel %vm545, %v1012, %v1006
    %v1017 = vld [vmem:[#allocation3 + $0xc0] sm:$0xff]
    %v1018 = vld [vmem:[#allocation3 + $0xc8] sm:$0xff]
    %v1019 = vld [vmem:[#allocation3 + $0xd0] sm:$0xff]
    %v1020 = vld [vmem:[#allocation3 + $0xd8] sm:$0xff]
    %v1021 = vmul.f32 %v1015, %v1017
    %v1022 = vmul.f32 %v1014, %v1018
    %v1023 = vmul.f32 %v1013, %v1019
    %v1024 = vmul.f32 %v1016, %v1020
    %1025 = vrot.lane.b32.xlu0 %v783, 111
    %v1026 = vpop.permute.xlu0 %1025
    %1027 = vrot.lane.b32.xlu0 %v816, 111
    %v1028 = vpop.permute.xlu0 %1027
    %1029 = vrot.lane.b32.xlu0 %v849, 111
    %v1030 = vpop.permute.xlu0 %1029
    %1031 = vrot.lane.b32.xlu0 %v882, 111
    %v1032 = vpop.permute.xlu0 %1031
    %v1033 = vsel %vm566, %v1030, %v1032
    %v1034 = vsel %vm566, %v1028, %v1030
    %v1035 = vsel %vm566, %v1026, %v1028
    %v1036 = vsel %vm566, %v1032, %v1026
    %v1037 = vld [vmem:[#allocation3 + $0xe0] sm:$0xff]
    %v1038 = vld [vmem:[#allocation3 + $0xe8] sm:$0xff]
    %v1039 = vld [vmem:[#allocation3 + $0xf0] sm:$0xff]
    %v1040 = vld [vmem:[#allocation3 + $0xf8] sm:$0xff]
    %v1041 = vmul.f32 %v1035, %v1037
    %v1042 = vmul.f32 %v1034, %v1038
    %v1043 = vmul.f32 %v1033, %v1039
    %v1044 = vmul.f32 %v1036, %v1040
    %v1045 = vadd.f32 %v901, %v921
    %v1046 = vadd.f32 %v902, %v922
    %v1047 = vadd.f32 %v903, %v923
    %v1048 = vadd.f32 %v904, %v924
    %v1049 = vadd.f32 %v941, %v961
    %v1050 = vadd.f32 %v942, %v962
    %v1051 = vadd.f32 %v943, %v963
    %v1052 = vadd.f32 %v944, %v964
    %v1053 = vadd.f32 %v773, %v981
    %v1054 = vadd.f32 %v806, %v982
    %v1055 = vadd.f32 %v839, %v983
    %v1056 = vadd.f32 %v872, %v984
    %v1057 = vadd.f32 %v1001, %v1021
    %v1058 = vadd.f32 %v1002, %v1022
    %v1059 = vadd.f32 %v1003, %v1023
    %v1060 = vadd.f32 %v1004, %v1024
    %v1061 = vadd.f32 %v1045, %v1049
    %v1062 = vadd.f32 %v1046, %v1050
    %v1063 = vadd.f32 %v1047, %v1051
    %v1064 = vadd.f32 %v1048, %v1052
    %v1065 = vadd.f32 %v1053, %v1057
    %v1066 = vadd.f32 %v1054, %v1058
    %v1067 = vadd.f32 %v1055, %v1059
    %v1068 = vadd.f32 %v1056, %v1060
    %v1069 = vadd.f32 %v1061, %v1065
    %v1070 = vadd.f32 %v1062, %v1066
    %v1071 = vadd.f32 %v1063, %v1067
    %v1072 = vadd.f32 %v1064, %v1068
    %v1073 = vadd.f32 %v1069, %v1041
    %v1074 = vadd.f32 %v1070, %v1042
    %v1075 = vadd.f32 %v1071, %v1043
    %v1076 = vadd.f32 %v1072, %v1044
    %v1077 = vadd.f32 %v1073, %v1074
    %v1078 = vadd.f32 %v1077, %v1075
    %v1079 = vadd.f32 %v1078, %v1076
    %1080 = vadd.xlane.f32.xlu0 %v1079
    %v1081 = vpop.xlane.xlu0 %1080
    %v1082 = vmul.f32 %v1073, %v1073
    %v1083 = vmul.f32 %v1074, %v1074
    %v1084 = vmul.f32 %v1075, %v1075
    %v1085 = vmul.f32 %v1076, %v1076
    %v1086 = vadd.f32 %v1082, %v1083
    %v1087 = vadd.f32 %v1086, %v1084
    %v1088 = vadd.f32 %v1087, %v1085
    %1089 = vadd.xlane.f32.xlu0 %v1088
    %v1090 = vpop.xlane.xlu0 %1089
    %v1091 = vmul.f32 %v1081, 0.001953125
    %v1092 = vmul.f32 %v1090, 0.001953125
    %v1093 = vmul.f32 %v1091, %v1091
    %v1094 = vsub.f32 %v1092, %v1093
    %v1095 = vmax.f32 %v1094, 0.0
    %v1096 = vld [vmem:[#allocation5] sm:$0xff]
    %v1097 = vadd.f32 %v1095, 1e-05
    %v1098 = vrsqrt.pop %v1097
    %v1099 = vmul.f32 %v1098, %v1097
    %v1100 = vmul.f32 %v1099, %v1098
    %v1101 = vmul.f32 0.5, %v1100
    %v1102 = vsub.f32 1.5, %v1101
    %v1103 = vmul.f32 %v1098, %v1102
    %vm1104 = vweird.f32 %v1097
    %vm1105 = vweird.f32 %v1098
    %vm1106 = vmor %vm1104, %vm1105
    %v1107 = vsel %vm1106, %v1098, %v1103
    %v1108 = vmul.f32 %v1096, %v1107
    %v1109 = vld [vmem:[#allocation7] sm:$0xff]
    %v1110 = vmul.f32 %v1091, %v1108
    %v1111 = vsub.f32 %v1109, %v1110
    %1113 = vset.pattern.permute.xlu0 1
    %1114 = vperm.xlu0 %1113, %v1108
    %v1115 = vpop.permute.xlu0 %1114
    %v1117 = vmul.f32 %v1073, %v1115
    %v1118 = vmul.f32 %v1074, %v1115
    %v1119 = vmul.f32 %v1075, %v1115
    %v1120 = vmul.f32 %v1076, %v1115
    %1122 = vset.pattern.permute.xlu0 1
    %1123 = vperm.xlu0 %1122, %v1111
    %v1124 = vpop.permute.xlu0 %1123
    %v1126 = vadd.f32 %v1117, %v1124
    %v1127 = vadd.f32 %v1118, %v1124
    %v1128 = vadd.f32 %v1119, %v1124
    %v1129 = vadd.f32 %v1120, %v1124
    %vm1130 = vcmp.ge.f32.partialorder %v1126, 0.0
    %vm1131 = vcmp.ge.f32.partialorder %v1127, 0.0
    %vm1132 = vcmp.ge.f32.partialorder %v1128, 0.0
    %vm1133 = vcmp.ge.f32.partialorder %v1129, 0.0
    %v1134 = vmul.f32 %v1126, 0.01
    %v1135 = vmul.f32 %v1127, 0.01
    %v1136 = vmul.f32 %v1128, 0.01
    %v1137 = vmul.f32 %v1129, 0.01
    %v1138 = vsel %vm1130, %v1126, %v1134
    %v1139 = vsel %vm1131, %v1127, %v1135
    %v1140 = vsel %vm1132, %v1128, %v1136
    %v1141 = vsel %vm1133, %v1129, %v1137
    %v1142 = vpack.c.bf16 %v1139, %v1138
    %v1143 = vpack.c.bf16 %v1141, %v1140
    %1144 = vst [vmem:[#allocation2 + $0x10] sm:$0xff] %v1142
    %1145 = vst [vmem:[#allocation2 + $0x18] sm:$0xff] %v1143
    %v1146 = vld [vmem:[#allocation2] sm:$0xff]
    %v1147 = vld [vmem:[#allocation2 + $0x8] sm:$0xff]
    %v1148 = vld [vmem:[#allocation2 + $0x10] sm:$0xff]
    %v1149 = vld [vmem:[#allocation2 + $0x18] sm:$0xff]
    %v1150 = vld [vmem:[%s7] sm:$0xf]
    %v1151 = vld [vmem:[%s7 + $0x4] sm:$0xf]
    %v1152 = vld [vmem:[%s7 + $0x8] sm:$0xf]
    %v1153 = vld [vmem:[%s7 + $0xc] sm:$0xf]
    %v1154 = vld [vmem:[%s7 + $0x10] sm:$0xf]
    %v1155 = vld [vmem:[%s7 + $0x14] sm:$0xf]
    %v1156 = vld [vmem:[%s7 + $0x18] sm:$0xf]
    %v1157 = vld [vmem:[%s7 + $0x1c] sm:$0xf]
    %v1158 = vld [vmem:[%s7 + $0x20] sm:$0xf]
    %v1168 = vunpack.c.l.b16 %v1150
    %v1169 = vunpack.c.l.b16 %v1151
    %v1170 = vunpack.c.l.b16 %v1152
    %v1171 = vunpack.c.l.b16 %v1153
    %v1172 = vunpack.c.l.b16 %v1154
    %v1173 = vunpack.c.l.b16 %v1155
    %v1174 = vunpack.c.l.b16 %v1156
    %v1175 = vunpack.c.l.b16 %v1157
    %v1176 = vunpack.c.l.b16 %v1158
    %v1177 = vpack.c.b16 %v1169, %v1168
    %v1178 = vpack.c.b16 %v1171, %v1170
    %v1179 = vpack.c.b16 %v1173, %v1172
    %v1180 = vpack.c.b16 %v1175, %v1174
    %v1181 = vpack.c.b16 %v1176, %v1176
    %v1186 = vunpack.c.l.b16 %v1146
    %v1187 = vunpack.c.h.b16 %v1146
    %v1188 = vunpack.c.l.b16 %v1147
    %v1189 = vunpack.c.h.b16 %v1147
    %v1190 = vunpack.c.l.b16 %v1148
    %v1191 = vunpack.c.h.b16 %v1148
    %v1192 = vunpack.c.l.b16 %v1149
    %v1193 = vunpack.c.h.b16 %v1149
    %v1194 = vpack.c.b16 %v1190, %v1186
    %v1195 = vpack.c.b16 %v1191, %v1187
    %v1196 = vpack.c.b16 %v1192, %v1188
    %v1197 = vpack.c.b16 %v1193, %v1189
    %vm1202 = vcmask 130048
    %v1204 = vsel %vm1202, %v1177, 0
    %v1207 = vsel %vm1202, %v1178, 0
    %v1210 = vsel %vm1202, %v1179, 0
    %v1213 = vsel %vm1202, %v1180, 0
    %v1216 = vsel %vm1202, %v1181, 0
    %1218 = vmatpush.bf16.msra.mxu0 0
    %1219 = vmatpush.bf16.msra.mxu0 0
    %1220 = vmatpush.bf16.msra.mxu0 0
    %1221 = vmatpush.bf16.msra.mxu0 0
    %1222 = vmatpush.bf16.msra.mxu0 0
    %1223 = vmatpush.bf16.msra.mxu0 0
    %1224 = vmatpush.bf16.msra.mxu0 0
    %1225 = vmatpush.bf16.msra.mxu0 %v1194
    %1226 = vmatmul.bf16.gmra.mxu0 %v1204
    %v1227 = vpop.f32.mrf.mxu0
    %v1228 = vadd.f32 0.0, %v1227
    %v1229 = vpop.f32.mrf.mxu0
    %v1230 = vadd.f32 0.0, %v1229
    %1231 = vmatmul.bf16.gmra.mxu0 %v1207
    %v1232 = vpop.f32.mrf.mxu0
    %v1233 = vadd.f32 0.0, %v1232
    %v1234 = vpop.f32.mrf.mxu0
    %v1235 = vadd.f32 0.0, %v1234
    %1236 = vmatmul.bf16.gmra.mxu0 %v1210
    %v1237 = vpop.f32.mrf.mxu0
    %v1238 = vadd.f32 0.0, %v1237
    %v1239 = vpop.f32.mrf.mxu0
    %v1240 = vadd.f32 0.0, %v1239
    %1241 = vmatmul.bf16.gmra.mxu0 %v1213
    %v1242 = vpop.f32.mrf.mxu0
    %v1243 = vadd.f32 0.0, %v1242
    %v1244 = vpop.f32.mrf.mxu0
    %v1245 = vadd.f32 0.0, %v1244
    %1246 = vmatmul.bf16.gmra.mxu0 %v1216
    %v1247 = vpop.f32.mrf.mxu0
    %v1248 = vadd.f32 0.0, %v1247
    %v1249 = vpop.f32.mrf.mxu0
    %1250 = vdwg.mxu0
    %1251 = vmatpush.bf16.msra.mxu0 0
    %1252 = vmatpush.bf16.msra.mxu0 0
    %1253 = vmatpush.bf16.msra.mxu0 0
    %1254 = vmatpush.bf16.msra.mxu0 0
    %1255 = vmatpush.bf16.msra.mxu0 0
    %1256 = vmatpush.bf16.msra.mxu0 0
    %1257 = vmatpush.bf16.msra.mxu0 0
    %1258 = vmatpush.bf16.msra.mxu0 %v1195
    %1259 = vmatmul.bf16.gmra.mxu0 %v1204
    %v1260 = vpop.f32.mrf.mxu0
    %v1261 = vadd.f32 0.0, %v1260
    %v1262 = vpop.f32.mrf.mxu0
    %v1263 = vadd.f32 0.0, %v1262
    %1264 = vmatmul.bf16.gmra.mxu0 %v1207
    %v1265 = vpop.f32.mrf.mxu0
    %v1266 = vadd.f32 0.0, %v1265
    %v1267 = vpop.f32.mrf.mxu0
    %v1268 = vadd.f32 0.0, %v1267
    %1269 = vmatmul.bf16.gmra.mxu0 %v1210
    %v1270 = vpop.f32.mrf.mxu0
    %v1271 = vadd.f32 0.0, %v1270
    %v1272 = vpop.f32.mrf.mxu0
    %v1273 = vadd.f32 0.0, %v1272
    %1274 = vmatmul.bf16.gmra.mxu0 %v1213
    %v1275 = vpop.f32.mrf.mxu0
    %v1276 = vadd.f32 0.0, %v1275
    %v1277 = vpop.f32.mrf.mxu0
    %v1278 = vadd.f32 0.0, %v1277
    %1279 = vmatmul.bf16.gmra.mxu0 %v1216
    %v1280 = vpop.f32.mrf.mxu0
    %v1281 = vadd.f32 0.0, %v1280
    %v1282 = vpop.f32.mrf.mxu0
    %1283 = vdwg.mxu0
    %1284 = vmatpush.bf16.msra.mxu0 0
    %1285 = vmatpush.bf16.msra.mxu0 0
    %1286 = vmatpush.bf16.msra.mxu0 0
    %1287 = vmatpush.bf16.msra.mxu0 0
    %1288 = vmatpush.bf16.msra.mxu0 0
    %1289 = vmatpush.bf16.msra.mxu0 0
    %1290 = vmatpush.bf16.msra.mxu0 0
    %1291 = vmatpush.bf16.msra.mxu0 %v1196
    %1292 = vmatmul.bf16.gmra.mxu0 %v1204
    %v1293 = vpop.f32.mrf.mxu0
    %v1294 = vadd.f32 0.0, %v1293
    %v1295 = vpop.f32.mrf.mxu0
    %v1296 = vadd.f32 0.0, %v1295
    %1297 = vmatmul.bf16.gmra.mxu0 %v1207
    %v1298 = vpop.f32.mrf.mxu0
    %v1299 = vadd.f32 0.0, %v1298
    %v1300 = vpop.f32.mrf.mxu0
    %v1301 = vadd.f32 0.0, %v1300
    %1302 = vmatmul.bf16.gmra.mxu0 %v1210
    %v1303 = vpop.f32.mrf.mxu0
    %v1304 = vadd.f32 0.0, %v1303
    %v1305 = vpop.f32.mrf.mxu0
    %v1306 = vadd.f32 0.0, %v1305
    %1307 = vmatmul.bf16.gmra.mxu0 %v1213
    %v1308 = vpop.f32.mrf.mxu0
    %v1309 = vadd.f32 0.0, %v1308
    %v1310 = vpop.f32.mrf.mxu0
    %v1311 = vadd.f32 0.0, %v1310
    %1312 = vmatmul.bf16.gmra.mxu0 %v1216
    %v1313 = vpop.f32.mrf.mxu0
    %v1314 = vadd.f32 0.0, %v1313
    %v1315 = vpop.f32.mrf.mxu0
    %1316 = vdwg.mxu0
    %1317 = vmatpush.bf16.msra.mxu0 0
    %1318 = vmatpush.bf16.msra.mxu0 0
    %1319 = vmatpush.bf16.msra.mxu0 0
    %1320 = vmatpush.bf16.msra.mxu0 0
    %1321 = vmatpush.bf16.msra.mxu0 0
    %1322 = vmatpush.bf16.msra.mxu0 0
    %1323 = vmatpush.bf16.msra.mxu0 0
    %1324 = vmatpush.bf16.msra.mxu0 %v1197
    %1325 = vmatmul.bf16.gmra.mxu0 %v1204
    %v1326 = vpop.f32.mrf.mxu0
    %v1327 = vadd.f32 0.0, %v1326
    %v1328 = vpop.f32.mrf.mxu0
    %v1329 = vadd.f32 0.0, %v1328
    %1330 = vmatmul.bf16.gmra.mxu0 %v1207
    %v1331 = vpop.f32.mrf.mxu0
    %v1332 = vadd.f32 0.0, %v1331
    %v1333 = vpop.f32.mrf.mxu0
    %v1334 = vadd.f32 0.0, %v1333
    %1335 = vmatmul.bf16.gmra.mxu0 %v1210
    %v1336 = vpop.f32.mrf.mxu0
    %v1337 = vadd.f32 0.0, %v1336
    %v1338 = vpop.f32.mrf.mxu0
    %v1339 = vadd.f32 0.0, %v1338
    %1340 = vmatmul.bf16.gmra.mxu0 %v1213
    %v1341 = vpop.f32.mrf.mxu0
    %v1342 = vadd.f32 0.0, %v1341
    %v1343 = vpop.f32.mrf.mxu0
    %v1344 = vadd.f32 0.0, %v1343
    %1345 = vmatmul.bf16.gmra.mxu0 %v1216
    %v1346 = vpop.f32.mrf.mxu0
    %v1347 = vadd.f32 0.0, %v1346
    %v1348 = vpop.f32.mrf.mxu0
    %1349 = vdwg.mxu0
    %1350 = vrot.lane.b32.xlu0 %v1228, 34
    %v1351 = vpop.permute.xlu0 %1350
    %1352 = vrot.lane.b32.xlu0 %v1261, 34
    %v1353 = vpop.permute.xlu0 %1352
    %1354 = vrot.lane.b32.xlu0 %v1294, 34
    %v1355 = vpop.permute.xlu0 %1354
    %1356 = vrot.lane.b32.xlu0 %v1327, 34
    %v1357 = vpop.permute.xlu0 %1356
    %vm1358 = vcmp.lt.s32.totalorder %v418, 34
    %v1359 = vsel %vm1358, %v1355, %v1357
    %v1360 = vsel %vm1358, %v1353, %v1355
    %v1361 = vsel %vm1358, %v1351, %v1353
    %v1362 = vsel %vm1358, %v1357, %v1351
    %v1363 = vld [vmem:[#allocation3 + $0x100] sm:$0xff]
    %v1364 = vld [vmem:[#allocation3 + $0x108] sm:$0xff]
    %v1365 = vld [vmem:[#allocation3 + $0x110] sm:$0xff]
    %v1366 = vld [vmem:[#allocation3 + $0x118] sm:$0xff]
    %v1367 = vmul.f32 %v1362, %v1363
    %v1368 = vmul.f32 %v1361, %v1364
    %v1369 = vmul.f32 %v1360, %v1365
    %v1370 = vmul.f32 %v1359, %v1366
    %1371 = vrot.lane.b32.xlu0 %v1230, 32
    %v1372 = vpop.permute.xlu0 %1371
    %1373 = vrot.lane.b32.xlu0 %v1263, 32
    %v1374 = vpop.permute.xlu0 %1373
    %1375 = vrot.lane.b32.xlu0 %v1296, 32
    %v1376 = vpop.permute.xlu0 %1375
    %1377 = vrot.lane.b32.xlu0 %v1329, 32
    %v1378 = vpop.permute.xlu0 %1377
    %vm1379 = vcmp.lt.s32.totalorder %v418, 32
    %v1380 = vsel %vm1379, %v1376, %v1378
    %v1381 = vsel %vm1379, %v1374, %v1376
    %v1382 = vsel %vm1379, %v1372, %v1374
    %v1383 = vsel %vm1379, %v1378, %v1372
    %v1384 = vld [vmem:[#allocation3 + $0x120] sm:$0xff]
    %v1385 = vld [vmem:[#allocation3 + $0x128] sm:$0xff]
    %v1386 = vld [vmem:[#allocation3 + $0x130] sm:$0xff]
    %v1387 = vld [vmem:[#allocation3 + $0x138] sm:$0xff]
    %v1388 = vmul.f32 %v1383, %v1384
    %v1389 = vmul.f32 %v1382, %v1385
    %v1390 = vmul.f32 %v1381, %v1386
    %v1391 = vmul.f32 %v1380, %v1387
    %1392 = vrot.lane.b32.xlu0 %v1233, 30
    %v1393 = vpop.permute.xlu0 %1392
    %1394 = vrot.lane.b32.xlu0 %v1266, 30
    %v1395 = vpop.permute.xlu0 %1394
    %1396 = vrot.lane.b32.xlu0 %v1299, 30
    %v1397 = vpop.permute.xlu0 %1396
    %1398 = vrot.lane.b32.xlu0 %v1332, 30
    %v1399 = vpop.permute.xlu0 %1398
    %vm1400 = vcmp.lt.s32.totalorder %v418, 30
    %v1401 = vsel %vm1400, %v1397, %v1399
    %v1402 = vsel %vm1400, %v1395, %v1397
    %v1403 = vsel %vm1400, %v1393, %v1395
    %v1404 = vsel %vm1400, %v1399, %v1393
    %v1405 = vld [vmem:[#allocation3 + $0x140] sm:$0xff]
    %v1406 = vld [vmem:[#allocation3 + $0x148] sm:$0xff]
    %v1407 = vld [vmem:[#allocation3 + $0x150] sm:$0xff]
    %v1408 = vld [vmem:[#allocation3 + $0x158] sm:$0xff]
    %v1409 = vmul.f32 %v1404, %v1405
    %v1410 = vmul.f32 %v1403, %v1406
    %v1411 = vmul.f32 %v1402, %v1407
    %v1412 = vmul.f32 %v1401, %v1408
    %1413 = vrot.lane.b32.xlu0 %v1235, 2
    %v1414 = vpop.permute.xlu0 %1413
    %1415 = vrot.lane.b32.xlu0 %v1268, 2
    %v1416 = vpop.permute.xlu0 %1415
    %1417 = vrot.lane.b32.xlu0 %v1301, 2
    %v1418 = vpop.permute.xlu0 %1417
    %1419 = vrot.lane.b32.xlu0 %v1334, 2
    %v1420 = vpop.permute.xlu0 %1419
    %vm1421 = vcmp.lt.s32.totalorder %v418, 2
    %v1422 = vsel %vm1421, %v1418, %v1420
    %v1423 = vsel %vm1421, %v1416, %v1418
    %v1424 = vsel %vm1421, %v1414, %v1416
    %v1425 = vsel %vm1421, %v1420, %v1414
    %v1426 = vld [vmem:[#allocation3 + $0x160] sm:$0xff]
    %v1427 = vld [vmem:[#allocation3 + $0x168] sm:$0xff]
    %v1428 = vld [vmem:[#allocation3 + $0x170] sm:$0xff]
    %v1429 = vld [vmem:[#allocation3 + $0x178] sm:$0xff]
    %v1430 = vmul.f32 %v1425, %v1426
    %v1431 = vmul.f32 %v1424, %v1427
    %v1432 = vmul.f32 %v1423, %v1428
    %v1433 = vmul.f32 %v1422, %v1429
    %1434 = vrot.lane.b32.xlu0 %v1240, 126
    %v1435 = vpop.permute.xlu0 %1434
    %1436 = vrot.lane.b32.xlu0 %v1273, 126
    %v1437 = vpop.permute.xlu0 %1436
    %1438 = vrot.lane.b32.xlu0 %v1306, 126
    %v1439 = vpop.permute.xlu0 %1438
    %1440 = vrot.lane.b32.xlu0 %v1339, 126
    %v1441 = vpop.permute.xlu0 %1440
    %vm1442 = vcmp.lt.s32.totalorder %v418, 126
    %v1443 = vsel %vm1442, %v1439, %v1441
    %v1444 = vsel %vm1442, %v1437, %v1439
    %v1445 = vsel %vm1442, %v1435, %v1437
    %v1446 = vsel %vm1442, %v1441, %v1435
    %v1447 = vld [vmem:[#allocation3 + $0x180] sm:$0xff]
    %v1448 = vld [vmem:[#allocation3 + $0x188] sm:$0xff]
    %v1449 = vld [vmem:[#allocation3 + $0x190] sm:$0xff]
    %v1450 = vld [vmem:[#allocation3 + $0x198] sm:$0xff]
    %v1451 = vmul.f32 %v1445, %v1447
    %v1452 = vmul.f32 %v1444, %v1448
    %v1453 = vmul.f32 %v1443, %v1449
    %v1454 = vmul.f32 %v1446, %v1450
    %1455 = vrot.lane.b32.xlu0 %v1243, 98
    %v1456 = vpop.permute.xlu0 %1455
    %1457 = vrot.lane.b32.xlu0 %v1276, 98
    %v1458 = vpop.permute.xlu0 %1457
    %1459 = vrot.lane.b32.xlu0 %v1309, 98
    %v1460 = vpop.permute.xlu0 %1459
    %1461 = vrot.lane.b32.xlu0 %v1342, 98
    %v1462 = vpop.permute.xlu0 %1461
    %vm1463 = vcmp.lt.s32.totalorder %v418, 98
    %v1464 = vsel %vm1463, %v1460, %v1462
    %v1465 = vsel %vm1463, %v1458, %v1460
    %v1466 = vsel %vm1463, %v1456, %v1458
    %v1467 = vsel %vm1463, %v1462, %v1456
    %v1468 = vld [vmem:[#allocation3 + $0x1a0] sm:$0xff]
    %v1469 = vld [vmem:[#allocation3 + $0x1a8] sm:$0xff]
    %v1470 = vld [vmem:[#allocation3 + $0x1b0] sm:$0xff]
    %v1471 = vld [vmem:[#allocation3 + $0x1b8] sm:$0xff]
    %v1472 = vmul.f32 %v1466, %v1468
    %v1473 = vmul.f32 %v1465, %v1469
    %v1474 = vmul.f32 %v1464, %v1470
    %v1475 = vmul.f32 %v1467, %v1471
    %1476 = vrot.lane.b32.xlu0 %v1245, 96
    %v1477 = vpop.permute.xlu0 %1476
    %1478 = vrot.lane.b32.xlu0 %v1278, 96
    %v1479 = vpop.permute.xlu0 %1478
    %1480 = vrot.lane.b32.xlu0 %v1311, 96
    %v1481 = vpop.permute.xlu0 %1480
    %1482 = vrot.lane.b32.xlu0 %v1344, 96
    %v1483 = vpop.permute.xlu0 %1482
    %vm1484 = vcmp.lt.s32.totalorder %v418, 96
    %v1485 = vsel %vm1484, %v1481, %v1483
    %v1486 = vsel %vm1484, %v1479, %v1481
    %v1487 = vsel %vm1484, %v1477, %v1479
    %v1488 = vsel %vm1484, %v1483, %v1477
    %v1489 = vld [vmem:[#allocation3 + $0x1c0] sm:$0xff]
    %v1490 = vld [vmem:[#allocation3 + $0x1c8] sm:$0xff]
    %v1491 = vld [vmem:[#allocation3 + $0x1d0] sm:$0xff]
    %v1492 = vld [vmem:[#allocation3 + $0x1d8] sm:$0xff]
    %v1493 = vmul.f32 %v1487, %v1489
    %v1494 = vmul.f32 %v1486, %v1490
    %v1495 = vmul.f32 %v1485, %v1491
    %v1496 = vmul.f32 %v1488, %v1492
    %1497 = vrot.lane.b32.xlu0 %v1248, 94
    %v1498 = vpop.permute.xlu0 %1497
    %1499 = vrot.lane.b32.xlu0 %v1281, 94
    %v1500 = vpop.permute.xlu0 %1499
    %1501 = vrot.lane.b32.xlu0 %v1314, 94
    %v1502 = vpop.permute.xlu0 %1501
    %1503 = vrot.lane.b32.xlu0 %v1347, 94
    %v1504 = vpop.permute.xlu0 %1503
    %vm1505 = vcmp.lt.s32.totalorder %v418, 94
    %v1506 = vsel %vm1505, %v1502, %v1504
    %v1507 = vsel %vm1505, %v1500, %v1502
    %v1508 = vsel %vm1505, %v1498, %v1500
    %v1509 = vsel %vm1505, %v1504, %v1498
    %v1510 = vld [vmem:[#allocation3 + $0x1e0] sm:$0xff]
    %v1511 = vld [vmem:[#allocation3 + $0x1e8] sm:$0xff]
    %v1512 = vld [vmem:[#allocation3 + $0x1f0] sm:$0xff]
    %v1513 = vld [vmem:[#allocation3 + $0x1f8] sm:$0xff]
    %v1514 = vmul.f32 %v1508, %v1510
    %v1515 = vmul.f32 %v1507, %v1511
    %v1516 = vmul.f32 %v1506, %v1512
    %v1517 = vmul.f32 %v1509, %v1513
    %v1518 = vadd.f32 %v1367, %v1388
    %v1519 = vadd.f32 %v1368, %v1389
    %v1520 = vadd.f32 %v1369, %v1390
    %v1521 = vadd.f32 %v1370, %v1391
    %v1522 = vadd.f32 %v1409, %v1430
    %v1523 = vadd.f32 %v1410, %v1431
    %v1524 = vadd.f32 %v1411, %v1432
    %v1525 = vadd.f32 %v1412, %v1433
    %v1526 = vadd.f32 %v1238, %v1451
    %v1527 = vadd.f32 %v1271, %v1452
    %v1528 = vadd.f32 %v1304, %v1453
    %v1529 = vadd.f32 %v1337, %v1454
    %v1530 = vadd.f32 %v1472, %v1493
    %v1531 = vadd.f32 %v1473, %v1494
    %v1532 = vadd.f32 %v1474, %v1495
    %v1533 = vadd.f32 %v1475, %v1496
    %v1534 = vadd.f32 %v1518, %v1522
    %v1535 = vadd.f32 %v1519, %v1523
    %v1536 = vadd.f32 %v1520, %v1524
    %v1537 = vadd.f32 %v1521, %v1525
    %v1538 = vadd.f32 %v1526, %v1530
    %v1539 = vadd.f32 %v1527, %v1531
    %v1540 = vadd.f32 %v1528, %v1532
    %v1541 = vadd.f32 %v1529, %v1533
    %v1542 = vadd.f32 %v1534, %v1538
    %v1543 = vadd.f32 %v1535, %v1539
    %v1544 = vadd.f32 %v1536, %v1540
    %v1545 = vadd.f32 %v1537, %v1541
    %v1546 = vadd.f32 %v1542, %v1514
    %v1547 = vadd.f32 %v1543, %v1515
    %v1548 = vadd.f32 %v1544, %v1516
    %v1549 = vadd.f32 %v1545, %v1517
    %v1550 = vadd.f32 %v1546, %v1547
    %v1551 = vadd.f32 %v1550, %v1548
    %v1552 = vadd.f32 %v1551, %v1549
    %1553 = vadd.xlane.f32.xlu0 %v1552
    %v1554 = vpop.xlane.xlu0 %1553
    %v1555 = vmul.f32 %v1546, %v1546
    %v1556 = vmul.f32 %v1547, %v1547
    %v1557 = vmul.f32 %v1548, %v1548
    %v1558 = vmul.f32 %v1549, %v1549
    %v1559 = vadd.f32 %v1555, %v1556
    %v1560 = vadd.f32 %v1559, %v1557
    %v1561 = vadd.f32 %v1560, %v1558
    %1562 = vadd.xlane.f32.xlu0 %v1561
    %v1563 = vpop.xlane.xlu0 %1562
    %v1564 = vmul.f32 %v1554, 0.001953125
    %v1565 = vmul.f32 %v1563, 0.001953125
    %v1566 = vmul.f32 %v1564, %v1564
    %v1567 = vsub.f32 %v1565, %v1566
    %v1568 = vmax.f32 %v1567, 0.0
    %v1569 = vld [vmem:[#allocation5] sm:$0xff]
    %v1570 = vadd.f32 %v1568, 1e-05
    %v1571 = vrsqrt.pop %v1570
    %v1572 = vmul.f32 %v1571, %v1570
    %v1573 = vmul.f32 %v1572, %v1571
    %v1574 = vmul.f32 0.5, %v1573
    %v1575 = vsub.f32 1.5, %v1574
    %v1576 = vmul.f32 %v1571, %v1575
    %vm1577 = vweird.f32 %v1570
    %vm1578 = vweird.f32 %v1571
    %vm1579 = vmor %vm1577, %vm1578
    %v1580 = vsel %vm1579, %v1571, %v1576
    %v1581 = vmul.f32 %v1569, %v1580
    %v1582 = vld [vmem:[#allocation7] sm:$0xff]
    %v1583 = vmul.f32 %v1564, %v1581
    %v1584 = vsub.f32 %v1582, %v1583
    %1586 = vset.pattern.permute.xlu0 2
    %1587 = vperm.xlu0 %1586, %v1581
    %v1588 = vpop.permute.xlu0 %1587
    %v1590 = vmul.f32 %v1546, %v1588
    %v1591 = vmul.f32 %v1547, %v1588
    %v1592 = vmul.f32 %v1548, %v1588
    %v1593 = vmul.f32 %v1549, %v1588
    %1595 = vset.pattern.permute.xlu0 2
    %1596 = vperm.xlu0 %1595, %v1584
    %v1597 = vpop.permute.xlu0 %1596
    %v1599 = vadd.f32 %v1590, %v1597
    %v1600 = vadd.f32 %v1591, %v1597
    %v1601 = vadd.f32 %v1592, %v1597
    %v1602 = vadd.f32 %v1593, %v1597
    %vm1603 = vcmp.ge.f32.partialorder %v1599, 0.0
    %vm1604 = vcmp.ge.f32.partialorder %v1600, 0.0
    %vm1605 = vcmp.ge.f32.partialorder %v1601, 0.0
    %vm1606 = vcmp.ge.f32.partialorder %v1602, 0.0
    %v1607 = vmul.f32 %v1599, 0.01
    %v1608 = vmul.f32 %v1600, 0.01
    %v1609 = vmul.f32 %v1601, 0.01
    %v1610 = vmul.f32 %v1602, 0.01
    %v1611 = vsel %vm1603, %v1599, %v1607
    %v1612 = vsel %vm1604, %v1600, %v1608
    %v1613 = vsel %vm1605, %v1601, %v1609
    %v1614 = vsel %vm1606, %v1602, %v1610
    %v1615 = vpack.c.bf16 %v1612, %v1611
    %v1616 = vpack.c.bf16 %v1614, %v1613
    %1617 = vst [vmem:[#allocation2 + $0x20] sm:$0xff] %v1615
    %1618 = vst [vmem:[#allocation2 + $0x28] sm:$0xff] %v1616
    %v1619 = vld [vmem:[#allocation2] sm:$0xff]
    %v1620 = vld [vmem:[#allocation2 + $0x8] sm:$0xff]
    %v1621 = vld [vmem:[#allocation2 + $0x10] sm:$0xff]
    %v1622 = vld [vmem:[#allocation2 + $0x18] sm:$0xff]
    %v1623 = vld [vmem:[#allocation2 + $0x20] sm:$0xff]
    %v1624 = vld [vmem:[#allocation2 + $0x28] sm:$0xff]
    %v1625 = vld [vmem:[%s8] sm:$0xf]
    %v1626 = vld [vmem:[%s8 + $0x4] sm:$0xf]
    %v1627 = vld [vmem:[%s8 + $0x8] sm:$0xf]
    %v1628 = vld [vmem:[%s8 + $0xc] sm:$0xf]
    %v1629 = vld [vmem:[%s8 + $0x10] sm:$0xf]
    %v1630 = vld [vmem:[%s8 + $0x14] sm:$0xf]
    %v1631 = vld [vmem:[%s8 + $0x18] sm:$0xf]
    %v1632 = vld [vmem:[%s8 + $0x1c] sm:$0xf]
    %v1633 = vld [vmem:[%s8 + $0x20] sm:$0xf]
    %v1643 = vunpack.c.l.b16 %v1625
    %v1644 = vunpack.c.l.b16 %v1626
    %v1645 = vunpack.c.l.b16 %v1627
    %v1646 = vunpack.c.l.b16 %v1628
    %v1647 = vunpack.c.l.b16 %v1629
    %v1648 = vunpack.c.l.b16 %v1630
    %v1649 = vunpack.c.l.b16 %v1631
    %v1650 = vunpack.c.l.b16 %v1632
    %v1651 = vunpack.c.l.b16 %v1633
    %v1652 = vpack.c.b16 %v1644, %v1643
    %v1653 = vpack.c.b16 %v1646, %v1645
    %v1654 = vpack.c.b16 %v1648, %v1647
    %v1655 = vpack.c.b16 %v1650, %v1649
    %v1656 = vpack.c.b16 %v1651, %v1651
    %v1663 = vunpack.c.l.b16 %v1619
    %v1664 = vunpack.c.h.b16 %v1619
    %v1665 = vunpack.c.l.b16 %v1620
    %v1666 = vunpack.c.h.b16 %v1620
    %v1667 = vunpack.c.l.b16 %v1621
    %v1668 = vunpack.c.h.b16 %v1621
    %v1669 = vunpack.c.l.b16 %v1622
    %v1670 = vunpack.c.h.b16 %v1622
    %v1671 = vunpack.c.l.b16 %v1623
    %v1672 = vunpack.c.h.b16 %v1623
    %v1673 = vunpack.c.l.b16 %v1624
    %v1674 = vunpack.c.h.b16 %v1624
    %v1675 = vpack.c.b16 %v1667, %v1663
    %v1676 = vpack.c.b16 %v1668, %v1664
    %v1677 = vpack.c.b16 %v1669, %v1665
    %v1678 = vpack.c.b16 %v1670, %v1666
    %v1679 = vpack.c.b16 %v1671, %v1671
    %v1680 = vpack.c.b16 %v1672, %v1672
    %v1681 = vpack.c.b16 %v1673, %v1673
    %v1682 = vpack.c.b16 %v1674, %v1674
    %vm1687 = vcmask 195584
    %v1689 = vsel %vm1687, %v1652, 0
    %v1692 = vsel %vm1687, %v1653, 0
    %v1695 = vsel %vm1687, %v1654, 0
    %v1698 = vsel %vm1687, %v1655, 0
    %v1701 = vsel %vm1687, %v1656, 0
    %v1704 = vsel %vm740, %v1679, 0
    %v1707 = vsel %vm740, %v1680, 0
    %v1710 = vsel %vm740, %v1681, 0
    %v1713 = vsel %vm740, %v1682, 0
    %1715 = vmatpush.bf16.msra.mxu0 0
    %1716 = vmatpush.bf16.msra.mxu0 0
    %1717 = vmatpush.bf16.msra.mxu0 0
    %1718 = vmatpush.bf16.msra.mxu0 0
    %1719 = vmatpush.bf16.msra.mxu0 0
    %1720 = vmatpush.bf16.msra.mxu0 0
    %1721 = vmatpush.bf16.msra.mxu0 %v1704
    %1722 = vmatpush.bf16.msra.mxu0 %v1675
    %1723 = vmatmul.bf16.gmra.mxu0 %v1689
    %v1724 = vpop.f32.mrf.mxu0
    %v1725 = vadd.f32 0.0, %v1724
    %v1726 = vpop.f32.mrf.mxu0
    %v1727 = vadd.f32 0.0, %v1726
    %1728 = vmatmul.bf16.gmra.mxu0 %v1692
    %v1729 = vpop.f32.mrf.mxu0
    %v1730 = vadd.f32 0.0, %v1729
    %v1731 = vpop.f32.mrf.mxu0
    %v1732 = vadd.f32 0.0, %v1731
    %1733 = vmatmul.bf16.gmra.mxu0 %v1695
    %v1734 = vpop.f32.mrf.mxu0
    %v1735 = vadd.f32 0.0, %v1734
    %v1736 = vpop.f32.mrf.mxu0
    %v1737 = vadd.f32 0.0, %v1736
    %1738 = vmatmul.bf16.gmra.mxu0 %v1698
    %v1739 = vpop.f32.mrf.mxu0
    %v1740 = vadd.f32 0.0, %v1739
    %v1741 = vpop.f32.mrf.mxu0
    %v1742 = vadd.f32 0.0, %v1741
    %1743 = vmatmul.bf16.gmra.mxu0 %v1701
    %v1744 = vpop.f32.mrf.mxu0
    %v1745 = vadd.f32 0.0, %v1744
    %v1746 = vpop.f32.mrf.mxu0
    %1747 = vdwg.mxu0
    %1748 = vmatpush.bf16.msra.mxu0 0
    %1749 = vmatpush.bf16.msra.mxu0 0
    %1750 = vmatpush.bf16.msra.mxu0 0
    %1751 = vmatpush.bf16.msra.mxu0 0
    %1752 = vmatpush.bf16.msra.mxu0 0
    %1753 = vmatpush.bf16.msra.mxu0 0
    %1754 = vmatpush.bf16.msra.mxu0 %v1707
    %1755 = vmatpush.bf16.msra.mxu0 %v1676
    %1756 = vmatmul.bf16.gmra.mxu0 %v1689
    %v1757 = vpop.f32.mrf.mxu0
    %v1758 = vadd.f32 0.0, %v1757
    %v1759 = vpop.f32.mrf.mxu0
    %v1760 = vadd.f32 0.0, %v1759
    %1761 = vmatmul.bf16.gmra.mxu0 %v1692
    %v1762 = vpop.f32.mrf.mxu0
    %v1763 = vadd.f32 0.0, %v1762
    %v1764 = vpop.f32.mrf.mxu0
    %v1765 = vadd.f32 0.0, %v1764
    %1766 = vmatmul.bf16.gmra.mxu0 %v1695
    %v1767 = vpop.f32.mrf.mxu0
    %v1768 = vadd.f32 0.0, %v1767
    %v1769 = vpop.f32.mrf.mxu0
    %v1770 = vadd.f32 0.0, %v1769
    %1771 = vmatmul.bf16.gmra.mxu0 %v1698
    %v1772 = vpop.f32.mrf.mxu0
    %v1773 = vadd.f32 0.0, %v1772
    %v1774 = vpop.f32.mrf.mxu0
    %v1775 = vadd.f32 0.0, %v1774
    %1776 = vmatmul.bf16.gmra.mxu0 %v1701
    %v1777 = vpop.f32.mrf.mxu0
    %v1778 = vadd.f32 0.0, %v1777
    %v1779 = vpop.f32.mrf.mxu0
    %1780 = vdwg.mxu0
    %1781 = vmatpush.bf16.msra.mxu0 0
    %1782 = vmatpush.bf16.msra.mxu0 0
    %1783 = vmatpush.bf16.msra.mxu0 0
    %1784 = vmatpush.bf16.msra.mxu0 0
    %1785 = vmatpush.bf16.msra.mxu0 0
    %1786 = vmatpush.bf16.msra.mxu0 0
    %1787 = vmatpush.bf16.msra.mxu0 %v1710
    %1788 = vmatpush.bf16.msra.mxu0 %v1677
    %1789 = vmatmul.bf16.gmra.mxu0 %v1689
    %v1790 = vpop.f32.mrf.mxu0
    %v1791 = vadd.f32 0.0, %v1790
    %v1792 = vpop.f32.mrf.mxu0
    %v1793 = vadd.f32 0.0, %v1792
    %1794 = vmatmul.bf16.gmra.mxu0 %v1692
    %v1795 = vpop.f32.mrf.mxu0
    %v1796 = vadd.f32 0.0, %v1795
    %v1797 = vpop.f32.mrf.mxu0
    %v1798 = vadd.f32 0.0, %v1797
    %1799 = vmatmul.bf16.gmra.mxu0 %v1695
    %v1800 = vpop.f32.mrf.mxu0
    %v1801 = vadd.f32 0.0, %v1800
    %v1802 = vpop.f32.mrf.mxu0
    %v1803 = vadd.f32 0.0, %v1802
    %1804 = vmatmul.bf16.gmra.mxu0 %v1698
    %v1805 = vpop.f32.mrf.mxu0
    %v1806 = vadd.f32 0.0, %v1805
    %v1807 = vpop.f32.mrf.mxu0
    %v1808 = vadd.f32 0.0, %v1807
    %1809 = vmatmul.bf16.gmra.mxu0 %v1701
    %v1810 = vpop.f32.mrf.mxu0
    %v1811 = vadd.f32 0.0, %v1810
    %v1812 = vpop.f32.mrf.mxu0
    %1813 = vdwg.mxu0
    %1814 = vmatpush.bf16.msra.mxu0 0
    %1815 = vmatpush.bf16.msra.mxu0 0
    %1816 = vmatpush.bf16.msra.mxu0 0
    %1817 = vmatpush.bf16.msra.mxu0 0
    %1818 = vmatpush.bf16.msra.mxu0 0
    %1819 = vmatpush.bf16.msra.mxu0 0
    %1820 = vmatpush.bf16.msra.mxu0 %v1713
    %1821 = vmatpush.bf16.msra.mxu0 %v1678
    %1822 = vmatmul.bf16.gmra.mxu0 %v1689
    %v1823 = vpop.f32.mrf.mxu0
    %v1824 = vadd.f32 0.0, %v1823
    %v1825 = vpop.f32.mrf.mxu0
    %v1826 = vadd.f32 0.0, %v1825
    %1827 = vmatmul.bf16.gmra.mxu0 %v1692
    %v1828 = vpop.f32.mrf.mxu0
    %v1829 = vadd.f32 0.0, %v1828
    %v1830 = vpop.f32.mrf.mxu0
    %v1831 = vadd.f32 0.0, %v1830
    %1832 = vmatmul.bf16.gmra.mxu0 %v1695
    %v1833 = vpop.f32.mrf.mxu0
    %v1834 = vadd.f32 0.0, %v1833
    %v1835 = vpop.f32.mrf.mxu0
    %v1836 = vadd.f32 0.0, %v1835
    %1837 = vmatmul.bf16.gmra.mxu0 %v1698
    %v1838 = vpop.f32.mrf.mxu0
    %v1839 = vadd.f32 0.0, %v1838
    %v1840 = vpop.f32.mrf.mxu0
    %v1841 = vadd.f32 0.0, %v1840
    %1842 = vmatmul.bf16.gmra.mxu0 %v1701
    %v1843 = vpop.f32.mrf.mxu0
    %v1844 = vadd.f32 0.0, %v1843
    %v1845 = vpop.f32.mrf.mxu0
    %1846 = vdwg.mxu0
    %1847 = vrot.lane.b32.xlu0 %v1725, 68
    %v1848 = vpop.permute.xlu0 %1847
    %1849 = vrot.lane.b32.xlu0 %v1758, 68
    %v1850 = vpop.permute.xlu0 %1849
    %1851 = vrot.lane.b32.xlu0 %v1791, 68
    %v1852 = vpop.permute.xlu0 %1851
    %1853 = vrot.lane.b32.xlu0 %v1824, 68
    %v1854 = vpop.permute.xlu0 %1853
    %vm1855 = vcmp.lt.s32.totalorder %v418, 68
    %v1856 = vsel %vm1855, %v1852, %v1854
    %v1857 = vsel %vm1855, %v1850, %v1852
    %v1858 = vsel %vm1855, %v1848, %v1850
    %v1859 = vsel %vm1855, %v1854, %v1848
    %v1860 = vld [vmem:[#allocation3 + $0x200] sm:$0xff]
    %v1861 = vld [vmem:[#allocation3 + $0x208] sm:$0xff]
    %v1862 = vld [vmem:[#allocation3 + $0x210] sm:$0xff]
    %v1863 = vld [vmem:[#allocation3 + $0x218] sm:$0xff]
    %v1864 = vmul.f32 %v1859, %v1860
    %v1865 = vmul.f32 %v1858, %v1861
    %v1866 = vmul.f32 %v1857, %v1862
    %v1867 = vmul.f32 %v1856, %v1863
    %1868 = vrot.lane.b32.xlu0 %v1727, 64
    %v1869 = vpop.permute.xlu0 %1868
    %1870 = vrot.lane.b32.xlu0 %v1760, 64
    %v1871 = vpop.permute.xlu0 %1870
    %1872 = vrot.lane.b32.xlu0 %v1793, 64
    %v1873 = vpop.permute.xlu0 %1872
    %1874 = vrot.lane.b32.xlu0 %v1826, 64
    %v1875 = vpop.permute.xlu0 %1874
    %vm1876 = vcmp.lt.s32.totalorder %v418, 64
    %v1877 = vsel %vm1876, %v1873, %v1875
    %v1878 = vsel %vm1876, %v1871, %v1873
    %v1879 = vsel %vm1876, %v1869, %v1871
    %v1880 = vsel %vm1876, %v1875, %v1869
    %v1881 = vld [vmem:[#allocation3 + $0x220] sm:$0xff]
    %v1882 = vld [vmem:[#allocation3 + $0x228] sm:$0xff]
    %v1883 = vld [vmem:[#allocation3 + $0x230] sm:$0xff]
    %v1884 = vld [vmem:[#allocation3 + $0x238] sm:$0xff]
    %v1885 = vmul.f32 %v1880, %v1881
    %v1886 = vmul.f32 %v1879, %v1882
    %v1887 = vmul.f32 %v1878, %v1883
    %v1888 = vmul.f32 %v1877, %v1884
    %1889 = vrot.lane.b32.xlu0 %v1730, 60
    %v1890 = vpop.permute.xlu0 %1889
    %1891 = vrot.lane.b32.xlu0 %v1763, 60
    %v1892 = vpop.permute.xlu0 %1891
    %1893 = vrot.lane.b32.xlu0 %v1796, 60
    %v1894 = vpop.permute.xlu0 %1893
    %1895 = vrot.lane.b32.xlu0 %v1829, 60
    %v1896 = vpop.permute.xlu0 %1895
    %vm1897 = vcmp.lt.s32.totalorder %v418, 60
    %v1898 = vsel %vm1897, %v1894, %v1896
    %v1899 = vsel %vm1897, %v1892, %v1894
    %v1900 = vsel %vm1897, %v1890, %v1892
    %v1901 = vsel %vm1897, %v1896, %v1890
    %v1902 = vld [vmem:[#allocation3 + $0x240] sm:$0xff]
    %v1903 = vld [vmem:[#allocation3 + $0x248] sm:$0xff]
    %v1904 = vld [vmem:[#allocation3 + $0x250] sm:$0xff]
    %v1905 = vld [vmem:[#allocation3 + $0x258] sm:$0xff]
    %v1906 = vmul.f32 %v1901, %v1902
    %v1907 = vmul.f32 %v1900, %v1903
    %v1908 = vmul.f32 %v1899, %v1904
    %v1909 = vmul.f32 %v1898, %v1905
    %1910 = vrot.lane.b32.xlu0 %v1732, 4
    %v1911 = vpop.permute.xlu0 %1910
    %1912 = vrot.lane.b32.xlu0 %v1765, 4
    %v1913 = vpop.permute.xlu0 %1912
    %1914 = vrot.lane.b32.xlu0 %v1798, 4
    %v1915 = vpop.permute.xlu0 %1914
    %1916 = vrot.lane.b32.xlu0 %v1831, 4
    %v1917 = vpop.permute.xlu0 %1916
    %vm1918 = vcmp.lt.s32.totalorder %v418, 4
    %v1919 = vsel %vm1918, %v1915, %v1917
    %v1920 = vsel %vm1918, %v1913, %v1915
    %v1921 = vsel %vm1918, %v1911, %v1913
    %v1922 = vsel %vm1918, %v1917, %v1911
    %v1923 = vld [vmem:[#allocation3 + $0x260] sm:$0xff]
    %v1924 = vld [vmem:[#allocation3 + $0x268] sm:$0xff]
    %v1925 = vld [vmem:[#allocation3 + $0x270] sm:$0xff]
    %v1926 = vld [vmem:[#allocation3 + $0x278] sm:$0xff]
    %v1927 = vmul.f32 %v1922, %v1923
    %v1928 = vmul.f32 %v1921, %v1924
    %v1929 = vmul.f32 %v1920, %v1925
    %v1930 = vmul.f32 %v1919, %v1926
    %1931 = vrot.lane.b32.xlu0 %v1737, 124
    %v1932 = vpop.permute.xlu0 %1931
    %1933 = vrot.lane.b32.xlu0 %v1770, 124
    %v1934 = vpop.permute.xlu0 %1933
    %1935 = vrot.lane.b32.xlu0 %v1803, 124
    %v1936 = vpop.permute.xlu0 %1935
    %1937 = vrot.lane.b32.xlu0 %v1836, 124
    %v1938 = vpop.permute.xlu0 %1937
    %vm1939 = vcmp.lt.s32.totalorder %v418, 124
    %v1940 = vsel %vm1939, %v1936, %v1938
    %v1941 = vsel %vm1939, %v1934, %v1936
    %v1942 = vsel %vm1939, %v1932, %v1934
    %v1943 = vsel %vm1939, %v1938, %v1932
    %v1944 = vld [vmem:[#allocation3 + $0x280] sm:$0xff]
    %v1945 = vld [vmem:[#allocation3 + $0x288] sm:$0xff]
    %v1946 = vld [vmem:[#allocation3 + $0x290] sm:$0xff]
    %v1947 = vld [vmem:[#allocation3 + $0x298] sm:$0xff]
    %v1948 = vmul.f32 %v1942, %v1944
    %v1949 = vmul.f32 %v1941, %v1945
    %v1950 = vmul.f32 %v1940, %v1946
    %v1951 = vmul.f32 %v1943, %v1947
    %1952 = vrot.lane.b32.xlu0 %v1740, 68
    %v1953 = vpop.permute.xlu0 %1952
    %1954 = vrot.lane.b32.xlu0 %v1773, 68
    %v1955 = vpop.permute.xlu0 %1954
    %1956 = vrot.lane.b32.xlu0 %v1806, 68
    %v1957 = vpop.permute.xlu0 %1956
    %1958 = vrot.lane.b32.xlu0 %v1839, 68
    %v1959 = vpop.permute.xlu0 %1958
    %v1960 = vsel %vm1855, %v1957, %v1959
    %v1961 = vsel %vm1855, %v1955, %v1957
    %v1962 = vsel %vm1855, %v1953, %v1955
    %v1963 = vsel %vm1855, %v1959, %v1953
    %v1964 = vld [vmem:[#allocation3 + $0x2a0] sm:$0xff]
    %v1965 = vld [vmem:[#allocation3 + $0x2a8] sm:$0xff]
    %v1966 = vld [vmem:[#allocation3 + $0x2b0] sm:$0xff]
    %v1967 = vld [vmem:[#allocation3 + $0x2b8] sm:$0xff]
    %v1968 = vmul.f32 %v1962, %v1964
    %v1969 = vmul.f32 %v1961, %v1965
    %v1970 = vmul.f32 %v1960, %v1966
    %v1971 = vmul.f32 %v1963, %v1967
    %1972 = vrot.lane.b32.xlu0 %v1742, 64
    %v1973 = vpop.permute.xlu0 %1972
    %1974 = vrot.lane.b32.xlu0 %v1775, 64
    %v1975 = vpop.permute.xlu0 %1974
    %1976 = vrot.lane.b32.xlu0 %v1808, 64
    %v1977 = vpop.permute.xlu0 %1976
    %1978 = vrot.lane.b32.xlu0 %v1841, 64
    %v1979 = vpop.permute.xlu0 %1978
    %v1980 = vsel %vm1876, %v1977, %v1979
    %v1981 = vsel %vm1876, %v1975, %v1977
    %v1982 = vsel %vm1876, %v1973, %v1975
    %v1983 = vsel %vm1876, %v1979, %v1973
    %v1984 = vld [vmem:[#allocation3 + $0x2c0] sm:$0xff]
    %v1985 = vld [vmem:[#allocation3 + $0x2c8] sm:$0xff]
    %v1986 = vld [vmem:[#allocation3 + $0x2d0] sm:$0xff]
    %v1987 = vld [vmem:[#allocation3 + $0x2d8] sm:$0xff]
    %v1988 = vmul.f32 %v1982, %v1984
    %v1989 = vmul.f32 %v1981, %v1985
    %v1990 = vmul.f32 %v1980, %v1986
    %v1991 = vmul.f32 %v1983, %v1987
    %1992 = vrot.lane.b32.xlu0 %v1745, 60
    %v1993 = vpop.permute.xlu0 %1992
    %1994 = vrot.lane.b32.xlu0 %v1778, 60
    %v1995 = vpop.permute.xlu0 %1994
    %1996 = vrot.lane.b32.xlu0 %v1811, 60
    %v1997 = vpop.permute.xlu0 %1996
    %1998 = vrot.lane.b32.xlu0 %v1844, 60
    %v1999 = vpop.permute.xlu0 %1998
    %v2000 = vsel %vm1897, %v1997, %v1999
    %v2001 = vsel %vm1897, %v1995, %v1997
    %v2002 = vsel %vm1897, %v1993, %v1995
    %v2003 = vsel %vm1897, %v1999, %v1993
    %v2004 = vld [vmem:[#allocation3 + $0x2e0] sm:$0xff]
    %v2005 = vld [vmem:[#allocation3 + $0x2e8] sm:$0xff]
    %v2006 = vld [vmem:[#allocation3 + $0x2f0] sm:$0xff]
    %v2007 = vld [vmem:[#allocation3 + $0x2f8] sm:$0xff]
    %v2008 = vmul.f32 %v2002, %v2004
    %v2009 = vmul.f32 %v2001, %v2005
    %v2010 = vmul.f32 %v2000, %v2006
    %v2011 = vmul.f32 %v2003, %v2007
    %v2012 = vadd.f32 %v1864, %v1885
    %v2013 = vadd.f32 %v1865, %v1886
    %v2014 = vadd.f32 %v1866, %v1887
    %v2015 = vadd.f32 %v1867, %v1888
    %v2016 = vadd.f32 %v1906, %v1927
    %v2017 = vadd.f32 %v1907, %v1928
    %v2018 = vadd.f32 %v1908, %v1929
    %v2019 = vadd.f32 %v1909, %v1930
    %v2020 = vadd.f32 %v1735, %v1948
    %v2021 = vadd.f32 %v1768, %v1949
    %v2022 = vadd.f32 %v1801, %v1950
    %v2023 = vadd.f32 %v1834, %v1951
    %v2024 = vadd.f32 %v1968, %v1988
    %v2025 = vadd.f32 %v1969, %v1989
    %v2026 = vadd.f32 %v1970, %v1990
    %v2027 = vadd.f32 %v1971, %v1991
    %v2028 = vadd.f32 %v2012, %v2016
    %v2029 = vadd.f32 %v2013, %v2017
    %v2030 = vadd.f32 %v2014, %v2018
    %v2031 = vadd.f32 %v2015, %v2019
    %v2032 = vadd.f32 %v2020, %v2024
    %v2033 = vadd.f32 %v2021, %v2025
    %v2034 = vadd.f32 %v2022, %v2026
    %v2035 = vadd.f32 %v2023, %v2027
    %v2036 = vadd.f32 %v2028, %v2032
    %v2037 = vadd.f32 %v2029, %v2033
    %v2038 = vadd.f32 %v2030, %v2034
    %v2039 = vadd.f32 %v2031, %v2035
    %v2040 = vadd.f32 %v2036, %v2008
    %v2041 = vadd.f32 %v2037, %v2009
    %v2042 = vadd.f32 %v2038, %v2010
    %v2043 = vadd.f32 %v2039, %v2011
    %v2044 = vadd.f32 %v2040, %v2041
    %v2045 = vadd.f32 %v2044, %v2042
    %v2046 = vadd.f32 %v2045, %v2043
    %2047 = vadd.xlane.f32.xlu0 %v2046
    %v2048 = vpop.xlane.xlu0 %2047
    %v2049 = vmul.f32 %v2040, %v2040
    %v2050 = vmul.f32 %v2041, %v2041
    %v2051 = vmul.f32 %v2042, %v2042
    %v2052 = vmul.f32 %v2043, %v2043
    %v2053 = vadd.f32 %v2049, %v2050
    %v2054 = vadd.f32 %v2053, %v2051
    %v2055 = vadd.f32 %v2054, %v2052
    %2056 = vadd.xlane.f32.xlu0 %v2055
    %v2057 = vpop.xlane.xlu0 %2056
    %v2058 = vmul.f32 %v2048, 0.001953125
    %v2059 = vmul.f32 %v2057, 0.001953125
    %v2060 = vmul.f32 %v2058, %v2058
    %v2061 = vsub.f32 %v2059, %v2060
    %v2062 = vmax.f32 %v2061, 0.0
    %v2063 = vld [vmem:[#allocation5] sm:$0xff]
    %v2064 = vadd.f32 %v2062, 1e-05
    %v2065 = vrsqrt.pop %v2064
    %v2066 = vmul.f32 %v2065, %v2064
    %v2067 = vmul.f32 %v2066, %v2065
    %v2068 = vmul.f32 0.5, %v2067
    %v2069 = vsub.f32 1.5, %v2068
    %v2070 = vmul.f32 %v2065, %v2069
    %vm2071 = vweird.f32 %v2064
    %vm2072 = vweird.f32 %v2065
    %vm2073 = vmor %vm2071, %vm2072
    %v2074 = vsel %vm2073, %v2065, %v2070
    %v2075 = vmul.f32 %v2063, %v2074
    %v2076 = vld [vmem:[#allocation7] sm:$0xff]
    %v2077 = vmul.f32 %v2058, %v2075
    %v2078 = vsub.f32 %v2076, %v2077
    %2080 = vset.pattern.permute.xlu0 3
    %2081 = vperm.xlu0 %2080, %v2075
    %v2082 = vpop.permute.xlu0 %2081
    %v2084 = vmul.f32 %v2040, %v2082
    %v2085 = vmul.f32 %v2041, %v2082
    %v2086 = vmul.f32 %v2042, %v2082
    %v2087 = vmul.f32 %v2043, %v2082
    %2089 = vset.pattern.permute.xlu0 3
    %2090 = vperm.xlu0 %2089, %v2078
    %v2091 = vpop.permute.xlu0 %2090
    %v2093 = vadd.f32 %v2084, %v2091
    %v2094 = vadd.f32 %v2085, %v2091
    %v2095 = vadd.f32 %v2086, %v2091
    %v2096 = vadd.f32 %v2087, %v2091
    %vm2097 = vcmp.ge.f32.partialorder %v2093, 0.0
    %vm2098 = vcmp.ge.f32.partialorder %v2094, 0.0
    %vm2099 = vcmp.ge.f32.partialorder %v2095, 0.0
    %vm2100 = vcmp.ge.f32.partialorder %v2096, 0.0
    %v2101 = vmul.f32 %v2093, 0.01
    %v2102 = vmul.f32 %v2094, 0.01
    %v2103 = vmul.f32 %v2095, 0.01
    %v2104 = vmul.f32 %v2096, 0.01
    %v2105 = vsel %vm2097, %v2093, %v2101
    %v2106 = vsel %vm2098, %v2094, %v2102
    %v2107 = vsel %vm2099, %v2095, %v2103
    %v2108 = vsel %vm2100, %v2096, %v2104
    %v2109 = vpack.c.bf16 %v2106, %v2105
    %v2110 = vpack.c.bf16 %v2108, %v2107
    %2111 = vst [vmem:[#allocation2 + $0x30] sm:$0xff] %v2109
    %2112 = vst [vmem:[#allocation2 + $0x38] sm:$0xff] %v2110
    %v2113 = vld [vmem:[#allocation2] sm:$0xff]
    %v2114 = vld [vmem:[#allocation2 + $0x8] sm:$0xff]
    %v2115 = vld [vmem:[#allocation2 + $0x10] sm:$0xff]
    %v2116 = vld [vmem:[#allocation2 + $0x18] sm:$0xff]
    %v2117 = vld [vmem:[#allocation2 + $0x20] sm:$0xff]
    %v2118 = vld [vmem:[#allocation2 + $0x28] sm:$0xff]
    %v2119 = vld [vmem:[#allocation2 + $0x30] sm:$0xff]
    %v2120 = vld [vmem:[#allocation2 + $0x38] sm:$0xff]
    %v2121 = vld [vmem:[%s9] sm:$0xf]
    %v2122 = vld [vmem:[%s9 + $0x4] sm:$0xf]
    %v2123 = vld [vmem:[%s9 + $0x8] sm:$0xf]
    %v2124 = vld [vmem:[%s9 + $0xc] sm:$0xf]
    %v2125 = vld [vmem:[%s9 + $0x10] sm:$0xf]
    %v2126 = vld [vmem:[%s9 + $0x14] sm:$0xf]
    %v2127 = vld [vmem:[%s9 + $0x18] sm:$0xf]
    %v2128 = vld [vmem:[%s9 + $0x1c] sm:$0xf]
    %v2129 = vld [vmem:[%s9 + $0x20] sm:$0xf]
    %v2139 = vunpack.c.l.b16 %v2121
    %v2140 = vunpack.c.l.b16 %v2122
    %v2141 = vunpack.c.l.b16 %v2123
    %v2142 = vunpack.c.l.b16 %v2124
    %v2143 = vunpack.c.l.b16 %v2125
    %v2144 = vunpack.c.l.b16 %v2126
    %v2145 = vunpack.c.l.b16 %v2127
    %v2146 = vunpack.c.l.b16 %v2128
    %v2147 = vunpack.c.l.b16 %v2129
    %v2148 = vpack.c.b16 %v2140, %v2139
    %v2149 = vpack.c.b16 %v2142, %v2141
    %v2150 = vpack.c.b16 %v2144, %v2143
    %v2151 = vpack.c.b16 %v2146, %v2145
    %v2152 = vpack.c.b16 %v2147, %v2147
    %v2161 = vunpack.c.l.b16 %v2113
    %v2162 = vunpack.c.h.b16 %v2113
    %v2163 = vunpack.c.l.b16 %v2114
    %v2164 = vunpack.c.h.b16 %v2114
    %v2165 = vunpack.c.l.b16 %v2115
    %v2166 = vunpack.c.h.b16 %v2115
    %v2167 = vunpack.c.l.b16 %v2116
    %v2168 = vunpack.c.h.b16 %v2116
    %v2169 = vunpack.c.l.b16 %v2117
    %v2170 = vunpack.c.h.b16 %v2117
    %v2171 = vunpack.c.l.b16 %v2118
    %v2172 = vunpack.c.h.b16 %v2118
    %v2173 = vunpack.c.l.b16 %v2119
    %v2174 = vunpack.c.h.b16 %v2119
    %v2175 = vunpack.c.l.b16 %v2120
    %v2176 = vunpack.c.h.b16 %v2120
    %v2177 = vpack.c.b16 %v2165, %v2161
    %v2178 = vpack.c.b16 %v2166, %v2162
    %v2179 = vpack.c.b16 %v2167, %v2163
    %v2180 = vpack.c.b16 %v2168, %v2164
    %v2181 = vpack.c.b16 %v2173, %v2169
    %v2182 = vpack.c.b16 %v2174, %v2170
    %v2183 = vpack.c.b16 %v2175, %v2171
    %v2184 = vpack.c.b16 %v2176, %v2172
    %vm2193 = vcmask 261120
    %v2195 = vsel %vm2193, %v2148, 0
    %v2198 = vsel %vm2193, %v2149, 0
    %v2201 = vsel %vm2193, %v2150, 0
    %v2204 = vsel %vm2193, %v2151, 0
    %v2207 = vsel %vm2193, %v2152, 0
    %2209 = vmatpush.bf16.msra.mxu0 0
    %2210 = vmatpush.bf16.msra.mxu0 0
    %2211 = vmatpush.bf16.msra.mxu0 0
    %2212 = vmatpush.bf16.msra.mxu0 0
    %2213 = vmatpush.bf16.msra.mxu0 0
    %2214 = vmatpush.bf16.msra.mxu0 0
    %2215 = vmatpush.bf16.msra.mxu0 %v2181
    %2216 = vmatpush.bf16.msra.mxu0 %v2177
    %2217 = vmatmul.bf16.gmra.mxu0 %v2195
    %v2218 = vpop.f32.mrf.mxu0
    %v2219 = vadd.f32 0.0, %v2218
    %v2220 = vpop.f32.mrf.mxu0
    %v2221 = vadd.f32 0.0, %v2220
    %2222 = vmatmul.bf16.gmra.mxu0 %v2198
    %v2223 = vpop.f32.mrf.mxu0
    %v2224 = vadd.f32 0.0, %v2223
    %v2225 = vpop.f32.mrf.mxu0
    %v2226 = vadd.f32 0.0, %v2225
    %2227 = vmatmul.bf16.gmra.mxu0 %v2201
    %v2228 = vpop.f32.mrf.mxu0
    %v2229 = vadd.f32 0.0, %v2228
    %v2230 = vpop.f32.mrf.mxu0
    %v2231 = vadd.f32 0.0, %v2230
    %2232 = vmatmul.bf16.gmra.mxu0 %v2204
    %v2233 = vpop.f32.mrf.mxu0
    %v2234 = vadd.f32 0.0, %v2233
    %v2235 = vpop.f32.mrf.mxu0
    %v2236 = vadd.f32 0.0, %v2235
    %2237 = vmatmul.bf16.gmra.mxu0 %v2207
    %v2238 = vpop.f32.mrf.mxu0
    %v2239 = vadd.f32 0.0, %v2238
    %v2240 = vpop.f32.mrf.mxu0
    %2241 = vdwg.mxu0
    %2242 = vmatpush.bf16.msra.mxu0 0
    %2243 = vmatpush.bf16.msra.mxu0 0
    %2244 = vmatpush.bf16.msra.mxu0 0
    %2245 = vmatpush.bf16.msra.mxu0 0
    %2246 = vmatpush.bf16.msra.mxu0 0
    %2247 = vmatpush.bf16.msra.mxu0 0
    %2248 = vmatpush.bf16.msra.mxu0 %v2182
    %2249 = vmatpush.bf16.msra.mxu0 %v2178
    %2250 = vmatmul.bf16.gmra.mxu0 %v2195
    %v2251 = vpop.f32.mrf.mxu0
    %v2252 = vadd.f32 0.0, %v2251
    %v2253 = vpop.f32.mrf.mxu0
    %v2254 = vadd.f32 0.0, %v2253
    %2255 = vmatmul.bf16.gmra.mxu0 %v2198
    %v2256 = vpop.f32.mrf.mxu0
    %v2257 = vadd.f32 0.0, %v2256
    %v2258 = vpop.f32.mrf.mxu0
    %v2259 = vadd.f32 0.0, %v2258
    %2260 = vmatmul.bf16.gmra.mxu0 %v2201
    %v2261 = vpop.f32.mrf.mxu0
    %v2262 = vadd.f32 0.0, %v2261
    %v2263 = vpop.f32.mrf.mxu0
    %v2264 = vadd.f32 0.0, %v2263
    %2265 = vmatmul.bf16.gmra.mxu0 %v2204
    %v2266 = vpop.f32.mrf.mxu0
    %v2267 = vadd.f32 0.0, %v2266
    %v2268 = vpop.f32.mrf.mxu0
    %v2269 = vadd.f32 0.0, %v2268
    %2270 = vmatmul.bf16.gmra.mxu0 %v2207
    %v2271 = vpop.f32.mrf.mxu0
    %v2272 = vadd.f32 0.0, %v2271
    %v2273 = vpop.f32.mrf.mxu0
    %2274 = vdwg.mxu0
    %2275 = vmatpush.bf16.msra.mxu0 0
    %2276 = vmatpush.bf16.msra.mxu0 0
    %2277 = vmatpush.bf16.msra.mxu0 0
    %2278 = vmatpush.bf16.msra.mxu0 0
    %2279 = vmatpush.bf16.msra.mxu0 0
    %2280 = vmatpush.bf16.msra.mxu0 0
    %2281 = vmatpush.bf16.msra.mxu0 %v2183
    %2282 = vmatpush.bf16.msra.mxu0 %v2179
    %2283 = vmatmul.bf16.gmra.mxu0 %v2195
    %v2284 = vpop.f32.mrf.mxu0
    %v2285 = vadd.f32 0.0, %v2284
    %v2286 = vpop.f32.mrf.mxu0
    %v2287 = vadd.f32 0.0, %v2286
    %2288 = vmatmul.bf16.gmra.mxu0 %v2198
    %v2289 = vpop.f32.mrf.mxu0
    %v2290 = vadd.f32 0.0, %v2289
    %v2291 = vpop.f32.mrf.mxu0
    %v2292 = vadd.f32 0.0, %v2291
    %2293 = vmatmul.bf16.gmra.mxu0 %v2201
    %v2294 = vpop.f32.mrf.mxu0
    %v2295 = vadd.f32 0.0, %v2294
    %v2296 = vpop.f32.mrf.mxu0
    %v2297 = vadd.f32 0.0, %v2296
    %2298 = vmatmul.bf16.gmra.mxu0 %v2204
    %v2299 = vpop.f32.mrf.mxu0
    %v2300 = vadd.f32 0.0, %v2299
    %v2301 = vpop.f32.mrf.mxu0
    %v2302 = vadd.f32 0.0, %v2301
    %2303 = vmatmul.bf16.gmra.mxu0 %v2207
    %v2304 = vpop.f32.mrf.mxu0
    %v2305 = vadd.f32 0.0, %v2304
    %v2306 = vpop.f32.mrf.mxu0
    %2307 = vdwg.mxu0
    %2308 = vmatpush.bf16.msra.mxu0 0
    %2309 = vmatpush.bf16.msra.mxu0 0
    %2310 = vmatpush.bf16.msra.mxu0 0
    %2311 = vmatpush.bf16.msra.mxu0 0
    %2312 = vmatpush.bf16.msra.mxu0 0
    %2313 = vmatpush.bf16.msra.mxu0 0
    %2314 = vmatpush.bf16.msra.mxu0 %v2184
    %2315 = vmatpush.bf16.msra.mxu0 %v2180
    %2316 = vmatmul.bf16.gmra.mxu0 %v2195
    %v2317 = vpop.f32.mrf.mxu0
    %v2318 = vadd.f32 0.0, %v2317
    %v2319 = vpop.f32.mrf.mxu0
    %v2320 = vadd.f32 0.0, %v2319
    %2321 = vmatmul.bf16.gmra.mxu0 %v2198
    %v2322 = vpop.f32.mrf.mxu0
    %v2323 = vadd.f32 0.0, %v2322
    %v2324 = vpop.f32.mrf.mxu0
    %v2325 = vadd.f32 0.0, %v2324
    %2326 = vmatmul.bf16.gmra.mxu0 %v2201
    %v2327 = vpop.f32.mrf.mxu0
    %v2328 = vadd.f32 0.0, %v2327
    %v2329 = vpop.f32.mrf.mxu0
    %v2330 = vadd.f32 0.0, %v2329
    %2331 = vmatmul.bf16.gmra.mxu0 %v2204
    %v2332 = vpop.f32.mrf.mxu0
    %v2333 = vadd.f32 0.0, %v2332
    %v2334 = vpop.f32.mrf.mxu0
    %v2335 = vadd.f32 0.0, %v2334
    %2336 = vmatmul.bf16.gmra.mxu0 %v2207
    %v2337 = vpop.f32.mrf.mxu0
    %v2338 = vadd.f32 0.0, %v2337
    %v2339 = vpop.f32.mrf.mxu0
    %2340 = vdwg.mxu0
    %2341 = vrot.lane.b32.xlu0 %v2219, 8
    %v2342 = vpop.permute.xlu0 %2341
    %2343 = vrot.lane.b32.xlu0 %v2252, 8
    %v2344 = vpop.permute.xlu0 %2343
    %2345 = vrot.lane.b32.xlu0 %v2285, 8
    %v2346 = vpop.permute.xlu0 %2345
    %2347 = vrot.lane.b32.xlu0 %v2318, 8
    %v2348 = vpop.permute.xlu0 %2347
    %vm2349 = vcmp.lt.s32.totalorder %v418, 8
    %v2350 = vsel %vm2349, %v2346, %v2348
    %v2351 = vsel %vm2349, %v2344, %v2346
    %v2352 = vsel %vm2349, %v2342, %v2344
    %v2353 = vsel %vm2349, %v2348, %v2342
    %v2354 = vld [vmem:[#allocation3 + $0x300] sm:$0xff]
    %v2355 = vld [vmem:[#allocation3 + $0x308] sm:$0xff]
    %v2356 = vld [vmem:[#allocation3 + $0x310] sm:$0xff]
    %v2357 = vld [vmem:[#allocation3 + $0x318] sm:$0xff]
    %v2358 = vmul.f32 %v2350, %v2354
    %v2359 = vmul.f32 %v2353, %v2355
    %v2360 = vmul.f32 %v2352, %v2356
    %v2361 = vmul.f32 %v2351, %v2357
    %v2362 = vld [vmem:[#allocation3 + $0x320] sm:$0xff]
    %v2363 = vld [vmem:[#allocation3 + $0x328] sm:$0xff]
    %v2364 = vld [vmem:[#allocation3 + $0x330] sm:$0xff]
    %v2365 = vld [vmem:[#allocation3 + $0x338] sm:$0xff]
    %v2366 = vmul.f32 %v2320, %v2362
    %v2367 = vmul.f32 %v2221, %v2363
    %v2368 = vmul.f32 %v2254, %v2364
    %v2369 = vmul.f32 %v2287, %v2365
    %2370 = vrot.lane.b32.xlu0 %v2224, 120
    %v2371 = vpop.permute.xlu0 %2370
    %2372 = vrot.lane.b32.xlu0 %v2257, 120
    %v2373 = vpop.permute.xlu0 %2372
    %2374 = vrot.lane.b32.xlu0 %v2290, 120
    %v2375 = vpop.permute.xlu0 %2374
    %2376 = vrot.lane.b32.xlu0 %v2323, 120
    %v2377 = vpop.permute.xlu0 %2376
    %vm2378 = vcmp.lt.s32.totalorder %v418, 120
    %v2379 = vsel %vm2378, %v2375, %v2377
    %v2380 = vsel %vm2378, %v2373, %v2375
    %v2381 = vsel %vm2378, %v2371, %v2373
    %v2382 = vsel %vm2378, %v2377, %v2371
    %v2383 = vld [vmem:[#allocation3 + $0x340] sm:$0xff]
    %v2384 = vld [vmem:[#allocation3 + $0x348] sm:$0xff]
    %v2385 = vld [vmem:[#allocation3 + $0x350] sm:$0xff]
    %v2386 = vld [vmem:[#allocation3 + $0x358] sm:$0xff]
    %v2387 = vmul.f32 %v2382, %v2383
    %v2388 = vmul.f32 %v2381, %v2384
    %v2389 = vmul.f32 %v2380, %v2385
    %v2390 = vmul.f32 %v2379, %v2386
    %2391 = vrot.lane.b32.xlu0 %v2226, 8
    %v2392 = vpop.permute.xlu0 %2391
    %2393 = vrot.lane.b32.xlu0 %v2259, 8
    %v2394 = vpop.permute.xlu0 %2393
    %2395 = vrot.lane.b32.xlu0 %v2292, 8
    %v2396 = vpop.permute.xlu0 %2395
    %2397 = vrot.lane.b32.xlu0 %v2325, 8
    %v2398 = vpop.permute.xlu0 %2397
    %v2399 = vsel %vm2349, %v2396, %v2398
    %v2400 = vsel %vm2349, %v2394, %v2396
    %v2401 = vsel %vm2349, %v2392, %v2394
    %v2402 = vsel %vm2349, %v2398, %v2392
    %v2403 = vld [vmem:[#allocation3 + $0x360] sm:$0xff]
    %v2404 = vld [vmem:[#allocation3 + $0x368] sm:$0xff]
    %v2405 = vld [vmem:[#allocation3 + $0x370] sm:$0xff]
    %v2406 = vld [vmem:[#allocation3 + $0x378] sm:$0xff]
    %v2407 = vmul.f32 %v2402, %v2403
    %v2408 = vmul.f32 %v2401, %v2404
    %v2409 = vmul.f32 %v2400, %v2405
    %v2410 = vmul.f32 %v2399, %v2406
    %2411 = vrot.lane.b32.xlu0 %v2231, 120
    %v2412 = vpop.permute.xlu0 %2411
    %2413 = vrot.lane.b32.xlu0 %v2264, 120
    %v2414 = vpop.permute.xlu0 %2413
    %2415 = vrot.lane.b32.xlu0 %v2297, 120
    %v2416 = vpop.permute.xlu0 %2415
    %2417 = vrot.lane.b32.xlu0 %v2330, 120
    %v2418 = vpop.permute.xlu0 %2417
    %v2419 = vsel %vm2378, %v2416, %v2418
    %v2420 = vsel %vm2378, %v2414, %v2416
    %v2421 = vsel %vm2378, %v2412, %v2414
    %v2422 = vsel %vm2378, %v2418, %v2412
    %v2423 = vld [vmem:[#allocation3 + $0x380] sm:$0xff]
    %v2424 = vld [vmem:[#allocation3 + $0x388] sm:$0xff]
    %v2425 = vld [vmem:[#allocation3 + $0x390] sm:$0xff]
    %v2426 = vld [vmem:[#allocation3 + $0x398] sm:$0xff]
    %v2427 = vmul.f32 %v2421, %v2423
    %v2428 = vmul.f32 %v2420, %v2424
    %v2429 = vmul.f32 %v2419, %v2425
    %v2430 = vmul.f32 %v2422, %v2426
    %2431 = vrot.lane.b32.xlu0 %v2234, 8
    %v2432 = vpop.permute.xlu0 %2431
    %2433 = vrot.lane.b32.xlu0 %v2267, 8
    %v2434 = vpop.permute.xlu0 %2433
    %2435 = vrot.lane.b32.xlu0 %v2300, 8
    %v2436 = vpop.permute.xlu0 %2435
    %2437 = vrot.lane.b32.xlu0 %v2333, 8
    %v2438 = vpop.permute.xlu0 %2437
    %v2439 = vsel %vm2349, %v2436, %v2438
    %v2440 = vsel %vm2349, %v2434, %v2436
    %v2441 = vsel %vm2349, %v2432, %v2434
    %v2442 = vsel %vm2349, %v2438, %v2432
    %v2443 = vld [vmem:[#allocation3 + $0x3a0] sm:$0xff]
    %v2444 = vld [vmem:[#allocation3 + $0x3a8] sm:$0xff]
    %v2445 = vld [vmem:[#allocation3 + $0x3b0] sm:$0xff]
    %v2446 = vld [vmem:[#allocation3 + $0x3b8] sm:$0xff]
    %v2447 = vmul.f32 %v2441, %v2443
    %v2448 = vmul.f32 %v2440, %v2444
    %v2449 = vmul.f32 %v2439, %v2445
    %v2450 = vmul.f32 %v2442, %v2446
    %v2451 = vld [vmem:[#allocation3 + $0x3c0] sm:$0xff]
    %v2452 = vld [vmem:[#allocation3 + $0x3c8] sm:$0xff]
    %v2453 = vld [vmem:[#allocation3 + $0x3d0] sm:$0xff]
    %v2454 = vld [vmem:[#allocation3 + $0x3d8] sm:$0xff]
    %v2455 = vmul.f32 %v2269, %v2451
    %v2456 = vmul.f32 %v2302, %v2452
    %v2457 = vmul.f32 %v2335, %v2453
    %v2458 = vmul.f32 %v2236, %v2454
    %2459 = vrot.lane.b32.xlu0 %v2239, 120
    %v2460 = vpop.permute.xlu0 %2459
    %2461 = vrot.lane.b32.xlu0 %v2272, 120
    %v2462 = vpop.permute.xlu0 %2461
    %2463 = vrot.lane.b32.xlu0 %v2305, 120
    %v2464 = vpop.permute.xlu0 %2463
    %2465 = vrot.lane.b32.xlu0 %v2338, 120
    %v2466 = vpop.permute.xlu0 %2465
    %v2467 = vsel %vm2378, %v2464, %v2466
    %v2468 = vsel %vm2378, %v2462, %v2464
    %v2469 = vsel %vm2378, %v2460, %v2462
    %v2470 = vsel %vm2378, %v2466, %v2460
    %v2471 = vld [vmem:[#allocation3 + $0x3e0] sm:$0xff]
    %v2472 = vld [vmem:[#allocation3 + $0x3e8] sm:$0xff]
    %v2473 = vld [vmem:[#allocation3 + $0x3f0] sm:$0xff]
    %v2474 = vld [vmem:[#allocation3 + $0x3f8] sm:$0xff]
    %v2475 = vmul.f32 %v2468, %v2471
    %v2476 = vmul.f32 %v2467, %v2472
    %v2477 = vmul.f32 %v2470, %v2473
    %v2478 = vmul.f32 %v2469, %v2474
    %v2479 = vadd.f32 %v2358, %v2366
    %v2480 = vadd.f32 %v2359, %v2367
    %v2481 = vadd.f32 %v2360, %v2368
    %v2482 = vadd.f32 %v2361, %v2369
    %v2483 = vadd.f32 %v2387, %v2407
    %v2484 = vadd.f32 %v2388, %v2408
    %v2485 = vadd.f32 %v2389, %v2409
    %v2486 = vadd.f32 %v2390, %v2410
    %v2487 = vadd.f32 %v2229, %v2427
    %v2488 = vadd.f32 %v2262, %v2428
    %v2489 = vadd.f32 %v2295, %v2429
    %v2490 = vadd.f32 %v2328, %v2430
    %v2491 = vadd.f32 %v2447, %v2455
    %v2492 = vadd.f32 %v2448, %v2456
    %v2493 = vadd.f32 %v2449, %v2457
    %v2494 = vadd.f32 %v2450, %v2458
    %v2495 = vadd.f32 %v2479, %v2483
    %v2496 = vadd.f32 %v2480, %v2484
    %v2497 = vadd.f32 %v2481, %v2485
    %v2498 = vadd.f32 %v2482, %v2486
    %v2499 = vadd.f32 %v2487, %v2491
    %v2500 = vadd.f32 %v2488, %v2492
    %v2501 = vadd.f32 %v2489, %v2493
    %v2502 = vadd.f32 %v2490, %v2494
    %v2503 = vadd.f32 %v2495, %v2499
    %v2504 = vadd.f32 %v2496, %v2500
    %v2505 = vadd.f32 %v2497, %v2501
    %v2506 = vadd.f32 %v2498, %v2502
    %v2507 = vadd.f32 %v2503, %v2475
    %v2508 = vadd.f32 %v2504, %v2476
    %v2509 = vadd.f32 %v2505, %v2477
    %v2510 = vadd.f32 %v2506, %v2478
    %v2511 = vadd.f32 %v2507, %v2508
    %v2512 = vadd.f32 %v2511, %v2509
    %v2513 = vadd.f32 %v2512, %v2510
    %2514 = vadd.xlane.f32.xlu0 %v2513
    %v2515 = vpop.xlane.xlu0 %2514
    %v2516 = vmul.f32 %v2507, %v2507
    %v2517 = vmul.f32 %v2508, %v2508
    %v2518 = vmul.f32 %v2509, %v2509
    %v2519 = vmul.f32 %v2510, %v2510
    %v2520 = vadd.f32 %v2516, %v2517
    %v2521 = vadd.f32 %v2520, %v2518
    %v2522 = vadd.f32 %v2521, %v2519
    %2523 = vadd.xlane.f32.xlu0 %v2522
    %v2524 = vpop.xlane.xlu0 %2523
    %v2525 = vmul.f32 %v2515, 0.001953125
    %v2526 = vmul.f32 %v2524, 0.001953125
    %v2527 = vmul.f32 %v2525, %v2525
    %v2528 = vsub.f32 %v2526, %v2527
    %v2529 = vmax.f32 %v2528, 0.0
    %v2530 = vld [vmem:[#allocation5] sm:$0xff]
    %v2531 = vadd.f32 %v2529, 1e-05
    %v2532 = vrsqrt.pop %v2531
    %v2533 = vmul.f32 %v2532, %v2531
    %v2534 = vmul.f32 %v2533, %v2532
    %v2535 = vmul.f32 0.5, %v2534
    %v2536 = vsub.f32 1.5, %v2535
    %v2537 = vmul.f32 %v2532, %v2536
    %vm2538 = vweird.f32 %v2531
    %vm2539 = vweird.f32 %v2532
    %vm2540 = vmor %vm2538, %vm2539
    %v2541 = vsel %vm2540, %v2532, %v2537
    %v2542 = vmul.f32 %v2530, %v2541
    %v2543 = vld [vmem:[#allocation7] sm:$0xff]
    %v2544 = vmul.f32 %v2525, %v2542
    %v2545 = vsub.f32 %v2543, %v2544
    %2547 = vset.pattern.permute.xlu0 4
    %2548 = vperm.xlu0 %2547, %v2542
    %v2549 = vpop.permute.xlu0 %2548
    %v2551 = vmul.f32 %v2507, %v2549
    %v2552 = vmul.f32 %v2508, %v2549
    %v2553 = vmul.f32 %v2509, %v2549
    %v2554 = vmul.f32 %v2510, %v2549
    %2556 = vset.pattern.permute.xlu0 4
    %2557 = vperm.xlu0 %2556, %v2545
    %v2558 = vpop.permute.xlu0 %2557
    %v2560 = vadd.f32 %v2551, %v2558
    %v2561 = vadd.f32 %v2552, %v2558
    %v2562 = vadd.f32 %v2553, %v2558
    %v2563 = vadd.f32 %v2554, %v2558
    %vm2564 = vcmp.ge.f32.partialorder %v2560, 0.0
    %vm2565 = vcmp.ge.f32.partialorder %v2561, 0.0
    %vm2566 = vcmp.ge.f32.partialorder %v2562, 0.0
    %vm2567 = vcmp.ge.f32.partialorder %v2563, 0.0
    %v2568 = vmul.f32 %v2560, 0.01
    %v2569 = vmul.f32 %v2561, 0.01
    %v2570 = vmul.f32 %v2562, 0.01
    %v2571 = vmul.f32 %v2563, 0.01
    %v2572 = vsel %vm2564, %v2560, %v2568
    %v2573 = vsel %vm2565, %v2561, %v2569
    %v2574 = vsel %vm2566, %v2562, %v2570
    %v2575 = vsel %vm2567, %v2563, %v2571
    %v2576 = vpack.c.bf16 %v2573, %v2572
    %v2577 = vpack.c.bf16 %v2575, %v2574
    %2578 = vst [vmem:[#allocation2 + $0x40] sm:$0xff] %v2576
    %2579 = vst [vmem:[#allocation2 + $0x48] sm:$0xff] %v2577
    %v2580 = vld [vmem:[#allocation2] sm:$0xff]
    %v2581 = vld [vmem:[#allocation2 + $0x8] sm:$0xff]
    %v2582 = vld [vmem:[#allocation2 + $0x10] sm:$0xff]
    %v2583 = vld [vmem:[#allocation2 + $0x18] sm:$0xff]
    %v2584 = vld [vmem:[#allocation2 + $0x20] sm:$0xff]
    %v2585 = vld [vmem:[#allocation2 + $0x28] sm:$0xff]
    %v2586 = vld [vmem:[#allocation2 + $0x30] sm:$0xff]
    %v2587 = vld [vmem:[#allocation2 + $0x38] sm:$0xff]
    %v2588 = vld [vmem:[#allocation2 + $0x40] sm:$0xff]
    %v2589 = vld [vmem:[#allocation2 + $0x48] sm:$0xff]
    %v2590 = vld [vmem:[#allocation10] sm:$0xf]
    %v2601 = vunpack.c.l.b16 %v2580
    %v2602 = vunpack.c.h.b16 %v2580
    %v2603 = vunpack.c.l.b16 %v2581
    %v2604 = vunpack.c.h.b16 %v2581
    %v2605 = vunpack.c.l.b16 %v2582
    %v2606 = vunpack.c.h.b16 %v2582
    %v2607 = vunpack.c.l.b16 %v2583
    %v2608 = vunpack.c.h.b16 %v2583
    %v2609 = vunpack.c.l.b16 %v2584
    %v2610 = vunpack.c.h.b16 %v2584
    %v2611 = vunpack.c.l.b16 %v2585
    %v2612 = vunpack.c.h.b16 %v2585
    %v2613 = vunpack.c.l.b16 %v2586
    %v2614 = vunpack.c.h.b16 %v2586
    %v2615 = vunpack.c.l.b16 %v2587
    %v2616 = vunpack.c.h.b16 %v2587
    %v2617 = vunpack.c.l.b16 %v2588
    %v2618 = vunpack.c.h.b16 %v2588
    %v2619 = vunpack.c.l.b16 %v2589
    %v2620 = vunpack.c.h.b16 %v2589
    %v2621 = vpack.c.b16 %v2605, %v2601
    %v2622 = vpack.c.b16 %v2606, %v2602
    %v2623 = vpack.c.b16 %v2607, %v2603
    %v2624 = vpack.c.b16 %v2608, %v2604
    %v2625 = vpack.c.b16 %v2613, %v2609
    %v2626 = vpack.c.b16 %v2614, %v2610
    %v2627 = vpack.c.b16 %v2615, %v2611
    %v2628 = vpack.c.b16 %v2616, %v2612
    %v2629 = vpack.c.b16 %v2617, %v2617
    %v2630 = vpack.c.b16 %v2618, %v2618
    %v2631 = vpack.c.b16 %v2619, %v2619
    %v2632 = vpack.c.b16 %v2620, %v2620
    %vm2641 = vcmask 326656
    %v2643 = vsel %vm2641, %v2590, 0
    %v2646 = vsel %vm740, %v2629, 0
    %v2649 = vsel %vm740, %v2630, 0
    %v2652 = vsel %vm740, %v2631, 0
    %v2655 = vsel %vm740, %v2632, 0
    %2657 = vmatpush.bf16.msra.mxu0 0
    %2658 = vmatpush.bf16.msra.mxu0 0
    %2659 = vmatpush.bf16.msra.mxu0 0
    %2660 = vmatpush.bf16.msra.mxu0 0
    %2661 = vmatpush.bf16.msra.mxu0 0
    %2662 = vmatpush.bf16.msra.mxu0 %v2646
    %2663 = vmatpush.bf16.msra.mxu0 %v2625
    %2664 = vmatpush.bf16.msra.mxu0 %v2621
    %2665 = vmatmul.bf16.gmra.mxu0 %v2643
    %v2666 = vpop.f32.mrf.mxu0
    %v2667 = vadd.f32 0.0, %v2666
    %v2668 = vpop.f32.mrf.mxu0
    %2669 = vdwg.mxu0
    %2670 = vmatpush.bf16.msra.mxu0 0
    %2671 = vmatpush.bf16.msra.mxu0 0
    %2672 = vmatpush.bf16.msra.mxu0 0
    %2673 = vmatpush.bf16.msra.mxu0 0
    %2674 = vmatpush.bf16.msra.mxu0 0
    %2675 = vmatpush.bf16.msra.mxu0 %v2649
    %2676 = vmatpush.bf16.msra.mxu0 %v2626
    %2677 = vmatpush.bf16.msra.mxu0 %v2622
    %2678 = vmatmul.bf16.gmra.mxu0 %v2643
    %v2679 = vpop.f32.mrf.mxu0
    %v2680 = vadd.f32 0.0, %v2679
    %v2681 = vpop.f32.mrf.mxu0
    %2682 = vdwg.mxu0
    %2683 = vmatpush.bf16.msra.mxu0 0
    %2684 = vmatpush.bf16.msra.mxu0 0
    %2685 = vmatpush.bf16.msra.mxu0 0
    %2686 = vmatpush.bf16.msra.mxu0 0
    %2687 = vmatpush.bf16.msra.mxu0 0
    %2688 = vmatpush.bf16.msra.mxu0 %v2652
    %2689 = vmatpush.bf16.msra.mxu0 %v2627
    %2690 = vmatpush.bf16.msra.mxu0 %v2623
    %2691 = vmatmul.bf16.gmra.mxu0 %v2643
    %v2692 = vpop.f32.mrf.mxu0
    %v2693 = vadd.f32 0.0, %v2692
    %v2694 = vpop.f32.mrf.mxu0
    %2695 = vdwg.mxu0
    %2696 = vmatpush.bf16.msra.mxu0 0
    %2697 = vmatpush.bf16.msra.mxu0 0
    %2698 = vmatpush.bf16.msra.mxu0 0
    %2699 = vmatpush.bf16.msra.mxu0 0
    %2700 = vmatpush.bf16.msra.mxu0 0
    %2701 = vmatpush.bf16.msra.mxu0 %v2655
    %2702 = vmatpush.bf16.msra.mxu0 %v2628
    %2703 = vmatpush.bf16.msra.mxu0 %v2624
    %2704 = vmatmul.bf16.gmra.mxu0 %v2643
    %v2705 = vpop.f32.mrf.mxu0
    %v2706 = vadd.f32 0.0, %v2705
    %v2707 = vpop.f32.mrf.mxu0
    %2708 = vdwg.mxu0
    %v2709 = vadd.f32 %v2667, %v2680
    %v2710 = vadd.f32 %v2709, %v2693
    %v2711 = vadd.f32 %v2710, %v2706
    %2712 = vadd.xlane.f32.xlu0 %v2711
    %v2713 = vpop.xlane.xlu0 %2712
    %v2714 = vmul.f32 %v2667, %v2667
    %v2715 = vmul.f32 %v2680, %v2680
    %v2716 = vmul.f32 %v2693, %v2693
    %v2717 = vmul.f32 %v2706, %v2706
    %v2718 = vadd.f32 %v2714, %v2715
    %v2719 = vadd.f32 %v2718, %v2716
    %v2720 = vadd.f32 %v2719, %v2717
    %2721 = vadd.xlane.f32.xlu0 %v2720
    %v2722 = vpop.xlane.xlu0 %2721
    %v2723 = vmul.f32 %v2713, 0.001953125
    %v2724 = vmul.f32 %v2722, 0.001953125
    %v2725 = vmul.f32 %v2723, %v2723
    %v2726 = vsub.f32 %v2724, %v2725
    %v2727 = vmax.f32 %v2726, 0.0
    %v2728 = vld [vmem:[#allocation5] sm:$0xff]
    %v2729 = vadd.f32 %v2727, 1e-05
    %v2730 = vrsqrt.pop %v2729
    %v2731 = vmul.f32 %v2730, %v2729
    %v2732 = vmul.f32 %v2731, %v2730
    %v2733 = vmul.f32 0.5, %v2732
    %v2734 = vsub.f32 1.5, %v2733
    %v2735 = vmul.f32 %v2730, %v2734
    %vm2736 = vweird.f32 %v2729
    %vm2737 = vweird.f32 %v2730
    %vm2738 = vmor %vm2736, %vm2737
    %v2739 = vsel %vm2738, %v2730, %v2735
    %v2740 = vmul.f32 %v2728, %v2739
    %v2741 = vld [vmem:[#allocation7] sm:$0xff]
    %v2742 = vmul.f32 %v2723, %v2740
    %v2743 = vsub.f32 %v2741, %v2742
    %2745 = vset.pattern.permute.xlu0 5
    %2746 = vperm.xlu0 %2745, %v2740
    %v2747 = vpop.permute.xlu0 %2746
    %v2749 = vmul.f32 %v2667, %v2747
    %v2750 = vmul.f32 %v2680, %v2747
    %v2751 = vmul.f32 %v2693, %v2747
    %v2752 = vmul.f32 %v2706, %v2747
    %2754 = vset.pattern.permute.xlu0 5
    %2755 = vperm.xlu0 %2754, %v2743
    %v2756 = vpop.permute.xlu0 %2755
    %v2758 = vadd.f32 %v2749, %v2756
    %v2759 = vadd.f32 %v2750, %v2756
    %v2760 = vadd.f32 %v2751, %v2756
    %v2761 = vadd.f32 %v2752, %v2756
    %vm2762 = vcmp.ge.f32.partialorder %v2758, 0.0
    %vm2763 = vcmp.ge.f32.partialorder %v2759, 0.0
    %vm2764 = vcmp.ge.f32.partialorder %v2760, 0.0
    %vm2765 = vcmp.ge.f32.partialorder %v2761, 0.0
    %v2766 = vmul.f32 %v2758, 0.01
    %v2767 = vmul.f32 %v2759, 0.01
    %v2768 = vmul.f32 %v2760, 0.01
    %v2769 = vmul.f32 %v2761, 0.01
    %v2770 = vsel %vm2762, %v2758, %v2766
    %v2771 = vsel %vm2763, %v2759, %v2767
    %v2772 = vsel %vm2764, %v2760, %v2768
    %v2773 = vsel %vm2765, %v2761, %v2769
    %v2774 = vpack.c.bf16 %v2771, %v2770
    %v2775 = vpack.c.bf16 %v2773, %v2772
    %2776 = vst [vmem:[#allocation2 + $0x50] sm:$0xff] %v2774
    %2777 = vst [vmem:[#allocation2 + $0x58] sm:$0xff] %v2775
    %v2778 = vld [vmem:[#allocation2] sm:$0xff]
    %v2779 = vld [vmem:[#allocation2 + $0x8] sm:$0xff]
    %v2780 = vld [vmem:[#allocation2 + $0x10] sm:$0xff]
    %v2781 = vld [vmem:[#allocation2 + $0x18] sm:$0xff]
    %v2782 = vld [vmem:[#allocation2 + $0x20] sm:$0xff]
    %v2783 = vld [vmem:[#allocation2 + $0x28] sm:$0xff]
    %v2784 = vld [vmem:[#allocation2 + $0x30] sm:$0xff]
    %v2785 = vld [vmem:[#allocation2 + $0x38] sm:$0xff]
    %v2786 = vld [vmem:[#allocation2 + $0x40] sm:$0xff]
    %v2787 = vld [vmem:[#allocation2 + $0x48] sm:$0xff]
    %v2788 = vld [vmem:[#allocation2 + $0x50] sm:$0xff]
    %v2789 = vld [vmem:[#allocation2 + $0x58] sm:$0xff]
    %v2790 = vld [vmem:[#allocation11] sm:$0xf]
    %v2803 = vunpack.c.l.b16 %v2778
    %v2804 = vunpack.c.h.b16 %v2778
    %v2805 = vunpack.c.l.b16 %v2779
    %v2806 = vunpack.c.h.b16 %v2779
    %v2807 = vunpack.c.l.b16 %v2780
    %v2808 = vunpack.c.h.b16 %v2780
    %v2809 = vunpack.c.l.b16 %v2781
    %v2810 = vunpack.c.h.b16 %v2781
    %v2811 = vunpack.c.l.b16 %v2782
    %v2812 = vunpack.c.h.b16 %v2782
    %v2813 = vunpack.c.l.b16 %v2783
    %v2814 = vunpack.c.h.b16 %v2783
    %v2815 = vunpack.c.l.b16 %v2784
    %v2816 = vunpack.c.h.b16 %v2784
    %v2817 = vunpack.c.l.b16 %v2785
    %v2818 = vunpack.c.h.b16 %v2785
    %v2819 = vunpack.c.l.b16 %v2786
    %v2820 = vunpack.c.h.b16 %v2786
    %v2821 = vunpack.c.l.b16 %v2787
    %v2822 = vunpack.c.h.b16 %v2787
    %v2823 = vunpack.c.l.b16 %v2788
    %v2824 = vunpack.c.h.b16 %v2788
    %v2825 = vunpack.c.l.b16 %v2789
    %v2826 = vunpack.c.h.b16 %v2789
    %v2827 = vpack.c.b16 %v2807, %v2803
    %v2828 = vpack.c.b16 %v2808, %v2804
    %v2829 = vpack.c.b16 %v2809, %v2805
    %v2830 = vpack.c.b16 %v2810, %v2806
    %v2831 = vpack.c.b16 %v2815, %v2811
    %v2832 = vpack.c.b16 %v2816, %v2812
    %v2833 = vpack.c.b16 %v2817, %v2813
    %v2834 = vpack.c.b16 %v2818, %v2814
    %v2835 = vpack.c.b16 %v2823, %v2819
    %v2836 = vpack.c.b16 %v2824, %v2820
    %v2837 = vpack.c.b16 %v2825, %v2821
    %v2838 = vpack.c.b16 %v2826, %v2822
    %vm2851 = vcmask 392192
    %v2853 = vsel %vm2851, %v2790, 0
    %2855 = vmatpush.bf16.msra.mxu0 0
    %2856 = vmatpush.bf16.msra.mxu0 0
    %2857 = vmatpush.bf16.msra.mxu0 0
    %2858 = vmatpush.bf16.msra.mxu0 0
    %2859 = vmatpush.bf16.msra.mxu0 0
    %2860 = vmatpush.bf16.msra.mxu0 %v2835
    %2861 = vmatpush.bf16.msra.mxu0 %v2831
    %2862 = vmatpush.bf16.msra.mxu0 %v2827
    %2863 = vmatmul.bf16.gmra.mxu0 %v2853
    %v2864 = vpop.f32.mrf.mxu0
    %v2865 = vadd.f32 0.0, %v2864
    %v2866 = vpop.f32.mrf.mxu0
    %2867 = vdwg.mxu0
    %2868 = vmatpush.bf16.msra.mxu0 0
    %2869 = vmatpush.bf16.msra.mxu0 0
    %2870 = vmatpush.bf16.msra.mxu0 0
    %2871 = vmatpush.bf16.msra.mxu0 0
    %2872 = vmatpush.bf16.msra.mxu0 0
    %2873 = vmatpush.bf16.msra.mxu0 %v2836
    %2874 = vmatpush.bf16.msra.mxu0 %v2832
    %2875 = vmatpush.bf16.msra.mxu0 %v2828
    %2876 = vmatmul.bf16.gmra.mxu0 %v2853
    %v2877 = vpop.f32.mrf.mxu0
    %v2878 = vadd.f32 0.0, %v2877
    %v2879 = vpop.f32.mrf.mxu0
    %2880 = vdwg.mxu0
    %2881 = vmatpush.bf16.msra.mxu0 0
    %2882 = vmatpush.bf16.msra.mxu0 0
    %2883 = vmatpush.bf16.msra.mxu0 0
    %2884 = vmatpush.bf16.msra.mxu0 0
    %2885 = vmatpush.bf16.msra.mxu0 0
    %2886 = vmatpush.bf16.msra.mxu0 %v2837
    %2887 = vmatpush.bf16.msra.mxu0 %v2833
    %2888 = vmatpush.bf16.msra.mxu0 %v2829
    %2889 = vmatmul.bf16.gmra.mxu0 %v2853
    %v2890 = vpop.f32.mrf.mxu0
    %v2891 = vadd.f32 0.0, %v2890
    %v2892 = vpop.f32.mrf.mxu0
    %2893 = vdwg.mxu0
    %2894 = vmatpush.bf16.msra.mxu0 0
    %2895 = vmatpush.bf16.msra.mxu0 0
    %2896 = vmatpush.bf16.msra.mxu0 0
    %2897 = vmatpush.bf16.msra.mxu0 0
    %2898 = vmatpush.bf16.msra.mxu0 0
    %2899 = vmatpush.bf16.msra.mxu0 %v2838
    %2900 = vmatpush.bf16.msra.mxu0 %v2834
    %2901 = vmatpush.bf16.msra.mxu0 %v2830
    %2902 = vmatmul.bf16.gmra.mxu0 %v2853
    %v2903 = vpop.f32.mrf.mxu0
    %v2904 = vadd.f32 0.0, %v2903
    %v2905 = vpop.f32.mrf.mxu0
    %2906 = vdwg.mxu0
    %v2907 = vadd.f32 %v2865, %v2878
    %v2908 = vadd.f32 %v2907, %v2891
    %v2909 = vadd.f32 %v2908, %v2904
    %2910 = vadd.xlane.f32.xlu0 %v2909
    %v2911 = vpop.xlane.xlu0 %2910
    %v2912 = vmul.f32 %v2865, %v2865
    %v2913 = vmul.f32 %v2878, %v2878
    %v2914 = vmul.f32 %v2891, %v2891
    %v2915 = vmul.f32 %v2904, %v2904
    %v2916 = vadd.f32 %v2912, %v2913
    %v2917 = vadd.f32 %v2916, %v2914
    %v2918 = vadd.f32 %v2917, %v2915
    %2919 = vadd.xlane.f32.xlu0 %v2918
    %v2920 = vpop.xlane.xlu0 %2919
    %v2921 = vmul.f32 %v2911, 0.001953125
    %v2922 = vmul.f32 %v2920, 0.001953125
    %v2923 = vmul.f32 %v2921, %v2921
    %v2924 = vsub.f32 %v2922, %v2923
    %v2925 = vmax.f32 %v2924, 0.0
    %v2926 = vld [vmem:[#allocation5] sm:$0xff]
    %v2927 = vadd.f32 %v2925, 1e-05
    %v2928 = vrsqrt.pop %v2927
    %v2929 = vmul.f32 %v2928, %v2927
    %v2930 = vmul.f32 %v2929, %v2928
    %v2931 = vmul.f32 0.5, %v2930
    %v2932 = vsub.f32 1.5, %v2931
    %v2933 = vmul.f32 %v2928, %v2932
    %vm2934 = vweird.f32 %v2927
    %vm2935 = vweird.f32 %v2928
    %vm2936 = vmor %vm2934, %vm2935
    %v2937 = vsel %vm2936, %v2928, %v2933
    %v2938 = vmul.f32 %v2926, %v2937
    %v2939 = vld [vmem:[#allocation7] sm:$0xff]
    %v2940 = vmul.f32 %v2921, %v2938
    %v2941 = vsub.f32 %v2939, %v2940
    %2943 = vset.pattern.permute.xlu0 6
    %2944 = vperm.xlu0 %2943, %v2938
    %v2945 = vpop.permute.xlu0 %2944
    %v2947 = vmul.f32 %v2865, %v2945
    %v2948 = vmul.f32 %v2878, %v2945
    %v2949 = vmul.f32 %v2891, %v2945
    %v2950 = vmul.f32 %v2904, %v2945
    %2952 = vset.pattern.permute.xlu0 6
    %2953 = vperm.xlu0 %2952, %v2941
    %v2954 = vpop.permute.xlu0 %2953
    %v2956 = vadd.f32 %v2947, %v2954
    %v2957 = vadd.f32 %v2948, %v2954
    %v2958 = vadd.f32 %v2949, %v2954
    %v2959 = vadd.f32 %v2950, %v2954
    %vm2960 = vcmp.ge.f32.partialorder %v2956, 0.0
    %vm2961 = vcmp.ge.f32.partialorder %v2957, 0.0
    %vm2962 = vcmp.ge.f32.partialorder %v2958, 0.0
    %vm2963 = vcmp.ge.f32.partialorder %v2959, 0.0
    %v2964 = vmul.f32 %v2956, 0.01
    %v2965 = vmul.f32 %v2957, 0.01
    %v2966 = vmul.f32 %v2958, 0.01
    %v2967 = vmul.f32 %v2959, 0.01
    %v2968 = vsel %vm2960, %v2956, %v2964
    %v2969 = vsel %vm2961, %v2957, %v2965
    %v2970 = vsel %vm2962, %v2958, %v2966
    %v2971 = vsel %vm2963, %v2959, %v2967
    %v2972 = vpack.c.bf16 %v2969, %v2968
    %v2973 = vpack.c.bf16 %v2971, %v2970
    %2974 = vst [vmem:[#allocation2 + $0x60] sm:$0xff] %v2972
    %2975 = vst [vmem:[#allocation2 + $0x68] sm:$0xff] %v2973
    %v2976 = vld [vmem:[#allocation2] sm:$0xff]
    %v2977 = vld [vmem:[#allocation2 + $0x8] sm:$0xff]
    %v2978 = vld [vmem:[#allocation2 + $0x10] sm:$0xff]
    %v2979 = vld [vmem:[#allocation2 + $0x18] sm:$0xff]
    %v2980 = vld [vmem:[#allocation2 + $0x20] sm:$0xff]
    %v2981 = vld [vmem:[#allocation2 + $0x28] sm:$0xff]
    %v2982 = vld [vmem:[#allocation2 + $0x30] sm:$0xff]
    %v2983 = vld [vmem:[#allocation2 + $0x38] sm:$0xff]
    %v2984 = vld [vmem:[#allocation2 + $0x40] sm:$0xff]
    %v2985 = vld [vmem:[#allocation2 + $0x48] sm:$0xff]
    %v2986 = vld [vmem:[#allocation2 + $0x50] sm:$0xff]
    %v2987 = vld [vmem:[#allocation2 + $0x58] sm:$0xff]
    %v2988 = vld [vmem:[#allocation2 + $0x60] sm:$0xff]
    %v2989 = vld [vmem:[#allocation2 + $0x68] sm:$0xff]
    %v2990 = vld [vmem:[#allocation13] sm:$0xf]
    %v3005 = vunpack.c.l.b16 %v2976
    %v3006 = vunpack.c.h.b16 %v2976
    %v3007 = vunpack.c.l.b16 %v2977
    %v3008 = vunpack.c.h.b16 %v2977
    %v3009 = vunpack.c.l.b16 %v2978
    %v3010 = vunpack.c.h.b16 %v2978
    %v3011 = vunpack.c.l.b16 %v2979
    %v3012 = vunpack.c.h.b16 %v2979
    %v3013 = vunpack.c.l.b16 %v2980
    %v3014 = vunpack.c.h.b16 %v2980
    %v3015 = vunpack.c.l.b16 %v2981
    %v3016 = vunpack.c.h.b16 %v2981
    %v3017 = vunpack.c.l.b16 %v2982
    %v3018 = vunpack.c.h.b16 %v2982
    %v3019 = vunpack.c.l.b16 %v2983
    %v3020 = vunpack.c.h.b16 %v2983
    %v3021 = vunpack.c.l.b16 %v2984
    %v3022 = vunpack.c.h.b16 %v2984
    %v3023 = vunpack.c.l.b16 %v2985
    %v3024 = vunpack.c.h.b16 %v2985
    %v3025 = vunpack.c.l.b16 %v2986
    %v3026 = vunpack.c.h.b16 %v2986
    %v3027 = vunpack.c.l.b16 %v2987
    %v3028 = vunpack.c.h.b16 %v2987
    %v3029 = vunpack.c.l.b16 %v2988
    %v3030 = vunpack.c.h.b16 %v2988
    %v3031 = vunpack.c.l.b16 %v2989
    %v3032 = vunpack.c.h.b16 %v2989
    %v3033 = vpack.c.b16 %v3009, %v3005
    %v3034 = vpack.c.b16 %v3010, %v3006
    %v3035 = vpack.c.b16 %v3011, %v3007
    %v3036 = vpack.c.b16 %v3012, %v3008
    %v3037 = vpack.c.b16 %v3017, %v3013
    %v3038 = vpack.c.b16 %v3018, %v3014
    %v3039 = vpack.c.b16 %v3019, %v3015
    %v3040 = vpack.c.b16 %v3020, %v3016
    %v3041 = vpack.c.b16 %v3025, %v3021
    %v3042 = vpack.c.b16 %v3026, %v3022
    %v3043 = vpack.c.b16 %v3027, %v3023
    %v3044 = vpack.c.b16 %v3028, %v3024
    %v3045 = vpack.c.b16 %v3029, %v3029
    %v3046 = vpack.c.b16 %v3030, %v3030
    %v3047 = vpack.c.b16 %v3031, %v3031
    %v3048 = vpack.c.b16 %v3032, %v3032
    %vm3061 = vcmask 457728
    %v3063 = vsel %vm3061, %v2990, 0
    %v3066 = vsel %vm740, %v3045, 0
    %v3069 = vsel %vm740, %v3046, 0
    %v3072 = vsel %vm740, %v3047, 0
    %v3075 = vsel %vm740, %v3048, 0
    %3077 = vmatpush.bf16.msra.mxu0 0
    %3078 = vmatpush.bf16.msra.mxu0 0
    %3079 = vmatpush.bf16.msra.mxu0 0
    %3080 = vmatpush.bf16.msra.mxu0 0
    %3081 = vmatpush.bf16.msra.mxu0 %v3066
    %3082 = vmatpush.bf16.msra.mxu0 %v3041
    %3083 = vmatpush.bf16.msra.mxu0 %v3037
    %3084 = vmatpush.bf16.msra.mxu0 %v3033
    %3085 = vmatmul.bf16.gmra.mxu0 %v3063
    %v3086 = vpop.f32.mrf.mxu0
    %v3087 = vadd.f32 0.0, %v3086
    %v3088 = vpop.f32.mrf.mxu0
    %3089 = vdwg.mxu0
    %3090 = vmatpush.bf16.msra.mxu0 0
    %3091 = vmatpush.bf16.msra.mxu0 0
    %3092 = vmatpush.bf16.msra.mxu0 0
    %3093 = vmatpush.bf16.msra.mxu0 0
    %3094 = vmatpush.bf16.msra.mxu0 %v3069
    %3095 = vmatpush.bf16.msra.mxu0 %v3042
    %3096 = vmatpush.bf16.msra.mxu0 %v3038
    %3097 = vmatpush.bf16.msra.mxu0 %v3034
    %3098 = vmatmul.bf16.gmra.mxu0 %v3063
    %v3099 = vpop.f32.mrf.mxu0
    %v3100 = vadd.f32 0.0, %v3099
    %v3101 = vpop.f32.mrf.mxu0
    %3102 = vdwg.mxu0
    %3103 = vmatpush.bf16.msra.mxu0 0
    %3104 = vmatpush.bf16.msra.mxu0 0
    %3105 = vmatpush.bf16.msra.mxu0 0
    %3106 = vmatpush.bf16.msra.mxu0 0
    %3107 = vmatpush.bf16.msra.mxu0 %v3072
    %3108 = vmatpush.bf16.msra.mxu0 %v3043
    %3109 = vmatpush.bf16.msra.mxu0 %v3039
    %3110 = vmatpush.bf16.msra.mxu0 %v3035
    %3111 = vmatmul.bf16.gmra.mxu0 %v3063
    %v3112 = vpop.f32.mrf.mxu0
    %v3113 = vadd.f32 0.0, %v3112
    %v3114 = vpop.f32.mrf.mxu0
    %3115 = vdwg.mxu0
    %3116 = vmatpush.bf16.msra.mxu0 0
    %3117 = vmatpush.bf16.msra.mxu0 0
    %3118 = vmatpush.bf16.msra.mxu0 0
    %3119 = vmatpush.bf16.msra.mxu0 0
    %3120 = vmatpush.bf16.msra.mxu0 %v3075
    %3121 = vmatpush.bf16.msra.mxu0 %v3044
    %3122 = vmatpush.bf16.msra.mxu0 %v3040
    %3123 = vmatpush.bf16.msra.mxu0 %v3036
    %3124 = vmatmul.bf16.gmra.mxu0 %v3063
    %v3125 = vpop.f32.mrf.mxu0
    %v3126 = vadd.f32 0.0, %v3125
    %v3127 = vpop.f32.mrf.mxu0
    %3128 = vdwg.mxu0
    %v3129 = vadd.f32 %v3087, %v3100
    %v3130 = vadd.f32 %v3129, %v3113
    %v3131 = vadd.f32 %v3130, %v3126
    %3132 = vadd.xlane.f32.xlu0 %v3131
    %v3133 = vpop.xlane.xlu0 %3132
    %v3134 = vmul.f32 %v3087, %v3087
    %v3135 = vmul.f32 %v3100, %v3100
    %v3136 = vmul.f32 %v3113, %v3113
    %v3137 = vmul.f32 %v3126, %v3126
    %v3138 = vadd.f32 %v3134, %v3135
    %v3139 = vadd.f32 %v3138, %v3136
    %v3140 = vadd.f32 %v3139, %v3137
    %3141 = vadd.xlane.f32.xlu0 %v3140
    %v3142 = vpop.xlane.xlu0 %3141
    %v3143 = vmul.f32 %v3133, 0.001953125
    %v3144 = vmul.f32 %v3142, 0.001953125
    %v3145 = vmul.f32 %v3143, %v3143
    %v3146 = vsub.f32 %v3144, %v3145
    %v3147 = vmax.f32 %v3146, 0.0
    %v3148 = vld [vmem:[#allocation5] sm:$0xff]
    %v3149 = vadd.f32 %v3147, 1e-05
    %v3150 = vrsqrt.pop %v3149
    %v3151 = vmul.f32 %v3150, %v3149
    %v3152 = vmul.f32 %v3151, %v3150
    %v3153 = vmul.f32 0.5, %v3152
    %v3154 = vsub.f32 1.5, %v3153
    %v3155 = vmul.f32 %v3150, %v3154
    %vm3156 = vweird.f32 %v3149
    %vm3157 = vweird.f32 %v3150
    %vm3158 = vmor %vm3156, %vm3157
    %v3159 = vsel %vm3158, %v3150, %v3155
    %v3160 = vmul.f32 %v3148, %v3159
    %v3161 = vld [vmem:[#allocation7] sm:$0xff]
    %v3162 = vmul.f32 %v3143, %v3160
    %v3163 = vsub.f32 %v3161, %v3162
    %3165 = vset.pattern.permute.xlu0 7
    %3166 = vperm.xlu0 %3165, %v3160
    %v3167 = vpop.permute.xlu0 %3166
    %v3169 = vmul.f32 %v3087, %v3167
    %v3170 = vmul.f32 %v3100, %v3167
    %v3171 = vmul.f32 %v3113, %v3167
    %v3172 = vmul.f32 %v3126, %v3167
    %3174 = vset.pattern.permute.xlu0 7
    %3175 = vperm.xlu0 %3174, %v3163
    %v3176 = vpop.permute.xlu0 %3175
    %v3178 = vadd.f32 %v3169, %v3176
    %v3179 = vadd.f32 %v3170, %v3176
    %v3180 = vadd.f32 %v3171, %v3176
    %v3181 = vadd.f32 %v3172, %v3176
    %vm3182 = vcmp.ge.f32.partialorder %v3178, 0.0
    %vm3183 = vcmp.ge.f32.partialorder %v3179, 0.0
    %vm3184 = vcmp.ge.f32.partialorder %v3180, 0.0
    %vm3185 = vcmp.ge.f32.partialorder %v3181, 0.0
    %v3186 = vmul.f32 %v3178, 0.01
    %v3187 = vmul.f32 %v3179, 0.01
    %v3188 = vmul.f32 %v3180, 0.01
    %v3189 = vmul.f32 %v3181, 0.01
    %v3190 = vsel %vm3182, %v3178, %v3186
    %v3191 = vsel %vm3183, %v3179, %v3187
    %v3192 = vsel %vm3184, %v3180, %v3188
    %v3193 = vsel %vm3185, %v3181, %v3189
    %v3194 = vpack.c.bf16 %v3191, %v3190
    %v3195 = vpack.c.bf16 %v3193, %v3192
    %3196 = vst [vmem:[#allocation2 + $0x70] sm:$0xff] %v3194
    %3197 = vst [vmem:[#allocation2 + $0x78] sm:$0xff] %v3195
    %v3198 = vld [vmem:[#allocation2] sm:$0xff]
    %v3199 = vld [vmem:[#allocation2 + $0x8] sm:$0xff]
    %v3200 = vld [vmem:[#allocation2 + $0x10] sm:$0xff]
    %v3201 = vld [vmem:[#allocation2 + $0x18] sm:$0xff]
    %v3202 = vld [vmem:[#allocation2 + $0x20] sm:$0xff]
    %v3203 = vld [vmem:[#allocation2 + $0x28] sm:$0xff]
    %v3204 = vld [vmem:[#allocation2 + $0x30] sm:$0xff]
    %v3205 = vld [vmem:[#allocation2 + $0x38] sm:$0xff]
    %v3206 = vld [vmem:[#allocation2 + $0x40] sm:$0xff]
    %v3207 = vld [vmem:[#allocation2 + $0x48] sm:$0xff]
    %v3208 = vld [vmem:[#allocation2 + $0x50] sm:$0xff]
    %v3209 = vld [vmem:[#allocation2 + $0x58] sm:$0xff]
    %v3210 = vld [vmem:[#allocation2 + $0x60] sm:$0xff]
    %v3211 = vld [vmem:[#allocation2 + $0x68] sm:$0xff]
    %v3212 = vld [vmem:[#allocation2 + $0x70] sm:$0xff]
    %v3213 = vld [vmem:[#allocation2 + $0x78] sm:$0xff]
    %v3214 = vld [vmem:[#allocation14] sm:$0xf]
    %v3231 = vunpack.c.l.b16 %v3198
    %v3232 = vunpack.c.h.b16 %v3198
    %v3233 = vunpack.c.l.b16 %v3199
    %v3234 = vunpack.c.h.b16 %v3199
    %v3235 = vunpack.c.l.b16 %v3200
    %v3236 = vunpack.c.h.b16 %v3200
    %v3237 = vunpack.c.l.b16 %v3201
    %v3238 = vunpack.c.h.b16 %v3201
    %v3239 = vunpack.c.l.b16 %v3202
    %v3240 = vunpack.c.h.b16 %v3202
    %v3241 = vunpack.c.l.b16 %v3203
    %v3242 = vunpack.c.h.b16 %v3203
    %v3243 = vunpack.c.l.b16 %v3204
    %v3244 = vunpack.c.h.b16 %v3204
    %v3245 = vunpack.c.l.b16 %v3205
    %v3246 = vunpack.c.h.b16 %v3205
    %v3247 = vunpack.c.l.b16 %v3206
    %v3248 = vunpack.c.h.b16 %v3206
    %v3249 = vunpack.c.l.b16 %v3207
    %v3250 = vunpack.c.h.b16 %v3207
    %v3251 = vunpack.c.l.b16 %v3208
    %v3252 = vunpack.c.h.b16 %v3208
    %v3253 = vunpack.c.l.b16 %v3209
    %v3254 = vunpack.c.h.b16 %v3209
    %v3255 = vunpack.c.l.b16 %v3210
    %v3256 = vunpack.c.h.b16 %v3210
    %v3257 = vunpack.c.l.b16 %v3211
    %v3258 = vunpack.c.h.b16 %v3211
    %v3259 = vunpack.c.l.b16 %v3212
    %v3260 = vunpack.c.h.b16 %v3212
    %v3261 = vunpack.c.l.b16 %v3213
    %v3262 = vunpack.c.h.b16 %v3213
    %v3263 = vpack.c.b16 %v3235, %v3231
    %v3264 = vpack.c.b16 %v3236, %v3232
    %v3265 = vpack.c.b16 %v3237, %v3233
    %v3266 = vpack.c.b16 %v3238, %v3234
    %v3267 = vpack.c.b16 %v3243, %v3239
    %v3268 = vpack.c.b16 %v3244, %v3240
    %v3269 = vpack.c.b16 %v3245, %v3241
    %v3270 = vpack.c.b16 %v3246, %v3242
    %v3271 = vpack.c.b16 %v3251, %v3247
    %v3272 = vpack.c.b16 %v3252, %v3248
    %v3273 = vpack.c.b16 %v3253, %v3249
    %v3274 = vpack.c.b16 %v3254, %v3250
    %v3275 = vpack.c.b16 %v3259, %v3255
    %v3276 = vpack.c.b16 %v3260, %v3256
    %v3277 = vpack.c.b16 %v3261, %v3257
    %v3278 = vpack.c.b16 %v3262, %v3258
    %vm3295 = vcmask 523264
    %v3297 = vsel %vm3295, %v3214, 0
    %3299 = vmatpush.bf16.msra.mxu0 0
    %3300 = vmatpush.bf16.msra.mxu0 0
    %3301 = vmatpush.bf16.msra.mxu0 0
    %3302 = vmatpush.bf16.msra.mxu0 0
    %3303 = vmatpush.bf16.msra.mxu0 %v3275
    %3304 = vmatpush.bf16.msra.mxu0 %v3271
    %3305 = vmatpush.bf16.msra.mxu0 %v3267
    %3306 = vmatpush.bf16.msra.mxu0 %v3263
    %3307 = vmatmul.bf16.gmra.mxu0 %v3297
    %v3308 = vpop.f32.mrf.mxu0
    %v3309 = vadd.f32 0.0, %v3308
    %v3310 = vpop.f32.mrf.mxu0
    %3311 = vdwg.mxu0
    %3312 = vmatpush.bf16.msra.mxu0 0
    %3313 = vmatpush.bf16.msra.mxu0 0
    %3314 = vmatpush.bf16.msra.mxu0 0
    %3315 = vmatpush.bf16.msra.mxu0 0
    %3316 = vmatpush.bf16.msra.mxu0 %v3276
    %3317 = vmatpush.bf16.msra.mxu0 %v3272
    %3318 = vmatpush.bf16.msra.mxu0 %v3268
    %3319 = vmatpush.bf16.msra.mxu0 %v3264
    %3320 = vmatmul.bf16.gmra.mxu0 %v3297
    %v3321 = vpop.f32.mrf.mxu0
    %v3322 = vadd.f32 0.0, %v3321
    %v3323 = vpop.f32.mrf.mxu0
    %3324 = vdwg.mxu0
    %3325 = vmatpush.bf16.msra.mxu0 0
    %3326 = vmatpush.bf16.msra.mxu0 0
    %3327 = vmatpush.bf16.msra.mxu0 0
    %3328 = vmatpush.bf16.msra.mxu0 0
    %3329 = vmatpush.bf16.msra.mxu0 %v3277
    %3330 = vmatpush.bf16.msra.mxu0 %v3273
    %3331 = vmatpush.bf16.msra.mxu0 %v3269
    %3332 = vmatpush.bf16.msra.mxu0 %v3265
    %3333 = vmatmul.bf16.gmra.mxu0 %v3297
    %v3334 = vpop.f32.mrf.mxu0
    %v3335 = vadd.f32 0.0, %v3334
    %v3336 = vpop.f32.mrf.mxu0
    %3337 = vdwg.mxu0
    %3338 = vmatpush.bf16.msra.mxu0 0
    %3339 = vmatpush.bf16.msra.mxu0 0
    %3340 = vmatpush.bf16.msra.mxu0 0
    %3341 = vmatpush.bf16.msra.mxu0 0
    %3342 = vmatpush.bf16.msra.mxu0 %v3278
    %3343 = vmatpush.bf16.msra.mxu0 %v3274
    %3344 = vmatpush.bf16.msra.mxu0 %v3270
    %3345 = vmatpush.bf16.msra.mxu0 %v3266
    %3346 = vmatmul.bf16.gmra.mxu0 %v3297
    %v3347 = vpop.f32.mrf.mxu0
    %v3348 = vadd.f32 0.0, %v3347
    %v3349 = vpop.f32.mrf.mxu0
    %3350 = vdwg.mxu0
    %v3351 = vadd.f32 %v3309, %v3322
    %v3352 = vadd.f32 %v3351, %v3335
    %v3353 = vadd.f32 %v3352, %v3348
    %3354 = vadd.xlane.f32.xlu0 %v3353
    %v3355 = vpop.xlane.xlu0 %3354
    %v3356 = vmul.f32 %v3309, %v3309
    %v3357 = vmul.f32 %v3322, %v3322
    %v3358 = vmul.f32 %v3335, %v3335
    %v3359 = vmul.f32 %v3348, %v3348
    %v3360 = vadd.f32 %v3356, %v3357
    %v3361 = vadd.f32 %v3360, %v3358
    %v3362 = vadd.f32 %v3361, %v3359
    %3363 = vadd.xlane.f32.xlu0 %v3362
    %v3364 = vpop.xlane.xlu0 %3363
    %v3365 = vmul.f32 %v3355, 0.001953125
    %v3366 = vmul.f32 %v3364, 0.001953125
    %v3367 = vmul.f32 %v3365, %v3365
    %v3368 = vsub.f32 %v3366, %v3367
    %v3369 = vmax.f32 %v3368, 0.0
    %v3370 = vld [vmem:[#allocation5] sm:$0xff]
    %v3371 = vadd.f32 %v3369, 1e-05
    %v3372 = vrsqrt.pop %v3371
    %v3373 = vmul.f32 %v3372, %v3371
    %v3374 = vmul.f32 %v3373, %v3372
    %v3375 = vmul.f32 0.5, %v3374
    %v3376 = vsub.f32 1.5, %v3375
    %v3377 = vmul.f32 %v3372, %v3376
    %vm3378 = vweird.f32 %v3371
    %vm3379 = vweird.f32 %v3372
    %vm3380 = vmor %vm3378, %vm3379
    %v3381 = vsel %vm3380, %v3372, %v3377
    %v3382 = vmul.f32 %v3370, %v3381
    %v3383 = vld [vmem:[#allocation7] sm:$0xff]
    %v3384 = vmul.f32 %v3365, %v3382
    %v3385 = vsub.f32 %v3383, %v3384
    %3387 = vset.pattern.permute.xlu0 8
    %3388 = vperm.xlu0 %3387, %v3382
    %v3389 = vpop.permute.xlu0 %3388
    %v3391 = vmul.f32 %v3309, %v3389
    %v3392 = vmul.f32 %v3322, %v3389
    %v3393 = vmul.f32 %v3335, %v3389
    %v3394 = vmul.f32 %v3348, %v3389
    %3396 = vset.pattern.permute.xlu0 8
    %3397 = vperm.xlu0 %3396, %v3385
    %v3398 = vpop.permute.xlu0 %3397
    %v3400 = vadd.f32 %v3391, %v3398
    %v3401 = vadd.f32 %v3392, %v3398
    %v3402 = vadd.f32 %v3393, %v3398
    %v3403 = vadd.f32 %v3394, %v3398
    %vm3404 = vcmp.ge.f32.partialorder %v3400, 0.0
    %vm3405 = vcmp.ge.f32.partialorder %v3401, 0.0
    %vm3406 = vcmp.ge.f32.partialorder %v3402, 0.0
    %vm3407 = vcmp.ge.f32.partialorder %v3403, 0.0
    %v3408 = vmul.f32 %v3400, 0.01
    %v3409 = vmul.f32 %v3401, 0.01
    %v3410 = vmul.f32 %v3402, 0.01
    %v3411 = vmul.f32 %v3403, 0.01
    %v3412 = vsel %vm3404, %v3400, %v3408
    %v3413 = vsel %vm3405, %v3401, %v3409
    %v3414 = vsel %vm3406, %v3402, %v3410
    %v3415 = vsel %vm3407, %v3403, %v3411
    %v3416 = vpack.c.bf16 %v3413, %v3412
    %v3417 = vpack.c.bf16 %v3415, %v3414
    %3418 = vst [vmem:[#allocation2 + $0x80] sm:$0xff] %v3416
    %3419 = vst [vmem:[#allocation2 + $0x88] sm:$0xff] %v3417
    %v3420 = vld [vmem:[#allocation2] sm:$0xff]
    %v3421 = vld [vmem:[#allocation2 + $0x8] sm:$0xff]
    %v3422 = vld [vmem:[#allocation2 + $0x10] sm:$0xff]
    %v3423 = vld [vmem:[#allocation2 + $0x18] sm:$0xff]
    %v3424 = vld [vmem:[#allocation2 + $0x20] sm:$0xff]
    %v3425 = vld [vmem:[#allocation2 + $0x28] sm:$0xff]
    %v3426 = vld [vmem:[#allocation2 + $0x30] sm:$0xff]
    %v3427 = vld [vmem:[#allocation2 + $0x38] sm:$0xff]
    %v3428 = vld [vmem:[#allocation2 + $0x40] sm:$0xff]
    %v3429 = vld [vmem:[#allocation2 + $0x48] sm:$0xff]
    %v3430 = vld [vmem:[#allocation2 + $0x50] sm:$0xff]
    %v3431 = vld [vmem:[#allocation2 + $0x58] sm:$0xff]
    %v3432 = vld [vmem:[#allocation2 + $0x60] sm:$0xff]
    %v3433 = vld [vmem:[#allocation2 + $0x68] sm:$0xff]
    %v3434 = vld [vmem:[#allocation2 + $0x70] sm:$0xff]
    %v3435 = vld [vmem:[#allocation2 + $0x78] sm:$0xff]
    %v3436 = vld [vmem:[#allocation2 + $0x80] sm:$0xff]
    %v3437 = vld [vmem:[#allocation2 + $0x88] sm:$0xff]
    %v3438 = vld [vmem:[%s14] sm:$0xf]
    %v3439 = vld [vmem:[%s14 + $0x4] sm:$0xf]
    %v3440 = vld [vmem:[%s14 + $0x8] sm:$0xf]
    %v3441 = vld [vmem:[%s14 + $0xc] sm:$0xf]
    %v3442 = vld [vmem:[%s14 + $0x10] sm:$0xf]
    %v3443 = vld [vmem:[%s14 + $0x14] sm:$0xf]
    %v3444 = vld [vmem:[%s14 + $0x18] sm:$0xf]
    %v3445 = vld [vmem:[%s14 + $0x1c] sm:$0xf]
    %v3446 = vld [vmem:[%s14 + $0x20] sm:$0xf]
    %v3456 = vunpack.c.l.b16 %v3438
    %v3457 = vunpack.c.l.b16 %v3439
    %v3458 = vunpack.c.l.b16 %v3440
    %v3459 = vunpack.c.l.b16 %v3441
    %v3460 = vunpack.c.l.b16 %v3442
    %v3461 = vunpack.c.l.b16 %v3443
    %v3462 = vunpack.c.l.b16 %v3444
    %v3463 = vunpack.c.l.b16 %v3445
    %v3464 = vunpack.c.l.b16 %v3446
    %v3465 = vpack.c.b16 %v3457, %v3456
    %v3466 = vpack.c.b16 %v3459, %v3458
    %v3467 = vpack.c.b16 %v3461, %v3460
    %v3468 = vpack.c.b16 %v3463, %v3462
    %v3469 = vpack.c.b16 %v3464, %v3464
    %v3488 = vunpack.c.l.b16 %v3420
    %v3489 = vunpack.c.h.b16 %v3420
    %v3490 = vunpack.c.l.b16 %v3421
    %v3491 = vunpack.c.h.b16 %v3421
    %v3492 = vunpack.c.l.b16 %v3422
    %v3493 = vunpack.c.h.b16 %v3422
    %v3494 = vunpack.c.l.b16 %v3423
    %v3495 = vunpack.c.h.b16 %v3423
    %v3496 = vunpack.c.l.b16 %v3424
    %v3497 = vunpack.c.h.b16 %v3424
    %v3498 = vunpack.c.l.b16 %v3425
    %v3499 = vunpack.c.h.b16 %v3425
    %v3500 = vunpack.c.l.b16 %v3426
    %v3501 = vunpack.c.h.b16 %v3426
    %v3502 = vunpack.c.l.b16 %v3427
    %v3503 = vunpack.c.h.b16 %v3427
    %v3504 = vunpack.c.l.b16 %v3428
    %v3505 = vunpack.c.h.b16 %v3428
    %v3506 = vunpack.c.l.b16 %v3429
    %v3507 = vunpack.c.h.b16 %v3429
    %v3508 = vunpack.c.l.b16 %v3430
    %v3509 = vunpack.c.h.b16 %v3430
    %v3510 = vunpack.c.l.b16 %v3431
    %v3511 = vunpack.c.h.b16 %v3431
    %v3512 = vunpack.c.l.b16 %v3432
    %v3513 = vunpack.c.h.b16 %v3432
    %v3514 = vunpack.c.l.b16 %v3433
    %v3515 = vunpack.c.h.b16 %v3433
    %v3516 = vunpack.c.l.b16 %v3434
    %v3517 = vunpack.c.h.b16 %v3434
    %v3518 = vunpack.c.l.b16 %v3435
    %v3519 = vunpack.c.h.b16 %v3435
    %v3520 = vunpack.c.l.b16 %v3436
    %v3521 = vunpack.c.h.b16 %v3436
    %v3522 = vunpack.c.l.b16 %v3437
    %v3523 = vunpack.c.h.b16 %v3437
    %v3524 = vpack.c.b16 %v3492, %v3488
    %v3525 = vpack.c.b16 %v3493, %v3489
    %v3526 = vpack.c.b16 %v3494, %v3490
    %v3527 = vpack.c.b16 %v3495, %v3491
    %v3528 = vpack.c.b16 %v3500, %v3496
    %v3529 = vpack.c.b16 %v3501, %v3497
    %v3530 = vpack.c.b16 %v3502, %v3498
    %v3531 = vpack.c.b16 %v3503, %v3499
    %v3532 = vpack.c.b16 %v3508, %v3504
    %v3533 = vpack.c.b16 %v3509, %v3505
    %v3534 = vpack.c.b16 %v3510, %v3506
    %v3535 = vpack.c.b16 %v3511, %v3507
    %v3536 = vpack.c.b16 %v3516, %v3512
    %v3537 = vpack.c.b16 %v3517, %v3513
    %v3538 = vpack.c.b16 %v3518, %v3514
    %v3539 = vpack.c.b16 %v3519, %v3515
    %v3540 = vpack.c.b16 %v3520, %v3520
    %v3541 = vpack.c.b16 %v3521, %v3521
    %v3542 = vpack.c.b16 %v3522, %v3522
    %v3543 = vpack.c.b16 %v3523, %v3523
    %vm3560 = vcmask 588800
    %v3562 = vsel %vm3560, %v3465, 0
    %v3565 = vsel %vm3560, %v3466, 0
    %v3568 = vsel %vm3560, %v3467, 0
    %v3571 = vsel %vm3560, %v3468, 0
    %v3574 = vsel %vm3560, %v3469, 0
    %v3577 = vsel %vm740, %v3540, 0
    %v3580 = vsel %vm740, %v3541, 0
    %v3583 = vsel %vm740, %v3542, 0
    %v3586 = vsel %vm740, %v3543, 0
    %3588 = vmatpush.bf16.msra.mxu0 0
    %3589 = vmatpush.bf16.msra.mxu0 0
    %3590 = vmatpush.bf16.msra.mxu0 0
    %3591 = vmatpush.bf16.msra.mxu0 %v3577
    %3592 = vmatpush.bf16.msra.mxu0 %v3536
    %3593 = vmatpush.bf16.msra.mxu0 %v3532
    %3594 = vmatpush.bf16.msra.mxu0 %v3528
    %3595 = vmatpush.bf16.msra.mxu0 %v3524
    %3596 = vmatmul.bf16.gmra.mxu0 %v3562
    %v3597 = vpop.f32.mrf.mxu0
    %v3598 = vadd.f32 0.0, %v3597
    %v3599 = vpop.f32.mrf.mxu0
    %v3600 = vadd.f32 0.0, %v3599
    %3601 = vmatmul.bf16.gmra.mxu0 %v3565
    %v3602 = vpop.f32.mrf.mxu0
    %v3603 = vadd.f32 0.0, %v3602
    %v3604 = vpop.f32.mrf.mxu0
    %v3605 = vadd.f32 0.0, %v3604
    %3606 = vmatmul.bf16.gmra.mxu0 %v3568
    %v3607 = vpop.f32.mrf.mxu0
    %v3608 = vadd.f32 0.0, %v3607
    %v3609 = vpop.f32.mrf.mxu0
    %v3610 = vadd.f32 0.0, %v3609
    %3611 = vmatmul.bf16.gmra.mxu0 %v3571
    %v3612 = vpop.f32.mrf.mxu0
    %v3613 = vadd.f32 0.0, %v3612
    %v3614 = vpop.f32.mrf.mxu0
    %v3615 = vadd.f32 0.0, %v3614
    %3616 = vmatmul.bf16.gmra.mxu0 %v3574
    %v3617 = vpop.f32.mrf.mxu0
    %v3618 = vadd.f32 0.0, %v3617
    %v3619 = vpop.f32.mrf.mxu0
    %3620 = vdwg.mxu0
    %3621 = vmatpush.bf16.msra.mxu0 0
    %3622 = vmatpush.bf16.msra.mxu0 0
    %3623 = vmatpush.bf16.msra.mxu0 0
    %3624 = vmatpush.bf16.msra.mxu0 %v3580
    %3625 = vmatpush.bf16.msra.mxu0 %v3537
    %3626 = vmatpush.bf16.msra.mxu0 %v3533
    %3627 = vmatpush.bf16.msra.mxu0 %v3529
    %3628 = vmatpush.bf16.msra.mxu0 %v3525
    %3629 = vmatmul.bf16.gmra.mxu0 %v3562
    %v3630 = vpop.f32.mrf.mxu0
    %v3631 = vadd.f32 0.0, %v3630
    %v3632 = vpop.f32.mrf.mxu0
    %v3633 = vadd.f32 0.0, %v3632
    %3634 = vmatmul.bf16.gmra.mxu0 %v3565
    %v3635 = vpop.f32.mrf.mxu0
    %v3636 = vadd.f32 0.0, %v3635
    %v3637 = vpop.f32.mrf.mxu0
    %v3638 = vadd.f32 0.0, %v3637
    %3639 = vmatmul.bf16.gmra.mxu0 %v3568
    %v3640 = vpop.f32.mrf.mxu0
    %v3641 = vadd.f32 0.0, %v3640
    %v3642 = vpop.f32.mrf.mxu0
    %v3643 = vadd.f32 0.0, %v3642
    %3644 = vmatmul.bf16.gmra.mxu0 %v3571
    %v3645 = vpop.f32.mrf.mxu0
    %v3646 = vadd.f32 0.0, %v3645
    %v3647 = vpop.f32.mrf.mxu0
    %v3648 = vadd.f32 0.0, %v3647
    %3649 = vmatmul.bf16.gmra.mxu0 %v3574
    %v3650 = vpop.f32.mrf.mxu0
    %v3651 = vadd.f32 0.0, %v3650
    %v3652 = vpop.f32.mrf.mxu0
    %3653 = vdwg.mxu0
    %3654 = vmatpush.bf16.msra.mxu0 0
    %3655 = vmatpush.bf16.msra.mxu0 0
    %3656 = vmatpush.bf16.msra.mxu0 0
    %3657 = vmatpush.bf16.msra.mxu0 %v3583
    %3658 = vmatpush.bf16.msra.mxu0 %v3538
    %3659 = vmatpush.bf16.msra.mxu0 %v3534
    %3660 = vmatpush.bf16.msra.mxu0 %v3530
    %3661 = vmatpush.bf16.msra.mxu0 %v3526
    %3662 = vmatmul.bf16.gmra.mxu0 %v3562
    %v3663 = vpop.f32.mrf.mxu0
    %v3664 = vadd.f32 0.0, %v3663
    %v3665 = vpop.f32.mrf.mxu0
    %v3666 = vadd.f32 0.0, %v3665
    %3667 = vmatmul.bf16.gmra.mxu0 %v3565
    %v3668 = vpop.f32.mrf.mxu0
    %v3669 = vadd.f32 0.0, %v3668
    %v3670 = vpop.f32.mrf.mxu0
    %v3671 = vadd.f32 0.0, %v3670
    %3672 = vmatmul.bf16.gmra.mxu0 %v3568
    %v3673 = vpop.f32.mrf.mxu0
    %v3674 = vadd.f32 0.0, %v3673
    %v3675 = vpop.f32.mrf.mxu0
    %v3676 = vadd.f32 0.0, %v3675
    %3677 = vmatmul.bf16.gmra.mxu0 %v3571
    %v3678 = vpop.f32.mrf.mxu0
    %v3679 = vadd.f32 0.0, %v3678
    %v3680 = vpop.f32.mrf.mxu0
    %v3681 = vadd.f32 0.0, %v3680
    %3682 = vmatmul.bf16.gmra.mxu0 %v3574
    %v3683 = vpop.f32.mrf.mxu0
    %v3684 = vadd.f32 0.0, %v3683
    %v3685 = vpop.f32.mrf.mxu0
    %3686 = vdwg.mxu0
    %3687 = vmatpush.bf16.msra.mxu0 0
    %3688 = vmatpush.bf16.msra.mxu0 0
    %3689 = vmatpush.bf16.msra.mxu0 0
    %3690 = vmatpush.bf16.msra.mxu0 %v3586
    %3691 = vmatpush.bf16.msra.mxu0 %v3539
    %3692 = vmatpush.bf16.msra.mxu0 %v3535
    %3693 = vmatpush.bf16.msra.mxu0 %v3531
    %3694 = vmatpush.bf16.msra.mxu0 %v3527
    %3695 = vmatmul.bf16.gmra.mxu0 %v3562
    %v3696 = vpop.f32.mrf.mxu0
    %v3697 = vadd.f32 0.0, %v3696
    %v3698 = vpop.f32.mrf.mxu0
    %v3699 = vadd.f32 0.0, %v3698
    %3700 = vmatmul.bf16.gmra.mxu0 %v3565
    %v3701 = vpop.f32.mrf.mxu0
    %v3702 = vadd.f32 0.0, %v3701
    %v3703 = vpop.f32.mrf.mxu0
    %v3704 = vadd.f32 0.0, %v3703
    %3705 = vmatmul.bf16.gmra.mxu0 %v3568
    %v3706 = vpop.f32.mrf.mxu0
    %v3707 = vadd.f32 0.0, %v3706
    %v3708 = vpop.f32.mrf.mxu0
    %v3709 = vadd.f32 0.0, %v3708
    %3710 = vmatmul.bf16.gmra.mxu0 %v3571
    %v3711 = vpop.f32.mrf.mxu0
    %v3712 = vadd.f32 0.0, %v3711
    %v3713 = vpop.f32.mrf.mxu0
    %v3714 = vadd.f32 0.0, %v3713
    %3715 = vmatmul.bf16.gmra.mxu0 %v3574
    %v3716 = vpop.f32.mrf.mxu0
    %v3717 = vadd.f32 0.0, %v3716
    %v3718 = vpop.f32.mrf.mxu0
    %3719 = vdwg.mxu0
    %3720 = vrot.lane.b32.xlu0 %v3598, 17
    %v3721 = vpop.permute.xlu0 %3720
    %3722 = vrot.lane.b32.xlu0 %v3631, 17
    %v3723 = vpop.permute.xlu0 %3722
    %3724 = vrot.lane.b32.xlu0 %v3664, 17
    %v3725 = vpop.permute.xlu0 %3724
    %3726 = vrot.lane.b32.xlu0 %v3697, 17
    %v3727 = vpop.permute.xlu0 %3726
    %v3728 = vsel %vm419, %v3725, %v3727
    %v3729 = vsel %vm419, %v3723, %v3725
    %v3730 = vsel %vm419, %v3721, %v3723
    %v3731 = vsel %vm419, %v3727, %v3721
    %v3732 = vld [vmem:[#allocation3] sm:$0xff]
    %v3733 = vld [vmem:[#allocation3 + $0x8] sm:$0xff]
    %v3734 = vld [vmem:[#allocation3 + $0x10] sm:$0xff]
    %v3735 = vld [vmem:[#allocation3 + $0x18] sm:$0xff]
    %v3736 = vmul.f32 %v3731, %v3732
    %v3737 = vmul.f32 %v3730, %v3733
    %v3738 = vmul.f32 %v3729, %v3734
    %v3739 = vmul.f32 %v3728, %v3735
    %3740 = vrot.lane.b32.xlu0 %v3600, 16
    %v3741 = vpop.permute.xlu0 %3740
    %3742 = vrot.lane.b32.xlu0 %v3633, 16
    %v3743 = vpop.permute.xlu0 %3742
    %3744 = vrot.lane.b32.xlu0 %v3666, 16
    %v3745 = vpop.permute.xlu0 %3744
    %3746 = vrot.lane.b32.xlu0 %v3699, 16
    %v3747 = vpop.permute.xlu0 %3746
    %v3748 = vsel %vm440, %v3745, %v3747
    %v3749 = vsel %vm440, %v3743, %v3745
    %v3750 = vsel %vm440, %v3741, %v3743
    %v3751 = vsel %vm440, %v3747, %v3741
    %v3752 = vld [vmem:[#allocation3 + $0x20] sm:$0xff]
    %v3753 = vld [vmem:[#allocation3 + $0x28] sm:$0xff]
    %v3754 = vld [vmem:[#allocation3 + $0x30] sm:$0xff]
    %v3755 = vld [vmem:[#allocation3 + $0x38] sm:$0xff]
    %v3756 = vmul.f32 %v3751, %v3752
    %v3757 = vmul.f32 %v3750, %v3753
    %v3758 = vmul.f32 %v3749, %v3754
    %v3759 = vmul.f32 %v3748, %v3755
    %3760 = vrot.lane.b32.xlu0 %v3603, 15
    %v3761 = vpop.permute.xlu0 %3760
    %3762 = vrot.lane.b32.xlu0 %v3636, 15
    %v3763 = vpop.permute.xlu0 %3762
    %3764 = vrot.lane.b32.xlu0 %v3669, 15
    %v3765 = vpop.permute.xlu0 %3764
    %3766 = vrot.lane.b32.xlu0 %v3702, 15
    %v3767 = vpop.permute.xlu0 %3766
    %v3768 = vsel %vm461, %v3765, %v3767
    %v3769 = vsel %vm461, %v3763, %v3765
    %v3770 = vsel %vm461, %v3761, %v3763
    %v3771 = vsel %vm461, %v3767, %v3761
    %v3772 = vld [vmem:[#allocation3 + $0x40] sm:$0xff]
    %v3773 = vld [vmem:[#allocation3 + $0x48] sm:$0xff]
    %v3774 = vld [vmem:[#allocation3 + $0x50] sm:$0xff]
    %v3775 = vld [vmem:[#allocation3 + $0x58] sm:$0xff]
    %v3776 = vmul.f32 %v3771, %v3772
    %v3777 = vmul.f32 %v3770, %v3773
    %v3778 = vmul.f32 %v3769, %v3774
    %v3779 = vmul.f32 %v3768, %v3775
    %3780 = vrot.lane.b32.xlu0 %v3605, 1
    %v3781 = vpop.permute.xlu0 %3780
    %3782 = vrot.lane.b32.xlu0 %v3638, 1
    %v3783 = vpop.permute.xlu0 %3782
    %3784 = vrot.lane.b32.xlu0 %v3671, 1
    %v3785 = vpop.permute.xlu0 %3784
    %3786 = vrot.lane.b32.xlu0 %v3704, 1
    %v3787 = vpop.permute.xlu0 %3786
    %v3788 = vsel %vm482, %v3785, %v3787
    %v3789 = vsel %vm482, %v3783, %v3785
    %v3790 = vsel %vm482, %v3781, %v3783
    %v3791 = vsel %vm482, %v3787, %v3781
    %v3792 = vld [vmem:[#allocation3 + $0x60] sm:$0xff]
    %v3793 = vld [vmem:[#allocation3 + $0x68] sm:$0xff]
    %v3794 = vld [vmem:[#allocation3 + $0x70] sm:$0xff]
    %v3795 = vld [vmem:[#allocation3 + $0x78] sm:$0xff]
    %v3796 = vmul.f32 %v3791, %v3792
    %v3797 = vmul.f32 %v3790, %v3793
    %v3798 = vmul.f32 %v3789, %v3794
    %v3799 = vmul.f32 %v3788, %v3795
    %3800 = vrot.lane.b32.xlu0 %v3610, 127
    %v3801 = vpop.permute.xlu0 %3800
    %3802 = vrot.lane.b32.xlu0 %v3643, 127
    %v3803 = vpop.permute.xlu0 %3802
    %3804 = vrot.lane.b32.xlu0 %v3676, 127
    %v3805 = vpop.permute.xlu0 %3804
    %3806 = vrot.lane.b32.xlu0 %v3709, 127
    %v3807 = vpop.permute.xlu0 %3806
    %v3808 = vsel %vm503, %v3805, %v3807
    %v3809 = vsel %vm503, %v3803, %v3805
    %v3810 = vsel %vm503, %v3801, %v3803
    %v3811 = vsel %vm503, %v3807, %v3801
    %v3812 = vld [vmem:[#allocation3 + $0x80] sm:$0xff]
    %v3813 = vld [vmem:[#allocation3 + $0x88] sm:$0xff]
    %v3814 = vld [vmem:[#allocation3 + $0x90] sm:$0xff]
    %v3815 = vld [vmem:[#allocation3 + $0x98] sm:$0xff]
    %v3816 = vmul.f32 %v3810, %v3812
    %v3817 = vmul.f32 %v3809, %v3813
    %v3818 = vmul.f32 %v3808, %v3814
    %v3819 = vmul.f32 %v3811, %v3815
    %3820 = vrot.lane.b32.xlu0 %v3613, 113
    %v3821 = vpop.permute.xlu0 %3820
    %3822 = vrot.lane.b32.xlu0 %v3646, 113
    %v3823 = vpop.permute.xlu0 %3822
    %3824 = vrot.lane.b32.xlu0 %v3679, 113
    %v3825 = vpop.permute.xlu0 %3824
    %3826 = vrot.lane.b32.xlu0 %v3712, 113
    %v3827 = vpop.permute.xlu0 %3826
    %v3828 = vsel %vm524, %v3825, %v3827
    %v3829 = vsel %vm524, %v3823, %v3825
    %v3830 = vsel %vm524, %v3821, %v3823
    %v3831 = vsel %vm524, %v3827, %v3821
    %v3832 = vld [vmem:[#allocation3 + $0xa0] sm:$0xff]
    %v3833 = vld [vmem:[#allocation3 + $0xa8] sm:$0xff]
    %v3834 = vld [vmem:[#allocation3 + $0xb0] sm:$0xff]
    %v3835 = vld [vmem:[#allocation3 + $0xb8] sm:$0xff]
    %v3836 = vmul.f32 %v3830, %v3832
    %v3837 = vmul.f32 %v3829, %v3833
    %v3838 = vmul.f32 %v3828, %v3834
    %v3839 = vmul.f32 %v3831, %v3835
    %3840 = vrot.lane.b32.xlu0 %v3615, 112
    %v3841 = vpop.permute.xlu0 %3840
    %3842 = vrot.lane.b32.xlu0 %v3648, 112
    %v3843 = vpop.permute.xlu0 %3842
    %3844 = vrot.lane.b32.xlu0 %v3681, 112
    %v3845 = vpop.permute.xlu0 %3844
    %3846 = vrot.lane.b32.xlu0 %v3714, 112
    %v3847 = vpop.permute.xlu0 %3846
    %v3848 = vsel %vm545, %v3845, %v3847
    %v3849 = vsel %vm545, %v3843, %v3845
    %v3850 = vsel %vm545, %v3841, %v3843
    %v3851 = vsel %vm545, %v3847, %v3841
    %v3852 = vld [vmem:[#allocation3 + $0xc0] sm:$0xff]
    %v3853 = vld [vmem:[#allocation3 + $0xc8] sm:$0xff]
    %v3854 = vld [vmem:[#allocation3 + $0xd0] sm:$0xff]
    %v3855 = vld [vmem:[#allocation3 + $0xd8] sm:$0xff]
    %v3856 = vmul.f32 %v3850, %v3852
    %v3857 = vmul.f32 %v3849, %v3853
    %v3858 = vmul.f32 %v3848, %v3854
    %v3859 = vmul.f32 %v3851, %v3855
    %3860 = vrot.lane.b32.xlu0 %v3618, 111
    %v3861 = vpop.permute.xlu0 %3860
    %3862 = vrot.lane.b32.xlu0 %v3651, 111
    %v3863 = vpop.permute.xlu0 %3862
    %3864 = vrot.lane.b32.xlu0 %v3684, 111
    %v3865 = vpop.permute.xlu0 %3864
    %3866 = vrot.lane.b32.xlu0 %v3717, 111
    %v3867 = vpop.permute.xlu0 %3866
    %v3868 = vsel %vm566, %v3865, %v3867
    %v3869 = vsel %vm566, %v3863, %v3865
    %v3870 = vsel %vm566, %v3861, %v3863
    %v3871 = vsel %vm566, %v3867, %v3861
    %v3872 = vld [vmem:[#allocation3 + $0xe0] sm:$0xff]
    %v3873 = vld [vmem:[#allocation3 + $0xe8] sm:$0xff]
    %v3874 = vld [vmem:[#allocation3 + $0xf0] sm:$0xff]
    %v3875 = vld [vmem:[#allocation3 + $0xf8] sm:$0xff]
    %v3876 = vmul.f32 %v3870, %v3872
    %v3877 = vmul.f32 %v3869, %v3873
    %v3878 = vmul.f32 %v3868, %v3874
    %v3879 = vmul.f32 %v3871, %v3875
    %v3880 = vadd.f32 %v3736, %v3756
    %v3881 = vadd.f32 %v3737, %v3757
    %v3882 = vadd.f32 %v3738, %v3758
    %v3883 = vadd.f32 %v3739, %v3759
    %v3884 = vadd.f32 %v3776, %v3796
    %v3885 = vadd.f32 %v3777, %v3797
    %v3886 = vadd.f32 %v3778, %v3798
    %v3887 = vadd.f32 %v3779, %v3799
    %v3888 = vadd.f32 %v3608, %v3816
    %v3889 = vadd.f32 %v3641, %v3817
    %v3890 = vadd.f32 %v3674, %v3818
    %v3891 = vadd.f32 %v3707, %v3819
    %v3892 = vadd.f32 %v3836, %v3856
    %v3893 = vadd.f32 %v3837, %v3857
    %v3894 = vadd.f32 %v3838, %v3858
    %v3895 = vadd.f32 %v3839, %v3859
    %v3896 = vadd.f32 %v3880, %v3884
    %v3897 = vadd.f32 %v3881, %v3885
    %v3898 = vadd.f32 %v3882, %v3886
    %v3899 = vadd.f32 %v3883, %v3887
    %v3900 = vadd.f32 %v3888, %v3892
    %v3901 = vadd.f32 %v3889, %v3893
    %v3902 = vadd.f32 %v3890, %v3894
    %v3903 = vadd.f32 %v3891, %v3895
    %v3904 = vadd.f32 %v3896, %v3900
    %v3905 = vadd.f32 %v3897, %v3901
    %v3906 = vadd.f32 %v3898, %v3902
    %v3907 = vadd.f32 %v3899, %v3903
    %v3908 = vadd.f32 %v3904, %v3876
    %v3909 = vadd.f32 %v3905, %v3877
    %v3910 = vadd.f32 %v3906, %v3878
    %v3911 = vadd.f32 %v3907, %v3879
    %v3912 = vadd.f32 %v3908, %v3909
    %v3913 = vadd.f32 %v3912, %v3910
    %v3914 = vadd.f32 %v3913, %v3911
    %3915 = vadd.xlane.f32.xlu0 %v3914
    %v3916 = vpop.xlane.xlu0 %3915
    %v3917 = vmul.f32 %v3908, %v3908
    %v3918 = vmul.f32 %v3909, %v3909
    %v3919 = vmul.f32 %v3910, %v3910
    %v3920 = vmul.f32 %v3911, %v3911
    %v3921 = vadd.f32 %v3917, %v3918
    %v3922 = vadd.f32 %v3921, %v3919
    %v3923 = vadd.f32 %v3922, %v3920
    %3924 = vadd.xlane.f32.xlu0 %v3923
    %v3925 = vpop.xlane.xlu0 %3924
    %v3926 = vmul.f32 %v3916, 0.001953125
    %v3927 = vmul.f32 %v3925, 0.001953125
    %v3928 = vmul.f32 %v3926, %v3926
    %v3929 = vsub.f32 %v3927, %v3928
    %v3930 = vmax.f32 %v3929, 0.0
    %v3931 = vld [vmem:[#allocation5] sm:$0xff]
    %v3932 = vadd.f32 %v3930, 1e-05
    %v3933 = vrsqrt.pop %v3932
    %v3934 = vmul.f32 %v3933, %v3932
    %v3935 = vmul.f32 %v3934, %v3933
    %v3936 = vmul.f32 0.5, %v3935
    %v3937 = vsub.f32 1.5, %v3936
    %v3938 = vmul.f32 %v3933, %v3937
    %vm3939 = vweird.f32 %v3932
    %vm3940 = vweird.f32 %v3933
    %vm3941 = vmor %vm3939, %vm3940
    %v3942 = vsel %vm3941, %v3933, %v3938
    %v3943 = vmul.f32 %v3931, %v3942
    %v3944 = vld [vmem:[#allocation7] sm:$0xff]
    %v3945 = vmul.f32 %v3926, %v3943
    %v3946 = vsub.f32 %v3944, %v3945
    %3948 = vset.pattern.permute.xlu0 9
    %3949 = vperm.xlu0 %3948, %v3943
    %v3950 = vpop.permute.xlu0 %3949
    %v3952 = vmul.f32 %v3908, %v3950
    %v3953 = vmul.f32 %v3909, %v3950
    %v3954 = vmul.f32 %v3910, %v3950
    %v3955 = vmul.f32 %v3911, %v3950
    %3957 = vset.pattern.permute.xlu0 9
    %3958 = vperm.xlu0 %3957, %v3946
    %v3959 = vpop.permute.xlu0 %3958
    %v3961 = vadd.f32 %v3952, %v3959
    %v3962 = vadd.f32 %v3953, %v3959
    %v3963 = vadd.f32 %v3954, %v3959
    %v3964 = vadd.f32 %v3955, %v3959
    %vm3965 = vcmp.ge.f32.partialorder %v3961, 0.0
    %vm3966 = vcmp.ge.f32.partialorder %v3962, 0.0
    %vm3967 = vcmp.ge.f32.partialorder %v3963, 0.0
    %vm3968 = vcmp.ge.f32.partialorder %v3964, 0.0
    %v3969 = vmul.f32 %v3961, 0.01
    %v3970 = vmul.f32 %v3962, 0.01
    %v3971 = vmul.f32 %v3963, 0.01
    %v3972 = vmul.f32 %v3964, 0.01
    %v3973 = vsel %vm3965, %v3961, %v3969
    %v3974 = vsel %vm3966, %v3962, %v3970
    %v3975 = vsel %vm3967, %v3963, %v3971
    %v3976 = vsel %vm3968, %v3964, %v3972
    %v3977 = vpack.c.bf16 %v3974, %v3973
    %v3978 = vpack.c.bf16 %v3976, %v3975
    %3979 = vst [vmem:[#allocation2 + $0x90] sm:$0xff] %v3977
    %3980 = vst [vmem:[#allocation2 + $0x98] sm:$0xff] %v3978
    %v3981 = vld [vmem:[#allocation2] sm:$0xff]
    %v3982 = vld [vmem:[#allocation2 + $0x8] sm:$0xff]
    %v3983 = vld [vmem:[#allocation2 + $0x10] sm:$0xff]
    %v3984 = vld [vmem:[#allocation2 + $0x18] sm:$0xff]
    %v3985 = vld [vmem:[#allocation2 + $0x20] sm:$0xff]
    %v3986 = vld [vmem:[#allocation2 + $0x28] sm:$0xff]
    %v3987 = vld [vmem:[#allocation2 + $0x30] sm:$0xff]
    %v3988 = vld [vmem:[#allocation2 + $0x38] sm:$0xff]
    %v3989 = vld [vmem:[#allocation2 + $0x40] sm:$0xff]
    %v3990 = vld [vmem:[#allocation2 + $0x48] sm:$0xff]
    %v3991 = vld [vmem:[#allocation2 + $0x50] sm:$0xff]
    %v3992 = vld [vmem:[#allocation2 + $0x58] sm:$0xff]
    %v3993 = vld [vmem:[#allocation2 + $0x60] sm:$0xff]
    %v3994 = vld [vmem:[#allocation2 + $0x68] sm:$0xff]
    %v3995 = vld [vmem:[#allocation2 + $0x70] sm:$0xff]
    %v3996 = vld [vmem:[#allocation2 + $0x78] sm:$0xff]
    %v3997 = vld [vmem:[#allocation2 + $0x80] sm:$0xff]
    %v3998 = vld [vmem:[#allocation2 + $0x88] sm:$0xff]
    %v3999 = vld [vmem:[#allocation2 + $0x90] sm:$0xff]
    %v4000 = vld [vmem:[#allocation2 + $0x98] sm:$0xff]
    %v4001 = vld [vmem:[%s15] sm:$0xf]
    %v4002 = vld [vmem:[%s15 + $0x4] sm:$0xf]
    %v4003 = vld [vmem:[%s15 + $0x8] sm:$0xf]
    %v4004 = vld [vmem:[%s15 + $0xc] sm:$0xf]
    %v4005 = vld [vmem:[%s15 + $0x10] sm:$0xf]
    %v4006 = vld [vmem:[%s15 + $0x14] sm:$0xf]
    %v4007 = vld [vmem:[%s15 + $0x18] sm:$0xf]
    %v4008 = vld [vmem:[%s15 + $0x1c] sm:$0xf]
    %v4009 = vld [vmem:[%s15 + $0x20] sm:$0xf]
    %v4019 = vunpack.c.l.b16 %v4001
    %v4020 = vunpack.c.l.b16 %v4002
    %v4021 = vunpack.c.l.b16 %v4003
    %v4022 = vunpack.c.l.b16 %v4004
    %v4023 = vunpack.c.l.b16 %v4005
    %v4024 = vunpack.c.l.b16 %v4006
    %v4025 = vunpack.c.l.b16 %v4007
    %v4026 = vunpack.c.l.b16 %v4008
    %v4027 = vunpack.c.l.b16 %v4009
    %v4028 = vpack.c.b16 %v4020, %v4019
    %v4029 = vpack.c.b16 %v4022, %v4021
    %v4030 = vpack.c.b16 %v4024, %v4023
    %v4031 = vpack.c.b16 %v4026, %v4025
    %v4032 = vpack.c.b16 %v4027, %v4027
    %v4053 = vunpack.c.l.b16 %v3981
    %v4054 = vunpack.c.h.b16 %v3981
    %v4055 = vunpack.c.l.b16 %v3982
    %v4056 = vunpack.c.h.b16 %v3982
    %v4057 = vunpack.c.l.b16 %v3983
    %v4058 = vunpack.c.h.b16 %v3983
    %v4059 = vunpack.c.l.b16 %v3984
    %v4060 = vunpack.c.h.b16 %v3984
    %v4061 = vunpack.c.l.b16 %v3985
    %v4062 = vunpack.c.h.b16 %v3985
    %v4063 = vunpack.c.l.b16 %v3986
    %v4064 = vunpack.c.h.b16 %v3986
    %v4065 = vunpack.c.l.b16 %v3987
    %v4066 = vunpack.c.h.b16 %v3987
    %v4067 = vunpack.c.l.b16 %v3988
    %v4068 = vunpack.c.h.b16 %v3988
    %v4069 = vunpack.c.l.b16 %v3989
    %v4070 = vunpack.c.h.b16 %v3989
    %v4071 = vunpack.c.l.b16 %v3990
    %v4072 = vunpack.c.h.b16 %v3990
    %v4073 = vunpack.c.l.b16 %v3991
    %v4074 = vunpack.c.h.b16 %v3991
    %v4075 = vunpack.c.l.b16 %v3992
    %v4076 = vunpack.c.h.b16 %v3992
    %v4077 = vunpack.c.l.b16 %v3993
    %v4078 = vunpack.c.h.b16 %v3993
    %v4079 = vunpack.c.l.b16 %v3994
    %v4080 = vunpack.c.h.b16 %v3994
    %v4081 = vunpack.c.l.b16 %v3995
    %v4082 = vunpack.c.h.b16 %v3995
    %v4083 = vunpack.c.l.b16 %v3996
    %v4084 = vunpack.c.h.b16 %v3996
    %v4085 = vunpack.c.l.b16 %v3997
    %v4086 = vunpack.c.h.b16 %v3997
    %v4087 = vunpack.c.l.b16 %v3998
    %v4088 = vunpack.c.h.b16 %v3998
    %v4089 = vunpack.c.l.b16 %v3999
    %v4090 = vunpack.c.h.b16 %v3999
    %v4091 = vunpack.c.l.b16 %v4000
    %v4092 = vunpack.c.h.b16 %v4000
    %v4093 = vpack.c.b16 %v4057, %v4053
    %v4094 = vpack.c.b16 %v4058, %v4054
    %v4095 = vpack.c.b16 %v4059, %v4055
    %v4096 = vpack.c.b16 %v4060, %v4056
    %v4097 = vpack.c.b16 %v4065, %v4061
    %v4098 = vpack.c.b16 %v4066, %v4062
    %v4099 = vpack.c.b16 %v4067, %v4063
    %v4100 = vpack.c.b16 %v4068, %v4064
    %v4101 = vpack.c.b16 %v4073, %v4069
    %v4102 = vpack.c.b16 %v4074, %v4070
    %v4103 = vpack.c.b16 %v4075, %v4071
    %v4104 = vpack.c.b16 %v4076, %v4072
    %v4105 = vpack.c.b16 %v4081, %v4077
    %v4106 = vpack.c.b16 %v4082, %v4078
    %v4107 = vpack.c.b16 %v4083, %v4079
    %v4108 = vpack.c.b16 %v4084, %v4080
    %v4109 = vpack.c.b16 %v4089, %v4085
    %v4110 = vpack.c.b16 %v4090, %v4086
    %v4111 = vpack.c.b16 %v4091, %v4087
    %v4112 = vpack.c.b16 %v4092, %v4088
    %vm4133 = vcmask 654336
    %v4135 = vsel %vm4133, %v4028, 0
    %v4138 = vsel %vm4133, %v4029, 0
    %v4141 = vsel %vm4133, %v4030, 0
    %v4144 = vsel %vm4133, %v4031, 0
    %v4147 = vsel %vm4133, %v4032, 0
    %4149 = vmatpush.bf16.msra.mxu0 0
    %4150 = vmatpush.bf16.msra.mxu0 0
    %4151 = vmatpush.bf16.msra.mxu0 0
    %4152 = vmatpush.bf16.msra.mxu0 %v4109
    %4153 = vmatpush.bf16.msra.mxu0 %v4105
    %4154 = vmatpush.bf16.msra.mxu0 %v4101
    %4155 = vmatpush.bf16.msra.mxu0 %v4097
    %4156 = vmatpush.bf16.msra.mxu0 %v4093
    %4157 = vmatmul.bf16.gmra.mxu0 %v4135
    %v4158 = vpop.f32.mrf.mxu0
    %v4159 = vadd.f32 0.0, %v4158
    %v4160 = vpop.f32.mrf.mxu0
    %v4161 = vadd.f32 0.0, %v4160
    %4162 = vmatmul.bf16.gmra.mxu0 %v4138
    %v4163 = vpop.f32.mrf.mxu0
    %v4164 = vadd.f32 0.0, %v4163
    %v4165 = vpop.f32.mrf.mxu0
    %v4166 = vadd.f32 0.0, %v4165
    %4167 = vmatmul.bf16.gmra.mxu0 %v4141
    %v4168 = vpop.f32.mrf.mxu0
    %v4169 = vadd.f32 0.0, %v4168
    %v4170 = vpop.f32.mrf.mxu0
    %v4171 = vadd.f32 0.0, %v4170
    %4172 = vmatmul.bf16.gmra.mxu0 %v4144
    %v4173 = vpop.f32.mrf.mxu0
    %v4174 = vadd.f32 0.0, %v4173
    %v4175 = vpop.f32.mrf.mxu0
    %v4176 = vadd.f32 0.0, %v4175
    %4177 = vmatmul.bf16.gmra.mxu0 %v4147
    %v4178 = vpop.f32.mrf.mxu0
    %v4179 = vadd.f32 0.0, %v4178
    %v4180 = vpop.f32.mrf.mxu0
    %4181 = vdwg.mxu0
    %4182 = vmatpush.bf16.msra.mxu0 0
    %4183 = vmatpush.bf16.msra.mxu0 0
    %4184 = vmatpush.bf16.msra.mxu0 0
    %4185 = vmatpush.bf16.msra.mxu0 %v4110
    %4186 = vmatpush.bf16.msra.mxu0 %v4106
    %4187 = vmatpush.bf16.msra.mxu0 %v4102
    %4188 = vmatpush.bf16.msra.mxu0 %v4098
    %4189 = vmatpush.bf16.msra.mxu0 %v4094
    %4190 = vmatmul.bf16.gmra.mxu0 %v4135
    %v4191 = vpop.f32.mrf.mxu0
    %v4192 = vadd.f32 0.0, %v4191
    %v4193 = vpop.f32.mrf.mxu0
    %v4194 = vadd.f32 0.0, %v4193
    %4195 = vmatmul.bf16.gmra.mxu0 %v4138
    %v4196 = vpop.f32.mrf.mxu0
    %v4197 = vadd.f32 0.0, %v4196
    %v4198 = vpop.f32.mrf.mxu0
    %v4199 = vadd.f32 0.0, %v4198
    %4200 = vmatmul.bf16.gmra.mxu0 %v4141
    %v4201 = vpop.f32.mrf.mxu0
    %v4202 = vadd.f32 0.0, %v4201
    %v4203 = vpop.f32.mrf.mxu0
    %v4204 = vadd.f32 0.0, %v4203
    %4205 = vmatmul.bf16.gmra.mxu0 %v4144
    %v4206 = vpop.f32.mrf.mxu0
    %v4207 = vadd.f32 0.0, %v4206
    %v4208 = vpop.f32.mrf.mxu0
    %v4209 = vadd.f32 0.0, %v4208
    %4210 = vmatmul.bf16.gmra.mxu0 %v4147
    %v4211 = vpop.f32.mrf.mxu0
    %v4212 = vadd.f32 0.0, %v4211
    %v4213 = vpop.f32.mrf.mxu0
    %4214 = vdwg.mxu0
    %4215 = vmatpush.bf16.msra.mxu0 0
    %4216 = vmatpush.bf16.msra.mxu0 0
    %4217 = vmatpush.bf16.msra.mxu0 0
    %4218 = vmatpush.bf16.msra.mxu0 %v4111
    %4219 = vmatpush.bf16.msra.mxu0 %v4107
    %4220 = vmatpush.bf16.msra.mxu0 %v4103
    %4221 = vmatpush.bf16.msra.mxu0 %v4099
    %4222 = vmatpush.bf16.msra.mxu0 %v4095
    %4223 = vmatmul.bf16.gmra.mxu0 %v4135
    %v4224 = vpop.f32.mrf.mxu0
    %v4225 = vadd.f32 0.0, %v4224
    %v4226 = vpop.f32.mrf.mxu0
    %v4227 = vadd.f32 0.0, %v4226
    %4228 = vmatmul.bf16.gmra.mxu0 %v4138
    %v4229 = vpop.f32.mrf.mxu0
    %v4230 = vadd.f32 0.0, %v4229
    %v4231 = vpop.f32.mrf.mxu0
    %v4232 = vadd.f32 0.0, %v4231
    %4233 = vmatmul.bf16.gmra.mxu0 %v4141
    %v4234 = vpop.f32.mrf.mxu0
    %v4235 = vadd.f32 0.0, %v4234
    %v4236 = vpop.f32.mrf.mxu0
    %v4237 = vadd.f32 0.0, %v4236
    %4238 = vmatmul.bf16.gmra.mxu0 %v4144
    %v4239 = vpop.f32.mrf.mxu0
    %v4240 = vadd.f32 0.0, %v4239
    %v4241 = vpop.f32.mrf.mxu0
    %v4242 = vadd.f32 0.0, %v4241
    %4243 = vmatmul.bf16.gmra.mxu0 %v4147
    %v4244 = vpop.f32.mrf.mxu0
    %v4245 = vadd.f32 0.0, %v4244
    %v4246 = vpop.f32.mrf.mxu0
    %4247 = vdwg.mxu0
    %4248 = vmatpush.bf16.msra.mxu0 0
    %4249 = vmatpush.bf16.msra.mxu0 0
    %4250 = vmatpush.bf16.msra.mxu0 0
    %4251 = vmatpush.bf16.msra.mxu0 %v4112
    %4252 = vmatpush.bf16.msra.mxu0 %v4108
    %4253 = vmatpush.bf16.msra.mxu0 %v4104
    %4254 = vmatpush.bf16.msra.mxu0 %v4100
    %4255 = vmatpush.bf16.msra.mxu0 %v4096
    %4256 = vmatmul.bf16.gmra.mxu0 %v4135
    %v4257 = vpop.f32.mrf.mxu0
    %v4258 = vadd.f32 0.0, %v4257
    %v4259 = vpop.f32.mrf.mxu0
    %v4260 = vadd.f32 0.0, %v4259
    %4261 = vmatmul.bf16.gmra.mxu0 %v4138
    %v4262 = vpop.f32.mrf.mxu0
    %v4263 = vadd.f32 0.0, %v4262
    %v4264 = vpop.f32.mrf.mxu0
    %v4265 = vadd.f32 0.0, %v4264
    %4266 = vmatmul.bf16.gmra.mxu0 %v4141
    %v4267 = vpop.f32.mrf.mxu0
    %v4268 = vadd.f32 0.0, %v4267
    %v4269 = vpop.f32.mrf.mxu0
    %v4270 = vadd.f32 0.0, %v4269
    %4271 = vmatmul.bf16.gmra.mxu0 %v4144
    %v4272 = vpop.f32.mrf.mxu0
    %v4273 = vadd.f32 0.0, %v4272
    %v4274 = vpop.f32.mrf.mxu0
    %v4275 = vadd.f32 0.0, %v4274
    %4276 = vmatmul.bf16.gmra.mxu0 %v4147
    %v4277 = vpop.f32.mrf.mxu0
    %v4278 = vadd.f32 0.0, %v4277
    %v4279 = vpop.f32.mrf.mxu0
    %4280 = vdwg.mxu0
    %4281 = vrot.lane.b32.xlu0 %v4159, 34
    %v4282 = vpop.permute.xlu0 %4281
    %4283 = vrot.lane.b32.xlu0 %v4192, 34
    %v4284 = vpop.permute.xlu0 %4283
    %4285 = vrot.lane.b32.xlu0 %v4225, 34
    %v4286 = vpop.permute.xlu0 %4285
    %4287 = vrot.lane.b32.xlu0 %v4258, 34
    %v4288 = vpop.permute.xlu0 %4287
    %v4289 = vsel %vm1358, %v4286, %v4288
    %v4290 = vsel %vm1358, %v4284, %v4286
    %v4291 = vsel %vm1358, %v4282, %v4284
    %v4292 = vsel %vm1358, %v4288, %v4282
    %v4293 = vld [vmem:[#allocation3 + $0x100] sm:$0xff]
    %v4294 = vld [vmem:[#allocation3 + $0x108] sm:$0xff]
    %v4295 = vld [vmem:[#allocation3 + $0x110] sm:$0xff]
    %v4296 = vld [vmem:[#allocation3 + $0x118] sm:$0xff]
    %v4297 = vmul.f32 %v4292, %v4293
    %v4298 = vmul.f32 %v4291, %v4294
    %v4299 = vmul.f32 %v4290, %v4295
    %v4300 = vmul.f32 %v4289, %v4296
    %4301 = vrot.lane.b32.xlu0 %v4161, 32
    %v4302 = vpop.permute.xlu0 %4301
    %4303 = vrot.lane.b32.xlu0 %v4194, 32
    %v4304 = vpop.permute.xlu0 %4303
    %4305 = vrot.lane.b32.xlu0 %v4227, 32
    %v4306 = vpop.permute.xlu0 %4305
    %4307 = vrot.lane.b32.xlu0 %v4260, 32
    %v4308 = vpop.permute.xlu0 %4307
    %v4309 = vsel %vm1379, %v4306, %v4308
    %v4310 = vsel %vm1379, %v4304, %v4306
    %v4311 = vsel %vm1379, %v4302, %v4304
    %v4312 = vsel %vm1379, %v4308, %v4302
    %v4313 = vld [vmem:[#allocation3 + $0x120] sm:$0xff]
    %v4314 = vld [vmem:[#allocation3 + $0x128] sm:$0xff]
    %v4315 = vld [vmem:[#allocation3 + $0x130] sm:$0xff]
    %v4316 = vld [vmem:[#allocation3 + $0x138] sm:$0xff]
    %v4317 = vmul.f32 %v4312, %v4313
    %v4318 = vmul.f32 %v4311, %v4314
    %v4319 = vmul.f32 %v4310, %v4315
    %v4320 = vmul.f32 %v4309, %v4316
    %4321 = vrot.lane.b32.xlu0 %v4164, 30
    %v4322 = vpop.permute.xlu0 %4321
    %4323 = vrot.lane.b32.xlu0 %v4197, 30
    %v4324 = vpop.permute.xlu0 %4323
    %4325 = vrot.lane.b32.xlu0 %v4230, 30
    %v4326 = vpop.permute.xlu0 %4325
    %4327 = vrot.lane.b32.xlu0 %v4263, 30
    %v4328 = vpop.permute.xlu0 %4327
    %v4329 = vsel %vm1400, %v4326, %v4328
    %v4330 = vsel %vm1400, %v4324, %v4326
    %v4331 = vsel %vm1400, %v4322, %v4324
    %v4332 = vsel %vm1400, %v4328, %v4322
    %v4333 = vld [vmem:[#allocation3 + $0x140] sm:$0xff]
    %v4334 = vld [vmem:[#allocation3 + $0x148] sm:$0xff]
    %v4335 = vld [vmem:[#allocation3 + $0x150] sm:$0xff]
    %v4336 = vld [vmem:[#allocation3 + $0x158] sm:$0xff]
    %v4337 = vmul.f32 %v4332, %v4333
    %v4338 = vmul.f32 %v4331, %v4334
    %v4339 = vmul.f32 %v4330, %v4335
    %v4340 = vmul.f32 %v4329, %v4336
    %4341 = vrot.lane.b32.xlu0 %v4166, 2
    %v4342 = vpop.permute.xlu0 %4341
    %4343 = vrot.lane.b32.xlu0 %v4199, 2
    %v4344 = vpop.permute.xlu0 %4343
    %4345 = vrot.lane.b32.xlu0 %v4232, 2
    %v4346 = vpop.permute.xlu0 %4345
    %4347 = vrot.lane.b32.xlu0 %v4265, 2
    %v4348 = vpop.permute.xlu0 %4347
    %v4349 = vsel %vm1421, %v4346, %v4348
    %v4350 = vsel %vm1421, %v4344, %v4346
    %v4351 = vsel %vm1421, %v4342, %v4344
    %v4352 = vsel %vm1421, %v4348, %v4342
    %v4353 = vld [vmem:[#allocation3 + $0x160] sm:$0xff]
    %v4354 = vld [vmem:[#allocation3 + $0x168] sm:$0xff]
    %v4355 = vld [vmem:[#allocation3 + $0x170] sm:$0xff]
    %v4356 = vld [vmem:[#allocation3 + $0x178] sm:$0xff]
    %v4357 = vmul.f32 %v4352, %v4353
    %v4358 = vmul.f32 %v4351, %v4354
    %v4359 = vmul.f32 %v4350, %v4355
    %v4360 = vmul.f32 %v4349, %v4356
    %4361 = vrot.lane.b32.xlu0 %v4171, 126
    %v4362 = vpop.permute.xlu0 %4361
    %4363 = vrot.lane.b32.xlu0 %v4204, 126
    %v4364 = vpop.permute.xlu0 %4363
    %4365 = vrot.lane.b32.xlu0 %v4237, 126
    %v4366 = vpop.permute.xlu0 %4365
    %4367 = vrot.lane.b32.xlu0 %v4270, 126
    %v4368 = vpop.permute.xlu0 %4367
    %v4369 = vsel %vm1442, %v4366, %v4368
    %v4370 = vsel %vm1442, %v4364, %v4366
    %v4371 = vsel %vm1442, %v4362, %v4364
    %v4372 = vsel %vm1442, %v4368, %v4362
    %v4373 = vld [vmem:[#allocation3 + $0x180] sm:$0xff]
    %v4374 = vld [vmem:[#allocation3 + $0x188] sm:$0xff]
    %v4375 = vld [vmem:[#allocation3 + $0x190] sm:$0xff]
    %v4376 = vld [vmem:[#allocation3 + $0x198] sm:$0xff]
    %v4377 = vmul.f32 %v4371, %v4373
    %v4378 = vmul.f32 %v4370, %v4374
    %v4379 = vmul.f32 %v4369, %v4375
    %v4380 = vmul.f32 %v4372, %v4376
    %4381 = vrot.lane.b32.xlu0 %v4174, 98
    %v4382 = vpop.permute.xlu0 %4381
    %4383 = vrot.lane.b32.xlu0 %v4207, 98
    %v4384 = vpop.permute.xlu0 %4383
    %4385 = vrot.lane.b32.xlu0 %v4240, 98
    %v4386 = vpop.permute.xlu0 %4385
    %4387 = vrot.lane.b32.xlu0 %v4273, 98
    %v4388 = vpop.permute.xlu0 %4387
    %v4389 = vsel %vm1463, %v4386, %v4388
    %v4390 = vsel %vm1463, %v4384, %v4386
    %v4391 = vsel %vm1463, %v4382, %v4384
    %v4392 = vsel %vm1463, %v4388, %v4382
    %v4393 = vld [vmem:[#allocation3 + $0x1a0] sm:$0xff]
    %v4394 = vld [vmem:[#allocation3 + $0x1a8] sm:$0xff]
    %v4395 = vld [vmem:[#allocation3 + $0x1b0] sm:$0xff]
    %v4396 = vld [vmem:[#allocation3 + $0x1b8] sm:$0xff]
    %v4397 = vmul.f32 %v4391, %v4393
    %v4398 = vmul.f32 %v4390, %v4394
    %v4399 = vmul.f32 %v4389, %v4395
    %v4400 = vmul.f32 %v4392, %v4396
    %4401 = vrot.lane.b32.xlu0 %v4176, 96
    %v4402 = vpop.permute.xlu0 %4401
    %4403 = vrot.lane.b32.xlu0 %v4209, 96
    %v4404 = vpop.permute.xlu0 %4403
    %4405 = vrot.lane.b32.xlu0 %v4242, 96
    %v4406 = vpop.permute.xlu0 %4405
    %4407 = vrot.lane.b32.xlu0 %v4275, 96
    %v4408 = vpop.permute.xlu0 %4407
    %v4409 = vsel %vm1484, %v4406, %v4408
    %v4410 = vsel %vm1484, %v4404, %v4406
    %v4411 = vsel %vm1484, %v4402, %v4404
    %v4412 = vsel %vm1484, %v4408, %v4402
    %v4413 = vld [vmem:[#allocation3 + $0x1c0] sm:$0xff]
    %v4414 = vld [vmem:[#allocation3 + $0x1c8] sm:$0xff]
    %v4415 = vld [vmem:[#allocation3 + $0x1d0] sm:$0xff]
    %v4416 = vld [vmem:[#allocation3 + $0x1d8] sm:$0xff]
    %v4417 = vmul.f32 %v4411, %v4413
    %v4418 = vmul.f32 %v4410, %v4414
    %v4419 = vmul.f32 %v4409, %v4415
    %v4420 = vmul.f32 %v4412, %v4416
    %4421 = vrot.lane.b32.xlu0 %v4179, 94
    %v4422 = vpop.permute.xlu0 %4421
    %4423 = vrot.lane.b32.xlu0 %v4212, 94
    %v4424 = vpop.permute.xlu0 %4423
    %4425 = vrot.lane.b32.xlu0 %v4245, 94
    %v4426 = vpop.permute.xlu0 %4425
    %4427 = vrot.lane.b32.xlu0 %v4278, 94
    %v4428 = vpop.permute.xlu0 %4427
    %v4429 = vsel %vm1505, %v4426, %v4428
    %v4430 = vsel %vm1505, %v4424, %v4426
    %v4431 = vsel %vm1505, %v4422, %v4424
    %v4432 = vsel %vm1505, %v4428, %v4422
    %v4433 = vld [vmem:[#allocation3 + $0x1e0] sm:$0xff]
    %v4434 = vld [vmem:[#allocation3 + $0x1e8] sm:$0xff]
    %v4435 = vld [vmem:[#allocation3 + $0x1f0] sm:$0xff]
    %v4436 = vld [vmem:[#allocation3 + $0x1f8] sm:$0xff]
    %v4437 = vmul.f32 %v4431, %v4433
    %v4438 = vmul.f32 %v4430, %v4434
    %v4439 = vmul.f32 %v4429, %v4435
    %v4440 = vmul.f32 %v4432, %v4436
    %v4441 = vadd.f32 %v4297, %v4317
    %v4442 = vadd.f32 %v4298, %v4318
    %v4443 = vadd.f32 %v4299, %v4319
    %v4444 = vadd.f32 %v4300, %v4320
    %v4445 = vadd.f32 %v4337, %v4357
    %v4446 = vadd.f32 %v4338, %v4358
    %v4447 = vadd.f32 %v4339, %v4359
    %v4448 = vadd.f32 %v4340, %v4360
    %v4449 = vadd.f32 %v4169, %v4377
    %v4450 = vadd.f32 %v4202, %v4378
    %v4451 = vadd.f32 %v4235, %v4379
    %v4452 = vadd.f32 %v4268, %v4380
    %v4453 = vadd.f32 %v4397, %v4417
    %v4454 = vadd.f32 %v4398, %v4418
    %v4455 = vadd.f32 %v4399, %v4419
    %v4456 = vadd.f32 %v4400, %v4420
    %v4457 = vadd.f32 %v4441, %v4445
    %v4458 = vadd.f32 %v4442, %v4446
    %v4459 = vadd.f32 %v4443, %v4447
    %v4460 = vadd.f32 %v4444, %v4448
    %v4461 = vadd.f32 %v4449, %v4453
    %v4462 = vadd.f32 %v4450, %v4454
    %v4463 = vadd.f32 %v4451, %v4455
    %v4464 = vadd.f32 %v4452, %v4456
    %v4465 = vadd.f32 %v4457, %v4461
    %v4466 = vadd.f32 %v4458, %v4462
    %v4467 = vadd.f32 %v4459, %v4463
    %v4468 = vadd.f32 %v4460, %v4464
    %v4469 = vadd.f32 %v4465, %v4437
    %v4470 = vadd.f32 %v4466, %v4438
    %v4471 = vadd.f32 %v4467, %v4439
    %v4472 = vadd.f32 %v4468, %v4440
    %v4473 = vadd.f32 %v4469, %v4470
    %v4474 = vadd.f32 %v4473, %v4471
    %v4475 = vadd.f32 %v4474, %v4472
    %4476 = vadd.xlane.f32.xlu0 %v4475
    %v4477 = vpop.xlane.xlu0 %4476
    %v4478 = vmul.f32 %v4469, %v4469
    %v4479 = vmul.f32 %v4470, %v4470
    %v4480 = vmul.f32 %v4471, %v4471
    %v4481 = vmul.f32 %v4472, %v4472
    %v4482 = vadd.f32 %v4478, %v4479
    %v4483 = vadd.f32 %v4482, %v4480
    %v4484 = vadd.f32 %v4483, %v4481
    %4485 = vadd.xlane.f32.xlu0 %v4484
    %v4486 = vpop.xlane.xlu0 %4485
    %v4487 = vmul.f32 %v4477, 0.001953125
    %v4488 = vmul.f32 %v4486, 0.001953125
    %v4489 = vmul.f32 %v4487, %v4487
    %v4490 = vsub.f32 %v4488, %v4489
    %v4491 = vmax.f32 %v4490, 0.0
    %v4492 = vld [vmem:[#allocation5] sm:$0xff]
    %v4493 = vadd.f32 %v4491, 1e-05
    %v4494 = vrsqrt.pop %v4493
    %v4495 = vmul.f32 %v4494, %v4493
    %v4496 = vmul.f32 %v4495, %v4494
    %v4497 = vmul.f32 0.5, %v4496
    %v4498 = vsub.f32 1.5, %v4497
    %v4499 = vmul.f32 %v4494, %v4498
    %vm4500 = vweird.f32 %v4493
    %vm4501 = vweird.f32 %v4494
    %vm4502 = vmor %vm4500, %vm4501
    %v4503 = vsel %vm4502, %v4494, %v4499
    %v4504 = vmul.f32 %v4492, %v4503
    %v4505 = vld [vmem:[#allocation7] sm:$0xff]
    %v4506 = vmul.f32 %v4487, %v4504
    %v4507 = vsub.f32 %v4505, %v4506
    %4509 = vset.pattern.permute.xlu0 10
    %4510 = vperm.xlu0 %4509, %v4504
    %v4511 = vpop.permute.xlu0 %4510
    %v4513 = vmul.f32 %v4469, %v4511
    %v4514 = vmul.f32 %v4470, %v4511
    %v4515 = vmul.f32 %v4471, %v4511
    %v4516 = vmul.f32 %v4472, %v4511
    %4518 = vset.pattern.permute.xlu0 10
    %4519 = vperm.xlu0 %4518, %v4507
    %v4520 = vpop.permute.xlu0 %4519
    %v4522 = vadd.f32 %v4513, %v4520
    %v4523 = vadd.f32 %v4514, %v4520
    %v4524 = vadd.f32 %v4515, %v4520
    %v4525 = vadd.f32 %v4516, %v4520
    %vm4526 = vcmp.ge.f32.partialorder %v4522, 0.0
    %vm4527 = vcmp.ge.f32.partialorder %v4523, 0.0
    %vm4528 = vcmp.ge.f32.partialorder %v4524, 0.0
    %vm4529 = vcmp.ge.f32.partialorder %v4525, 0.0
    %v4530 = vmul.f32 %v4522, 0.01
    %v4531 = vmul.f32 %v4523, 0.01
    %v4532 = vmul.f32 %v4524, 0.01
    %v4533 = vmul.f32 %v4525, 0.01
    %v4534 = vsel %vm4526, %v4522, %v4530
    %v4535 = vsel %vm4527, %v4523, %v4531
    %v4536 = vsel %vm4528, %v4524, %v4532
    %v4537 = vsel %vm4529, %v4525, %v4533
    %v4538 = vpack.c.bf16 %v4535, %v4534
    %v4539 = vpack.c.bf16 %v4537, %v4536
    %4540 = vst [vmem:[#allocation2 + $0xa0] sm:$0xff] %v4538
    %4541 = vst [vmem:[#allocation2 + $0xa8] sm:$0xff] %v4539
    %v4542 = vld [vmem:[#allocation2] sm:$0xff]
    %v4543 = vld [vmem:[#allocation2 + $0x8] sm:$0xff]
    %v4544 = vld [vmem:[#allocation2 + $0x10] sm:$0xff]
    %v4545 = vld [vmem:[#allocation2 + $0x18] sm:$0xff]
    %v4546 = vld [vmem:[#allocation2 + $0x20] sm:$0xff]
    %v4547 = vld [vmem:[#allocation2 + $0x28] sm:$0xff]
    %v4548 = vld [vmem:[#allocation2 + $0x30] sm:$0xff]
    %v4549 = vld [vmem:[#allocation2 + $0x38] sm:$0xff]
    %v4550 = vld [vmem:[#allocation2 + $0x40] sm:$0xff]
    %v4551 = vld [vmem:[#allocation2 + $0x48] sm:$0xff]
    %v4552 = vld [vmem:[#allocation2 + $0x50] sm:$0xff]
    %v4553 = vld [vmem:[#allocation2 + $0x58] sm:$0xff]
    %v4554 = vld [vmem:[#allocation2 + $0x60] sm:$0xff]
    %v4555 = vld [vmem:[#allocation2 + $0x68] sm:$0xff]
    %v4556 = vld [vmem:[#allocation2 + $0x70] sm:$0xff]
    %v4557 = vld [vmem:[#allocation2 + $0x78] sm:$0xff]
    %v4558 = vld [vmem:[#allocation2 + $0x80] sm:$0xff]
    %v4559 = vld [vmem:[#allocation2 + $0x88] sm:$0xff]
    %v4560 = vld [vmem:[#allocation2 + $0x90] sm:$0xff]
    %v4561 = vld [vmem:[#allocation2 + $0x98] sm:$0xff]
    %v4562 = vld [vmem:[#allocation2 + $0xa0] sm:$0xff]
    %v4563 = vld [vmem:[#allocation2 + $0xa8] sm:$0xff]
    %v4564 = vld [vmem:[%s16] sm:$0xf]
    %v4565 = vld [vmem:[%s16 + $0x4] sm:$0xf]
    %v4566 = vld [vmem:[%s16 + $0x8] sm:$0xf]
    %v4567 = vld [vmem:[%s16 + $0xc] sm:$0xf]
    %v4568 = vld [vmem:[%s16 + $0x10] sm:$0xf]
    %v4569 = vld [vmem:[%s16 + $0x14] sm:$0xf]
    %v4570 = vld [vmem:[%s16 + $0x18] sm:$0xf]
    %v4571 = vld [vmem:[%s16 + $0x1c] sm:$0xf]
    %v4572 = vld [vmem:[%s16 + $0x20] sm:$0xf]
    %v4582 = vunpack.c.l.b16 %v4564
    %v4583 = vunpack.c.l.b16 %v4565
    %v4584 = vunpack.c.l.b16 %v4566
    %v4585 = vunpack.c.l.b16 %v4567
    %v4586 = vunpack.c.l.b16 %v4568
    %v4587 = vunpack.c.l.b16 %v4569
    %v4588 = vunpack.c.l.b16 %v4570
    %v4589 = vunpack.c.l.b16 %v4571
    %v4590 = vunpack.c.l.b16 %v4572
    %v4591 = vpack.c.b16 %v4583, %v4582
    %v4592 = vpack.c.b16 %v4585, %v4584
    %v4593 = vpack.c.b16 %v4587, %v4586
    %v4594 = vpack.c.b16 %v4589, %v4588
    %v4595 = vpack.c.b16 %v4590, %v4590
    %v4618 = vunpack.c.l.b16 %v4542
    %v4619 = vunpack.c.h.b16 %v4542
    %v4620 = vunpack.c.l.b16 %v4543
    %v4621 = vunpack.c.h.b16 %v4543
    %v4622 = vunpack.c.l.b16 %v4544
    %v4623 = vunpack.c.h.b16 %v4544
    %v4624 = vunpack.c.l.b16 %v4545
    %v4625 = vunpack.c.h.b16 %v4545
    %v4626 = vunpack.c.l.b16 %v4546
    %v4627 = vunpack.c.h.b16 %v4546
    %v4628 = vunpack.c.l.b16 %v4547
    %v4629 = vunpack.c.h.b16 %v4547
    %v4630 = vunpack.c.l.b16 %v4548
    %v4631 = vunpack.c.h.b16 %v4548
    %v4632 = vunpack.c.l.b16 %v4549
    %v4633 = vunpack.c.h.b16 %v4549
    %v4634 = vunpack.c.l.b16 %v4550
    %v4635 = vunpack.c.h.b16 %v4550
    %v4636 = vunpack.c.l.b16 %v4551
    %v4637 = vunpack.c.h.b16 %v4551
    %v4638 = vunpack.c.l.b16 %v4552
    %v4639 = vunpack.c.h.b16 %v4552
    %v4640 = vunpack.c.l.b16 %v4553
    %v4641 = vunpack.c.h.b16 %v4553
    %v4642 = vunpack.c.l.b16 %v4554
    %v4643 = vunpack.c.h.b16 %v4554
    %v4644 = vunpack.c.l.b16 %v4555
    %v4645 = vunpack.c.h.b16 %v4555
    %v4646 = vunpack.c.l.b16 %v4556
    %v4647 = vunpack.c.h.b16 %v4556
    %v4648 = vunpack.c.l.b16 %v4557
    %v4649 = vunpack.c.h.b16 %v4557
    %v4650 = vunpack.c.l.b16 %v4558
    %v4651 = vunpack.c.h.b16 %v4558
    %v4652 = vunpack.c.l.b16 %v4559
    %v4653 = vunpack.c.h.b16 %v4559
    %v4654 = vunpack.c.l.b16 %v4560
    %v4655 = vunpack.c.h.b16 %v4560
    %v4656 = vunpack.c.l.b16 %v4561
    %v4657 = vunpack.c.h.b16 %v4561
    %v4658 = vunpack.c.l.b16 %v4562
    %v4659 = vunpack.c.h.b16 %v4562
    %v4660 = vunpack.c.l.b16 %v4563
    %v4661 = vunpack.c.h.b16 %v4563
    %v4662 = vpack.c.b16 %v4622, %v4618
    %v4663 = vpack.c.b16 %v4623, %v4619
    %v4664 = vpack.c.b16 %v4624, %v4620
    %v4665 = vpack.c.b16 %v4625, %v4621
    %v4666 = vpack.c.b16 %v4630, %v4626
    %v4667 = vpack.c.b16 %v4631, %v4627
    %v4668 = vpack.c.b16 %v4632, %v4628
    %v4669 = vpack.c.b16 %v4633, %v4629
    %v4670 = vpack.c.b16 %v4638, %v4634
    %v4671 = vpack.c.b16 %v4639, %v4635
    %v4672 = vpack.c.b16 %v4640, %v4636
    %v4673 = vpack.c.b16 %v4641, %v4637
    %v4674 = vpack.c.b16 %v4646, %v4642
    %v4675 = vpack.c.b16 %v4647, %v4643
    %v4676 = vpack.c.b16 %v4648, %v4644
    %v4677 = vpack.c.b16 %v4649, %v4645
    %v4678 = vpack.c.b16 %v4654, %v4650
    %v4679 = vpack.c.b16 %v4655, %v4651
    %v4680 = vpack.c.b16 %v4656, %v4652
    %v4681 = vpack.c.b16 %v4657, %v4653
    %v4682 = vpack.c.b16 %v4658, %v4658
    %v4683 = vpack.c.b16 %v4659, %v4659
    %v4684 = vpack.c.b16 %v4660, %v4660
    %v4685 = vpack.c.b16 %v4661, %v4661
    %vm4706 = vcmask 719872
    %v4708 = vsel %vm4706, %v4591, 0
    %v4711 = vsel %vm4706, %v4592, 0
    %v4714 = vsel %vm4706, %v4593, 0
    %v4717 = vsel %vm4706, %v4594, 0
    %v4720 = vsel %vm4706, %v4595, 0
    %v4723 = vsel %vm740, %v4682, 0
    %v4726 = vsel %vm740, %v4683, 0
    %v4729 = vsel %vm740, %v4684, 0
    %v4732 = vsel %vm740, %v4685, 0
    %4734 = vmatpush.bf16.msra.mxu0 0
    %4735 = vmatpush.bf16.msra.mxu0 0
    %4736 = vmatpush.bf16.msra.mxu0 %v4723
    %4737 = vmatpush.bf16.msra.mxu0 %v4678
    %4738 = vmatpush.bf16.msra.mxu0 %v4674
    %4739 = vmatpush.bf16.msra.mxu0 %v4670
    %4740 = vmatpush.bf16.msra.mxu0 %v4666
    %4741 = vmatpush.bf16.msra.mxu0 %v4662
    %4742 = vmatmul.bf16.gmra.mxu0 %v4708
    %v4743 = vpop.f32.mrf.mxu0
    %v4744 = vadd.f32 0.0, %v4743
    %v4745 = vpop.f32.mrf.mxu0
    %v4746 = vadd.f32 0.0, %v4745
    %4747 = vmatmul.bf16.gmra.mxu0 %v4711
    %v4748 = vpop.f32.mrf.mxu0
    %v4749 = vadd.f32 0.0, %v4748
    %v4750 = vpop.f32.mrf.mxu0
    %v4751 = vadd.f32 0.0, %v4750
    %4752 = vmatmul.bf16.gmra.mxu0 %v4714
    %v4753 = vpop.f32.mrf.mxu0
    %v4754 = vadd.f32 0.0, %v4753
    %v4755 = vpop.f32.mrf.mxu0
    %v4756 = vadd.f32 0.0, %v4755
    %4757 = vmatmul.bf16.gmra.mxu0 %v4717
    %v4758 = vpop.f32.mrf.mxu0
    %v4759 = vadd.f32 0.0, %v4758
    %v4760 = vpop.f32.mrf.mxu0
    %v4761 = vadd.f32 0.0, %v4760
    %4762 = vmatmul.bf16.gmra.mxu0 %v4720
    %v4763 = vpop.f32.mrf.mxu0
    %v4764 = vadd.f32 0.0, %v4763
    %v4765 = vpop.f32.mrf.mxu0
    %4766 = vdwg.mxu0
    %4767 = vmatpush.bf16.msra.mxu0 0
    %4768 = vmatpush.bf16.msra.mxu0 0
    %4769 = vmatpush.bf16.msra.mxu0 %v4726
    %4770 = vmatpush.bf16.msra.mxu0 %v4679
    %4771 = vmatpush.bf16.msra.mxu0 %v4675
    %4772 = vmatpush.bf16.msra.mxu0 %v4671
    %4773 = vmatpush.bf16.msra.mxu0 %v4667
    %4774 = vmatpush.bf16.msra.mxu0 %v4663
    %4775 = vmatmul.bf16.gmra.mxu0 %v4708
    %v4776 = vpop.f32.mrf.mxu0
    %v4777 = vadd.f32 0.0, %v4776
    %v4778 = vpop.f32.mrf.mxu0
    %v4779 = vadd.f32 0.0, %v4778
    %4780 = vmatmul.bf16.gmra.mxu0 %v4711
    %v4781 = vpop.f32.mrf.mxu0
    %v4782 = vadd.f32 0.0, %v4781
    %v4783 = vpop.f32.mrf.mxu0
    %v4784 = vadd.f32 0.0, %v4783
    %4785 = vmatmul.bf16.gmra.mxu0 %v4714
    %v4786 = vpop.f32.mrf.mxu0
    %v4787 = vadd.f32 0.0, %v4786
    %v4788 = vpop.f32.mrf.mxu0
    %v4789 = vadd.f32 0.0, %v4788
    %4790 = vmatmul.bf16.gmra.mxu0 %v4717
    %v4791 = vpop.f32.mrf.mxu0
    %v4792 = vadd.f32 0.0, %v4791
    %v4793 = vpop.f32.mrf.mxu0
    %v4794 = vadd.f32 0.0, %v4793
    %4795 = vmatmul.bf16.gmra.mxu0 %v4720
    %v4796 = vpop.f32.mrf.mxu0
    %v4797 = vadd.f32 0.0, %v4796
    %v4798 = vpop.f32.mrf.mxu0
    %4799 = vdwg.mxu0
    %4800 = vmatpush.bf16.msra.mxu0 0
    %4801 = vmatpush.bf16.msra.mxu0 0
    %4802 = vmatpush.bf16.msra.mxu0 %v4729
    %4803 = vmatpush.bf16.msra.mxu0 %v4680
    %4804 = vmatpush.bf16.msra.mxu0 %v4676
    %4805 = vmatpush.bf16.msra.mxu0 %v4672
    %4806 = vmatpush.bf16.msra.mxu0 %v4668
    %4807 = vmatpush.bf16.msra.mxu0 %v4664
    %4808 = vmatmul.bf16.gmra.mxu0 %v4708
    %v4809 = vpop.f32.mrf.mxu0
    %v4810 = vadd.f32 0.0, %v4809
    %v4811 = vpop.f32.mrf.mxu0
    %v4812 = vadd.f32 0.0, %v4811
    %4813 = vmatmul.bf16.gmra.mxu0 %v4711
    %v4814 = vpop.f32.mrf.mxu0
    %v4815 = vadd.f32 0.0, %v4814
    %v4816 = vpop.f32.mrf.mxu0
    %v4817 = vadd.f32 0.0, %v4816
    %4818 = vmatmul.bf16.gmra.mxu0 %v4714
    %v4819 = vpop.f32.mrf.mxu0
    %v4820 = vadd.f32 0.0, %v4819
    %v4821 = vpop.f32.mrf.mxu0
    %v4822 = vadd.f32 0.0, %v4821
    %4823 = vmatmul.bf16.gmra.mxu0 %v4717
    %v4824 = vpop.f32.mrf.mxu0
    %v4825 = vadd.f32 0.0, %v4824
    %v4826 = vpop.f32.mrf.mxu0
    %v4827 = vadd.f32 0.0, %v4826
    %4828 = vmatmul.bf16.gmra.mxu0 %v4720
    %v4829 = vpop.f32.mrf.mxu0
    %v4830 = vadd.f32 0.0, %v4829
    %v4831 = vpop.f32.mrf.mxu0
    %4832 = vdwg.mxu0
    %4833 = vmatpush.bf16.msra.mxu0 0
    %4834 = vmatpush.bf16.msra.mxu0 0
    %4835 = vmatpush.bf16.msra.mxu0 %v4732
    %4836 = vmatpush.bf16.msra.mxu0 %v4681
    %4837 = vmatpush.bf16.msra.mxu0 %v4677
    %4838 = vmatpush.bf16.msra.mxu0 %v4673
    %4839 = vmatpush.bf16.msra.mxu0 %v4669
    %4840 = vmatpush.bf16.msra.mxu0 %v4665
    %4841 = vmatmul.bf16.gmra.mxu0 %v4708
    %v4842 = vpop.f32.mrf.mxu0
    %v4843 = vadd.f32 0.0, %v4842
    %v4844 = vpop.f32.mrf.mxu0
    %v4845 = vadd.f32 0.0, %v4844
    %4846 = vmatmul.bf16.gmra.mxu0 %v4711
    %v4847 = vpop.f32.mrf.mxu0
    %v4848 = vadd.f32 0.0, %v4847
    %v4849 = vpop.f32.mrf.mxu0
    %v4850 = vadd.f32 0.0, %v4849
    %4851 = vmatmul.bf16.gmra.mxu0 %v4714
    %v4852 = vpop.f32.mrf.mxu0
    %v4853 = vadd.f32 0.0, %v4852
    %v4854 = vpop.f32.mrf.mxu0
    %v4855 = vadd.f32 0.0, %v4854
    %4856 = vmatmul.bf16.gmra.mxu0 %v4717
    %v4857 = vpop.f32.mrf.mxu0
    %v4858 = vadd.f32 0.0, %v4857
    %v4859 = vpop.f32.mrf.mxu0
    %v4860 = vadd.f32 0.0, %v4859
    %4861 = vmatmul.bf16.gmra.mxu0 %v4720
    %v4862 = vpop.f32.mrf.mxu0
    %v4863 = vadd.f32 0.0, %v4862
    %v4864 = vpop.f32.mrf.mxu0
    %4865 = vdwg.mxu0
    %4866 = vrot.lane.b32.xlu0 %v4744, 68
    %v4867 = vpop.permute.xlu0 %4866
    %4868 = vrot.lane.b32.xlu0 %v4777, 68
    %v4869 = vpop.permute.xlu0 %4868
    %4870 = vrot.lane.b32.xlu0 %v4810, 68
    %v4871 = vpop.permute.xlu0 %4870
    %4872 = vrot.lane.b32.xlu0 %v4843, 68
    %v4873 = vpop.permute.xlu0 %4872
    %v4874 = vsel %vm1855, %v4871, %v4873
    %v4875 = vsel %vm1855, %v4869, %v4871
    %v4876 = vsel %vm1855, %v4867, %v4869
    %v4877 = vsel %vm1855, %v4873, %v4867
    %v4878 = vld [vmem:[#allocation3 + $0x200] sm:$0xff]
    %v4879 = vld [vmem:[#allocation3 + $0x208] sm:$0xff]
    %v4880 = vld [vmem:[#allocation3 + $0x210] sm:$0xff]
    %v4881 = vld [vmem:[#allocation3 + $0x218] sm:$0xff]
    %v4882 = vmul.f32 %v4877, %v4878
    %v4883 = vmul.f32 %v4876, %v4879
    %v4884 = vmul.f32 %v4875, %v4880
    %v4885 = vmul.f32 %v4874, %v4881
    %4886 = vrot.lane.b32.xlu0 %v4746, 64
    %v4887 = vpop.permute.xlu0 %4886
    %4888 = vrot.lane.b32.xlu0 %v4779, 64
    %v4889 = vpop.permute.xlu0 %4888
    %4890 = vrot.lane.b32.xlu0 %v4812, 64
    %v4891 = vpop.permute.xlu0 %4890
    %4892 = vrot.lane.b32.xlu0 %v4845, 64
    %v4893 = vpop.permute.xlu0 %4892
    %v4894 = vsel %vm1876, %v4891, %v4893
    %v4895 = vsel %vm1876, %v4889, %v4891
    %v4896 = vsel %vm1876, %v4887, %v4889
    %v4897 = vsel %vm1876, %v4893, %v4887
    %v4898 = vld [vmem:[#allocation3 + $0x220] sm:$0xff]
    %v4899 = vld [vmem:[#allocation3 + $0x228] sm:$0xff]
    %v4900 = vld [vmem:[#allocation3 + $0x230] sm:$0xff]
    %v4901 = vld [vmem:[#allocation3 + $0x238] sm:$0xff]
    %v4902 = vmul.f32 %v4897, %v4898
    %v4903 = vmul.f32 %v4896, %v4899
    %v4904 = vmul.f32 %v4895, %v4900
    %v4905 = vmul.f32 %v4894, %v4901
    %4906 = vrot.lane.b32.xlu0 %v4749, 60
    %v4907 = vpop.permute.xlu0 %4906
    %4908 = vrot.lane.b32.xlu0 %v4782, 60
    %v4909 = vpop.permute.xlu0 %4908
    %4910 = vrot.lane.b32.xlu0 %v4815, 60
    %v4911 = vpop.permute.xlu0 %4910
    %4912 = vrot.lane.b32.xlu0 %v4848, 60
    %v4913 = vpop.permute.xlu0 %4912
    %v4914 = vsel %vm1897, %v4911, %v4913
    %v4915 = vsel %vm1897, %v4909, %v4911
    %v4916 = vsel %vm1897, %v4907, %v4909
    %v4917 = vsel %vm1897, %v4913, %v4907
    %v4918 = vld [vmem:[#allocation3 + $0x240] sm:$0xff]
    %v4919 = vld [vmem:[#allocation3 + $0x248] sm:$0xff]
    %v4920 = vld [vmem:[#allocation3 + $0x250] sm:$0xff]
    %v4921 = vld [vmem:[#allocation3 + $0x258] sm:$0xff]
    %v4922 = vmul.f32 %v4917, %v4918
    %v4923 = vmul.f32 %v4916, %v4919
    %v4924 = vmul.f32 %v4915, %v4920
    %v4925 = vmul.f32 %v4914, %v4921
    %4926 = vrot.lane.b32.xlu0 %v4751, 4
    %v4927 = vpop.permute.xlu0 %4926
    %4928 = vrot.lane.b32.xlu0 %v4784, 4
    %v4929 = vpop.permute.xlu0 %4928
    %4930 = vrot.lane.b32.xlu0 %v4817, 4
    %v4931 = vpop.permute.xlu0 %4930
    %4932 = vrot.lane.b32.xlu0 %v4850, 4
    %v4933 = vpop.permute.xlu0 %4932
    %v4934 = vsel %vm1918, %v4931, %v4933
    %v4935 = vsel %vm1918, %v4929, %v4931
    %v4936 = vsel %vm1918, %v4927, %v4929
    %v4937 = vsel %vm1918, %v4933, %v4927
    %v4938 = vld [vmem:[#allocation3 + $0x260] sm:$0xff]
    %v4939 = vld [vmem:[#allocation3 + $0x268] sm:$0xff]
    %v4940 = vld [vmem:[#allocation3 + $0x270] sm:$0xff]
    %v4941 = vld [vmem:[#allocation3 + $0x278] sm:$0xff]
    %v4942 = vmul.f32 %v4937, %v4938
    %v4943 = vmul.f32 %v4936, %v4939
    %v4944 = vmul.f32 %v4935, %v4940
    %v4945 = vmul.f32 %v4934, %v4941
    %4946 = vrot.lane.b32.xlu0 %v4756, 124
    %v4947 = vpop.permute.xlu0 %4946
    %4948 = vrot.lane.b32.xlu0 %v4789, 124
    %v4949 = vpop.permute.xlu0 %4948
    %4950 = vrot.lane.b32.xlu0 %v4822, 124
    %v4951 = vpop.permute.xlu0 %4950
    %4952 = vrot.lane.b32.xlu0 %v4855, 124
    %v4953 = vpop.permute.xlu0 %4952
    %v4954 = vsel %vm1939, %v4951, %v4953
    %v4955 = vsel %vm1939, %v4949, %v4951
    %v4956 = vsel %vm1939, %v4947, %v4949
    %v4957 = vsel %vm1939, %v4953, %v4947
    %v4958 = vld [vmem:[#allocation3 + $0x280] sm:$0xff]
    %v4959 = vld [vmem:[#allocation3 + $0x288] sm:$0xff]
    %v4960 = vld [vmem:[#allocation3 + $0x290] sm:$0xff]
    %v4961 = vld [vmem:[#allocation3 + $0x298] sm:$0xff]
    %v4962 = vmul.f32 %v4956, %v4958
    %v4963 = vmul.f32 %v4955, %v4959
    %v4964 = vmul.f32 %v4954, %v4960
    %v4965 = vmul.f32 %v4957, %v4961
    %4966 = vrot.lane.b32.xlu0 %v4759, 68
    %v4967 = vpop.permute.xlu0 %4966
    %4968 = vrot.lane.b32.xlu0 %v4792, 68
    %v4969 = vpop.permute.xlu0 %4968
    %4970 = vrot.lane.b32.xlu0 %v4825, 68
    %v4971 = vpop.permute.xlu0 %4970
    %4972 = vrot.lane.b32.xlu0 %v4858, 68
    %v4973 = vpop.permute.xlu0 %4972
    %v4974 = vsel %vm1855, %v4971, %v4973
    %v4975 = vsel %vm1855, %v4969, %v4971
    %v4976 = vsel %vm1855, %v4967, %v4969
    %v4977 = vsel %vm1855, %v4973, %v4967
    %v4978 = vld [vmem:[#allocation3 + $0x2a0] sm:$0xff]
    %v4979 = vld [vmem:[#allocation3 + $0x2a8] sm:$0xff]
    %v4980 = vld [vmem:[#allocation3 + $0x2b0] sm:$0xff]
    %v4981 = vld [vmem:[#allocation3 + $0x2b8] sm:$0xff]
    %v4982 = vmul.f32 %v4976, %v4978
    %v4983 = vmul.f32 %v4975, %v4979
    %v4984 = vmul.f32 %v4974, %v4980
    %v4985 = vmul.f32 %v4977, %v4981
    %4986 = vrot.lane.b32.xlu0 %v4761, 64
    %v4987 = vpop.permute.xlu0 %4986
    %4988 = vrot.lane.b32.xlu0 %v4794, 64
    %v4989 = vpop.permute.xlu0 %4988
    %4990 = vrot.lane.b32.xlu0 %v4827, 64
    %v4991 = vpop.permute.xlu0 %4990
    %4992 = vrot.lane.b32.xlu0 %v4860, 64
    %v4993 = vpop.permute.xlu0 %4992
    %v4994 = vsel %vm1876, %v4991, %v4993
    %v4995 = vsel %vm1876, %v4989, %v4991
    %v4996 = vsel %vm1876, %v4987, %v4989
    %v4997 = vsel %vm1876, %v4993, %v4987
    %v4998 = vld [vmem:[#allocation3 + $0x2c0] sm:$0xff]
    %v4999 = vld [vmem:[#allocation3 + $0x2c8] sm:$0xff]
    %v5000 = vld [vmem:[#allocation3 + $0x2d0] sm:$0xff]
    %v5001 = vld [vmem:[#allocation3 + $0x2d8] sm:$0xff]
    %v5002 = vmul.f32 %v4996, %v4998
    %v5003 = vmul.f32 %v4995, %v4999
    %v5004 = vmul.f32 %v4994, %v5000
    %v5005 = vmul.f32 %v4997, %v5001
    %5006 = vrot.lane.b32.xlu0 %v4764, 60
    %v5007 = vpop.permute.xlu0 %5006
    %5008 = vrot.lane.b32.xlu0 %v4797, 60
    %v5009 = vpop.permute.xlu0 %5008
    %5010 = vrot.lane.b32.xlu0 %v4830, 60
    %v5011 = vpop.permute.xlu0 %5010
    %5012 = vrot.lane.b32.xlu0 %v4863, 60
    %v5013 = vpop.permute.xlu0 %5012
    %v5014 = vsel %vm1897, %v5011, %v5013
    %v5015 = vsel %vm1897, %v5009, %v5011
    %v5016 = vsel %vm1897, %v5007, %v5009
    %v5017 = vsel %vm1897, %v5013, %v5007
    %v5018 = vld [vmem:[#allocation3 + $0x2e0] sm:$0xff]
    %v5019 = vld [vmem:[#allocation3 + $0x2e8] sm:$0xff]
    %v5020 = vld [vmem:[#allocation3 + $0x2f0] sm:$0xff]
    %v5021 = vld [vmem:[#allocation3 + $0x2f8] sm:$0xff]
    %v5022 = vmul.f32 %v5016, %v5018
    %v5023 = vmul.f32 %v5015, %v5019
    %v5024 = vmul.f32 %v5014, %v5020
    %v5025 = vmul.f32 %v5017, %v5021
    %v5026 = vadd.f32 %v4882, %v4902
    %v5027 = vadd.f32 %v4883, %v4903
    %v5028 = vadd.f32 %v4884, %v4904
    %v5029 = vadd.f32 %v4885, %v4905
    %v5030 = vadd.f32 %v4922, %v4942
    %v5031 = vadd.f32 %v4923, %v4943
    %v5032 = vadd.f32 %v4924, %v4944
    %v5033 = vadd.f32 %v4925, %v4945
    %v5034 = vadd.f32 %v4754, %v4962
    %v5035 = vadd.f32 %v4787, %v4963
    %v5036 = vadd.f32 %v4820, %v4964
    %v5037 = vadd.f32 %v4853, %v4965
    %v5038 = vadd.f32 %v4982, %v5002
    %v5039 = vadd.f32 %v4983, %v5003
    %v5040 = vadd.f32 %v4984, %v5004
    %v5041 = vadd.f32 %v4985, %v5005
    %v5042 = vadd.f32 %v5026, %v5030
    %v5043 = vadd.f32 %v5027, %v5031
    %v5044 = vadd.f32 %v5028, %v5032
    %v5045 = vadd.f32 %v5029, %v5033
    %v5046 = vadd.f32 %v5034, %v5038
    %v5047 = vadd.f32 %v5035, %v5039
    %v5048 = vadd.f32 %v5036, %v5040
    %v5049 = vadd.f32 %v5037, %v5041
    %v5050 = vadd.f32 %v5042, %v5046
    %v5051 = vadd.f32 %v5043, %v5047
    %v5052 = vadd.f32 %v5044, %v5048
    %v5053 = vadd.f32 %v5045, %v5049
    %v5054 = vadd.f32 %v5050, %v5022
    %v5055 = vadd.f32 %v5051, %v5023
    %v5056 = vadd.f32 %v5052, %v5024
    %v5057 = vadd.f32 %v5053, %v5025
    %v5058 = vadd.f32 %v5054, %v5055
    %v5059 = vadd.f32 %v5058, %v5056
    %v5060 = vadd.f32 %v5059, %v5057
    %5061 = vadd.xlane.f32.xlu0 %v5060
    %v5062 = vpop.xlane.xlu0 %5061
    %v5063 = vmul.f32 %v5054, %v5054
    %v5064 = vmul.f32 %v5055, %v5055
    %v5065 = vmul.f32 %v5056, %v5056
    %v5066 = vmul.f32 %v5057, %v5057
    %v5067 = vadd.f32 %v5063, %v5064
    %v5068 = vadd.f32 %v5067, %v5065
    %v5069 = vadd.f32 %v5068, %v5066
    %5070 = vadd.xlane.f32.xlu0 %v5069
    %v5071 = vpop.xlane.xlu0 %5070
    %v5072 = vmul.f32 %v5062, 0.001953125
    %v5073 = vmul.f32 %v5071, 0.001953125
    %v5074 = vmul.f32 %v5072, %v5072
    %v5075 = vsub.f32 %v5073, %v5074
    %v5076 = vmax.f32 %v5075, 0.0
    %v5077 = vld [vmem:[#allocation5] sm:$0xff]
    %v5078 = vadd.f32 %v5076, 1e-05
    %v5079 = vrsqrt.pop %v5078
    %v5080 = vmul.f32 %v5079, %v5078
    %v5081 = vmul.f32 %v5080, %v5079
    %v5082 = vmul.f32 0.5, %v5081
    %v5083 = vsub.f32 1.5, %v5082
    %v5084 = vmul.f32 %v5079, %v5083
    %vm5085 = vweird.f32 %v5078
    %vm5086 = vweird.f32 %v5079
    %vm5087 = vmor %vm5085, %vm5086
    %v5088 = vsel %vm5087, %v5079, %v5084
    %v5089 = vmul.f32 %v5077, %v5088
    %v5090 = vld [vmem:[#allocation7] sm:$0xff]
    %v5091 = vmul.f32 %v5072, %v5089
    %v5092 = vsub.f32 %v5090, %v5091
    %5094 = vset.pattern.permute.xlu0 11
    %5095 = vperm.xlu0 %5094, %v5089
    %v5096 = vpop.permute.xlu0 %5095
    %v5098 = vmul.f32 %v5054, %v5096
    %v5099 = vmul.f32 %v5055, %v5096
    %v5100 = vmul.f32 %v5056, %v5096
    %v5101 = vmul.f32 %v5057, %v5096
    %5103 = vset.pattern.permute.xlu0 11
    %5104 = vperm.xlu0 %5103, %v5092
    %v5105 = vpop.permute.xlu0 %5104
    %v5107 = vadd.f32 %v5098, %v5105
    %v5108 = vadd.f32 %v5099, %v5105
    %v5109 = vadd.f32 %v5100, %v5105
    %v5110 = vadd.f32 %v5101, %v5105
    %vm5111 = vcmp.ge.f32.partialorder %v5107, 0.0
    %vm5112 = vcmp.ge.f32.partialorder %v5108, 0.0
    %vm5113 = vcmp.ge.f32.partialorder %v5109, 0.0
    %vm5114 = vcmp.ge.f32.partialorder %v5110, 0.0
    %v5115 = vmul.f32 %v5107, 0.01
    %v5116 = vmul.f32 %v5108, 0.01
    %v5117 = vmul.f32 %v5109, 0.01
    %v5118 = vmul.f32 %v5110, 0.01
    %v5119 = vsel %vm5111, %v5107, %v5115
    %v5120 = vsel %vm5112, %v5108, %v5116
    %v5121 = vsel %vm5113, %v5109, %v5117
    %v5122 = vsel %vm5114, %v5110, %v5118
    %v5123 = vpack.c.bf16 %v5120, %v5119
    %v5124 = vpack.c.bf16 %v5122, %v5121
    %5125 = vst [vmem:[#allocation2 + $0xb0] sm:$0xff] %v5123
    %5126 = vst [vmem:[#allocation2 + $0xb8] sm:$0xff] %v5124
    %v5127 = vld [vmem:[#allocation2] sm:$0xff]
    %v5128 = vld [vmem:[#allocation2 + $0x8] sm:$0xff]
    %v5129 = vld [vmem:[#allocation2 + $0x10] sm:$0xff]
    %v5130 = vld [vmem:[#allocation2 + $0x18] sm:$0xff]
    %v5131 = vld [vmem:[#allocation2 + $0x20] sm:$0xff]
    %v5132 = vld [vmem:[#allocation2 + $0x28] sm:$0xff]
    %v5133 = vld [vmem:[#allocation2 + $0x30] sm:$0xff]
    %v5134 = vld [vmem:[#allocation2 + $0x38] sm:$0xff]
    %v5135 = vld [vmem:[#allocation2 + $0x40] sm:$0xff]
    %v5136 = vld [vmem:[#allocation2 + $0x48] sm:$0xff]
    %v5137 = vld [vmem:[#allocation2 + $0x50] sm:$0xff]
    %v5138 = vld [vmem:[#allocation2 + $0x58] sm:$0xff]
    %v5139 = vld [vmem:[#allocation2 + $0x60] sm:$0xff]
    %v5140 = vld [vmem:[#allocation2 + $0x68] sm:$0xff]
    %v5141 = vld [vmem:[#allocation2 + $0x70] sm:$0xff]
    %v5142 = vld [vmem:[#allocation2 + $0x78] sm:$0xff]
    %v5143 = vld [vmem:[#allocation2 + $0x80] sm:$0xff]
    %v5144 = vld [vmem:[#allocation2 + $0x88] sm:$0xff]
    %v5145 = vld [vmem:[#allocation2 + $0x90] sm:$0xff]
    %v5146 = vld [vmem:[#allocation2 + $0x98] sm:$0xff]
    %v5147 = vld [vmem:[#allocation2 + $0xa0] sm:$0xff]
    %v5148 = vld [vmem:[#allocation2 + $0xa8] sm:$0xff]
    %v5149 = vld [vmem:[#allocation2 + $0xb0] sm:$0xff]
    %v5150 = vld [vmem:[#allocation2 + $0xb8] sm:$0xff]
    %v5151 = vld [vmem:[%s17] sm:$0xf]
    %v5152 = vld [vmem:[%s17 + $0x4] sm:$0xf]
    %v5153 = vld [vmem:[%s17 + $0x8] sm:$0xf]
    %v5154 = vld [vmem:[%s17 + $0xc] sm:$0xf]
    %v5155 = vld [vmem:[%s17 + $0x10] sm:$0xf]
    %v5156 = vld [vmem:[%s17 + $0x14] sm:$0xf]
    %v5157 = vld [vmem:[%s17 + $0x18] sm:$0xf]
    %v5158 = vld [vmem:[%s17 + $0x1c] sm:$0xf]
    %v5159 = vld [vmem:[%s17 + $0x20] sm:$0xf]
    %v5169 = vunpack.c.l.b16 %v5151
    %v5170 = vunpack.c.l.b16 %v5152
    %v5171 = vunpack.c.l.b16 %v5153
    %v5172 = vunpack.c.l.b16 %v5154
    %v5173 = vunpack.c.l.b16 %v5155
    %v5174 = vunpack.c.l.b16 %v5156
    %v5175 = vunpack.c.l.b16 %v5157
    %v5176 = vunpack.c.l.b16 %v5158
    %v5177 = vunpack.c.l.b16 %v5159
    %v5178 = vpack.c.b16 %v5170, %v5169
    %v5179 = vpack.c.b16 %v5172, %v5171
    %v5180 = vpack.c.b16 %v5174, %v5173
    %v5181 = vpack.c.b16 %v5176, %v5175
    %v5182 = vpack.c.b16 %v5177, %v5177
    %v5207 = vunpack.c.l.b16 %v5127
    %v5208 = vunpack.c.h.b16 %v5127
    %v5209 = vunpack.c.l.b16 %v5128
    %v5210 = vunpack.c.h.b16 %v5128
    %v5211 = vunpack.c.l.b16 %v5129
    %v5212 = vunpack.c.h.b16 %v5129
    %v5213 = vunpack.c.l.b16 %v5130
    %v5214 = vunpack.c.h.b16 %v5130
    %v5215 = vunpack.c.l.b16 %v5131
    %v5216 = vunpack.c.h.b16 %v5131
    %v5217 = vunpack.c.l.b16 %v5132
    %v5218 = vunpack.c.h.b16 %v5132
    %v5219 = vunpack.c.l.b16 %v5133
    %v5220 = vunpack.c.h.b16 %v5133
    %v5221 = vunpack.c.l.b16 %v5134
    %v5222 = vunpack.c.h.b16 %v5134
    %v5223 = vunpack.c.l.b16 %v5135
    %v5224 = vunpack.c.h.b16 %v5135
    %v5225 = vunpack.c.l.b16 %v5136
    %v5226 = vunpack.c.h.b16 %v5136
    %v5227 = vunpack.c.l.b16 %v5137
    %v5228 = vunpack.c.h.b16 %v5137
    %v5229 = vunpack.c.l.b16 %v5138
    %v5230 = vunpack.c.h.b16 %v5138
    %v5231 = vunpack.c.l.b16 %v5139
    %v5232 = vunpack.c.h.b16 %v5139
    %v5233 = vunpack.c.l.b16 %v5140
    %v5234 = vunpack.c.h.b16 %v5140
    %v5235 = vunpack.c.l.b16 %v5141
    %v5236 = vunpack.c.h.b16 %v5141
    %v5237 = vunpack.c.l.b16 %v5142
    %v5238 = vunpack.c.h.b16 %v5142
    %v5239 = vunpack.c.l.b16 %v5143
    %v5240 = vunpack.c.h.b16 %v5143
    %v5241 = vunpack.c.l.b16 %v5144
    %v5242 = vunpack.c.h.b16 %v5144
    %v5243 = vunpack.c.l.b16 %v5145
    %v5244 = vunpack.c.h.b16 %v5145
    %v5245 = vunpack.c.l.b16 %v5146
    %v5246 = vunpack.c.h.b16 %v5146
    %v5247 = vunpack.c.l.b16 %v5147
    %v5248 = vunpack.c.h.b16 %v5147
    %v5249 = vunpack.c.l.b16 %v5148
    %v5250 = vunpack.c.h.b16 %v5148
    %v5251 = vunpack.c.l.b16 %v5149
    %v5252 = vunpack.c.h.b16 %v5149
    %v5253 = vunpack.c.l.b16 %v5150
    %v5254 = vunpack.c.h.b16 %v5150
    %v5255 = vpack.c.b16 %v5211, %v5207
    %v5256 = vpack.c.b16 %v5212, %v5208
    %v5257 = vpack.c.b16 %v5213, %v5209
    %v5258 = vpack.c.b16 %v5214, %v5210
    %v5259 = vpack.c.b16 %v5219, %v5215
    %v5260 = vpack.c.b16 %v5220, %v5216
    %v5261 = vpack.c.b16 %v5221, %v5217
    %v5262 = vpack.c.b16 %v5222, %v5218
    %v5263 = vpack.c.b16 %v5227, %v5223
    %v5264 = vpack.c.b16 %v5228, %v5224
    %v5265 = vpack.c.b16 %v5229, %v5225
    %v5266 = vpack.c.b16 %v5230, %v5226
    %v5267 = vpack.c.b16 %v5235, %v5231
    %v5268 = vpack.c.b16 %v5236, %v5232
    %v5269 = vpack.c.b16 %v5237, %v5233
    %v5270 = vpack.c.b16 %v5238, %v5234
    %v5271 = vpack.c.b16 %v5243, %v5239
    %v5272 = vpack.c.b16 %v5244, %v5240
    %v5273 = vpack.c.b16 %v5245, %v5241
    %v5274 = vpack.c.b16 %v5246, %v5242
    %v5275 = vpack.c.b16 %v5251, %v5247
    %v5276 = vpack.c.b16 %v5252, %v5248
    %v5277 = vpack.c.b16 %v5253, %v5249
    %v5278 = vpack.c.b16 %v5254, %v5250
    %vm5303 = vcmask 785408
    %v5305 = vsel %vm5303, %v5178, 0
    %v5308 = vsel %vm5303, %v5179, 0
    %v5311 = vsel %vm5303, %v5180, 0
    %v5314 = vsel %vm5303, %v5181, 0
    %v5317 = vsel %vm5303, %v5182, 0
    %5319 = vmatpush.bf16.msra.mxu0 0
    %5320 = vmatpush.bf16.msra.mxu0 0
    %5321 = vmatpush.bf16.msra.mxu0 %v5275
    %5322 = vmatpush.bf16.msra.mxu0 %v5271
    %5323 = vmatpush.bf16.msra.mxu0 %v5267
    %5324 = vmatpush.bf16.msra.mxu0 %v5263
    %5325 = vmatpush.bf16.msra.mxu0 %v5259
    %5326 = vmatpush.bf16.msra.mxu0 %v5255
    %5327 = vmatmul.bf16.gmra.mxu0 %v5305
    %v5328 = vpop.f32.mrf.mxu0
    %v5329 = vadd.f32 0.0, %v5328
    %v5330 = vpop.f32.mrf.mxu0
    %v5331 = vadd.f32 0.0, %v5330
    %5332 = vmatmul.bf16.gmra.mxu0 %v5308
    %v5333 = vpop.f32.mrf.mxu0
    %v5334 = vadd.f32 0.0, %v5333
    %v5335 = vpop.f32.mrf.mxu0
    %v5336 = vadd.f32 0.0, %v5335
    %5337 = vmatmul.bf16.gmra.mxu0 %v5311
    %v5338 = vpop.f32.mrf.mxu0
    %v5339 = vadd.f32 0.0, %v5338
    %v5340 = vpop.f32.mrf.mxu0
    %v5341 = vadd.f32 0.0, %v5340
    %5342 = vmatmul.bf16.gmra.mxu0 %v5314
    %v5343 = vpop.f32.mrf.mxu0
    %v5344 = vadd.f32 0.0, %v5343
    %v5345 = vpop.f32.mrf.mxu0
    %v5346 = vadd.f32 0.0, %v5345
    %5347 = vmatmul.bf16.gmra.mxu0 %v5317
    %v5348 = vpop.f32.mrf.mxu0
    %v5349 = vadd.f32 0.0, %v5348
    %v5350 = vpop.f32.mrf.mxu0
    %5351 = vdwg.mxu0
    %5352 = vmatpush.bf16.msra.mxu0 0
    %5353 = vmatpush.bf16.msra.mxu0 0
    %5354 = vmatpush.bf16.msra.mxu0 %v5276
    %5355 = vmatpush.bf16.msra.mxu0 %v5272
    %5356 = vmatpush.bf16.msra.mxu0 %v5268
    %5357 = vmatpush.bf16.msra.mxu0 %v5264
    %5358 = vmatpush.bf16.msra.mxu0 %v5260
    %5359 = vmatpush.bf16.msra.mxu0 %v5256
    %5360 = vmatmul.bf16.gmra.mxu0 %v5305
    %v5361 = vpop.f32.mrf.mxu0
    %v5362 = vadd.f32 0.0, %v5361
    %v5363 = vpop.f32.mrf.mxu0
    %v5364 = vadd.f32 0.0, %v5363
    %5365 = vmatmul.bf16.gmra.mxu0 %v5308
    %v5366 = vpop.f32.mrf.mxu0
    %v5367 = vadd.f32 0.0, %v5366
    %v5368 = vpop.f32.mrf.mxu0
    %v5369 = vadd.f32 0.0, %v5368
    %5370 = vmatmul.bf16.gmra.mxu0 %v5311
    %v5371 = vpop.f32.mrf.mxu0
    %v5372 = vadd.f32 0.0, %v5371
    %v5373 = vpop.f32.mrf.mxu0
    %v5374 = vadd.f32 0.0, %v5373
    %5375 = vmatmul.bf16.gmra.mxu0 %v5314
    %v5376 = vpop.f32.mrf.mxu0
    %v5377 = vadd.f32 0.0, %v5376
    %v5378 = vpop.f32.mrf.mxu0
    %v5379 = vadd.f32 0.0, %v5378
    %5380 = vmatmul.bf16.gmra.mxu0 %v5317
    %v5381 = vpop.f32.mrf.mxu0
    %v5382 = vadd.f32 0.0, %v5381
    %v5383 = vpop.f32.mrf.mxu0
    %5384 = vdwg.mxu0
    %5385 = vmatpush.bf16.msra.mxu0 0
    %5386 = vmatpush.bf16.msra.mxu0 0
    %5387 = vmatpush.bf16.msra.mxu0 %v5277
    %5388 = vmatpush.bf16.msra.mxu0 %v5273
    %5389 = vmatpush.bf16.msra.mxu0 %v5269
    %5390 = vmatpush.bf16.msra.mxu0 %v5265
    %5391 = vmatpush.bf16.msra.mxu0 %v5261
    %5392 = vmatpush.bf16.msra.mxu0 %v5257
    %5393 = vmatmul.bf16.gmra.mxu0 %v5305
    %v5394 = vpop.f32.mrf.mxu0
    %v5395 = vadd.f32 0.0, %v5394
    %v5396 = vpop.f32.mrf.mxu0
    %v5397 = vadd.f32 0.0, %v5396
    %5398 = vmatmul.bf16.gmra.mxu0 %v5308
    %v5399 = vpop.f32.mrf.mxu0
    %v5400 = vadd.f32 0.0, %v5399
    %v5401 = vpop.f32.mrf.mxu0
    %v5402 = vadd.f32 0.0, %v5401
    %5403 = vmatmul.bf16.gmra.mxu0 %v5311
    %v5404 = vpop.f32.mrf.mxu0
    %v5405 = vadd.f32 0.0, %v5404
    %v5406 = vpop.f32.mrf.mxu0
    %v5407 = vadd.f32 0.0, %v5406
    %5408 = vmatmul.bf16.gmra.mxu0 %v5314
    %v5409 = vpop.f32.mrf.mxu0
    %v5410 = vadd.f32 0.0, %v5409
    %v5411 = vpop.f32.mrf.mxu0
    %v5412 = vadd.f32 0.0, %v5411
    %5413 = vmatmul.bf16.gmra.mxu0 %v5317
    %v5414 = vpop.f32.mrf.mxu0
    %v5415 = vadd.f32 0.0, %v5414
    %v5416 = vpop.f32.mrf.mxu0
    %5417 = vdwg.mxu0
    %5418 = vmatpush.bf16.msra.mxu0 0
    %5419 = vmatpush.bf16.msra.mxu0 0
    %5420 = vmatpush.bf16.msra.mxu0 %v5278
    %5421 = vmatpush.bf16.msra.mxu0 %v5274
    %5422 = vmatpush.bf16.msra.mxu0 %v5270
    %5423 = vmatpush.bf16.msra.mxu0 %v5266
    %5424 = vmatpush.bf16.msra.mxu0 %v5262
    %5425 = vmatpush.bf16.msra.mxu0 %v5258
    %5426 = vmatmul.bf16.gmra.mxu0 %v5305
    %v5427 = vpop.f32.mrf.mxu0
    %v5428 = vadd.f32 0.0, %v5427
    %v5429 = vpop.f32.mrf.mxu0
    %v5430 = vadd.f32 0.0, %v5429
    %5431 = vmatmul.bf16.gmra.mxu0 %v5308
    %v5432 = vpop.f32.mrf.mxu0
    %v5433 = vadd.f32 0.0, %v5432
    %v5434 = vpop.f32.mrf.mxu0
    %v5435 = vadd.f32 0.0, %v5434
    %5436 = vmatmul.bf16.gmra.mxu0 %v5311
    %v5437 = vpop.f32.mrf.mxu0
    %v5438 = vadd.f32 0.0, %v5437
    %v5439 = vpop.f32.mrf.mxu0
    %v5440 = vadd.f32 0.0, %v5439
    %5441 = vmatmul.bf16.gmra.mxu0 %v5314
    %v5442 = vpop.f32.mrf.mxu0
    %v5443 = vadd.f32 0.0, %v5442
    %v5444 = vpop.f32.mrf.mxu0
    %v5445 = vadd.f32 0.0, %v5444
    %5446 = vmatmul.bf16.gmra.mxu0 %v5317
    %v5447 = vpop.f32.mrf.mxu0
    %v5448 = vadd.f32 0.0, %v5447
    %v5449 = vpop.f32.mrf.mxu0
    %5450 = vdwg.mxu0
    %5451 = vrot.lane.b32.xlu0 %v5329, 8
    %v5452 = vpop.permute.xlu0 %5451
    %5453 = vrot.lane.b32.xlu0 %v5362, 8
    %v5454 = vpop.permute.xlu0 %5453
    %5455 = vrot.lane.b32.xlu0 %v5395, 8
    %v5456 = vpop.permute.xlu0 %5455
    %5457 = vrot.lane.b32.xlu0 %v5428, 8
    %v5458 = vpop.permute.xlu0 %5457
    %v5459 = vsel %vm2349, %v5456, %v5458
    %v5460 = vsel %vm2349, %v5454, %v5456
    %v5461 = vsel %vm2349, %v5452, %v5454
    %v5462 = vsel %vm2349, %v5458, %v5452
    %v5463 = vld [vmem:[#allocation3 + $0x300] sm:$0xff]
    %v5464 = vld [vmem:[#allocation3 + $0x308] sm:$0xff]
    %v5465 = vld [vmem:[#allocation3 + $0x310] sm:$0xff]
    %v5466 = vld [vmem:[#allocation3 + $0x318] sm:$0xff]
    %v5467 = vmul.f32 %v5459, %v5463
    %v5468 = vmul.f32 %v5462, %v5464
    %v5469 = vmul.f32 %v5461, %v5465
    %v5470 = vmul.f32 %v5460, %v5466
    %v5471 = vld [vmem:[#allocation3 + $0x320] sm:$0xff]
    %v5472 = vld [vmem:[#allocation3 + $0x328] sm:$0xff]
    %v5473 = vld [vmem:[#allocation3 + $0x330] sm:$0xff]
    %v5474 = vld [vmem:[#allocation3 + $0x338] sm:$0xff]
    %v5475 = vmul.f32 %v5430, %v5471
    %v5476 = vmul.f32 %v5331, %v5472
    %v5477 = vmul.f32 %v5364, %v5473
    %v5478 = vmul.f32 %v5397, %v5474
    %5479 = vrot.lane.b32.xlu0 %v5334, 120
    %v5480 = vpop.permute.xlu0 %5479
    %5481 = vrot.lane.b32.xlu0 %v5367, 120
    %v5482 = vpop.permute.xlu0 %5481
    %5483 = vrot.lane.b32.xlu0 %v5400, 120
    %v5484 = vpop.permute.xlu0 %5483
    %5485 = vrot.lane.b32.xlu0 %v5433, 120
    %v5486 = vpop.permute.xlu0 %5485
    %v5487 = vsel %vm2378, %v5484, %v5486
    %v5488 = vsel %vm2378, %v5482, %v5484
    %v5489 = vsel %vm2378, %v5480, %v5482
    %v5490 = vsel %vm2378, %v5486, %v5480
    %v5491 = vld [vmem:[#allocation3 + $0x340] sm:$0xff]
    %v5492 = vld [vmem:[#allocation3 + $0x348] sm:$0xff]
    %v5493 = vld [vmem:[#allocation3 + $0x350] sm:$0xff]
    %v5494 = vld [vmem:[#allocation3 + $0x358] sm:$0xff]
    %v5495 = vmul.f32 %v5490, %v5491
    %v5496 = vmul.f32 %v5489, %v5492
    %v5497 = vmul.f32 %v5488, %v5493
    %v5498 = vmul.f32 %v5487, %v5494
    %5499 = vrot.lane.b32.xlu0 %v5336, 8
    %v5500 = vpop.permute.xlu0 %5499
    %5501 = vrot.lane.b32.xlu0 %v5369, 8
    %v5502 = vpop.permute.xlu0 %5501
    %5503 = vrot.lane.b32.xlu0 %v5402, 8
    %v5504 = vpop.permute.xlu0 %5503
    %5505 = vrot.lane.b32.xlu0 %v5435, 8
    %v5506 = vpop.permute.xlu0 %5505
    %v5507 = vsel %vm2349, %v5504, %v5506
    %v5508 = vsel %vm2349, %v5502, %v5504
    %v5509 = vsel %vm2349, %v5500, %v5502
    %v5510 = vsel %vm2349, %v5506, %v5500
    %v5511 = vld [vmem:[#allocation3 + $0x360] sm:$0xff]
    %v5512 = vld [vmem:[#allocation3 + $0x368] sm:$0xff]
    %v5513 = vld [vmem:[#allocation3 + $0x370] sm:$0xff]
    %v5514 = vld [vmem:[#allocation3 + $0x378] sm:$0xff]
    %v5515 = vmul.f32 %v5510, %v5511
    %v5516 = vmul.f32 %v5509, %v5512
    %v5517 = vmul.f32 %v5508, %v5513
    %v5518 = vmul.f32 %v5507, %v5514
    %5519 = vrot.lane.b32.xlu0 %v5341, 120
    %v5520 = vpop.permute.xlu0 %5519
    %5521 = vrot.lane.b32.xlu0 %v5374, 120
    %v5522 = vpop.permute.xlu0 %5521
    %5523 = vrot.lane.b32.xlu0 %v5407, 120
    %v5524 = vpop.permute.xlu0 %5523
    %5525 = vrot.lane.b32.xlu0 %v5440, 120
    %v5526 = vpop.permute.xlu0 %5525
    %v5527 = vsel %vm2378, %v5524, %v5526
    %v5528 = vsel %vm2378, %v5522, %v5524
    %v5529 = vsel %vm2378, %v5520, %v5522
    %v5530 = vsel %vm2378, %v5526, %v5520
    %v5531 = vld [vmem:[#allocation3 + $0x380] sm:$0xff]
    %v5532 = vld [vmem:[#allocation3 + $0x388] sm:$0xff]
    %v5533 = vld [vmem:[#allocation3 + $0x390] sm:$0xff]
    %v5534 = vld [vmem:[#allocation3 + $0x398] sm:$0xff]
    %v5535 = vmul.f32 %v5529, %v5531
    %v5536 = vmul.f32 %v5528, %v5532
    %v5537 = vmul.f32 %v5527, %v5533
    %v5538 = vmul.f32 %v5530, %v5534
    %5539 = vrot.lane.b32.xlu0 %v5344, 8
    %v5540 = vpop.permute.xlu0 %5539
    %5541 = vrot.lane.b32.xlu0 %v5377, 8
    %v5542 = vpop.permute.xlu0 %5541
    %5543 = vrot.lane.b32.xlu0 %v5410, 8
    %v5544 = vpop.permute.xlu0 %5543
    %5545 = vrot.lane.b32.xlu0 %v5443, 8
    %v5546 = vpop.permute.xlu0 %5545
    %v5547 = vsel %vm2349, %v5544, %v5546
    %v5548 = vsel %vm2349, %v5542, %v5544
    %v5549 = vsel %vm2349, %v5540, %v5542
    %v5550 = vsel %vm2349, %v5546, %v5540
    %v5551 = vld [vmem:[#allocation3 + $0x3a0] sm:$0xff]
    %v5552 = vld [vmem:[#allocation3 + $0x3a8] sm:$0xff]
    %v5553 = vld [vmem:[#allocation3 + $0x3b0] sm:$0xff]
    %v5554 = vld [vmem:[#allocation3 + $0x3b8] sm:$0xff]
    %v5555 = vmul.f32 %v5549, %v5551
    %v5556 = vmul.f32 %v5548, %v5552
    %v5557 = vmul.f32 %v5547, %v5553
    %v5558 = vmul.f32 %v5550, %v5554
    %v5559 = vld [vmem:[#allocation3 + $0x3c0] sm:$0xff]
    %v5560 = vld [vmem:[#allocation3 + $0x3c8] sm:$0xff]
    %v5561 = vld [vmem:[#allocation3 + $0x3d0] sm:$0xff]
    %v5562 = vld [vmem:[#allocation3 + $0x3d8] sm:$0xff]
    %v5563 = vmul.f32 %v5379, %v5559
    %v5564 = vmul.f32 %v5412, %v5560
    %v5565 = vmul.f32 %v5445, %v5561
    %v5566 = vmul.f32 %v5346, %v5562
    %5567 = vrot.lane.b32.xlu0 %v5349, 120
    %v5568 = vpop.permute.xlu0 %5567
    %5569 = vrot.lane.b32.xlu0 %v5382, 120
    %v5570 = vpop.permute.xlu0 %5569
    %5571 = vrot.lane.b32.xlu0 %v5415, 120
    %v5572 = vpop.permute.xlu0 %5571
    %5573 = vrot.lane.b32.xlu0 %v5448, 120
    %v5574 = vpop.permute.xlu0 %5573
    %v5575 = vsel %vm2378, %v5572, %v5574
    %v5576 = vsel %vm2378, %v5570, %v5572
    %v5577 = vsel %vm2378, %v5568, %v5570
    %v5578 = vsel %vm2378, %v5574, %v5568
    %v5579 = vld [vmem:[#allocation3 + $0x3e0] sm:$0xff]
    %v5580 = vld [vmem:[#allocation3 + $0x3e8] sm:$0xff]
    %v5581 = vld [vmem:[#allocation3 + $0x3f0] sm:$0xff]
    %v5582 = vld [vmem:[#allocation3 + $0x3f8] sm:$0xff]
    %v5583 = vmul.f32 %v5576, %v5579
    %v5584 = vmul.f32 %v5575, %v5580
    %v5585 = vmul.f32 %v5578, %v5581
    %v5586 = vmul.f32 %v5577, %v5582
    %v5587 = vadd.f32 %v5467, %v5475
    %v5588 = vadd.f32 %v5468, %v5476
    %v5589 = vadd.f32 %v5469, %v5477
    %v5590 = vadd.f32 %v5470, %v5478
    %v5591 = vadd.f32 %v5495, %v5515
    %v5592 = vadd.f32 %v5496, %v5516
    %v5593 = vadd.f32 %v5497, %v5517
    %v5594 = vadd.f32 %v5498, %v5518
    %v5595 = vadd.f32 %v5339, %v5535
    %v5596 = vadd.f32 %v5372, %v5536
    %v5597 = vadd.f32 %v5405, %v5537
    %v5598 = vadd.f32 %v5438, %v5538
    %v5599 = vadd.f32 %v5555, %v5563
    %v5600 = vadd.f32 %v5556, %v5564
    %v5601 = vadd.f32 %v5557, %v5565
    %v5602 = vadd.f32 %v5558, %v5566
    %v5603 = vadd.f32 %v5587, %v5591
    %v5604 = vadd.f32 %v5588, %v5592
    %v5605 = vadd.f32 %v5589, %v5593
    %v5606 = vadd.f32 %v5590, %v5594
    %v5607 = vadd.f32 %v5595, %v5599
    %v5608 = vadd.f32 %v5596, %v5600
    %v5609 = vadd.f32 %v5597, %v5601
    %v5610 = vadd.f32 %v5598, %v5602
    %v5611 = vadd.f32 %v5603, %v5607
    %v5612 = vadd.f32 %v5604, %v5608
    %v5613 = vadd.f32 %v5605, %v5609
    %v5614 = vadd.f32 %v5606, %v5610
    %v5615 = vadd.f32 %v5611, %v5583
    %v5616 = vadd.f32 %v5612, %v5584
    %v5617 = vadd.f32 %v5613, %v5585
    %v5618 = vadd.f32 %v5614, %v5586
    %v5619 = vadd.f32 %v5615, %v5616
    %v5620 = vadd.f32 %v5619, %v5617
    %v5621 = vadd.f32 %v5620, %v5618
    %5622 = vadd.xlane.f32.xlu0 %v5621
    %v5623 = vpop.xlane.xlu0 %5622
    %v5624 = vmul.f32 %v5615, %v5615
    %v5625 = vmul.f32 %v5616, %v5616
    %v5626 = vmul.f32 %v5617, %v5617
    %v5627 = vmul.f32 %v5618, %v5618
    %v5628 = vadd.f32 %v5624, %v5625
    %v5629 = vadd.f32 %v5628, %v5626
    %v5630 = vadd.f32 %v5629, %v5627
    %5631 = vadd.xlane.f32.xlu0 %v5630
    %v5632 = vpop.xlane.xlu0 %5631
    %v5633 = vmul.f32 %v5623, 0.001953125
    %v5634 = vmul.f32 %v5632, 0.001953125
    %v5635 = vmul.f32 %v5633, %v5633
    %v5636 = vsub.f32 %v5634, %v5635
    %v5637 = vmax.f32 %v5636, 0.0
    %v5638 = vld [vmem:[#allocation5] sm:$0xff]
    %v5639 = vadd.f32 %v5637, 1e-05
    %v5640 = vrsqrt.pop %v5639
    %v5641 = vmul.f32 %v5640, %v5639
    %v5642 = vmul.f32 %v5641, %v5640
    %v5643 = vmul.f32 0.5, %v5642
    %v5644 = vsub.f32 1.5, %v5643
    %v5645 = vmul.f32 %v5640, %v5644
    %vm5646 = vweird.f32 %v5639
    %vm5647 = vweird.f32 %v5640
    %vm5648 = vmor %vm5646, %vm5647
    %v5649 = vsel %vm5648, %v5640, %v5645
    %v5650 = vmul.f32 %v5638, %v5649
    %v5651 = vld [vmem:[#allocation7] sm:$0xff]
    %v5652 = vmul.f32 %v5633, %v5650
    %v5653 = vsub.f32 %v5651, %v5652
    %5655 = vset.pattern.permute.xlu0 12
    %5656 = vperm.xlu0 %5655, %v5650
    %v5657 = vpop.permute.xlu0 %5656
    %v5659 = vmul.f32 %v5615, %v5657
    %v5660 = vmul.f32 %v5616, %v5657
    %v5661 = vmul.f32 %v5617, %v5657
    %v5662 = vmul.f32 %v5618, %v5657
    %5664 = vset.pattern.permute.xlu0 12
    %5665 = vperm.xlu0 %5664, %v5653
    %v5666 = vpop.permute.xlu0 %5665
    %v5668 = vadd.f32 %v5659, %v5666
    %v5669 = vadd.f32 %v5660, %v5666
    %v5670 = vadd.f32 %v5661, %v5666
    %v5671 = vadd.f32 %v5662, %v5666
    %vm5672 = vcmp.ge.f32.partialorder %v5668, 0.0
    %vm5673 = vcmp.ge.f32.partialorder %v5669, 0.0
    %vm5674 = vcmp.ge.f32.partialorder %v5670, 0.0
    %vm5675 = vcmp.ge.f32.partialorder %v5671, 0.0
    %v5676 = vmul.f32 %v5668, 0.01
    %v5677 = vmul.f32 %v5669, 0.01
    %v5678 = vmul.f32 %v5670, 0.01
    %v5679 = vmul.f32 %v5671, 0.01
    %v5680 = vsel %vm5672, %v5668, %v5676
    %v5681 = vsel %vm5673, %v5669, %v5677
    %v5682 = vsel %vm5674, %v5670, %v5678
    %v5683 = vsel %vm5675, %v5671, %v5679
    %v5684 = vpack.c.bf16 %v5681, %v5680
    %v5685 = vpack.c.bf16 %v5683, %v5682
    %5686 = vst [vmem:[#allocation2 + $0xc0] sm:$0xff] %v5684
    %5687 = vst [vmem:[#allocation2 + $0xc8] sm:$0xff] %v5685
    %v5688 = vld [vmem:[#allocation2] sm:$0xff]
    %v5689 = vld [vmem:[#allocation2 + $0x8] sm:$0xff]
    %v5690 = vld [vmem:[#allocation2 + $0x10] sm:$0xff]
    %v5691 = vld [vmem:[#allocation2 + $0x18] sm:$0xff]
    %v5692 = vld [vmem:[#allocation2 + $0x20] sm:$0xff]
    %v5693 = vld [vmem:[#allocation2 + $0x28] sm:$0xff]
    %v5694 = vld [vmem:[#allocation2 + $0x30] sm:$0xff]
    %v5695 = vld [vmem:[#allocation2 + $0x38] sm:$0xff]
    %v5696 = vld [vmem:[#allocation2 + $0x40] sm:$0xff]
    %v5697 = vld [vmem:[#allocation2 + $0x48] sm:$0xff]
    %v5698 = vld [vmem:[#allocation2 + $0x50] sm:$0xff]
    %v5699 = vld [vmem:[#allocation2 + $0x58] sm:$0xff]
    %v5700 = vld [vmem:[#allocation2 + $0x60] sm:$0xff]
    %v5701 = vld [vmem:[#allocation2 + $0x68] sm:$0xff]
    %v5702 = vld [vmem:[#allocation2 + $0x70] sm:$0xff]
    %v5703 = vld [vmem:[#allocation2 + $0x78] sm:$0xff]
    %v5704 = vld [vmem:[#allocation2 + $0x80] sm:$0xff]
    %v5705 = vld [vmem:[#allocation2 + $0x88] sm:$0xff]
    %v5706 = vld [vmem:[#allocation2 + $0x90] sm:$0xff]
    %v5707 = vld [vmem:[#allocation2 + $0x98] sm:$0xff]
    %v5708 = vld [vmem:[#allocation2 + $0xa0] sm:$0xff]
    %v5709 = vld [vmem:[#allocation2 + $0xa8] sm:$0xff]
    %v5710 = vld [vmem:[#allocation2 + $0xb0] sm:$0xff]
    %v5711 = vld [vmem:[#allocation2 + $0xb8] sm:$0xff]
    %v5712 = vld [vmem:[#allocation2 + $0xc0] sm:$0xff]
    %v5713 = vld [vmem:[#allocation2 + $0xc8] sm:$0xff]
    %v5714 = vld [vmem:[#allocation16] sm:$0xf]
    %v5741 = vunpack.c.l.b16 %v5688
    %v5742 = vunpack.c.h.b16 %v5688
    %v5743 = vunpack.c.l.b16 %v5689
    %v5744 = vunpack.c.h.b16 %v5689
    %v5745 = vunpack.c.l.b16 %v5690
    %v5746 = vunpack.c.h.b16 %v5690
    %v5747 = vunpack.c.l.b16 %v5691
    %v5748 = vunpack.c.h.b16 %v5691
    %v5749 = vunpack.c.l.b16 %v5692
    %v5750 = vunpack.c.h.b16 %v5692
    %v5751 = vunpack.c.l.b16 %v5693
    %v5752 = vunpack.c.h.b16 %v5693
    %v5753 = vunpack.c.l.b16 %v5694
    %v5754 = vunpack.c.h.b16 %v5694
    %v5755 = vunpack.c.l.b16 %v5695
    %v5756 = vunpack.c.h.b16 %v5695
    %v5757 = vunpack.c.l.b16 %v5696
    %v5758 = vunpack.c.h.b16 %v5696
    %v5759 = vunpack.c.l.b16 %v5697
    %v5760 = vunpack.c.h.b16 %v5697
    %v5761 = vunpack.c.l.b16 %v5698
    %v5762 = vunpack.c.h.b16 %v5698
    %v5763 = vunpack.c.l.b16 %v5699
    %v5764 = vunpack.c.h.b16 %v5699
    %v5765 = vunpack.c.l.b16 %v5700
    %v5766 = vunpack.c.h.b16 %v5700
    %v5767 = vunpack.c.l.b16 %v5701
    %v5768 = vunpack.c.h.b16 %v5701
    %v5769 = vunpack.c.l.b16 %v5702
    %v5770 = vunpack.c.h.b16 %v5702
    %v5771 = vunpack.c.l.b16 %v5703
    %v5772 = vunpack.c.h.b16 %v5703
    %v5773 = vunpack.c.l.b16 %v5704
    %v5774 = vunpack.c.h.b16 %v5704
    %v5775 = vunpack.c.l.b16 %v5705
    %v5776 = vunpack.c.h.b16 %v5705
    %v5777 = vunpack.c.l.b16 %v5706
    %v5778 = vunpack.c.h.b16 %v5706
    %v5779 = vunpack.c.l.b16 %v5707
    %v5780 = vunpack.c.h.b16 %v5707
    %v5781 = vunpack.c.l.b16 %v5708
    %v5782 = vunpack.c.h.b16 %v5708
    %v5783 = vunpack.c.l.b16 %v5709
    %v5784 = vunpack.c.h.b16 %v5709
    %v5785 = vunpack.c.l.b16 %v5710
    %v5786 = vunpack.c.h.b16 %v5710
    %v5787 = vunpack.c.l.b16 %v5711
    %v5788 = vunpack.c.h.b16 %v5711
    %v5789 = vunpack.c.l.b16 %v5712
    %v5790 = vunpack.c.h.b16 %v5712
    %v5791 = vunpack.c.l.b16 %v5713
    %v5792 = vunpack.c.h.b16 %v5713
    %v5793 = vpack.c.b16 %v5745, %v5741
    %v5794 = vpack.c.b16 %v5746, %v5742
    %v5795 = vpack.c.b16 %v5747, %v5743
    %v5796 = vpack.c.b16 %v5748, %v5744
    %v5797 = vpack.c.b16 %v5753, %v5749
    %v5798 = vpack.c.b16 %v5754, %v5750
    %v5799 = vpack.c.b16 %v5755, %v5751
    %v5800 = vpack.c.b16 %v5756, %v5752
    %v5801 = vpack.c.b16 %v5761, %v5757
    %v5802 = vpack.c.b16 %v5762, %v5758
    %v5803 = vpack.c.b16 %v5763, %v5759
    %v5804 = vpack.c.b16 %v5764, %v5760
    %v5805 = vpack.c.b16 %v5769, %v5765
    %v5806 = vpack.c.b16 %v5770, %v5766
    %v5807 = vpack.c.b16 %v5771, %v5767
    %v5808 = vpack.c.b16 %v5772, %v5768
    %v5809 = vpack.c.b16 %v5777, %v5773
    %v5810 = vpack.c.b16 %v5778, %v5774
    %v5811 = vpack.c.b16 %v5779, %v5775
    %v5812 = vpack.c.b16 %v5780, %v5776
    %v5813 = vpack.c.b16 %v5785, %v5781
    %v5814 = vpack.c.b16 %v5786, %v5782
    %v5815 = vpack.c.b16 %v5787, %v5783
    %v5816 = vpack.c.b16 %v5788, %v5784
    %v5817 = vpack.c.b16 %v5789, %v5789
    %v5818 = vpack.c.b16 %v5790, %v5790
    %v5819 = vpack.c.b16 %v5791, %v5791
    %v5820 = vpack.c.b16 %v5792, %v5792
    %vm5845 = vcmask 850944
    %v5847 = vsel %vm5845, %v5714, 0
    %v5850 = vsel %vm740, %v5817, 0
    %v5853 = vsel %vm740, %v5818, 0
    %v5856 = vsel %vm740, %v5819, 0
    %v5859 = vsel %vm740, %v5820, 0
    %5861 = vmatpush.bf16.msra.mxu0 0
    %5862 = vmatpush.bf16.msra.mxu0 %v5850
    %5863 = vmatpush.bf16.msra.mxu0 %v5813
    %5864 = vmatpush.bf16.msra.mxu0 %v5809
    %5865 = vmatpush.bf16.msra.mxu0 %v5805
    %5866 = vmatpush.bf16.msra.mxu0 %v5801
    %5867 = vmatpush.bf16.msra.mxu0 %v5797
    %5868 = vmatpush.bf16.msra.mxu0 %v5793
    %5869 = vmatmul.bf16.gmra.mxu0 %v5847
    %v5870 = vpop.f32.mrf.mxu0
    %v5871 = vadd.f32 0.0, %v5870
    %v5872 = vpop.f32.mrf.mxu0
    %5873 = vdwg.mxu0
    %5874 = vmatpush.bf16.msra.mxu0 0
    %5875 = vmatpush.bf16.msra.mxu0 %v5853
    %5876 = vmatpush.bf16.msra.mxu0 %v5814
    %5877 = vmatpush.bf16.msra.mxu0 %v5810
    %5878 = vmatpush.bf16.msra.mxu0 %v5806
    %5879 = vmatpush.bf16.msra.mxu0 %v5802
    %5880 = vmatpush.bf16.msra.mxu0 %v5798
    %5881 = vmatpush.bf16.msra.mxu0 %v5794
    %5882 = vmatmul.bf16.gmra.mxu0 %v5847
    %v5883 = vpop.f32.mrf.mxu0
    %v5884 = vadd.f32 0.0, %v5883
    %v5885 = vpop.f32.mrf.mxu0
    %5886 = vdwg.mxu0
    %5887 = vmatpush.bf16.msra.mxu0 0
    %5888 = vmatpush.bf16.msra.mxu0 %v5856
    %5889 = vmatpush.bf16.msra.mxu0 %v5815
    %5890 = vmatpush.bf16.msra.mxu0 %v5811
    %5891 = vmatpush.bf16.msra.mxu0 %v5807
    %5892 = vmatpush.bf16.msra.mxu0 %v5803
    %5893 = vmatpush.bf16.msra.mxu0 %v5799
    %5894 = vmatpush.bf16.msra.mxu0 %v5795
    %5895 = vmatmul.bf16.gmra.mxu0 %v5847
    %v5896 = vpop.f32.mrf.mxu0
    %v5897 = vadd.f32 0.0, %v5896
    %v5898 = vpop.f32.mrf.mxu0
    %5899 = vdwg.mxu0
    %5900 = vmatpush.bf16.msra.mxu0 0
    %5901 = vmatpush.bf16.msra.mxu0 %v5859
    %5902 = vmatpush.bf16.msra.mxu0 %v5816
    %5903 = vmatpush.bf16.msra.mxu0 %v5812
    %5904 = vmatpush.bf16.msra.mxu0 %v5808
    %5905 = vmatpush.bf16.msra.mxu0 %v5804
    %5906 = vmatpush.bf16.msra.mxu0 %v5800
    %5907 = vmatpush.bf16.msra.mxu0 %v5796
    %5908 = vmatmul.bf16.gmra.mxu0 %v5847
    %v5909 = vpop.f32.mrf.mxu0
    %v5910 = vadd.f32 0.0, %v5909
    %v5911 = vpop.f32.mrf.mxu0
    %5912 = vdwg.mxu0
    %v5913 = vadd.f32 %v5871, %v5884
    %v5914 = vadd.f32 %v5913, %v5897
    %v5915 = vadd.f32 %v5914, %v5910
    %5916 = vadd.xlane.f32.xlu0 %v5915
    %v5917 = vpop.xlane.xlu0 %5916
    %v5918 = vmul.f32 %v5871, %v5871
    %v5919 = vmul.f32 %v5884, %v5884
    %v5920 = vmul.f32 %v5897, %v5897
    %v5921 = vmul.f32 %v5910, %v5910
    %v5922 = vadd.f32 %v5918, %v5919
    %v5923 = vadd.f32 %v5922, %v5920
    %v5924 = vadd.f32 %v5923, %v5921
    %5925 = vadd.xlane.f32.xlu0 %v5924
    %v5926 = vpop.xlane.xlu0 %5925
    %v5927 = vmul.f32 %v5917, 0.001953125
    %v5928 = vmul.f32 %v5926, 0.001953125
    %v5929 = vmul.f32 %v5927, %v5927
    %v5930 = vsub.f32 %v5928, %v5929
    %v5931 = vmax.f32 %v5930, 0.0
    %v5932 = vld [vmem:[#allocation5] sm:$0xff]
    %v5933 = vadd.f32 %v5931, 1e-05
    %v5934 = vrsqrt.pop %v5933
    %v5935 = vmul.f32 %v5934, %v5933
    %v5936 = vmul.f32 %v5935, %v5934
    %v5937 = vmul.f32 0.5, %v5936
    %v5938 = vsub.f32 1.5, %v5937
    %v5939 = vmul.f32 %v5934, %v5938
    %vm5940 = vweird.f32 %v5933
    %vm5941 = vweird.f32 %v5934
    %vm5942 = vmor %vm5940, %vm5941
    %v5943 = vsel %vm5942, %v5934, %v5939
    %v5944 = vmul.f32 %v5932, %v5943
    %v5945 = vld [vmem:[#allocation7] sm:$0xff]
    %v5946 = vmul.f32 %v5927, %v5944
    %v5947 = vsub.f32 %v5945, %v5946
    %5949 = vset.pattern.permute.xlu0 13
    %5950 = vperm.xlu0 %5949, %v5944
    %v5951 = vpop.permute.xlu0 %5950
    %v5953 = vmul.f32 %v5871, %v5951
    %v5954 = vmul.f32 %v5884, %v5951
    %v5955 = vmul.f32 %v5897, %v5951
    %v5956 = vmul.f32 %v5910, %v5951
    %5958 = vset.pattern.permute.xlu0 13
    %5959 = vperm.xlu0 %5958, %v5947
    %v5960 = vpop.permute.xlu0 %5959
    %v5962 = vadd.f32 %v5953, %v5960
    %v5963 = vadd.f32 %v5954, %v5960
    %v5964 = vadd.f32 %v5955, %v5960
    %v5965 = vadd.f32 %v5956, %v5960
    %vm5966 = vcmp.ge.f32.partialorder %v5962, 0.0
    %vm5967 = vcmp.ge.f32.partialorder %v5963, 0.0
    %vm5968 = vcmp.ge.f32.partialorder %v5964, 0.0
    %vm5969 = vcmp.ge.f32.partialorder %v5965, 0.0
    %v5970 = vmul.f32 %v5962, 0.01
    %v5971 = vmul.f32 %v5963, 0.01
    %v5972 = vmul.f32 %v5964, 0.01
    %v5973 = vmul.f32 %v5965, 0.01
    %v5974 = vsel %vm5966, %v5962, %v5970
    %v5975 = vsel %vm5967, %v5963, %v5971
    %v5976 = vsel %vm5968, %v5964, %v5972
    %v5977 = vsel %vm5969, %v5965, %v5973
    %v5978 = vpack.c.bf16 %v5975, %v5974
    %v5979 = vpack.c.bf16 %v5977, %v5976
    %5980 = vst [vmem:[#allocation2 + $0xd0] sm:$0xff] %v5978
    %5981 = vst [vmem:[#allocation2 + $0xd8] sm:$0xff] %v5979
    %v5982 = vld [vmem:[#allocation2] sm:$0xff]
    %v5983 = vld [vmem:[#allocation2 + $0x8] sm:$0xff]
    %v5984 = vld [vmem:[#allocation2 + $0x10] sm:$0xff]
    %v5985 = vld [vmem:[#allocation2 + $0x18] sm:$0xff]
    %v5986 = vld [vmem:[#allocation2 + $0x20] sm:$0xff]
    %v5987 = vld [vmem:[#allocation2 + $0x28] sm:$0xff]
    %v5988 = vld [vmem:[#allocation2 + $0x30] sm:$0xff]
    %v5989 = vld [vmem:[#allocation2 + $0x38] sm:$0xff]
    %v5990 = vld [vmem:[#allocation2 + $0x40] sm:$0xff]
    %v5991 = vld [vmem:[#allocation2 + $0x48] sm:$0xff]
    %v5992 = vld [vmem:[#allocation2 + $0x50] sm:$0xff]
    %v5993 = vld [vmem:[#allocation2 + $0x58] sm:$0xff]
    %v5994 = vld [vmem:[#allocation2 + $0x60] sm:$0xff]
    %v5995 = vld [vmem:[#allocation2 + $0x68] sm:$0xff]
    %v5996 = vld [vmem:[#allocation2 + $0x70] sm:$0xff]
    %v5997 = vld [vmem:[#allocation2 + $0x78] sm:$0xff]
    %v5998 = vld [vmem:[#allocation2 + $0x80] sm:$0xff]
    %v5999 = vld [vmem:[#allocation2 + $0x88] sm:$0xff]
    %v6000 = vld [vmem:[#allocation2 + $0x90] sm:$0xff]
    %v6001 = vld [vmem:[#allocation2 + $0x98] sm:$0xff]
    %v6002 = vld [vmem:[#allocation2 + $0xa0] sm:$0xff]
    %v6003 = vld [vmem:[#allocation2 + $0xa8] sm:$0xff]
    %v6004 = vld [vmem:[#allocation2 + $0xb0] sm:$0xff]
    %v6005 = vld [vmem:[#allocation2 + $0xb8] sm:$0xff]
    %v6006 = vld [vmem:[#allocation2 + $0xc0] sm:$0xff]
    %v6007 = vld [vmem:[#allocation2 + $0xc8] sm:$0xff]
    %v6008 = vld [vmem:[#allocation2 + $0xd0] sm:$0xff]
    %v6009 = vld [vmem:[#allocation2 + $0xd8] sm:$0xff]
    %v6010 = vld [vmem:[#allocation17] sm:$0xf]
    %v6039 = vunpack.c.l.b16 %v5982
    %v6040 = vunpack.c.h.b16 %v5982
    %v6041 = vunpack.c.l.b16 %v5983
    %v6042 = vunpack.c.h.b16 %v5983
    %v6043 = vunpack.c.l.b16 %v5984
    %v6044 = vunpack.c.h.b16 %v5984
    %v6045 = vunpack.c.l.b16 %v5985
    %v6046 = vunpack.c.h.b16 %v5985
    %v6047 = vunpack.c.l.b16 %v5986
    %v6048 = vunpack.c.h.b16 %v5986
    %v6049 = vunpack.c.l.b16 %v5987
    %v6050 = vunpack.c.h.b16 %v5987
    %v6051 = vunpack.c.l.b16 %v5988
    %v6052 = vunpack.c.h.b16 %v5988
    %v6053 = vunpack.c.l.b16 %v5989
    %v6054 = vunpack.c.h.b16 %v5989
    %v6055 = vunpack.c.l.b16 %v5990
    %v6056 = vunpack.c.h.b16 %v5990
    %v6057 = vunpack.c.l.b16 %v5991
    %v6058 = vunpack.c.h.b16 %v5991
    %v6059 = vunpack.c.l.b16 %v5992
    %v6060 = vunpack.c.h.b16 %v5992
    %v6061 = vunpack.c.l.b16 %v5993
    %v6062 = vunpack.c.h.b16 %v5993
    %v6063 = vunpack.c.l.b16 %v5994
    %v6064 = vunpack.c.h.b16 %v5994
    %v6065 = vunpack.c.l.b16 %v5995
    %v6066 = vunpack.c.h.b16 %v5995
    %v6067 = vunpack.c.l.b16 %v5996
    %v6068 = vunpack.c.h.b16 %v5996
    %v6069 = vunpack.c.l.b16 %v5997
    %v6070 = vunpack.c.h.b16 %v5997
    %v6071 = vunpack.c.l.b16 %v5998
    %v6072 = vunpack.c.h.b16 %v5998
    %v6073 = vunpack.c.l.b16 %v5999
    %v6074 = vunpack.c.h.b16 %v5999
    %v6075 = vunpack.c.l.b16 %v6000
    %v6076 = vunpack.c.h.b16 %v6000
    %v6077 = vunpack.c.l.b16 %v6001
    %v6078 = vunpack.c.h.b16 %v6001
    %v6079 = vunpack.c.l.b16 %v6002
    %v6080 = vunpack.c.h.b16 %v6002
    %v6081 = vunpack.c.l.b16 %v6003
    %v6082 = vunpack.c.h.b16 %v6003
    %v6083 = vunpack.c.l.b16 %v6004
    %v6084 = vunpack.c.h.b16 %v6004
    %v6085 = vunpack.c.l.b16 %v6005
    %v6086 = vunpack.c.h.b16 %v6005
    %v6087 = vunpack.c.l.b16 %v6006
    %v6088 = vunpack.c.h.b16 %v6006
    %v6089 = vunpack.c.l.b16 %v6007
    %v6090 = vunpack.c.h.b16 %v6007
    %v6091 = vunpack.c.l.b16 %v6008
    %v6092 = vunpack.c.h.b16 %v6008
    %v6093 = vunpack.c.l.b16 %v6009
    %v6094 = vunpack.c.h.b16 %v6009
    %v6095 = vpack.c.b16 %v6043, %v6039
    %v6096 = vpack.c.b16 %v6044, %v6040
    %v6097 = vpack.c.b16 %v6045, %v6041
    %v6098 = vpack.c.b16 %v6046, %v6042
    %v6099 = vpack.c.b16 %v6051, %v6047
    %v6100 = vpack.c.b16 %v6052, %v6048
    %v6101 = vpack.c.b16 %v6053, %v6049
    %v6102 = vpack.c.b16 %v6054, %v6050
    %v6103 = vpack.c.b16 %v6059, %v6055
    %v6104 = vpack.c.b16 %v6060, %v6056
    %v6105 = vpack.c.b16 %v6061, %v6057
    %v6106 = vpack.c.b16 %v6062, %v6058
    %v6107 = vpack.c.b16 %v6067, %v6063
    %v6108 = vpack.c.b16 %v6068, %v6064
    %v6109 = vpack.c.b16 %v6069, %v6065
    %v6110 = vpack.c.b16 %v6070, %v6066
    %v6111 = vpack.c.b16 %v6075, %v6071
    %v6112 = vpack.c.b16 %v6076, %v6072
    %v6113 = vpack.c.b16 %v6077, %v6073
    %v6114 = vpack.c.b16 %v6078, %v6074
    %v6115 = vpack.c.b16 %v6083, %v6079
    %v6116 = vpack.c.b16 %v6084, %v6080
    %v6117 = vpack.c.b16 %v6085, %v6081
    %v6118 = vpack.c.b16 %v6086, %v6082
    %v6119 = vpack.c.b16 %v6091, %v6087
    %v6120 = vpack.c.b16 %v6092, %v6088
    %v6121 = vpack.c.b16 %v6093, %v6089
    %v6122 = vpack.c.b16 %v6094, %v6090
    %vm6151 = vcmask 916480
    %v6153 = vsel %vm6151, %v6010, 0
    %6155 = vmatpush.bf16.msra.mxu0 0
    %6156 = vmatpush.bf16.msra.mxu0 %v6119
    %6157 = vmatpush.bf16.msra.mxu0 %v6115
    %6158 = vmatpush.bf16.msra.mxu0 %v6111
    %6159 = vmatpush.bf16.msra.mxu0 %v6107
    %6160 = vmatpush.bf16.msra.mxu0 %v6103
    %6161 = vmatpush.bf16.msra.mxu0 %v6099
    %6162 = vmatpush.bf16.msra.mxu0 %v6095
    %6163 = vmatmul.bf16.gmra.mxu0 %v6153
    %v6164 = vpop.f32.mrf.mxu0
    %v6165 = vadd.f32 0.0, %v6164
    %v6166 = vpop.f32.mrf.mxu0
    %6167 = vdwg.mxu0
    %6168 = vmatpush.bf16.msra.mxu0 0
    %6169 = vmatpush.bf16.msra.mxu0 %v6120
    %6170 = vmatpush.bf16.msra.mxu0 %v6116
    %6171 = vmatpush.bf16.msra.mxu0 %v6112
    %6172 = vmatpush.bf16.msra.mxu0 %v6108
    %6173 = vmatpush.bf16.msra.mxu0 %v6104
    %6174 = vmatpush.bf16.msra.mxu0 %v6100
    %6175 = vmatpush.bf16.msra.mxu0 %v6096
    %6176 = vmatmul.bf16.gmra.mxu0 %v6153
    %v6177 = vpop.f32.mrf.mxu0
    %v6178 = vadd.f32 0.0, %v6177
    %v6179 = vpop.f32.mrf.mxu0
    %6180 = vdwg.mxu0
    %6181 = vmatpush.bf16.msra.mxu0 0
    %6182 = vmatpush.bf16.msra.mxu0 %v6121
    %6183 = vmatpush.bf16.msra.mxu0 %v6117
    %6184 = vmatpush.bf16.msra.mxu0 %v6113
    %6185 = vmatpush.bf16.msra.mxu0 %v6109
    %6186 = vmatpush.bf16.msra.mxu0 %v6105
    %6187 = vmatpush.bf16.msra.mxu0 %v6101
    %6188 = vmatpush.bf16.msra.mxu0 %v6097
    %6189 = vmatmul.bf16.gmra.mxu0 %v6153
    %v6190 = vpop.f32.mrf.mxu0
    %v6191 = vadd.f32 0.0, %v6190
    %v6192 = vpop.f32.mrf.mxu0
    %6193 = vdwg.mxu0
    %6194 = vmatpush.bf16.msra.mxu0 0
    %6195 = vmatpush.bf16.msra.mxu0 %v6122
    %6196 = vmatpush.bf16.msra.mxu0 %v6118
    %6197 = vmatpush.bf16.msra.mxu0 %v6114
    %6198 = vmatpush.bf16.msra.mxu0 %v6110
    %6199 = vmatpush.bf16.msra.mxu0 %v6106
    %6200 = vmatpush.bf16.msra.mxu0 %v6102
    %6201 = vmatpush.bf16.msra.mxu0 %v6098
    %6202 = vmatmul.bf16.gmra.mxu0 %v6153
    %v6203 = vpop.f32.mrf.mxu0
    %v6204 = vadd.f32 0.0, %v6203
    %v6205 = vpop.f32.mrf.mxu0
    %6206 = vdwg.mxu0
    %v6207 = vadd.f32 %v6165, %v6178
    %v6208 = vadd.f32 %v6207, %v6191
    %v6209 = vadd.f32 %v6208, %v6204
    %6210 = vadd.xlane.f32.xlu0 %v6209
    %v6211 = vpop.xlane.xlu0 %6210
    %v6212 = vmul.f32 %v6165, %v6165
    %v6213 = vmul.f32 %v6178, %v6178
    %v6214 = vmul.f32 %v6191, %v6191
    %v6215 = vmul.f32 %v6204, %v6204
    %v6216 = vadd.f32 %v6212, %v6213
    %v6217 = vadd.f32 %v6216, %v6214
    %v6218 = vadd.f32 %v6217, %v6215
    %6219 = vadd.xlane.f32.xlu0 %v6218
    %v6220 = vpop.xlane.xlu0 %6219
    %v6221 = vmul.f32 %v6211, 0.001953125
    %v6222 = vmul.f32 %v6220, 0.001953125
    %v6223 = vmul.f32 %v6221, %v6221
    %v6224 = vsub.f32 %v6222, %v6223
    %v6225 = vmax.f32 %v6224, 0.0
    %v6226 = vld [vmem:[#allocation5] sm:$0xff]
    %v6227 = vadd.f32 %v6225, 1e-05
    %v6228 = vrsqrt.pop %v6227
    %v6229 = vmul.f32 %v6228, %v6227
    %v6230 = vmul.f32 %v6229, %v6228
    %v6231 = vmul.f32 0.5, %v6230
    %v6232 = vsub.f32 1.5, %v6231
    %v6233 = vmul.f32 %v6228, %v6232
    %vm6234 = vweird.f32 %v6227
    %vm6235 = vweird.f32 %v6228
    %vm6236 = vmor %vm6234, %vm6235
    %v6237 = vsel %vm6236, %v6228, %v6233
    %v6238 = vmul.f32 %v6226, %v6237
    %v6239 = vld [vmem:[#allocation7] sm:$0xff]
    %v6240 = vmul.f32 %v6221, %v6238
    %v6241 = vsub.f32 %v6239, %v6240
    %6243 = vset.pattern.permute.xlu0 14
    %6244 = vperm.xlu0 %6243, %v6238
    %v6245 = vpop.permute.xlu0 %6244
    %v6247 = vmul.f32 %v6165, %v6245
    %v6248 = vmul.f32 %v6178, %v6245
    %v6249 = vmul.f32 %v6191, %v6245
    %v6250 = vmul.f32 %v6204, %v6245
    %6252 = vset.pattern.permute.xlu0 14
    %6253 = vperm.xlu0 %6252, %v6241
    %v6254 = vpop.permute.xlu0 %6253
    %v6256 = vadd.f32 %v6247, %v6254
    %v6257 = vadd.f32 %v6248, %v6254
    %v6258 = vadd.f32 %v6249, %v6254
    %v6259 = vadd.f32 %v6250, %v6254
    %vm6260 = vcmp.ge.f32.partialorder %v6256, 0.0
    %vm6261 = vcmp.ge.f32.partialorder %v6257, 0.0
    %vm6262 = vcmp.ge.f32.partialorder %v6258, 0.0
    %vm6263 = vcmp.ge.f32.partialorder %v6259, 0.0
    %v6264 = vmul.f32 %v6256, 0.01
    %v6265 = vmul.f32 %v6257, 0.01
    %v6266 = vmul.f32 %v6258, 0.01
    %v6267 = vmul.f32 %v6259, 0.01
    %v6268 = vsel %vm6260, %v6256, %v6264
    %v6269 = vsel %vm6261, %v6257, %v6265
    %v6270 = vsel %vm6262, %v6258, %v6266
    %v6271 = vsel %vm6263, %v6259, %v6267
    %v6272 = vpack.c.bf16 %v6269, %v6268
    %v6273 = vpack.c.bf16 %v6271, %v6270
    %6274 = vst [vmem:[#allocation2 + $0xe0] sm:$0xff] %v6272
    %6275 = vst [vmem:[#allocation2 + $0xe8] sm:$0xff] %v6273
    %v6276 = vld [vmem:[#allocation2] sm:$0xff]
    %v6277 = vld [vmem:[#allocation2 + $0x8] sm:$0xff]
    %v6278 = vld [vmem:[#allocation2 + $0x10] sm:$0xff]
    %v6279 = vld [vmem:[#allocation2 + $0x18] sm:$0xff]
    %v6280 = vld [vmem:[#allocation2 + $0x20] sm:$0xff]
    %v6281 = vld [vmem:[#allocation2 + $0x28] sm:$0xff]
    %v6282 = vld [vmem:[#allocation2 + $0x30] sm:$0xff]
    %v6283 = vld [vmem:[#allocation2 + $0x38] sm:$0xff]
    %v6284 = vld [vmem:[#allocation2 + $0x40] sm:$0xff]
    %v6285 = vld [vmem:[#allocation2 + $0x48] sm:$0xff]
    %v6286 = vld [vmem:[#allocation2 + $0x50] sm:$0xff]
    %v6287 = vld [vmem:[#allocation2 + $0x58] sm:$0xff]
    %v6288 = vld [vmem:[#allocation2 + $0x60] sm:$0xff]
    %v6289 = vld [vmem:[#allocation2 + $0x68] sm:$0xff]
    %v6290 = vld [vmem:[#allocation2 + $0x70] sm:$0xff]
    %v6291 = vld [vmem:[#allocation2 + $0x78] sm:$0xff]
    %v6292 = vld [vmem:[#allocation2 + $0x80] sm:$0xff]
    %v6293 = vld [vmem:[#allocation2 + $0x88] sm:$0xff]
    %v6294 = vld [vmem:[#allocation2 + $0x90] sm:$0xff]
    %v6295 = vld [vmem:[#allocation2 + $0x98] sm:$0xff]
    %v6296 = vld [vmem:[#allocation2 + $0xa0] sm:$0xff]
    %v6297 = vld [vmem:[#allocation2 + $0xa8] sm:$0xff]
    %v6298 = vld [vmem:[#allocation2 + $0xb0] sm:$0xff]
    %v6299 = vld [vmem:[#allocation2 + $0xb8] sm:$0xff]
    %v6300 = vld [vmem:[#allocation2 + $0xc0] sm:$0xff]
    %v6301 = vld [vmem:[#allocation2 + $0xc8] sm:$0xff]
    %v6302 = vld [vmem:[#allocation2 + $0xd0] sm:$0xff]
    %v6303 = vld [vmem:[#allocation2 + $0xd8] sm:$0xff]
    %v6304 = vld [vmem:[#allocation2 + $0xe0] sm:$0xff]
    %v6305 = vld [vmem:[#allocation2 + $0xe8] sm:$0xff]
    %v6306 = vld [vmem:[%s20] sm:$0xf]
    %v6337 = vunpack.c.l.b16 %v6276
    %v6338 = vunpack.c.h.b16 %v6276
    %v6339 = vunpack.c.l.b16 %v6277
    %v6340 = vunpack.c.h.b16 %v6277
    %v6341 = vunpack.c.l.b16 %v6278
    %v6342 = vunpack.c.h.b16 %v6278
    %v6343 = vunpack.c.l.b16 %v6279
    %v6344 = vunpack.c.h.b16 %v6279
    %v6345 = vunpack.c.l.b16 %v6280
    %v6346 = vunpack.c.h.b16 %v6280
    %v6347 = vunpack.c.l.b16 %v6281
    %v6348 = vunpack.c.h.b16 %v6281
    %v6349 = vunpack.c.l.b16 %v6282
    %v6350 = vunpack.c.h.b16 %v6282
    %v6351 = vunpack.c.l.b16 %v6283
    %v6352 = vunpack.c.h.b16 %v6283
    %v6353 = vunpack.c.l.b16 %v6284
    %v6354 = vunpack.c.h.b16 %v6284
    %v6355 = vunpack.c.l.b16 %v6285
    %v6356 = vunpack.c.h.b16 %v6285
    %v6357 = vunpack.c.l.b16 %v6286
    %v6358 = vunpack.c.h.b16 %v6286
    %v6359 = vunpack.c.l.b16 %v6287
    %v6360 = vunpack.c.h.b16 %v6287
    %v6361 = vunpack.c.l.b16 %v6288
    %v6362 = vunpack.c.h.b16 %v6288
    %v6363 = vunpack.c.l.b16 %v6289
    %v6364 = vunpack.c.h.b16 %v6289
    %v6365 = vunpack.c.l.b16 %v6290
    %v6366 = vunpack.c.h.b16 %v6290
    %v6367 = vunpack.c.l.b16 %v6291
    %v6368 = vunpack.c.h.b16 %v6291
    %v6369 = vunpack.c.l.b16 %v6292
    %v6370 = vunpack.c.h.b16 %v6292
    %v6371 = vunpack.c.l.b16 %v6293
    %v6372 = vunpack.c.h.b16 %v6293
    %v6373 = vunpack.c.l.b16 %v6294
    %v6374 = vunpack.c.h.b16 %v6294
    %v6375 = vunpack.c.l.b16 %v6295
    %v6376 = vunpack.c.h.b16 %v6295
    %v6377 = vunpack.c.l.b16 %v6296
    %v6378 = vunpack.c.h.b16 %v6296
    %v6379 = vunpack.c.l.b16 %v6297
    %v6380 = vunpack.c.h.b16 %v6297
    %v6381 = vunpack.c.l.b16 %v6298
    %v6382 = vunpack.c.h.b16 %v6298
    %v6383 = vunpack.c.l.b16 %v6299
    %v6384 = vunpack.c.h.b16 %v6299
    %v6385 = vunpack.c.l.b16 %v6300
    %v6386 = vunpack.c.h.b16 %v6300
    %v6387 = vunpack.c.l.b16 %v6301
    %v6388 = vunpack.c.h.b16 %v6301
    %v6389 = vunpack.c.l.b16 %v6302
    %v6390 = vunpack.c.h.b16 %v6302
    %v6391 = vunpack.c.l.b16 %v6303
    %v6392 = vunpack.c.h.b16 %v6303
    %v6393 = vunpack.c.l.b16 %v6304
    %v6394 = vunpack.c.h.b16 %v6304
    %v6395 = vunpack.c.l.b16 %v6305
    %v6396 = vunpack.c.h.b16 %v6305
    %v6397 = vpack.c.b16 %v6341, %v6337
    %v6398 = vpack.c.b16 %v6342, %v6338
    %v6399 = vpack.c.b16 %v6343, %v6339
    %v6400 = vpack.c.b16 %v6344, %v6340
    %v6401 = vpack.c.b16 %v6349, %v6345
    %v6402 = vpack.c.b16 %v6350, %v6346
    %v6403 = vpack.c.b16 %v6351, %v6347
    %v6404 = vpack.c.b16 %v6352, %v6348
    %v6405 = vpack.c.b16 %v6357, %v6353
    %v6406 = vpack.c.b16 %v6358, %v6354
    %v6407 = vpack.c.b16 %v6359, %v6355
    %v6408 = vpack.c.b16 %v6360, %v6356
    %v6409 = vpack.c.b16 %v6365, %v6361
    %v6410 = vpack.c.b16 %v6366, %v6362
    %v6411 = vpack.c.b16 %v6367, %v6363
    %v6412 = vpack.c.b16 %v6368, %v6364
    %v6413 = vpack.c.b16 %v6373, %v6369
    %v6414 = vpack.c.b16 %v6374, %v6370
    %v6415 = vpack.c.b16 %v6375, %v6371
    %v6416 = vpack.c.b16 %v6376, %v6372
    %v6417 = vpack.c.b16 %v6381, %v6377
    %v6418 = vpack.c.b16 %v6382, %v6378
    %v6419 = vpack.c.b16 %v6383, %v6379
    %v6420 = vpack.c.b16 %v6384, %v6380
    %v6421 = vpack.c.b16 %v6389, %v6385
    %v6422 = vpack.c.b16 %v6390, %v6386
    %v6423 = vpack.c.b16 %v6391, %v6387
    %v6424 = vpack.c.b16 %v6392, %v6388
    %v6425 = vpack.c.b16 %v6393, %v6393
    %v6426 = vpack.c.b16 %v6394, %v6394
    %v6427 = vpack.c.b16 %v6395, %v6395
    %v6428 = vpack.c.b16 %v6396, %v6396
    %vm6457 = vcmask 982016
    %v6459 = vsel %vm6457, %v6306, 0
    %v6462 = vsel %vm740, %v6425, 0
    %v6465 = vsel %vm740, %v6426, 0
    %v6468 = vsel %vm740, %v6427, 0
    %v6471 = vsel %vm740, %v6428, 0
    %6473 = vmatpush.bf16.msra.mxu0 %v6462
    %6474 = vmatpush.bf16.msra.mxu0 %v6421
    %6475 = vmatpush.bf16.msra.mxu0 %v6417
    %6476 = vmatpush.bf16.msra.mxu0 %v6413
    %6477 = vmatpush.bf16.msra.mxu0 %v6409
    %6478 = vmatpush.bf16.msra.mxu0 %v6405
    %6479 = vmatpush.bf16.msra.mxu0 %v6401
    %6480 = vmatpush.bf16.msra.mxu0 %v6397
    %6481 = vmatmul.bf16.gmra.mxu0 %v6459
    %v6482 = vpop.f32.mrf.mxu0
    %v6483 = vadd.f32 0.0, %v6482
    %v6484 = vpop.f32.mrf.mxu0
    %6485 = vdwg.mxu0
    %6486 = vmatpush.bf16.msra.mxu0 %v6465
    %6487 = vmatpush.bf16.msra.mxu0 %v6422
    %6488 = vmatpush.bf16.msra.mxu0 %v6418
    %6489 = vmatpush.bf16.msra.mxu0 %v6414
    %6490 = vmatpush.bf16.msra.mxu0 %v6410
    %6491 = vmatpush.bf16.msra.mxu0 %v6406
    %6492 = vmatpush.bf16.msra.mxu0 %v6402
    %6493 = vmatpush.bf16.msra.mxu0 %v6398
    %6494 = vmatmul.bf16.gmra.mxu0 %v6459
    %v6495 = vpop.f32.mrf.mxu0
    %v6496 = vadd.f32 0.0, %v6495
    %v6497 = vpop.f32.mrf.mxu0
    %6498 = vdwg.mxu0
    %6499 = vmatpush.bf16.msra.mxu0 %v6468
    %6500 = vmatpush.bf16.msra.mxu0 %v6423
    %6501 = vmatpush.bf16.msra.mxu0 %v6419
    %6502 = vmatpush.bf16.msra.mxu0 %v6415
    %6503 = vmatpush.bf16.msra.mxu0 %v6411
    %6504 = vmatpush.bf16.msra.mxu0 %v6407
    %6505 = vmatpush.bf16.msra.mxu0 %v6403
    %6506 = vmatpush.bf16.msra.mxu0 %v6399
    %6507 = vmatmul.bf16.gmra.mxu0 %v6459
    %v6508 = vpop.f32.mrf.mxu0
    %v6509 = vadd.f32 0.0, %v6508
    %v6510 = vpop.f32.mrf.mxu0
    %6511 = vdwg.mxu0
    %6512 = vmatpush.bf16.msra.mxu0 %v6471
    %6513 = vmatpush.bf16.msra.mxu0 %v6424
    %6514 = vmatpush.bf16.msra.mxu0 %v6420
    %6515 = vmatpush.bf16.msra.mxu0 %v6416
    %6516 = vmatpush.bf16.msra.mxu0 %v6412
    %6517 = vmatpush.bf16.msra.mxu0 %v6408
    %6518 = vmatpush.bf16.msra.mxu0 %v6404
    %6519 = vmatpush.bf16.msra.mxu0 %v6400
    %6520 = vmatmul.bf16.gmra.mxu0 %v6459
    %v6521 = vpop.f32.mrf.mxu0
    %v6522 = vadd.f32 0.0, %v6521
    %v6523 = vpop.f32.mrf.mxu0
    %6524 = vdwg.mxu0
    %v6525 = vadd.f32 %v6483, %v6496
    %v6526 = vadd.f32 %v6525, %v6509
    %v6527 = vadd.f32 %v6526, %v6522
    %6528 = vadd.xlane.f32.xlu0 %v6527
    %v6529 = vpop.xlane.xlu0 %6528
    %v6530 = vmul.f32 %v6483, %v6483
    %v6531 = vmul.f32 %v6496, %v6496
    %v6532 = vmul.f32 %v6509, %v6509
    %v6533 = vmul.f32 %v6522, %v6522
    %v6534 = vadd.f32 %v6530, %v6531
    %v6535 = vadd.f32 %v6534, %v6532
    %v6536 = vadd.f32 %v6535, %v6533
    %6537 = vadd.xlane.f32.xlu0 %v6536
    %v6538 = vpop.xlane.xlu0 %6537
    %v6539 = vmul.f32 %v6529, 0.001953125
    %v6540 = vmul.f32 %v6538, 0.001953125
    %v6541 = vmul.f32 %v6539, %v6539
    %v6542 = vsub.f32 %v6540, %v6541
    %v6543 = vmax.f32 %v6542, 0.0
    %v6544 = vld [vmem:[#allocation5] sm:$0xff]
    %v6545 = vadd.f32 %v6543, 1e-05
    %v6546 = vrsqrt.pop %v6545
    %v6547 = vmul.f32 %v6546, %v6545
    %v6548 = vmul.f32 %v6547, %v6546
    %v6549 = vmul.f32 0.5, %v6548
    %v6550 = vsub.f32 1.5, %v6549
    %v6551 = vmul.f32 %v6546, %v6550
    %vm6552 = vweird.f32 %v6545
    %vm6553 = vweird.f32 %v6546
    %vm6554 = vmor %vm6552, %vm6553
    %v6555 = vsel %vm6554, %v6546, %v6551
    %v6556 = vmul.f32 %v6544, %v6555
    %v6557 = vld [vmem:[#allocation7] sm:$0xff]
    %v6558 = vmul.f32 %v6539, %v6556
    %v6559 = vsub.f32 %v6557, %v6558
    %6561 = vset.pattern.permute.xlu0 15
    %6562 = vperm.xlu0 %6561, %v6556
    %v6563 = vpop.permute.xlu0 %6562
    %v6565 = vmul.f32 %v6483, %v6563
    %v6566 = vmul.f32 %v6496, %v6563
    %v6567 = vmul.f32 %v6509, %v6563
    %v6568 = vmul.f32 %v6522, %v6563
    %6570 = vset.pattern.permute.xlu0 15
    %6571 = vperm.xlu0 %6570, %v6559
    %v6572 = vpop.permute.xlu0 %6571
    %v6574 = vadd.f32 %v6565, %v6572
    %v6575 = vadd.f32 %v6566, %v6572
    %v6576 = vadd.f32 %v6567, %v6572
    %v6577 = vadd.f32 %v6568, %v6572
    %vm6578 = vcmp.ge.f32.partialorder %v6574, 0.0
    %vm6579 = vcmp.ge.f32.partialorder %v6575, 0.0
    %vm6580 = vcmp.ge.f32.partialorder %v6576, 0.0
    %vm6581 = vcmp.ge.f32.partialorder %v6577, 0.0
    %v6582 = vmul.f32 %v6574, 0.01
    %v6583 = vmul.f32 %v6575, 0.01
    %v6584 = vmul.f32 %v6576, 0.01
    %v6585 = vmul.f32 %v6577, 0.01
    %v6586 = vsel %vm6578, %v6574, %v6582
    %v6587 = vsel %vm6579, %v6575, %v6583
    %v6588 = vsel %vm6580, %v6576, %v6584
    %v6589 = vsel %vm6581, %v6577, %v6585
    %v6590 = vpack.c.bf16 %v6587, %v6586
    %v6591 = vpack.c.bf16 %v6589, %v6588
    %6592 = vst [vmem:[#allocation2 + $0xf0] sm:$0xff] %v6590
    %6593 = vst [vmem:[#allocation2 + $0xf8] sm:$0xff] %v6591
    %v6594 = vld [vmem:[#allocation2] sm:$0xff]
    %v6595 = vld [vmem:[#allocation2 + $0x8] sm:$0xff]
    %v6596 = vld [vmem:[#allocation2 + $0x10] sm:$0xff]
    %v6597 = vld [vmem:[#allocation2 + $0x18] sm:$0xff]
    %v6598 = vld [vmem:[#allocation2 + $0x20] sm:$0xff]
    %v6599 = vld [vmem:[#allocation2 + $0x28] sm:$0xff]
    %v6600 = vld [vmem:[#allocation2 + $0x30] sm:$0xff]
    %v6601 = vld [vmem:[#allocation2 + $0x38] sm:$0xff]
    %v6602 = vld [vmem:[#allocation2 + $0x40] sm:$0xff]
    %v6603 = vld [vmem:[#allocation2 + $0x48] sm:$0xff]
    %v6604 = vld [vmem:[#allocation2 + $0x50] sm:$0xff]
    %v6605 = vld [vmem:[#allocation2 + $0x58] sm:$0xff]
    %v6606 = vld [vmem:[#allocation2 + $0x60] sm:$0xff]
    %v6607 = vld [vmem:[#allocation2 + $0x68] sm:$0xff]
    %v6608 = vld [vmem:[#allocation2 + $0x70] sm:$0xff]
    %v6609 = vld [vmem:[#allocation2 + $0x78] sm:$0xff]
    %v6610 = vld [vmem:[#allocation2 + $0x80] sm:$0xff]
    %v6611 = vld [vmem:[#allocation2 + $0x88] sm:$0xff]
    %v6612 = vld [vmem:[#allocation2 + $0x90] sm:$0xff]
    %v6613 = vld [vmem:[#allocation2 + $0x98] sm:$0xff]
    %v6614 = vld [vmem:[#allocation2 + $0xa0] sm:$0xff]
    %v6615 = vld [vmem:[#allocation2 + $0xa8] sm:$0xff]
    %v6616 = vld [vmem:[#allocation2 + $0xb0] sm:$0xff]
    %v6617 = vld [vmem:[#allocation2 + $0xb8] sm:$0xff]
    %v6618 = vld [vmem:[#allocation2 + $0xc0] sm:$0xff]
    %v6619 = vld [vmem:[#allocation2 + $0xc8] sm:$0xff]
    %v6620 = vld [vmem:[#allocation2 + $0xd0] sm:$0xff]
    %v6621 = vld [vmem:[#allocation2 + $0xd8] sm:$0xff]
    %v6622 = vld [vmem:[#allocation2 + $0xe0] sm:$0xff]
    %v6623 = vld [vmem:[#allocation2 + $0xe8] sm:$0xff]
    %v6624 = vld [vmem:[#allocation2 + $0xf0] sm:$0xff]
    %v6625 = vld [vmem:[#allocation2 + $0xf8] sm:$0xff]
    %v6626 = vld [vmem:[%s21] sm:$0xf]
    %v6659 = vunpack.c.l.b16 %v6594
    %v6660 = vunpack.c.h.b16 %v6594
    %v6661 = vunpack.c.l.b16 %v6595
    %v6662 = vunpack.c.h.b16 %v6595
    %v6663 = vunpack.c.l.b16 %v6596
    %v6664 = vunpack.c.h.b16 %v6596
    %v6665 = vunpack.c.l.b16 %v6597
    %v6666 = vunpack.c.h.b16 %v6597
    %v6667 = vunpack.c.l.b16 %v6598
    %v6668 = vunpack.c.h.b16 %v6598
    %v6669 = vunpack.c.l.b16 %v6599
    %v6670 = vunpack.c.h.b16 %v6599
    %v6671 = vunpack.c.l.b16 %v6600
    %v6672 = vunpack.c.h.b16 %v6600
    %v6673 = vunpack.c.l.b16 %v6601
    %v6674 = vunpack.c.h.b16 %v6601
    %v6675 = vunpack.c.l.b16 %v6602
    %v6676 = vunpack.c.h.b16 %v6602
    %v6677 = vunpack.c.l.b16 %v6603
    %v6678 = vunpack.c.h.b16 %v6603
    %v6679 = vunpack.c.l.b16 %v6604
    %v6680 = vunpack.c.h.b16 %v6604
    %v6681 = vunpack.c.l.b16 %v6605
    %v6682 = vunpack.c.h.b16 %v6605
    %v6683 = vunpack.c.l.b16 %v6606
    %v6684 = vunpack.c.h.b16 %v6606
    %v6685 = vunpack.c.l.b16 %v6607
    %v6686 = vunpack.c.h.b16 %v6607
    %v6687 = vunpack.c.l.b16 %v6608
    %v6688 = vunpack.c.h.b16 %v6608
    %v6689 = vunpack.c.l.b16 %v6609
    %v6690 = vunpack.c.h.b16 %v6609
    %v6691 = vunpack.c.l.b16 %v6610
    %v6692 = vunpack.c.h.b16 %v6610
    %v6693 = vunpack.c.l.b16 %v6611
    %v6694 = vunpack.c.h.b16 %v6611
    %v6695 = vunpack.c.l.b16 %v6612
    %v6696 = vunpack.c.h.b16 %v6612
    %v6697 = vunpack.c.l.b16 %v6613
    %v6698 = vunpack.c.h.b16 %v6613
    %v6699 = vunpack.c.l.b16 %v6614
    %v6700 = vunpack.c.h.b16 %v6614
    %v6701 = vunpack.c.l.b16 %v6615
    %v6702 = vunpack.c.h.b16 %v6615
    %v6703 = vunpack.c.l.b16 %v6616
    %v6704 = vunpack.c.h.b16 %v6616
    %v6705 = vunpack.c.l.b16 %v6617
    %v6706 = vunpack.c.h.b16 %v6617
    %v6707 = vunpack.c.l.b16 %v6618
    %v6708 = vunpack.c.h.b16 %v6618
    %v6709 = vunpack.c.l.b16 %v6619
    %v6710 = vunpack.c.h.b16 %v6619
    %v6711 = vunpack.c.l.b16 %v6620
    %v6712 = vunpack.c.h.b16 %v6620
    %v6713 = vunpack.c.l.b16 %v6621
    %v6714 = vunpack.c.h.b16 %v6621
    %v6715 = vunpack.c.l.b16 %v6622
    %v6716 = vunpack.c.h.b16 %v6622
    %v6717 = vunpack.c.l.b16 %v6623
    %v6718 = vunpack.c.h.b16 %v6623
    %v6719 = vunpack.c.l.b16 %v6624
    %v6720 = vunpack.c.h.b16 %v6624
    %v6721 = vunpack.c.l.b16 %v6625
    %v6722 = vunpack.c.h.b16 %v6625
    %v6723 = vpack.c.b16 %v6663, %v6659
    %v6724 = vpack.c.b16 %v6664, %v6660
    %v6725 = vpack.c.b16 %v6665, %v6661
    %v6726 = vpack.c.b16 %v6666, %v6662
    %v6727 = vpack.c.b16 %v6671, %v6667
    %v6728 = vpack.c.b16 %v6672, %v6668
    %v6729 = vpack.c.b16 %v6673, %v6669
    %v6730 = vpack.c.b16 %v6674, %v6670
    %v6731 = vpack.c.b16 %v6679, %v6675
    %v6732 = vpack.c.b16 %v6680, %v6676
    %v6733 = vpack.c.b16 %v6681, %v6677
    %v6734 = vpack.c.b16 %v6682, %v6678
    %v6735 = vpack.c.b16 %v6687, %v6683
    %v6736 = vpack.c.b16 %v6688, %v6684
    %v6737 = vpack.c.b16 %v6689, %v6685
    %v6738 = vpack.c.b16 %v6690, %v6686
    %v6739 = vpack.c.b16 %v6695, %v6691
    %v6740 = vpack.c.b16 %v6696, %v6692
    %v6741 = vpack.c.b16 %v6697, %v6693
    %v6742 = vpack.c.b16 %v6698, %v6694
    %v6743 = vpack.c.b16 %v6703, %v6699
    %v6744 = vpack.c.b16 %v6704, %v6700
    %v6745 = vpack.c.b16 %v6705, %v6701
    %v6746 = vpack.c.b16 %v6706, %v6702
    %v6747 = vpack.c.b16 %v6711, %v6707
    %v6748 = vpack.c.b16 %v6712, %v6708
    %v6749 = vpack.c.b16 %v6713, %v6709
    %v6750 = vpack.c.b16 %v6714, %v6710
    %v6751 = vpack.c.b16 %v6719, %v6715
    %v6752 = vpack.c.b16 %v6720, %v6716
    %v6753 = vpack.c.b16 %v6721, %v6717
    %v6754 = vpack.c.b16 %v6722, %v6718
    %6787 = vmatpush.bf16.msra.mxu0 %v6751
    %6788 = vmatpush.bf16.msra.mxu0 %v6747
    %6789 = vmatpush.bf16.msra.mxu0 %v6743
    %6790 = vmatpush.bf16.msra.mxu0 %v6739
    %6791 = vmatpush.bf16.msra.mxu0 %v6735
    %6792 = vmatpush.bf16.msra.mxu0 %v6731
    %6793 = vmatpush.bf16.msra.mxu0 %v6727
    %6794 = vmatpush.bf16.msra.mxu0 %v6723
    %6795 = vmatmul.bf16.gmra.mxu0 %v6626
    %v6796 = vpop.f32.mrf.mxu0
    %v6797 = vadd.f32 0.0, %v6796
    %v6798 = vpop.f32.mrf.mxu0
    %6799 = vdwg.mxu0
    %6800 = vmatpush.bf16.msra.mxu0 %v6752
    %6801 = vmatpush.bf16.msra.mxu0 %v6748
    %6802 = vmatpush.bf16.msra.mxu0 %v6744
    %6803 = vmatpush.bf16.msra.mxu0 %v6740
    %6804 = vmatpush.bf16.msra.mxu0 %v6736
    %6805 = vmatpush.bf16.msra.mxu0 %v6732
    %6806 = vmatpush.bf16.msra.mxu0 %v6728
    %6807 = vmatpush.bf16.msra.mxu0 %v6724
    %6808 = vmatmul.bf16.gmra.mxu0 %v6626
    %v6809 = vpop.f32.mrf.mxu0
    %v6810 = vadd.f32 0.0, %v6809
    %v6811 = vpop.f32.mrf.mxu0
    %6812 = vdwg.mxu0
    %6813 = vmatpush.bf16.msra.mxu0 %v6753
    %6814 = vmatpush.bf16.msra.mxu0 %v6749
    %6815 = vmatpush.bf16.msra.mxu0 %v6745
    %6816 = vmatpush.bf16.msra.mxu0 %v6741
    %6817 = vmatpush.bf16.msra.mxu0 %v6737
    %6818 = vmatpush.bf16.msra.mxu0 %v6733
    %6819 = vmatpush.bf16.msra.mxu0 %v6729
    %6820 = vmatpush.bf16.msra.mxu0 %v6725
    %6821 = vmatmul.bf16.gmra.mxu0 %v6626
    %v6822 = vpop.f32.mrf.mxu0
    %v6823 = vadd.f32 0.0, %v6822
    %v6824 = vpop.f32.mrf.mxu0
    %6825 = vdwg.mxu0
    %6826 = vmatpush.bf16.msra.mxu0 %v6754
    %6827 = vmatpush.bf16.msra.mxu0 %v6750
    %6828 = vmatpush.bf16.msra.mxu0 %v6746
    %6829 = vmatpush.bf16.msra.mxu0 %v6742
    %6830 = vmatpush.bf16.msra.mxu0 %v6738
    %6831 = vmatpush.bf16.msra.mxu0 %v6734
    %6832 = vmatpush.bf16.msra.mxu0 %v6730
    %6833 = vmatpush.bf16.msra.mxu0 %v6726
    %6834 = vmatmul.bf16.gmra.mxu0 %v6626
    %v6835 = vpop.f32.mrf.mxu0
    %v6836 = vadd.f32 0.0, %v6835
    %v6837 = vpop.f32.mrf.mxu0
    %6838 = vdwg.mxu0
    %v6839 = vadd.f32 %v6797, %v6810
    %v6840 = vadd.f32 %v6839, %v6823
    %v6841 = vadd.f32 %v6840, %v6836
    %6842 = vadd.xlane.f32.xlu0 %v6841
    %v6843 = vpop.xlane.xlu0 %6842
    %v6844 = vmul.f32 %v6797, %v6797
    %v6845 = vmul.f32 %v6810, %v6810
    %v6846 = vmul.f32 %v6823, %v6823
    %v6847 = vmul.f32 %v6836, %v6836
    %v6848 = vadd.f32 %v6844, %v6845
    %v6849 = vadd.f32 %v6848, %v6846
    %v6850 = vadd.f32 %v6849, %v6847
    %6851 = vadd.xlane.f32.xlu0 %v6850
    %v6852 = vpop.xlane.xlu0 %6851
    %v6853 = vmul.f32 %v6843, 0.001953125
    %v6854 = vmul.f32 %v6852, 0.001953125
    %v6855 = vmul.f32 %v6853, %v6853
    %v6856 = vsub.f32 %v6854, %v6855
    %v6857 = vmax.f32 %v6856, 0.0
    %v6858 = vld [vmem:[#allocation5] sm:$0xff]
    %v6859 = vadd.f32 %v6857, 1e-05
    %v6860 = vrsqrt.pop %v6859
    %v6861 = vmul.f32 %v6860, %v6859
    %v6862 = vmul.f32 %v6861, %v6860
    %v6863 = vmul.f32 0.5, %v6862
    %v6864 = vsub.f32 1.5, %v6863
    %v6865 = vmul.f32 %v6860, %v6864
    %vm6866 = vweird.f32 %v6859
    %vm6867 = vweird.f32 %v6860
    %vm6868 = vmor %vm6866, %vm6867
    %v6869 = vsel %vm6868, %v6860, %v6865
    %v6870 = vmul.f32 %v6858, %v6869
    %v6871 = vld [vmem:[#allocation7] sm:$0xff]
    %v6872 = vmul.f32 %v6853, %v6870
    %v6873 = vsub.f32 %v6871, %v6872
    %6875 = vset.pattern.permute.xlu0 16
    %6876 = vperm.xlu0 %6875, %v6870
    %v6877 = vpop.permute.xlu0 %6876
    %v6879 = vmul.f32 %v6797, %v6877
    %v6880 = vmul.f32 %v6810, %v6877
    %v6881 = vmul.f32 %v6823, %v6877
    %v6882 = vmul.f32 %v6836, %v6877
    %6884 = vset.pattern.permute.xlu0 16
    %6885 = vperm.xlu0 %6884, %v6873
    %v6886 = vpop.permute.xlu0 %6885
    %v6888 = vadd.f32 %v6879, %v6886
    %v6889 = vadd.f32 %v6880, %v6886
    %v6890 = vadd.f32 %v6881, %v6886
    %v6891 = vadd.f32 %v6882, %v6886
    %vm6892 = vcmp.ge.f32.partialorder %v6888, 0.0
    %vm6893 = vcmp.ge.f32.partialorder %v6889, 0.0
    %vm6894 = vcmp.ge.f32.partialorder %v6890, 0.0
    %vm6895 = vcmp.ge.f32.partialorder %v6891, 0.0
    %v6896 = vmul.f32 %v6888, 0.01
    %v6897 = vmul.f32 %v6889, 0.01
    %v6898 = vmul.f32 %v6890, 0.01
    %v6899 = vmul.f32 %v6891, 0.01
    %v6900 = vsel %vm6892, %v6888, %v6896
    %v6901 = vsel %vm6893, %v6889, %v6897
    %v6902 = vsel %vm6894, %v6890, %v6898
    %v6903 = vsel %vm6895, %v6891, %v6899
    %v6904 = vpack.c.bf16 %v6901, %v6900
    %v6905 = vpack.c.bf16 %v6903, %v6902
    %6906 = vst [vmem:[#allocation2 + $0x100] sm:$0xff] %v6904
    %6907 = vst [vmem:[#allocation2 + $0x108] sm:$0xff] %v6905
    %v6908 = vld [vmem:[#allocation2] sm:$0xff]
    %v6909 = vld [vmem:[#allocation2 + $0x8] sm:$0xff]
    %v6910 = vld [vmem:[#allocation2 + $0x10] sm:$0xff]
    %v6911 = vld [vmem:[#allocation2 + $0x18] sm:$0xff]
    %v6912 = vld [vmem:[#allocation2 + $0x20] sm:$0xff]
    %v6913 = vld [vmem:[#allocation2 + $0x28] sm:$0xff]
    %v6914 = vld [vmem:[#allocation2 + $0x30] sm:$0xff]
    %v6915 = vld [vmem:[#allocation2 + $0x38] sm:$0xff]
    %v6916 = vld [vmem:[#allocation2 + $0x40] sm:$0xff]
    %v6917 = vld [vmem:[#allocation2 + $0x48] sm:$0xff]
    %v6918 = vld [vmem:[#allocation2 + $0x50] sm:$0xff]
    %v6919 = vld [vmem:[#allocation2 + $0x58] sm:$0xff]
    %v6920 = vld [vmem:[#allocation2 + $0x60] sm:$0xff]
    %v6921 = vld [vmem:[#allocation2 + $0x68] sm:$0xff]
    %v6922 = vld [vmem:[#allocation2 + $0x70] sm:$0xff]
    %v6923 = vld [vmem:[#allocation2 + $0x78] sm:$0xff]
    %v6924 = vld [vmem:[#allocation2 + $0x80] sm:$0xff]
    %v6925 = vld [vmem:[#allocation2 + $0x88] sm:$0xff]
    %v6926 = vld [vmem:[#allocation2 + $0x90] sm:$0xff]
    %v6927 = vld [vmem:[#allocation2 + $0x98] sm:$0xff]
    %v6928 = vld [vmem:[#allocation2 + $0xa0] sm:$0xff]
    %v6929 = vld [vmem:[#allocation2 + $0xa8] sm:$0xff]
    %v6930 = vld [vmem:[#allocation2 + $0xb0] sm:$0xff]
    %v6931 = vld [vmem:[#allocation2 + $0xb8] sm:$0xff]
    %v6932 = vld [vmem:[#allocation2 + $0xc0] sm:$0xff]
    %v6933 = vld [vmem:[#allocation2 + $0xc8] sm:$0xff]
    %v6934 = vld [vmem:[#allocation2 + $0xd0] sm:$0xff]
    %v6935 = vld [vmem:[#allocation2 + $0xd8] sm:$0xff]
    %v6936 = vld [vmem:[#allocation2 + $0xe0] sm:$0xff]
    %v6937 = vld [vmem:[#allocation2 + $0xe8] sm:$0xff]
    %v6938 = vld [vmem:[#allocation2 + $0xf0] sm:$0xff]
    %v6939 = vld [vmem:[#allocation2 + $0xf8] sm:$0xff]
    %v6940 = vld [vmem:[#allocation2 + $0x100] sm:$0xff]
    %v6941 = vld [vmem:[#allocation2 + $0x108] sm:$0xff]
    %v6942 = vld [vmem:[%s22] sm:$0xff]
    %v6943 = vld [vmem:[%s22 + $0x8] sm:$0xff]
    %v6944 = vld [vmem:[%s22 + $0x10] sm:$0xff]
    %v6945 = vld [vmem:[%s22 + $0x18] sm:$0xff]
    %v6946 = vld [vmem:[%s22 + $0x20] sm:$0xff]
    %v6947 = vld [vmem:[%s22 + $0x28] sm:$0xff]
    %v6948 = vld [vmem:[%s22 + $0x30] sm:$0xff]
    %v6949 = vld [vmem:[%s22 + $0x38] sm:$0xff]
    %v6950 = vld [vmem:[%s22 + $0x40] sm:$0xff]
    %v6960 = vunpack.c.l.b16 %v6942
    %v6961 = vunpack.c.h.b16 %v6942
    %v6962 = vunpack.c.l.b16 %v6943
    %v6963 = vunpack.c.h.b16 %v6943
    %v6964 = vunpack.c.l.b16 %v6944
    %v6965 = vunpack.c.h.b16 %v6944
    %v6966 = vunpack.c.l.b16 %v6945
    %v6967 = vunpack.c.h.b16 %v6945
    %v6968 = vunpack.c.l.b16 %v6946
    %v6969 = vunpack.c.h.b16 %v6946
    %v6970 = vunpack.c.l.b16 %v6947
    %v6971 = vunpack.c.h.b16 %v6947
    %v6972 = vunpack.c.l.b16 %v6948
    %v6973 = vunpack.c.h.b16 %v6948
    %v6974 = vunpack.c.l.b16 %v6949
    %v6975 = vunpack.c.h.b16 %v6949
    %v6976 = vunpack.c.l.b16 %v6950
    %v6977 = vunpack.c.h.b16 %v6950
    %v6978 = vpack.c.b16 %v6962, %v6960
    %v6979 = vpack.c.b16 %v6963, %v6961
    %v6980 = vpack.c.b16 %v6966, %v6964
    %v6981 = vpack.c.b16 %v6967, %v6965
    %v6982 = vpack.c.b16 %v6970, %v6968
    %v6983 = vpack.c.b16 %v6971, %v6969
    %v6984 = vpack.c.b16 %v6974, %v6972
    %v6985 = vpack.c.b16 %v6975, %v6973
    %v6986 = vpack.c.b16 %v6976, %v6976
    %v6987 = vpack.c.b16 %v6977, %v6977
    %v7027 = vunpack.c.l.b16 %v6908
    %v7028 = vunpack.c.h.b16 %v6908
    %v7029 = vunpack.c.l.b16 %v6909
    %v7030 = vunpack.c.h.b16 %v6909
    %v7031 = vunpack.c.l.b16 %v6910
    %v7032 = vunpack.c.h.b16 %v6910
    %v7033 = vunpack.c.l.b16 %v6911
    %v7034 = vunpack.c.h.b16 %v6911
    %v7035 = vunpack.c.l.b16 %v6912
    %v7036 = vunpack.c.h.b16 %v6912
    %v7037 = vunpack.c.l.b16 %v6913
    %v7038 = vunpack.c.h.b16 %v6913
    %v7039 = vunpack.c.l.b16 %v6914
    %v7040 = vunpack.c.h.b16 %v6914
    %v7041 = vunpack.c.l.b16 %v6915
    %v7042 = vunpack.c.h.b16 %v6915
    %v7043 = vunpack.c.l.b16 %v6916
    %v7044 = vunpack.c.h.b16 %v6916
    %v7045 = vunpack.c.l.b16 %v6917
    %v7046 = vunpack.c.h.b16 %v6917
    %v7047 = vunpack.c.l.b16 %v6918
    %v7048 = vunpack.c.h.b16 %v6918
    %v7049 = vunpack.c.l.b16 %v6919
    %v7050 = vunpack.c.h.b16 %v6919
    %v7051 = vunpack.c.l.b16 %v6920
    %v7052 = vunpack.c.h.b16 %v6920
    %v7053 = vunpack.c.l.b16 %v6921
    %v7054 = vunpack.c.h.b16 %v6921
    %v7055 = vunpack.c.l.b16 %v6922
    %v7056 = vunpack.c.h.b16 %v6922
    %v7057 = vunpack.c.l.b16 %v6923
    %v7058 = vunpack.c.h.b16 %v6923
    %v7059 = vunpack.c.l.b16 %v6924
    %v7060 = vunpack.c.h.b16 %v6924
    %v7061 = vunpack.c.l.b16 %v6925
    %v7062 = vunpack.c.h.b16 %v6925
    %v7063 = vunpack.c.l.b16 %v6926
    %v7064 = vunpack.c.h.b16 %v6926
    %v7065 = vunpack.c.l.b16 %v6927
    %v7066 = vunpack.c.h.b16 %v6927
    %v7067 = vunpack.c.l.b16 %v6928
    %v7068 = vunpack.c.h.b16 %v6928
    %v7069 = vunpack.c.l.b16 %v6929
    %v7070 = vunpack.c.h.b16 %v6929
    %v7071 = vunpack.c.l.b16 %v6930
    %v7072 = vunpack.c.h.b16 %v6930
    %v7073 = vunpack.c.l.b16 %v6931
    %v7074 = vunpack.c.h.b16 %v6931
    %v7075 = vunpack.c.l.b16 %v6932
    %v7076 = vunpack.c.h.b16 %v6932
    %v7077 = vunpack.c.l.b16 %v6933
    %v7078 = vunpack.c.h.b16 %v6933
    %v7079 = vunpack.c.l.b16 %v6934
    %v7080 = vunpack.c.h.b16 %v6934
    %v7081 = vunpack.c.l.b16 %v6935
    %v7082 = vunpack.c.h.b16 %v6935
    %v7083 = vunpack.c.l.b16 %v6936
    %v7084 = vunpack.c.h.b16 %v6936
    %v7085 = vunpack.c.l.b16 %v6937
    %v7086 = vunpack.c.h.b16 %v6937
    %v7087 = vunpack.c.l.b16 %v6938
    %v7088 = vunpack.c.h.b16 %v6938
    %v7089 = vunpack.c.l.b16 %v6939
    %v7090 = vunpack.c.h.b16 %v6939
    %v7091 = vunpack.c.l.b16 %v6940
    %v7092 = vunpack.c.h.b16 %v6940
    %v7093 = vunpack.c.l.b16 %v6941
    %v7094 = vunpack.c.h.b16 %v6941
    %v7095 = vpack.c.b16 %v7031, %v7027
    %v7096 = vpack.c.b16 %v7032, %v7028
    %v7097 = vpack.c.b16 %v7033, %v7029
    %v7098 = vpack.c.b16 %v7034, %v7030
    %v7099 = vpack.c.b16 %v7039, %v7035
    %v7100 = vpack.c.b16 %v7040, %v7036
    %v7101 = vpack.c.b16 %v7041, %v7037
    %v7102 = vpack.c.b16 %v7042, %v7038
    %v7103 = vpack.c.b16 %v7047, %v7043
    %v7104 = vpack.c.b16 %v7048, %v7044
    %v7105 = vpack.c.b16 %v7049, %v7045
    %v7106 = vpack.c.b16 %v7050, %v7046
    %v7107 = vpack.c.b16 %v7055, %v7051
    %v7108 = vpack.c.b16 %v7056, %v7052
    %v7109 = vpack.c.b16 %v7057, %v7053
    %v7110 = vpack.c.b16 %v7058, %v7054
    %v7111 = vpack.c.b16 %v7063, %v7059
    %v7112 = vpack.c.b16 %v7064, %v7060
    %v7113 = vpack.c.b16 %v7065, %v7061
    %v7114 = vpack.c.b16 %v7066, %v7062
    %v7115 = vpack.c.b16 %v7071, %v7067
    %v7116 = vpack.c.b16 %v7072, %v7068
    %v7117 = vpack.c.b16 %v7073, %v7069
    %v7118 = vpack.c.b16 %v7074, %v7070
    %v7119 = vpack.c.b16 %v7079, %v7075
    %v7120 = vpack.c.b16 %v7080, %v7076
    %v7121 = vpack.c.b16 %v7081, %v7077
    %v7122 = vpack.c.b16 %v7082, %v7078
    %v7123 = vpack.c.b16 %v7087, %v7083
    %v7124 = vpack.c.b16 %v7088, %v7084
    %v7125 = vpack.c.b16 %v7089, %v7085
    %v7126 = vpack.c.b16 %v7090, %v7086
    %v7127 = vpack.c.b16 %v7091, %v7091
    %v7128 = vpack.c.b16 %v7092, %v7092
    %v7129 = vpack.c.b16 %v7093, %v7093
    %v7130 = vpack.c.b16 %v7094, %v7094
    %v7164 = vsel %vm724, %v6979, 0
    %v7167 = vsel %vm724, %v6981, 0
    %v7170 = vsel %vm724, %v6983, 0
    %v7173 = vsel %vm724, %v6985, 0
    %v7176 = vsel %vm724, %v6987, 0
    %v7179 = vsel %vm740, %v7127, 0
    %v7182 = vsel %vm740, %v7128, 0
    %v7185 = vsel %vm740, %v7129, 0
    %v7188 = vsel %vm740, %v7130, 0
    %7190 = vmatpush.bf16.msra.mxu0 %v7123
    %7191 = vmatpush.bf16.msra.mxu0 %v7119
    %7192 = vmatpush.bf16.msra.mxu0 %v7115
    %7193 = vmatpush.bf16.msra.mxu0 %v7111
    %7194 = vmatpush.bf16.msra.mxu0 %v7107
    %7195 = vmatpush.bf16.msra.mxu0 %v7103
    %7196 = vmatpush.bf16.msra.mxu0 %v7099
    %7197 = vmatpush.bf16.msra.mxu0 %v7095
    %7198 = vmatmul.bf16.gmra.mxu0 %v6978
    %v7199 = vpop.f32.mrf.mxu0
    %v7200 = vadd.f32 0.0, %v7199
    %v7201 = vpop.f32.mrf.mxu0
    %v7202 = vadd.f32 0.0, %v7201
    %7203 = vmatmul.bf16.gmra.mxu0 %v6980
    %v7204 = vpop.f32.mrf.mxu0
    %v7205 = vadd.f32 0.0, %v7204
    %v7206 = vpop.f32.mrf.mxu0
    %v7207 = vadd.f32 0.0, %v7206
    %7208 = vmatmul.bf16.gmra.mxu0 %v6982
    %v7209 = vpop.f32.mrf.mxu0
    %v7210 = vadd.f32 0.0, %v7209
    %v7211 = vpop.f32.mrf.mxu0
    %v7212 = vadd.f32 0.0, %v7211
    %7213 = vmatmul.bf16.gmra.mxu0 %v6984
    %v7214 = vpop.f32.mrf.mxu0
    %v7215 = vadd.f32 0.0, %v7214
    %v7216 = vpop.f32.mrf.mxu0
    %v7217 = vadd.f32 0.0, %v7216
    %7218 = vmatmul.bf16.gmra.mxu0 %v6986
    %v7219 = vpop.f32.mrf.mxu0
    %v7220 = vadd.f32 0.0, %v7219
    %v7221 = vpop.f32.mrf.mxu0
    %7222 = vdwg.mxu0
    %7223 = vmatpush.bf16.msra.mxu0 0
    %7224 = vmatpush.bf16.msra.mxu0 0
    %7225 = vmatpush.bf16.msra.mxu0 0
    %7226 = vmatpush.bf16.msra.mxu0 0
    %7227 = vmatpush.bf16.msra.mxu0 0
    %7228 = vmatpush.bf16.msra.mxu0 0
    %7229 = vmatpush.bf16.msra.mxu0 0
    %7230 = vmatpush.bf16.msra.mxu0 %v7179
    %7231 = vmatmul.bf16.gmra.mxu0 %v7164
    %v7232 = vpop.f32.mrf.mxu0
    %v7233 = vadd.f32 %v7200, %v7232
    %v7234 = vpop.f32.mrf.mxu0
    %v7235 = vadd.f32 %v7202, %v7234
    %7236 = vmatmul.bf16.gmra.mxu0 %v7167
    %v7237 = vpop.f32.mrf.mxu0
    %v7238 = vadd.f32 %v7205, %v7237
    %v7239 = vpop.f32.mrf.mxu0
    %v7240 = vadd.f32 %v7207, %v7239
    %7241 = vmatmul.bf16.gmra.mxu0 %v7170
    %v7242 = vpop.f32.mrf.mxu0
    %v7243 = vadd.f32 %v7210, %v7242
    %v7244 = vpop.f32.mrf.mxu0
    %v7245 = vadd.f32 %v7212, %v7244
    %7246 = vmatmul.bf16.gmra.mxu0 %v7173
    %v7247 = vpop.f32.mrf.mxu0
    %v7248 = vadd.f32 %v7215, %v7247
    %v7249 = vpop.f32.mrf.mxu0
    %v7250 = vadd.f32 %v7217, %v7249
    %7251 = vmatmul.bf16.gmra.mxu0 %v7176
    %v7252 = vpop.f32.mrf.mxu0
    %v7253 = vadd.f32 %v7220, %v7252
    %v7254 = vpop.f32.mrf.mxu0
    %7255 = vdwg.mxu0
    %7256 = vmatpush.bf16.msra.mxu0 %v7124
    %7257 = vmatpush.bf16.msra.mxu0 %v7120
    %7258 = vmatpush.bf16.msra.mxu0 %v7116
    %7259 = vmatpush.bf16.msra.mxu0 %v7112
    %7260 = vmatpush.bf16.msra.mxu0 %v7108
    %7261 = vmatpush.bf16.msra.mxu0 %v7104
    %7262 = vmatpush.bf16.msra.mxu0 %v7100
    %7263 = vmatpush.bf16.msra.mxu0 %v7096
    %7264 = vmatmul.bf16.gmra.mxu0 %v6978
    %v7265 = vpop.f32.mrf.mxu0
    %v7266 = vadd.f32 0.0, %v7265
    %v7267 = vpop.f32.mrf.mxu0
    %v7268 = vadd.f32 0.0, %v7267
    %7269 = vmatmul.bf16.gmra.mxu0 %v6980
    %v7270 = vpop.f32.mrf.mxu0
    %v7271 = vadd.f32 0.0, %v7270
    %v7272 = vpop.f32.mrf.mxu0
    %v7273 = vadd.f32 0.0, %v7272
    %7274 = vmatmul.bf16.gmra.mxu0 %v6982
    %v7275 = vpop.f32.mrf.mxu0
    %v7276 = vadd.f32 0.0, %v7275
    %v7277 = vpop.f32.mrf.mxu0
    %v7278 = vadd.f32 0.0, %v7277
    %7279 = vmatmul.bf16.gmra.mxu0 %v6984
    %v7280 = vpop.f32.mrf.mxu0
    %v7281 = vadd.f32 0.0, %v7280
    %v7282 = vpop.f32.mrf.mxu0
    %v7283 = vadd.f32 0.0, %v7282
    %7284 = vmatmul.bf16.gmra.mxu0 %v6986
    %v7285 = vpop.f32.mrf.mxu0
    %v7286 = vadd.f32 0.0, %v7285
    %v7287 = vpop.f32.mrf.mxu0
    %7288 = vdwg.mxu0
    %7289 = vmatpush.bf16.msra.mxu0 0
    %7290 = vmatpush.bf16.msra.mxu0 0
    %7291 = vmatpush.bf16.msra.mxu0 0
    %7292 = vmatpush.bf16.msra.mxu0 0
    %7293 = vmatpush.bf16.msra.mxu0 0
    %7294 = vmatpush.bf16.msra.mxu0 0
    %7295 = vmatpush.bf16.msra.mxu0 0
    %7296 = vmatpush.bf16.msra.mxu0 %v7182
    %7297 = vmatmul.bf16.gmra.mxu0 %v7164
    %v7298 = vpop.f32.mrf.mxu0
    %v7299 = vadd.f32 %v7266, %v7298
    %v7300 = vpop.f32.mrf.mxu0
    %v7301 = vadd.f32 %v7268, %v7300
    %7302 = vmatmul.bf16.gmra.mxu0 %v7167
    %v7303 = vpop.f32.mrf.mxu0
    %v7304 = vadd.f32 %v7271, %v7303
    %v7305 = vpop.f32.mrf.mxu0
    %v7306 = vadd.f32 %v7273, %v7305
    %7307 = vmatmul.bf16.gmra.mxu0 %v7170
    %v7308 = vpop.f32.mrf.mxu0
    %v7309 = vadd.f32 %v7276, %v7308
    %v7310 = vpop.f32.mrf.mxu0
    %v7311 = vadd.f32 %v7278, %v7310
    %7312 = vmatmul.bf16.gmra.mxu0 %v7173
    %v7313 = vpop.f32.mrf.mxu0
    %v7314 = vadd.f32 %v7281, %v7313
    %v7315 = vpop.f32.mrf.mxu0
    %v7316 = vadd.f32 %v7283, %v7315
    %7317 = vmatmul.bf16.gmra.mxu0 %v7176
    %v7318 = vpop.f32.mrf.mxu0
    %v7319 = vadd.f32 %v7286, %v7318
    %v7320 = vpop.f32.mrf.mxu0
    %7321 = vdwg.mxu0
    %7322 = vmatpush.bf16.msra.mxu0 %v7125
    %7323 = vmatpush.bf16.msra.mxu0 %v7121
    %7324 = vmatpush.bf16.msra.mxu0 %v7117
    %7325 = vmatpush.bf16.msra.mxu0 %v7113
    %7326 = vmatpush.bf16.msra.mxu0 %v7109
    %7327 = vmatpush.bf16.msra.mxu0 %v7105
    %7328 = vmatpush.bf16.msra.mxu0 %v7101
    %7329 = vmatpush.bf16.msra.mxu0 %v7097
    %7330 = vmatmul.bf16.gmra.mxu0 %v6978
    %v7331 = vpop.f32.mrf.mxu0
    %v7332 = vadd.f32 0.0, %v7331
    %v7333 = vpop.f32.mrf.mxu0
    %v7334 = vadd.f32 0.0, %v7333
    %7335 = vmatmul.bf16.gmra.mxu0 %v6980
    %v7336 = vpop.f32.mrf.mxu0
    %v7337 = vadd.f32 0.0, %v7336
    %v7338 = vpop.f32.mrf.mxu0
    %v7339 = vadd.f32 0.0, %v7338
    %7340 = vmatmul.bf16.gmra.mxu0 %v6982
    %v7341 = vpop.f32.mrf.mxu0
    %v7342 = vadd.f32 0.0, %v7341
    %v7343 = vpop.f32.mrf.mxu0
    %v7344 = vadd.f32 0.0, %v7343
    %7345 = vmatmul.bf16.gmra.mxu0 %v6984
    %v7346 = vpop.f32.mrf.mxu0
    %v7347 = vadd.f32 0.0, %v7346
    %v7348 = vpop.f32.mrf.mxu0
    %v7349 = vadd.f32 0.0, %v7348
    %7350 = vmatmul.bf16.gmra.mxu0 %v6986
    %v7351 = vpop.f32.mrf.mxu0
    %v7352 = vadd.f32 0.0, %v7351
    %v7353 = vpop.f32.mrf.mxu0
    %7354 = vdwg.mxu0
    %7355 = vmatpush.bf16.msra.mxu0 0
    %7356 = vmatpush.bf16.msra.mxu0 0
    %7357 = vmatpush.bf16.msra.mxu0 0
    %7358 = vmatpush.bf16.msra.mxu0 0
    %7359 = vmatpush.bf16.msra.mxu0 0
    %7360 = vmatpush.bf16.msra.mxu0 0
    %7361 = vmatpush.bf16.msra.mxu0 0
    %7362 = vmatpush.bf16.msra.mxu0 %v7185
    %7363 = vmatmul.bf16.gmra.mxu0 %v7164
    %v7364 = vpop.f32.mrf.mxu0
    %v7365 = vadd.f32 %v7332, %v7364
    %v7366 = vpop.f32.mrf.mxu0
    %v7367 = vadd.f32 %v7334, %v7366
    %7368 = vmatmul.bf16.gmra.mxu0 %v7167
    %v7369 = vpop.f32.mrf.mxu0
    %v7370 = vadd.f32 %v7337, %v7369
    %v7371 = vpop.f32.mrf.mxu0
    %v7372 = vadd.f32 %v7339, %v7371
    %7373 = vmatmul.bf16.gmra.mxu0 %v7170
    %v7374 = vpop.f32.mrf.mxu0
    %v7375 = vadd.f32 %v7342, %v7374
    %v7376 = vpop.f32.mrf.mxu0
    %v7377 = vadd.f32 %v7344, %v7376
    %7378 = vmatmul.bf16.gmra.mxu0 %v7173
    %v7379 = vpop.f32.mrf.mxu0
    %v7380 = vadd.f32 %v7347, %v7379
    %v7381 = vpop.f32.mrf.mxu0
    %v7382 = vadd.f32 %v7349, %v7381
    %7383 = vmatmul.bf16.gmra.mxu0 %v7176
    %v7384 = vpop.f32.mrf.mxu0
    %v7385 = vadd.f32 %v7352, %v7384
    %v7386 = vpop.f32.mrf.mxu0
    %7387 = vdwg.mxu0
    %7388 = vmatpush.bf16.msra.mxu0 %v7126
    %7389 = vmatpush.bf16.msra.mxu0 %v7122
    %7390 = vmatpush.bf16.msra.mxu0 %v7118
    %7391 = vmatpush.bf16.msra.mxu0 %v7114
    %7392 = vmatpush.bf16.msra.mxu0 %v7110
    %7393 = vmatpush.bf16.msra.mxu0 %v7106
    %7394 = vmatpush.bf16.msra.mxu0 %v7102
    %7395 = vmatpush.bf16.msra.mxu0 %v7098
    %7396 = vmatmul.bf16.gmra.mxu0 %v6978
    %v7397 = vpop.f32.mrf.mxu0
    %v7398 = vadd.f32 0.0, %v7397
    %v7399 = vpop.f32.mrf.mxu0
    %v7400 = vadd.f32 0.0, %v7399
    %7401 = vmatmul.bf16.gmra.mxu0 %v6980
    %v7402 = vpop.f32.mrf.mxu0
    %v7403 = vadd.f32 0.0, %v7402
    %v7404 = vpop.f32.mrf.mxu0
    %v7405 = vadd.f32 0.0, %v7404
    %7406 = vmatmul.bf16.gmra.mxu0 %v6982
    %v7407 = vpop.f32.mrf.mxu0
    %v7408 = vadd.f32 0.0, %v7407
    %v7409 = vpop.f32.mrf.mxu0
    %v7410 = vadd.f32 0.0, %v7409
    %7411 = vmatmul.bf16.gmra.mxu0 %v6984
    %v7412 = vpop.f32.mrf.mxu0
    %v7413 = vadd.f32 0.0, %v7412
    %v7414 = vpop.f32.mrf.mxu0
    %v7415 = vadd.f32 0.0, %v7414
    %7416 = vmatmul.bf16.gmra.mxu0 %v6986
    %v7417 = vpop.f32.mrf.mxu0
    %v7418 = vadd.f32 0.0, %v7417
    %v7419 = vpop.f32.mrf.mxu0
    %7420 = vdwg.mxu0
    %7421 = vmatpush.bf16.msra.mxu0 0
    %7422 = vmatpush.bf16.msra.mxu0 0
    %7423 = vmatpush.bf16.msra.mxu0 0
    %7424 = vmatpush.bf16.msra.mxu0 0
    %7425 = vmatpush.bf16.msra.mxu0 0
    %7426 = vmatpush.bf16.msra.mxu0 0
    %7427 = vmatpush.bf16.msra.mxu0 0
    %7428 = vmatpush.bf16.msra.mxu0 %v7188
    %7429 = vmatmul.bf16.gmra.mxu0 %v7164
    %v7430 = vpop.f32.mrf.mxu0
    %v7431 = vadd.f32 %v7398, %v7430
    %v7432 = vpop.f32.mrf.mxu0
    %v7433 = vadd.f32 %v7400, %v7432
    %7434 = vmatmul.bf16.gmra.mxu0 %v7167
    %v7435 = vpop.f32.mrf.mxu0
    %v7436 = vadd.f32 %v7403, %v7435
    %v7437 = vpop.f32.mrf.mxu0
    %v7438 = vadd.f32 %v7405, %v7437
    %7439 = vmatmul.bf16.gmra.mxu0 %v7170
    %v7440 = vpop.f32.mrf.mxu0
    %v7441 = vadd.f32 %v7408, %v7440
    %v7442 = vpop.f32.mrf.mxu0
    %v7443 = vadd.f32 %v7410, %v7442
    %7444 = vmatmul.bf16.gmra.mxu0 %v7173
    %v7445 = vpop.f32.mrf.mxu0
    %v7446 = vadd.f32 %v7413, %v7445
    %v7447 = vpop.f32.mrf.mxu0
    %v7448 = vadd.f32 %v7415, %v7447
    %7449 = vmatmul.bf16.gmra.mxu0 %v7176
    %v7450 = vpop.f32.mrf.mxu0
    %v7451 = vadd.f32 %v7418, %v7450
    %v7452 = vpop.f32.mrf.mxu0
    %7453 = vdwg.mxu0
    %7454 = vrot.lane.b32.xlu0 %v7233, 17
    %v7455 = vpop.permute.xlu0 %7454
    %7456 = vrot.lane.b32.xlu0 %v7299, 17
    %v7457 = vpop.permute.xlu0 %7456
    %7458 = vrot.lane.b32.xlu0 %v7365, 17
    %v7459 = vpop.permute.xlu0 %7458
    %7460 = vrot.lane.b32.xlu0 %v7431, 17
    %v7461 = vpop.permute.xlu0 %7460
    %v7462 = vsel %vm419, %v7459, %v7461
    %v7463 = vsel %vm419, %v7457, %v7459
    %v7464 = vsel %vm419, %v7455, %v7457
    %v7465 = vsel %vm419, %v7461, %v7455
    %v7466 = vld [vmem:[#allocation3] sm:$0xff]
    %v7467 = vld [vmem:[#allocation3 + $0x8] sm:$0xff]
    %v7468 = vld [vmem:[#allocation3 + $0x10] sm:$0xff]
    %v7469 = vld [vmem:[#allocation3 + $0x18] sm:$0xff]
    %v7470 = vmul.f32 %v7465, %v7466
    %v7471 = vmul.f32 %v7464, %v7467
    %v7472 = vmul.f32 %v7463, %v7468
    %v7473 = vmul.f32 %v7462, %v7469
    %7474 = vrot.lane.b32.xlu0 %v7235, 16
    %v7475 = vpop.permute.xlu0 %7474
    %7476 = vrot.lane.b32.xlu0 %v7301, 16
    %v7477 = vpop.permute.xlu0 %7476
    %7478 = vrot.lane.b32.xlu0 %v7367, 16
    %v7479 = vpop.permute.xlu0 %7478
    %7480 = vrot.lane.b32.xlu0 %v7433, 16
    %v7481 = vpop.permute.xlu0 %7480
    %v7482 = vsel %vm440, %v7479, %v7481
    %v7483 = vsel %vm440, %v7477, %v7479
    %v7484 = vsel %vm440, %v7475, %v7477
    %v7485 = vsel %vm440, %v7481, %v7475
    %v7486 = vld [vmem:[#allocation3 + $0x20] sm:$0xff]
    %v7487 = vld [vmem:[#allocation3 + $0x28] sm:$0xff]
    %v7488 = vld [vmem:[#allocation3 + $0x30] sm:$0xff]
    %v7489 = vld [vmem:[#allocation3 + $0x38] sm:$0xff]
    %v7490 = vmul.f32 %v7485, %v7486
    %v7491 = vmul.f32 %v7484, %v7487
    %v7492 = vmul.f32 %v7483, %v7488
    %v7493 = vmul.f32 %v7482, %v7489
    %7494 = vrot.lane.b32.xlu0 %v7238, 15
    %v7495 = vpop.permute.xlu0 %7494
    %7496 = vrot.lane.b32.xlu0 %v7304, 15
    %v7497 = vpop.permute.xlu0 %7496
    %7498 = vrot.lane.b32.xlu0 %v7370, 15
    %v7499 = vpop.permute.xlu0 %7498
    %7500 = vrot.lane.b32.xlu0 %v7436, 15
    %v7501 = vpop.permute.xlu0 %7500
    %v7502 = vsel %vm461, %v7499, %v7501
    %v7503 = vsel %vm461, %v7497, %v7499
    %v7504 = vsel %vm461, %v7495, %v7497
    %v7505 = vsel %vm461, %v7501, %v7495
    %v7506 = vld [vmem:[#allocation3 + $0x40] sm:$0xff]
    %v7507 = vld [vmem:[#allocation3 + $0x48] sm:$0xff]
    %v7508 = vld [vmem:[#allocation3 + $0x50] sm:$0xff]
    %v7509 = vld [vmem:[#allocation3 + $0x58] sm:$0xff]
    %v7510 = vmul.f32 %v7505, %v7506
    %v7511 = vmul.f32 %v7504, %v7507
    %v7512 = vmul.f32 %v7503, %v7508
    %v7513 = vmul.f32 %v7502, %v7509
    %7514 = vrot.lane.b32.xlu0 %v7240, 1
    %v7515 = vpop.permute.xlu0 %7514
    %7516 = vrot.lane.b32.xlu0 %v7306, 1
    %v7517 = vpop.permute.xlu0 %7516
    %7518 = vrot.lane.b32.xlu0 %v7372, 1
    %v7519 = vpop.permute.xlu0 %7518
    %7520 = vrot.lane.b32.xlu0 %v7438, 1
    %v7521 = vpop.permute.xlu0 %7520
    %v7522 = vsel %vm482, %v7519, %v7521
    %v7523 = vsel %vm482, %v7517, %v7519
    %v7524 = vsel %vm482, %v7515, %v7517
    %v7525 = vsel %vm482, %v7521, %v7515
    %v7526 = vld [vmem:[#allocation3 + $0x60] sm:$0xff]
    %v7527 = vld [vmem:[#allocation3 + $0x68] sm:$0xff]
    %v7528 = vld [vmem:[#allocation3 + $0x70] sm:$0xff]
    %v7529 = vld [vmem:[#allocation3 + $0x78] sm:$0xff]
    %v7530 = vmul.f32 %v7525, %v7526
    %v7531 = vmul.f32 %v7524, %v7527
    %v7532 = vmul.f32 %v7523, %v7528
    %v7533 = vmul.f32 %v7522, %v7529
    %7534 = vrot.lane.b32.xlu0 %v7245, 127
    %v7535 = vpop.permute.xlu0 %7534
    %7536 = vrot.lane.b32.xlu0 %v7311, 127
    %v7537 = vpop.permute.xlu0 %7536
    %7538 = vrot.lane.b32.xlu0 %v7377, 127
    %v7539 = vpop.permute.xlu0 %7538
    %7540 = vrot.lane.b32.xlu0 %v7443, 127
    %v7541 = vpop.permute.xlu0 %7540
    %v7542 = vsel %vm503, %v7539, %v7541
    %v7543 = vsel %vm503, %v7537, %v7539
    %v7544 = vsel %vm503, %v7535, %v7537
    %v7545 = vsel %vm503, %v7541, %v7535
    %v7546 = vld [vmem:[#allocation3 + $0x80] sm:$0xff]
    %v7547 = vld [vmem:[#allocation3 + $0x88] sm:$0xff]
    %v7548 = vld [vmem:[#allocation3 + $0x90] sm:$0xff]
    %v7549 = vld [vmem:[#allocation3 + $0x98] sm:$0xff]
    %v7550 = vmul.f32 %v7544, %v7546
    %v7551 = vmul.f32 %v7543, %v7547
    %v7552 = vmul.f32 %v7542, %v7548
    %v7553 = vmul.f32 %v7545, %v7549
    %7554 = vrot.lane.b32.xlu0 %v7248, 113
    %v7555 = vpop.permute.xlu0 %7554
    %7556 = vrot.lane.b32.xlu0 %v7314, 113
    %v7557 = vpop.permute.xlu0 %7556
    %7558 = vrot.lane.b32.xlu0 %v7380, 113
    %v7559 = vpop.permute.xlu0 %7558
    %7560 = vrot.lane.b32.xlu0 %v7446, 113
    %v7561 = vpop.permute.xlu0 %7560
    %v7562 = vsel %vm524, %v7559, %v7561
    %v7563 = vsel %vm524, %v7557, %v7559
    %v7564 = vsel %vm524, %v7555, %v7557
    %v7565 = vsel %vm524, %v7561, %v7555
    %v7566 = vld [vmem:[#allocation3 + $0xa0] sm:$0xff]
    %v7567 = vld [vmem:[#allocation3 + $0xa8] sm:$0xff]
    %v7568 = vld [vmem:[#allocation3 + $0xb0] sm:$0xff]
    %v7569 = vld [vmem:[#allocation3 + $0xb8] sm:$0xff]
    %v7570 = vmul.f32 %v7564, %v7566
    %v7571 = vmul.f32 %v7563, %v7567
    %v7572 = vmul.f32 %v7562, %v7568
    %v7573 = vmul.f32 %v7565, %v7569
    %7574 = vrot.lane.b32.xlu0 %v7250, 112
    %v7575 = vpop.permute.xlu0 %7574
    %7576 = vrot.lane.b32.xlu0 %v7316, 112
    %v7577 = vpop.permute.xlu0 %7576
    %7578 = vrot.lane.b32.xlu0 %v7382, 112
    %v7579 = vpop.permute.xlu0 %7578
    %7580 = vrot.lane.b32.xlu0 %v7448, 112
    %v7581 = vpop.permute.xlu0 %7580
    %v7582 = vsel %vm545, %v7579, %v7581
    %v7583 = vsel %vm545, %v7577, %v7579
    %v7584 = vsel %vm545, %v7575, %v7577
    %v7585 = vsel %vm545, %v7581, %v7575
    %v7586 = vld [vmem:[#allocation3 + $0xc0] sm:$0xff]
    %v7587 = vld [vmem:[#allocation3 + $0xc8] sm:$0xff]
    %v7588 = vld [vmem:[#allocation3 + $0xd0] sm:$0xff]
    %v7589 = vld [vmem:[#allocation3 + $0xd8] sm:$0xff]
    %v7590 = vmul.f32 %v7584, %v7586
    %v7591 = vmul.f32 %v7583, %v7587
    %v7592 = vmul.f32 %v7582, %v7588
    %v7593 = vmul.f32 %v7585, %v7589
    %7594 = vrot.lane.b32.xlu0 %v7253, 111
    %v7595 = vpop.permute.xlu0 %7594
    %7596 = vrot.lane.b32.xlu0 %v7319, 111
    %v7597 = vpop.permute.xlu0 %7596
    %7598 = vrot.lane.b32.xlu0 %v7385, 111
    %v7599 = vpop.permute.xlu0 %7598
    %7600 = vrot.lane.b32.xlu0 %v7451, 111
    %v7601 = vpop.permute.xlu0 %7600
    %v7602 = vsel %vm566, %v7599, %v7601
    %v7603 = vsel %vm566, %v7597, %v7599
    %v7604 = vsel %vm566, %v7595, %v7597
    %v7605 = vsel %vm566, %v7601, %v7595
    %v7606 = vld [vmem:[#allocation3 + $0xe0] sm:$0xff]
    %v7607 = vld [vmem:[#allocation3 + $0xe8] sm:$0xff]
    %v7608 = vld [vmem:[#allocation3 + $0xf0] sm:$0xff]
    %v7609 = vld [vmem:[#allocation3 + $0xf8] sm:$0xff]
    %v7610 = vmul.f32 %v7604, %v7606
    %v7611 = vmul.f32 %v7603, %v7607
    %v7612 = vmul.f32 %v7602, %v7608
    %v7613 = vmul.f32 %v7605, %v7609
    %v7614 = vadd.f32 %v7470, %v7490
    %v7615 = vadd.f32 %v7471, %v7491
    %v7616 = vadd.f32 %v7472, %v7492
    %v7617 = vadd.f32 %v7473, %v7493
    %v7618 = vadd.f32 %v7510, %v7530
    %v7619 = vadd.f32 %v7511, %v7531
    %v7620 = vadd.f32 %v7512, %v7532
    %v7621 = vadd.f32 %v7513, %v7533
    %v7622 = vadd.f32 %v7243, %v7550
    %v7623 = vadd.f32 %v7309, %v7551
    %v7624 = vadd.f32 %v7375, %v7552
    %v7625 = vadd.f32 %v7441, %v7553
    %v7626 = vadd.f32 %v7570, %v7590
    %v7627 = vadd.f32 %v7571, %v7591
    %v7628 = vadd.f32 %v7572, %v7592
    %v7629 = vadd.f32 %v7573, %v7593
    %v7630 = vadd.f32 %v7614, %v7618
    %v7631 = vadd.f32 %v7615, %v7619
    %v7632 = vadd.f32 %v7616, %v7620
    %v7633 = vadd.f32 %v7617, %v7621
    %v7634 = vadd.f32 %v7622, %v7626
    %v7635 = vadd.f32 %v7623, %v7627
    %v7636 = vadd.f32 %v7624, %v7628
    %v7637 = vadd.f32 %v7625, %v7629
    %v7638 = vadd.f32 %v7630, %v7634
    %v7639 = vadd.f32 %v7631, %v7635
    %v7640 = vadd.f32 %v7632, %v7636
    %v7641 = vadd.f32 %v7633, %v7637
    %v7642 = vadd.f32 %v7638, %v7610
    %v7643 = vadd.f32 %v7639, %v7611
    %v7644 = vadd.f32 %v7640, %v7612
    %v7645 = vadd.f32 %v7641, %v7613
    %v7646 = vld [vmem:[#allocation8] sm:$0xff]
    %7648 = vset.pattern.permute.xlu0 0
    %7649 = vperm.xlu0 %7648, %v7646
    %v7650 = vpop.permute.xlu0 %7649
    %v7652 = vadd.f32 %v7642, %v7650
    %v7653 = vadd.f32 %v7643, %v7650
    %v7654 = vadd.f32 %v7644, %v7650
    %v7655 = vadd.f32 %v7645, %v7650
    %7656 = vst [vmem:[%s23] sm:$0xff] %v7652
    %7657 = vst [vmem:[%s23 + $0x8] sm:$0xff] %v7653
    %7658 = vst [vmem:[%s23 + $0x10] sm:$0xff] %v7654
    %7659 = vst [vmem:[%s23 + $0x18] sm:$0xff] %v7655
    // Predicated region
    $region134: #{_lambda_.1} parent=1 // pred_check
      _
    $region135: #{_lambda_.1} parent=1 // pred_check_branch
      %7661 = sbr.rel (0) target = $region137
    $region136: #{_lambda_.1} parent=1 // pred_region
      _
    $region137: #{_lambda_.1} parent=1 // pred_fallthru
      _
    // Predicated region
    $region138: #{_lambda_.1} parent=1 // pred_check
      _
    $region139: #{_lambda_.1} parent=1 // pred_check_branch
      %7663 = sbr.rel (0) target = $region141
    $region140: #{_lambda_.1} parent=1 // pred_region
      _
    $region141: #{_lambda_.1} parent=1 // pred_fallthru
      _
    %7664 = vsyncpa [#allocation4], 1
    %7665 = vsyncpa [#allocation6], 1
    %7666 = vsyncpa [#allocation9], 1
    %7667 = vsyncpa [#allocation12], 1
    %7668 = vsyncpa [#allocation15], 1
    %7669 = vsyncpa [#allocation18], 1

</llo_original>
